<compile_context>
chip_gen: v6e
topology: v6e:2x2x1
jax: 0.10.0
libtpu: 0.0.40
codegen_flags: <defaults>
</compile_context>

<pallas_src>
import jax
import jax.numpy as jnp
from jax import lax
from jax.experimental import pallas as pl
from jax.experimental.pallas import tpu as pltpu


# Window starts exactly as in the PyTorch reference (all windows are full
# length 11, so the repeat-pad branch never triggers for 110-sample input).
_WINDOW_STARTS = tuple(i * 10 for i in range(10)) + (99,)

_C = 256            # channel width of the conv scratch (max Cout)
_L = 11             # positions per window
_W = 16             # padded window count per element (11 real + 5 dummy)
_ROWS = _L * _W     # 176 data rows per element (row = 16*l + w)
_SLAB = _ROWS + 2 * _W   # 208 rows per element incl. 16-row halos


# ------------------------------ fused kernel -------------------------------

def _fused_kernel(
    imu_ref,                                   # [Bt, 176, 8]  f32
    c1w0, c1w1, c1w2, c1b,                     # conv1 (Cin padded 6->8)
    c2w0, c2w1, c2w2, c2b,                     # conv2
    c3w0, c3w1, c3w2, c3b,                     # conv3
    pw, pb,                                    # proj (row-permuted) [2816,256],[1,256]
    t0w, t0b, t0g, t0be,                       # temporal 0
    t1w, t1b, t1g, t1be,                       # temporal 1
    t2w, t2b, t2g, t2be,                       # temporal 2
    q1w, q1b, q2w, q2b,                        # pose head
    o_ref,                                     # [Bt, 10, 7]  f32
    buf_ref,                                   # VMEM scratch [Bt, 208, 256] bf16
):
    f32 = jnp.float32
    bf16 = jnp.bfloat16
    Bt = buf_ref.shape[0]

    # (1) Re-zero only the per-element halo rows.  The convs never write them
    #     and the IMU store (8 zero-padded channels) fully covers what conv1
    #     reads from the data rows, so nothing else needs clearing.
    zeros_halo = jnp.zeros((Bt, _W, _C), bf16)
    buf_ref[:, 0:_W, :] = zeros_halo
    buf_ref[:, _W + _ROWS:_SLAB, :] = zeros_halo

    # (2) Drop the (host-side 8-channel-padded) IMU slab into the data rows.
    buf_ref[:, _W:_W + _ROWS, 0:8] = imu_ref[...].astype(bf16)

    # (3) Conv stack: Conv1d(k=3, pad=1) as 3 shifted MXU matmuls.  Shifting
    #     by +/-16 rows moves to position l-1 / l+1 of the SAME window; the
    #     zero halos reproduce the zero padding and window boundaries never
    #     mix.  Element-wise math stays in f32 (v5e has no bf16 VALU).
    def conv(cin, cout, w0, w1, w2, b):
        w0v, w1v, w2v, bv = w0[...], w1[...], w2[...], b[...]
        for e in range(Bt):                                  # static unroll
            xm1 = buf_ref[e, pl.ds(0, _ROWS), pl.ds(0, cin)]       # l-1
            x0 = buf_ref[e, pl.ds(_W, _ROWS), pl.ds(0, cin)]       # l
            xp1 = buf_ref[e, pl.ds(2 * _W, _ROWS), pl.ds(0, cin)]  # l+1
            y = (jnp.dot(xm1, w0v, preferred_element_type=f32)
                 + jnp.dot(x0, w1v, preferred_element_type=f32)
                 + jnp.dot(xp1, w2v, preferred_element_type=f32)
                 + bv)
            y = jnp.maximum(y, 0.1 * y)                      # LeakyReLU(0.1)
            buf_ref[e, pl.ds(_W, _ROWS), pl.ds(0, cout)] = y.astype(bf16)

    conv(8, 64, c1w0, c1w1, c1w2, c1b)
    conv(64, 128, c2w0, c2w1, c2w2, c2b)
    conv(128, 256, c3w0, c3w1, c3w2, c3b)

    # (4) proj + temporal + pose head, processed in chunks of EC elements
    #     (EC*16 <= 64 rows) so every live value is <= 32 vregs.
    EC = 4
    while Bt % EC:
        EC //= 2
    rows = EC * _W

    temporal = ((t0w, t0b, t0g, t0be),
                (t1w, t1b, t1g, t1be),
                (t2w, t2b, t2g, t2be))

    for c in range(Bt // EC):
        e0 = c * EC

        # proj Linear(256*11 -> 256): accumulate over the 11 positions; the
        # PyTorch channel-major flatten is folded into the row-permuted pw.
        h = jnp.zeros((rows, _C), f32) + pb[...]
        for l in range(_L):
            xl = buf_ref[pl.ds(e0, EC), pl.ds(_W * (l + 1), _W), :]  # (EC,16,256) bf16
            xl = xl.reshape(rows, _C)
            wl = pw[pl.ds(_C * l, _C), :]                            # (256,256) bf16
            h = h + jnp.dot(xl, wl, preferred_element_type=f32)

        # temporal: (Linear -> LayerNorm -> ReLU) x 3  (Dropout = identity).
        for w, b, g, be in temporal:
            y = jnp.dot(h.astype(bf16), w[...], preferred_element_type=f32) + b[...]
            mu = jnp.mean(y, axis=-1, keepdims=True)
            var = jnp.mean((y - mu) ** 2, axis=-1, keepdims=True)
            y = (y - mu) * lax.rsqrt(var + 1e-5)
            h = jnp.maximum(y * g[...] + be[...], 0.0)

        # pose predictor + quaternion L2 normalize (F.normalize eps clamp).
        p = jnp.dot(h.astype(bf16), q1w[...], preferred_element_type=f32) + q1b[...]
        p = jnp.maximum(p, 0.0)
        p = jnp.dot(p.astype(bf16), q2w[...], preferred_element_type=f32) + q2b[...]
        col = lax.broadcasted_iota(jnp.int32, p.shape, 1)
        is_q = col >= 3
        qsq = jnp.sum(jnp.where(is_q, p * p, 0.0), axis=-1, keepdims=True)
        inv = 1.0 / jnp.maximum(jnp.sqrt(qsq), 1e-12)
        p = jnp.where(is_q, p * inv, p)

        # Windows 0..9 are the 10 transitions (10 = extra window, 11..15 pad).
        p = p.reshape(EC, _W, 7)
        o_ref[pl.ds(e0, EC), :, :] = p[:, 0:10, :].astype(o_ref.dtype)


# ------------------------------ parameters ---------------------------------

def init_params(key):
    keys = jax.random.split(key, 9)

    def uni(k, shape, bound):
        return jax.random.uniform(k, shape, jnp.float32, -bound, bound)

    p = {}

    # Inertial_encoder conv stack, eval-mode BatchNorm folded in.
    # TODO(synk): for trained checkpoints fold the real running_mean/var and
    # BN affine params instead of fresh-init stats (mean=0, var=1, g=1, b=0).
    bn_scale = 1.0 / (1.0 + 1e-5) ** 0.5
    conv_dims = [(6, 64), (64, 128), (128, 256)]
    for idx, (cin, cout) in enumerate(conv_dims):
        kw, kb = jax.random.split(keys[idx])
        bound = 1.0 / (cin * 3) ** 0.5
        w_conv = uni(kw, (cout, cin, 3), bound)     # PyTorch Conv1d [Cout,Cin,k]
        b_conv = uni(kb, (cout,), bound)
        wk = [jnp.transpose(w_conv[:, :, k]) * bn_scale for k in range(3)]  # [Cin,Cout]
        if cin == 6:                                 # pad contraction dim 6 -> 8
            wk = [jnp.pad(w, ((0, 2), (0, 0))) for w in wk]
        b = (b_conv * bn_scale).reshape(1, cout)
        p[f"conv{idx + 1}"] = (wk[0], wk[1], wk[2], b)

    def linear_init(k, fin, fout):
        kw, kb = jax.random.split(k)
        bound = 1.0 / fin ** 0.5
        return uni(kw, (fin, fout), bound), uni(kb, (1, fout), bound)

    # proj: Linear(256*11 -> 256).  PyTorch flattens the NCL tensor channel-
    # major (row c*11 + l); permute rows so the kernel can consume the natural
    # position-major layout (row l*256 + c).
    w_proj, b_proj = linear_init(keys[3], 256 * 11, 256)
    j = jnp.arange(256 * 11)
    perm = (j % 256) * 11 + (j // 256)
    p["proj"] = (w_proj[perm, :], b_proj)
    p["proj_ref"] = w_proj                           # unpermuted, for the reference

    dims = [(256, 512), (512, 512), (512, 512)]
    for i, (fin, fout) in enumerate(dims):
        w, b = linear_init(keys[4 + i], fin, fout)
        p[f"temporal{i}"] = (w, b,
                             jnp.ones((1, fout), jnp.float32),
                             jnp.zeros((1, fout), jnp.float32))

    p["pose1"] = linear_init(keys[7], 512, 256)
    w2, b2 = linear_init(keys[8], 256, 7)
    w2 = w2 * 0.01                                   # matches weight.data *= 0.01
    b2 = b2.at[0, 3:6].set(0.0).at[0, 6].set(1.0)    # matches bias init
    p["pose2"] = (w2, b2)
    return p


def _kernel_weights(params):
    """Weight tuple for the kernel: matmul weights cast to bf16, biases/LN f32."""
    bf = lambda x: x.astype(jnp.bfloat16)
    out = []
    for name in ("conv1", "conv2", "conv3"):
        w0, w1, w2, b = params[name]
        out += [bf(w0), bf(w1), bf(w2), b]
    pw, pb = params["proj"]
    out += [bf(pw), pb]
    for i in range(3):
        w, b, g, be = params[f"temporal{i}"]
        out += [bf(w), b, g, be]
    for name in ("pose1", "pose2"):
        w, b = params[name]
        out += [bf(w), b]
    return tuple(out)


# ------------------------------ forward pass --------------------------------

def imu_only_forward(params, imu, block_batch=8):
    """imu: [B, 110, 6] -> poses: [B, 10, 7] (quaternion part unit-normalized)."""
    B = imu.shape[0]

    # Elements per grid step: a power of two, <= 8 (v5e cap / register budget),
    # <= B.  Batch is padded up to a multiple of Bt and cropped afterwards.
    Bt = 1
    while Bt * 2 <= min(block_batch, B):
        Bt *= 2
    Bp = -(-B // Bt) * Bt

    # Single tiny host-side gather: lay the 11 overlapping windows out in
    # kernel row order (row = 16*l + w; w>=11 are dummies, never read back),
    # and pad channels 6 -> 8 so the kernel never clears stale lanes.
    row_idx = jnp.array(
        [(_WINDOW_STARTS[w] + l) if w < 11 else 0
         for l in range(_L) for w in range(_W)], dtype=jnp.int32)
    imu_lay = jnp.take(imu, row_idx, axis=1)                     # [B, 176, 6]
    imu_lay = jnp.pad(imu_lay, ((0, Bp - B), (0, 0), (0, 2)))    # [Bp, 176, 8]

    weights = _kernel_weights(params)

    in_specs = [pl.BlockSpec((Bt, _ROWS, 8), lambda b: (b, 0, 0))]
    # Whole-array weight blocks with constant index maps stay VMEM-resident
    # across steps (~3.3 MB in bf16, comfortably inside every generation's
    # scoped-VMEM default even double-buffered, so no Buffered(1) needed).
    in_specs += [pl.BlockSpec(w.shape, lambda b: (0, 0)) for w in weights]

    out = pl.pallas_call(
        _fused_kernel,
        grid=(Bp // Bt,),
        in_specs=in_specs,
        out_specs=pl.BlockSpec((Bt, 10, 7), lambda b: (b, 0, 0)),
        out_shape=jax.ShapeDtypeStruct((Bp, 10, 7), jnp.float32),
        scratch_shapes=[pltpu.VMEM((Bt, _SLAB, _C), jnp.bfloat16)],
        compiler_params=pltpu.CompilerParams(
            dimension_semantics=("parallel",),
        ),
    )(imu_lay, *weights)
    return out[:B]


# --------------------- pure-JAX reference (for checking) --------------------

def imu_only_forward_ref(params, imu):
    """Reference with bf16 matmul operands (f32 accumulation) to mirror the
    kernel's MXU precision; LayerNorm / quaternion math in f32."""
    bf16, f32 = jnp.bfloat16, jnp.float32

    def mm(a, b):
        return jnp.dot(a.astype(bf16), b.astype(bf16), preferred_element_type=f32)

    B = imu.shape[0]
    windows = jnp.stack([imu[:, s:s + 11, :] for s in _WINDOW_STARTS], axis=1)
    x = windows.reshape(B * 11, 11, 6)
    x = jnp.pad(x, ((0, 0), (0, 0), (0, 2)))         # channel pad 6 -> 8 (zeros)
    for name in ("conv1", "conv2", "conv3"):
        w0, w1, w2, b = params[name]
        xp = jnp.pad(x, ((0, 0), (1, 1), (0, 0)))
        y = mm(xp[:, 0:11, :], w0) + mm(xp[:, 1:12, :], w1) + mm(xp[:, 2:13, :], w2) + b
        x = jnp.maximum(y, 0.1 * y)
    # PyTorch channel-major flatten against the UNpermuted proj weight.
    h = mm(jnp.transpose(x, (0, 2, 1)).reshape(B * 11, 256 * 11), params["proj_ref"])
    h = h + params["proj"][1]
    for i in range(3):
        w, b, g, be = params[f"temporal{i}"]
        y = mm(h, w) + b
        mu = jnp.mean(y, axis=-1, keepdims=True)
        var = jnp.mean((y - mu) ** 2, axis=-1, keepdims=True)
        h = jnp.maximum((y - mu) * lax.rsqrt(var + 1e-5) * g + be, 0.0)
    h = h.reshape(B, 11, 512)[:, :10, :].reshape(B * 10, 512)
    w1_, b1_ = params["pose1"]
    w2_, b2_ = params["pose2"]
    p = mm(jnp.maximum(mm(h, w1_) + b1_, 0.0), w2_) + b2_
    t, q = p[:, :3], p[:, 3:]
    q = q / jnp.maximum(jnp.linalg.norm(q, axis=-1, keepdims=True), 1e-12)
    return jnp.concatenate([t, q], axis=-1).reshape(B, 10, 7)


if __name__ == "__main__":
    key = jax.random.PRNGKey(0)
    pkey, dkey, dkey2 = jax.random.split(key, 3)
    params = init_params(pkey)

    fwd = jax.jit(imu_only_forward)
    ref_fn = jax.jit(imu_only_forward_ref)

    # Small primary test (B=2 -> Bt=2, single grid step).
    imu = jax.random.normal(dkey, (2, 110, 6), jnp.float32)
    poses = jax.block_until_ready(fwd(params, imu))
    assert poses.shape == (2, 10, 7), poses.shape
    assert bool(jnp.all(jnp.isfinite(poses)))
    qnorm = jnp.linalg.norm(poses[..., 3:], axis=-1)
    assert bool(jnp.allclose(qnorm, 1.0, atol=1e-3)), qnorm
    ref = ref_fn(params, imu)
    max_diff = float(jnp.max(jnp.abs(poses - ref)))
    assert max_diff < 5e-3, f"max diff vs reference: {max_diff}"

    # Second shape: exercises Bt=8, two post-conv chunks, batch padding and a
    # multi-step ("parallel") grid.
    imu2 = jax.random.normal(dkey2, (9, 110, 6), jnp.float32)
    poses2 = jax.block_until_ready(fwd(params, imu2))
    assert poses2.shape == (9, 10, 7), poses2.shape
    assert bool(jnp.all(jnp.isfinite(poses2)))
    ref2 = ref_fn(params, imu2)
    max_diff2 = float(jnp.max(jnp.abs(poses2 - ref2)))
    assert max_diff2 < 5e-3, f"max diff vs reference (B=9): {max_diff2}"

    print("KERNEL_OK")
</pallas_src>

<mosaic_0001>
module attributes {stable_mosaic.version = 11 : i64} {
  func.func @_fused_kernel(%arg0: i32, %arg1: memref<2x176x8xf32, #tpu.memory_space<vmem>>, %arg2: memref<8x64xbf16, #tpu.memory_space<vmem>>, %arg3: memref<8x64xbf16, #tpu.memory_space<vmem>>, %arg4: memref<8x64xbf16, #tpu.memory_space<vmem>>, %arg5: memref<1x64xf32, #tpu.memory_space<vmem>>, %arg6: memref<64x128xbf16, #tpu.memory_space<vmem>>, %arg7: memref<64x128xbf16, #tpu.memory_space<vmem>>, %arg8: memref<64x128xbf16, #tpu.memory_space<vmem>>, %arg9: memref<1x128xf32, #tpu.memory_space<vmem>>, %arg10: memref<128x256xbf16, #tpu.memory_space<vmem>>, %arg11: memref<128x256xbf16, #tpu.memory_space<vmem>>, %arg12: memref<128x256xbf16, #tpu.memory_space<vmem>>, %arg13: memref<1x256xf32, #tpu.memory_space<vmem>>, %arg14: memref<2816x256xbf16, #tpu.memory_space<vmem>>, %arg15: memref<1x256xf32, #tpu.memory_space<vmem>>, %arg16: memref<256x512xbf16, #tpu.memory_space<vmem>>, %arg17: memref<1x512xf32, #tpu.memory_space<vmem>>, %arg18: memref<1x512xf32, #tpu.memory_space<vmem>>, %arg19: memref<1x512xf32, #tpu.memory_space<vmem>>, %arg20: memref<512x512xbf16, #tpu.memory_space<vmem>>, %arg21: memref<1x512xf32, #tpu.memory_space<vmem>>, %arg22: memref<1x512xf32, #tpu.memory_space<vmem>>, %arg23: memref<1x512xf32, #tpu.memory_space<vmem>>, %arg24: memref<512x512xbf16, #tpu.memory_space<vmem>>, %arg25: memref<1x512xf32, #tpu.memory_space<vmem>>, %arg26: memref<1x512xf32, #tpu.memory_space<vmem>>, %arg27: memref<1x512xf32, #tpu.memory_space<vmem>>, %arg28: memref<512x256xbf16, #tpu.memory_space<vmem>>, %arg29: memref<1x256xf32, #tpu.memory_space<vmem>>, %arg30: memref<256x7xbf16, #tpu.memory_space<vmem>>, %arg31: memref<1x7xf32, #tpu.memory_space<vmem>>, %arg32: memref<2x10x7xf32, #tpu.memory_space<vmem>>, %arg33: memref<2x208x256xbf16, #tpu.memory_space<vmem>>) attributes {dimension_semantics = [#tpu.dimension_semantics<parallel>], iteration_bounds = array<i64: 1>, scalar_prefetch = 0 : i64, scratch_operands = 1 : i64, tpu.core_type = #tpu.core_type<tc>, window_params = [{transform_indices = @transform_0, window_bounds = array<i64: 2, 176, 8>}, {pipeline_mode = #tpu.pipeline_mode<synchronous>, transform_indices = @transform_1, window_bounds = array<i64: 8, 64>}, {pipeline_mode = #tpu.pipeline_mode<synchronous>, transform_indices = @transform_2, window_bounds = array<i64: 8, 64>}, {pipeline_mode = #tpu.pipeline_mode<synchronous>, transform_indices = @transform_3, window_bounds = array<i64: 8, 64>}, {pipeline_mode = #tpu.pipeline_mode<synchronous>, transform_indices = @transform_4, window_bounds = array<i64: 1, 64>}, {pipeline_mode = #tpu.pipeline_mode<synchronous>, transform_indices = @transform_5, window_bounds = array<i64: 64, 128>}, {pipeline_mode = #tpu.pipeline_mode<synchronous>, transform_indices = @transform_6, window_bounds = array<i64: 64, 128>}, {pipeline_mode = #tpu.pipeline_mode<synchronous>, transform_indices = @transform_7, window_bounds = array<i64: 64, 128>}, {pipeline_mode = #tpu.pipeline_mode<synchronous>, transform_indices = @transform_8, window_bounds = array<i64: 1, 128>}, {pipeline_mode = #tpu.pipeline_mode<synchronous>, transform_indices = @transform_9, window_bounds = array<i64: 128, 256>}, {pipeline_mode = #tpu.pipeline_mode<synchronous>, transform_indices = @transform_10, window_bounds = array<i64: 128, 256>}, {pipeline_mode = #tpu.pipeline_mode<synchronous>, transform_indices = @transform_11, window_bounds = array<i64: 128, 256>}, {pipeline_mode = #tpu.pipeline_mode<synchronous>, transform_indices = @transform_12, window_bounds = array<i64: 1, 256>}, {pipeline_mode = #tpu.pipeline_mode<synchronous>, transform_indices = @transform_13, window_bounds = array<i64: 2816, 256>}, {pipeline_mode = #tpu.pipeline_mode<synchronous>, transform_indices = @transform_14, window_bounds = array<i64: 1, 256>}, {pipeline_mode = #tpu.pipeline_mode<synchronous>, transform_indices = @transform_15, window_bounds = array<i64: 256, 512>}, {pipeline_mode = #tpu.pipeline_mode<synchronous>, transform_indices = @transform_16, window_bounds = array<i64: 1, 512>}, {pipeline_mode = #tpu.pipeline_mode<synchronous>, transform_indices = @transform_17, window_bounds = array<i64: 1, 512>}, {pipeline_mode = #tpu.pipeline_mode<synchronous>, transform_indices = @transform_18, window_bounds = array<i64: 1, 512>}, {pipeline_mode = #tpu.pipeline_mode<synchronous>, transform_indices = @transform_19, window_bounds = array<i64: 512, 512>}, {pipeline_mode = #tpu.pipeline_mode<synchronous>, transform_indices = @transform_20, window_bounds = array<i64: 1, 512>}, {pipeline_mode = #tpu.pipeline_mode<synchronous>, transform_indices = @transform_21, window_bounds = array<i64: 1, 512>}, {pipeline_mode = #tpu.pipeline_mode<synchronous>, transform_indices = @transform_22, window_bounds = array<i64: 1, 512>}, {pipeline_mode = #tpu.pipeline_mode<synchronous>, transform_indices = @transform_23, window_bounds = array<i64: 512, 512>}, {pipeline_mode = #tpu.pipeline_mode<synchronous>, transform_indices = @transform_24, window_bounds = array<i64: 1, 512>}, {pipeline_mode = #tpu.pipeline_mode<synchronous>, transform_indices = @transform_25, window_bounds = array<i64: 1, 512>}, {pipeline_mode = #tpu.pipeline_mode<synchronous>, transform_indices = @transform_26, window_bounds = array<i64: 1, 512>}, {pipeline_mode = #tpu.pipeline_mode<synchronous>, transform_indices = @transform_27, window_bounds = array<i64: 512, 256>}, {pipeline_mode = #tpu.pipeline_mode<synchronous>, transform_indices = @transform_28, window_bounds = array<i64: 1, 256>}, {pipeline_mode = #tpu.pipeline_mode<synchronous>, transform_indices = @transform_29, window_bounds = array<i64: 256, 7>}, {pipeline_mode = #tpu.pipeline_mode<synchronous>, transform_indices = @transform_30, window_bounds = array<i64: 1, 7>}, {transform_indices = @transform_31, window_bounds = array<i64: 2, 10, 7>}]} {
    %cst = arith.constant 0.000000e+00 : bf16
    %0 = vector.broadcast %cst : bf16 to vector<2x16x256xbf16>
    %c0 = arith.constant 0 : index
    %c0_0 = arith.constant 0 : index
    %c0_1 = arith.constant 0 : index
    %1 = vector.load %arg33[%c0, %c0_0, %c0_1] : memref<2x208x256xbf16, #tpu.memory_space<vmem>>, vector<2x16x256xbf16>
    tpu.vector_store %arg33[%c0, %c0_0, %c0_1], %0 {strides = array<i32>} : memref<2x208x256xbf16, #tpu.memory_space<vmem>>, vector<2x16x256xbf16>,
    %c0_2 = arith.constant 0 : index
    %c192 = arith.constant 192 : index
    %c0_3 = arith.constant 0 : index
    %2 = vector.load %arg33[%c0_2, %c192, %c0_3] : memref<2x208x256xbf16, #tpu.memory_space<vmem>>, vector<2x16x256xbf16>
    tpu.vector_store %arg33[%c0_2, %c192, %c0_3], %0 {strides = array<i32>} : memref<2x208x256xbf16, #tpu.memory_space<vmem>>, vector<2x16x256xbf16>,
    %c0_4 = arith.constant 0 : index
    %c0_5 = arith.constant 0 : index
    %c0_6 = arith.constant 0 : index
    %3 = vector.load %arg1[%c0_4, %c0_5, %c0_6] : memref<2x176x8xf32, #tpu.memory_space<vmem>>, vector<2x176x8xf32>
    %4 = arith.truncf %3 : vector<2x176x8xf32> to vector<2x176x8xbf16>
    %c0_7 = arith.constant 0 : index
    %c16 = arith.constant 16 : index
    %c0_8 = arith.constant 0 : index
    %5 = vector.load %arg33[%c0_7, %c16, %c0_8] : memref<2x208x256xbf16, #tpu.memory_space<vmem>>, vector<2x176x8xbf16>
    tpu.vector_store %arg33[%c0_7, %c16, %c0_8], %4 {strides = array<i32>} : memref<2x208x256xbf16, #tpu.memory_space<vmem>>, vector<2x176x8xbf16>,
    %c0_9 = arith.constant 0 : index
    %c0_10 = arith.constant 0 : index
    %6 = vector.load %arg2[%c0_9, %c0_10] : memref<8x64xbf16, #tpu.memory_space<vmem>>, vector<8x64xbf16>
    %c0_11 = arith.constant 0 : index
    %c0_12 = arith.constant 0 : index
    %7 = vector.load %arg3[%c0_11, %c0_12] : memref<8x64xbf16, #tpu.memory_space<vmem>>, vector<8x64xbf16>
    %c0_13 = arith.constant 0 : index
    %c0_14 = arith.constant 0 : index
    %8 = vector.load %arg4[%c0_13, %c0_14] : memref<8x64xbf16, #tpu.memory_space<vmem>>, vector<8x64xbf16>
    %c0_15 = arith.constant 0 : index
    %c0_16 = arith.constant 0 : index
    %9 = vector.load %arg5[%c0_15, %c0_16] : memref<1x64xf32, #tpu.memory_space<vmem>>, vector<1x64xf32>
    %c0_17 = arith.constant 0 : index
    %c0_18 = arith.constant 0 : index
    %c0_19 = arith.constant 0 : index
    %10 = vector.load %arg33[%c0_17, %c0_18, %c0_19] : memref<2x208x256xbf16, #tpu.memory_space<vmem>>, vector<1x176x8xbf16>
    %11 = vector.shape_cast %10 : vector<1x176x8xbf16> to vector<176x8xbf16>
    %c0_20 = arith.constant 0 : index
    %c16_21 = arith.constant 16 : index
    %c0_22 = arith.constant 0 : index
    %12 = vector.load %arg33[%c0_20, %c16_21, %c0_22] : memref<2x208x256xbf16, #tpu.memory_space<vmem>>, vector<1x176x8xbf16>
    %13 = vector.shape_cast %12 : vector<1x176x8xbf16> to vector<176x8xbf16>
    %c0_23 = arith.constant 0 : index
    %c32 = arith.constant 32 : index
    %c0_24 = arith.constant 0 : index
    %14 = vector.load %arg33[%c0_23, %c32, %c0_24] : memref<2x208x256xbf16, #tpu.memory_space<vmem>>, vector<1x176x8xbf16>
    %15 = vector.shape_cast %14 : vector<1x176x8xbf16> to vector<176x8xbf16>
    %cst_25 = arith.constant dense<0.000000e+00> : vector<176x64xf32>
    %16 = tpu.matmul %11, %6, %cst_25 {dimension_numbers = #tpu.dot_dimension_numbers<[1], [0], [0], [1], [0, 0, 1, 1], [], []>} : vector<176x8xbf16>, vector<8x64xbf16>, vector<176x64xf32> -> vector<176x64xf32>
    %cst_26 = arith.constant dense<0.000000e+00> : vector<176x64xf32>
    %17 = tpu.matmul %13, %7, %cst_26 {dimension_numbers = #tpu.dot_dimension_numbers<[1], [0], [0], [1], [0, 0, 1, 1], [], []>} : vector<176x8xbf16>, vector<8x64xbf16>, vector<176x64xf32> -> vector<176x64xf32>
    %18 = arith.addf %16, %17 : vector<176x64xf32>
    %cst_27 = arith.constant dense<0.000000e+00> : vector<176x64xf32>
    %19 = tpu.matmul %15, %8, %cst_27 {dimension_numbers = #tpu.dot_dimension_numbers<[1], [0], [0], [1], [0, 0, 1, 1], [], []>} : vector<176x8xbf16>, vector<8x64xbf16>, vector<176x64xf32> -> vector<176x64xf32>
    %20 = arith.addf %18, %19 : vector<176x64xf32>
    %21 = vector.broadcast %9 : vector<1x64xf32> to vector<176x64xf32>
    %22 = arith.addf %20, %21 : vector<176x64xf32>
    %cst_28 = arith.constant 1.000000e-01 : f32
    %23 = vector.broadcast %cst_28 : f32 to vector<176x64xf32>
    %24 = arith.mulf %23, %22 : vector<176x64xf32>
    %25 = arith.maximumf %22, %24 : vector<176x64xf32>
    %26 = arith.truncf %25 : vector<176x64xf32> to vector<176x64xbf16>
    %c0_29 = arith.constant 0 : index
    %c16_30 = arith.constant 16 : index
    %c0_31 = arith.constant 0 : index
    %27 = vector.load %arg33[%c0_29, %c16_30, %c0_31] : memref<2x208x256xbf16, #tpu.memory_space<vmem>>, vector<1x176x64xbf16>
    %28 = vector.shape_cast %27 : vector<1x176x64xbf16> to vector<176x64xbf16>
    %29 = vector.shape_cast %26 : vector<176x64xbf16> to vector<1x176x64xbf16>
    tpu.vector_store %arg33[%c0_29, %c16_30, %c0_31], %29 {strides = array<i32>} : memref<2x208x256xbf16, #tpu.memory_space<vmem>>, vector<1x176x64xbf16>,
    %c1 = arith.constant 1 : index
    %c0_32 = arith.constant 0 : index
    %c0_33 = arith.constant 0 : index
    %30 = vector.load %arg33[%c1, %c0_32, %c0_33] : memref<2x208x256xbf16, #tpu.memory_space<vmem>>, vector<1x176x8xbf16>
    %31 = vector.shape_cast %30 : vector<1x176x8xbf16> to vector<176x8xbf16>
    %c1_34 = arith.constant 1 : index
    %c16_35 = arith.constant 16 : index
    %c0_36 = arith.constant 0 : index
    %32 = vector.load %arg33[%c1_34, %c16_35, %c0_36] : memref<2x208x256xbf16, #tpu.memory_space<vmem>>, vector<1x176x8xbf16>
    %33 = vector.shape_cast %32 : vector<1x176x8xbf16> to vector<176x8xbf16>
    %c1_37 = arith.constant 1 : index
    %c32_38 = arith.constant 32 : index
    %c0_39 = arith.constant 0 : index
    %34 = vector.load %arg33[%c1_37, %c32_38, %c0_39] : memref<2x208x256xbf16, #tpu.memory_space<vmem>>, vector<1x176x8xbf16>
    %35 = vector.shape_cast %34 : vector<1x176x8xbf16> to vector<176x8xbf16>
    %cst_40 = arith.constant dense<0.000000e+00> : vector<176x64xf32>
    %36 = tpu.matmul %31, %6, %cst_40 {dimension_numbers = #tpu.dot_dimension_numbers<[1], [0], [0], [1], [0, 0, 1, 1], [], []>} : vector<176x8xbf16>, vector<8x64xbf16>, vector<176x64xf32> -> vector<176x64xf32>
    %cst_41 = arith.constant dense<0.000000e+00> : vector<176x64xf32>
    %37 = tpu.matmul %33, %7, %cst_41 {dimension_numbers = #tpu.dot_dimension_numbers<[1], [0], [0], [1], [0, 0, 1, 1], [], []>} : vector<176x8xbf16>, vector<8x64xbf16>, vector<176x64xf32> -> vector<176x64xf32>
    %38 = arith.addf %36, %37 : vector<176x64xf32>
    %cst_42 = arith.constant dense<0.000000e+00> : vector<176x64xf32>
    %39 = tpu.matmul %35, %8, %cst_42 {dimension_numbers = #tpu.dot_dimension_numbers<[1], [0], [0], [1], [0, 0, 1, 1], [], []>} : vector<176x8xbf16>, vector<8x64xbf16>, vector<176x64xf32> -> vector<176x64xf32>
    %40 = arith.addf %38, %39 : vector<176x64xf32>
    %41 = vector.broadcast %9 : vector<1x64xf32> to vector<176x64xf32>
    %42 = arith.addf %40, %41 : vector<176x64xf32>
    %cst_43 = arith.constant 1.000000e-01 : f32
    %43 = vector.broadcast %cst_43 : f32 to vector<176x64xf32>
    %44 = arith.mulf %43, %42 : vector<176x64xf32>
    %45 = arith.maximumf %42, %44 : vector<176x64xf32>
    %46 = arith.truncf %45 : vector<176x64xf32> to vector<176x64xbf16>
    %c1_44 = arith.constant 1 : index
    %c16_45 = arith.constant 16 : index
    %c0_46 = arith.constant 0 : index
    %47 = vector.load %arg33[%c1_44, %c16_45, %c0_46] : memref<2x208x256xbf16, #tpu.memory_space<vmem>>, vector<1x176x64xbf16>
    %48 = vector.shape_cast %47 : vector<1x176x64xbf16> to vector<176x64xbf16>
    %49 = vector.shape_cast %46 : vector<176x64xbf16> to vector<1x176x64xbf16>
    tpu.vector_store %arg33[%c1_44, %c16_45, %c0_46], %49 {strides = array<i32>} : memref<2x208x256xbf16, #tpu.memory_space<vmem>>, vector<1x176x64xbf16>,
    %c0_47 = arith.constant 0 : index
    %c0_48 = arith.constant 0 : index
    %50 = vector.load %arg6[%c0_47, %c0_48] : memref<64x128xbf16, #tpu.memory_space<vmem>>, vector<64x128xbf16>
    %c0_49 = arith.constant 0 : index
    %c0_50 = arith.constant 0 : index
    %51 = vector.load %arg7[%c0_49, %c0_50] : memref<64x128xbf16, #tpu.memory_space<vmem>>, vector<64x128xbf16>
    %c0_51 = arith.constant 0 : index
    %c0_52 = arith.constant 0 : index
    %52 = vector.load %arg8[%c0_51, %c0_52] : memref<64x128xbf16, #tpu.memory_space<vmem>>, vector<64x128xbf16>
    %c0_53 = arith.constant 0 : index
    %c0_54 = arith.constant 0 : index
    %53 = vector.load %arg9[%c0_53, %c0_54] : memref<1x128xf32, #tpu.memory_space<vmem>>, vector<1x128xf32>
    %c0_55 = arith.constant 0 : index
    %c0_56 = arith.constant 0 : index
    %c0_57 = arith.constant 0 : index
    %54 = vector.load %arg33[%c0_55, %c0_56, %c0_57] : memref<2x208x256xbf16, #tpu.memory_space<vmem>>, vector<1x176x64xbf16>
    %55 = vector.shape_cast %54 : vector<1x176x64xbf16> to vector<176x64xbf16>
    %c0_58 = arith.constant 0 : index
    %c16_59 = arith.constant 16 : index
    %c0_60 = arith.constant 0 : index
    %56 = vector.load %arg33[%c0_58, %c16_59, %c0_60] : memref<2x208x256xbf16, #tpu.memory_space<vmem>>, vector<1x176x64xbf16>
    %57 = vector.shape_cast %56 : vector<1x176x64xbf16> to vector<176x64xbf16>
    %c0_61 = arith.constant 0 : index
    %c32_62 = arith.constant 32 : index
    %c0_63 = arith.constant 0 : index
    %58 = vector.load %arg33[%c0_61, %c32_62, %c0_63] : memref<2x208x256xbf16, #tpu.memory_space<vmem>>, vector<1x176x64xbf16>
    %59 = vector.shape_cast %58 : vector<1x176x64xbf16> to vector<176x64xbf16>
    %cst_64 = arith.constant dense<0.000000e+00> : vector<176x128xf32>
    %60 = tpu.matmul %55, %50, %cst_64 {dimension_numbers = #tpu.dot_dimension_numbers<[1], [0], [0], [1], [0, 0, 1, 1], [], []>} : vector<176x64xbf16>, vector<64x128xbf16>, vector<176x128xf32> -> vector<176x128xf32>
    %cst_65 = arith.constant dense<0.000000e+00> : vector<176x128xf32>
    %61 = tpu.matmul %57, %51, %cst_65 {dimension_numbers = #tpu.dot_dimension_numbers<[1], [0], [0], [1], [0, 0, 1, 1], [], []>} : vector<176x64xbf16>, vector<64x128xbf16>, vector<176x128xf32> -> vector<176x128xf32>
    %62 = arith.addf %60, %61 : vector<176x128xf32>
    %cst_66 = arith.constant dense<0.000000e+00> : vector<176x128xf32>
    %63 = tpu.matmul %59, %52, %cst_66 {dimension_numbers = #tpu.dot_dimension_numbers<[1], [0], [0], [1], [0, 0, 1, 1], [], []>} : vector<176x64xbf16>, vector<64x128xbf16>, vector<176x128xf32> -> vector<176x128xf32>
    %64 = arith.addf %62, %63 : vector<176x128xf32>
    %65 = vector.broadcast %53 : vector<1x128xf32> to vector<176x128xf32>
    %66 = arith.addf %64, %65 : vector<176x128xf32>
    %cst_67 = arith.constant 1.000000e-01 : f32
    %67 = vector.broadcast %cst_67 : f32 to vector<176x128xf32>
    %68 = arith.mulf %67, %66 : vector<176x128xf32>
    %69 = arith.maximumf %66, %68 : vector<176x128xf32>
    %70 = arith.truncf %69 : vector<176x128xf32> to vector<176x128xbf16>
    %c0_68 = arith.constant 0 : index
    %c16_69 = arith.constant 16 : index
    %c0_70 = arith.constant 0 : index
    %71 = vector.load %arg33[%c0_68, %c16_69, %c0_70] : memref<2x208x256xbf16, #tpu.memory_space<vmem>>, vector<1x176x128xbf16>
    %72 = vector.shape_cast %71 : vector<1x176x128xbf16> to vector<176x128xbf16>
    %73 = vector.shape_cast %70 : vector<176x128xbf16> to vector<1x176x128xbf16>
    tpu.vector_store %arg33[%c0_68, %c16_69, %c0_70], %73 {strides = array<i32>} : memref<2x208x256xbf16, #tpu.memory_space<vmem>>, vector<1x176x128xbf16>,
    %c1_71 = arith.constant 1 : index
    %c0_72 = arith.constant 0 : index
    %c0_73 = arith.constant 0 : index
    %74 = vector.load %arg33[%c1_71, %c0_72, %c0_73] : memref<2x208x256xbf16, #tpu.memory_space<vmem>>, vector<1x176x64xbf16>
    %75 = vector.shape_cast %74 : vector<1x176x64xbf16> to vector<176x64xbf16>
    %c1_74 = arith.constant 1 : index
    %c16_75 = arith.constant 16 : index
    %c0_76 = arith.constant 0 : index
    %76 = vector.load %arg33[%c1_74, %c16_75, %c0_76] : memref<2x208x256xbf16, #tpu.memory_space<vmem>>, vector<1x176x64xbf16>
    %77 = vector.shape_cast %76 : vector<1x176x64xbf16> to vector<176x64xbf16>
    %c1_77 = arith.constant 1 : index
    %c32_78 = arith.constant 32 : index
    %c0_79 = arith.constant 0 : index
    %78 = vector.load %arg33[%c1_77, %c32_78, %c0_79] : memref<2x208x256xbf16, #tpu.memory_space<vmem>>, vector<1x176x64xbf16>
    %79 = vector.shape_cast %78 : vector<1x176x64xbf16> to vector<176x64xbf16>
    %cst_80 = arith.constant dense<0.000000e+00> : vector<176x128xf32>
    %80 = tpu.matmul %75, %50, %cst_80 {dimension_numbers = #tpu.dot_dimension_numbers<[1], [0], [0], [1], [0, 0, 1, 1], [], []>} : vector<176x64xbf16>, vector<64x128xbf16>, vector<176x128xf32> -> vector<176x128xf32>
    %cst_81 = arith.constant dense<0.000000e+00> : vector<176x128xf32>
    %81 = tpu.matmul %77, %51, %cst_81 {dimension_numbers = #tpu.dot_dimension_numbers<[1], [0], [0], [1], [0, 0, 1, 1], [], []>} : vector<176x64xbf16>, vector<64x128xbf16>, vector<176x128xf32> -> vector<176x128xf32>
    %82 = arith.addf %80, %81 : vector<176x128xf32>
    %cst_82 = arith.constant dense<0.000000e+00> : vector<176x128xf32>
    %83 = tpu.matmul %79, %52, %cst_82 {dimension_numbers = #tpu.dot_dimension_numbers<[1], [0], [0], [1], [0, 0, 1, 1], [], []>} : vector<176x64xbf16>, vector<64x128xbf16>, vector<176x128xf32> -> vector<176x128xf32>
    %84 = arith.addf %82, %83 : vector<176x128xf32>
    %85 = vector.broadcast %53 : vector<1x128xf32> to vector<176x128xf32>
    %86 = arith.addf %84, %85 : vector<176x128xf32>
    %cst_83 = arith.constant 1.000000e-01 : f32
    %87 = vector.broadcast %cst_83 : f32 to vector<176x128xf32>
    %88 = arith.mulf %87, %86 : vector<176x128xf32>
    %89 = arith.maximumf %86, %88 : vector<176x128xf32>
    %90 = arith.truncf %89 : vector<176x128xf32> to vector<176x128xbf16>
    %c1_84 = arith.constant 1 : index
    %c16_85 = arith.constant 16 : index
    %c0_86 = arith.constant 0 : index
    %91 = vector.load %arg33[%c1_84, %c16_85, %c0_86] : memref<2x208x256xbf16, #tpu.memory_space<vmem>>, vector<1x176x128xbf16>
    %92 = vector.shape_cast %91 : vector<1x176x128xbf16> to vector<176x128xbf16>
    %93 = vector.shape_cast %90 : vector<176x128xbf16> to vector<1x176x128xbf16>
    tpu.vector_store %arg33[%c1_84, %c16_85, %c0_86], %93 {strides = array<i32>} : memref<2x208x256xbf16, #tpu.memory_space<vmem>>, vector<1x176x128xbf16>,
    %c0_87 = arith.constant 0 : index
    %c0_88 = arith.constant 0 : index
    %94 = vector.load %arg10[%c0_87, %c0_88] : memref<128x256xbf16, #tpu.memory_space<vmem>>, vector<128x256xbf16>
    %c0_89 = arith.constant 0 : index
    %c0_90 = arith.constant 0 : index
    %95 = vector.load %arg11[%c0_89, %c0_90] : memref<128x256xbf16, #tpu.memory_space<vmem>>, vector<128x256xbf16>
    %c0_91 = arith.constant 0 : index
    %c0_92 = arith.constant 0 : index
    %96 = vector.load %arg12[%c0_91, %c0_92] : memref<128x256xbf16, #tpu.memory_space<vmem>>, vector<128x256xbf16>
    %c0_93 = arith.constant 0 : index
    %c0_94 = arith.constant 0 : index
    %97 = vector.load %arg13[%c0_93, %c0_94] : memref<1x256xf32, #tpu.memory_space<vmem>>, vector<1x256xf32>
    %c0_95 = arith.constant 0 : index
    %c0_96 = arith.constant 0 : index
    %c0_97 = arith.constant 0 : index
    %98 = vector.load %arg33[%c0_95, %c0_96, %c0_97] : memref<2x208x256xbf16, #tpu.memory_space<vmem>>, vector<1x176x128xbf16>
    %99 = vector.shape_cast %98 : vector<1x176x128xbf16> to vector<176x128xbf16>
    %c0_98 = arith.constant 0 : index
    %c16_99 = arith.constant 16 : index
    %c0_100 = arith.constant 0 : index
    %100 = vector.load %arg33[%c0_98, %c16_99, %c0_100] : memref<2x208x256xbf16, #tpu.memory_space<vmem>>, vector<1x176x128xbf16>
    %101 = vector.shape_cast %100 : vector<1x176x128xbf16> to vector<176x128xbf16>
    %c0_101 = arith.constant 0 : index
    %c32_102 = arith.constant 32 : index
    %c0_103 = arith.constant 0 : index
    %102 = vector.load %arg33[%c0_101, %c32_102, %c0_103] : memref<2x208x256xbf16, #tpu.memory_space<vmem>>, vector<1x176x128xbf16>
    %103 = vector.shape_cast %102 : vector<1x176x128xbf16> to vector<176x128xbf16>
    %cst_104 = arith.constant dense<0.000000e+00> : vector<176x256xf32>
    %104 = tpu.matmul %99, %94, %cst_104 {dimension_numbers = #tpu.dot_dimension_numbers<[1], [0], [0], [1], [0, 0, 1, 1], [], []>} : vector<176x128xbf16>, vector<128x256xbf16>, vector<176x256xf32> -> vector<176x256xf32>
    %cst_105 = arith.constant dense<0.000000e+00> : vector<176x256xf32>
    %105 = tpu.matmul %101, %95, %cst_105 {dimension_numbers = #tpu.dot_dimension_numbers<[1], [0], [0], [1], [0, 0, 1, 1], [], []>} : vector<176x128xbf16>, vector<128x256xbf16>, vector<176x256xf32> -> vector<176x256xf32>
    %106 = arith.addf %104, %105 : vector<176x256xf32>
    %cst_106 = arith.constant dense<0.000000e+00> : vector<176x256xf32>
    %107 = tpu.matmul %103, %96, %cst_106 {dimension_numbers = #tpu.dot_dimension_numbers<[1], [0], [0], [1], [0, 0, 1, 1], [], []>} : vector<176x128xbf16>, vector<128x256xbf16>, vector<176x256xf32> -> vector<176x256xf32>
    %108 = arith.addf %106, %107 : vector<176x256xf32>
    %109 = vector.broadcast %97 : vector<1x256xf32> to vector<176x256xf32>
    %110 = arith.addf %108, %109 : vector<176x256xf32>
    %cst_107 = arith.constant 1.000000e-01 : f32
    %111 = vector.broadcast %cst_107 : f32 to vector<176x256xf32>
    %112 = arith.mulf %111, %110 : vector<176x256xf32>
    %113 = arith.maximumf %110, %112 : vector<176x256xf32>
    %114 = arith.truncf %113 : vector<176x256xf32> to vector<176x256xbf16>
    %c0_108 = arith.constant 0 : index
    %c16_109 = arith.constant 16 : index
    %c0_110 = arith.constant 0 : index
    %115 = vector.load %arg33[%c0_108, %c16_109, %c0_110] : memref<2x208x256xbf16, #tpu.memory_space<vmem>>, vector<1x176x256xbf16>
    %116 = vector.shape_cast %115 : vector<1x176x256xbf16> to vector<176x256xbf16>
    %117 = vector.shape_cast %114 : vector<176x256xbf16> to vector<1x176x256xbf16>
    tpu.vector_store %arg33[%c0_108, %c16_109, %c0_110], %117 {strides = array<i32>} : memref<2x208x256xbf16, #tpu.memory_space<vmem>>, vector<1x176x256xbf16>,
    %c1_111 = arith.constant 1 : index
    %c0_112 = arith.constant 0 : index
    %c0_113 = arith.constant 0 : index
    %118 = vector.load %arg33[%c1_111, %c0_112, %c0_113] : memref<2x208x256xbf16, #tpu.memory_space<vmem>>, vector<1x176x128xbf16>
    %119 = vector.shape_cast %118 : vector<1x176x128xbf16> to vector<176x128xbf16>
    %c1_114 = arith.constant 1 : index
    %c16_115 = arith.constant 16 : index
    %c0_116 = arith.constant 0 : index
    %120 = vector.load %arg33[%c1_114, %c16_115, %c0_116] : memref<2x208x256xbf16, #tpu.memory_space<vmem>>, vector<1x176x128xbf16>
    %121 = vector.shape_cast %120 : vector<1x176x128xbf16> to vector<176x128xbf16>
    %c1_117 = arith.constant 1 : index
    %c32_118 = arith.constant 32 : index
    %c0_119 = arith.constant 0 : index
    %122 = vector.load %arg33[%c1_117, %c32_118, %c0_119] : memref<2x208x256xbf16, #tpu.memory_space<vmem>>, vector<1x176x128xbf16>
    %123 = vector.shape_cast %122 : vector<1x176x128xbf16> to vector<176x128xbf16>
    %cst_120 = arith.constant dense<0.000000e+00> : vector<176x256xf32>
    %124 = tpu.matmul %119, %94, %cst_120 {dimension_numbers = #tpu.dot_dimension_numbers<[1], [0], [0], [1], [0, 0, 1, 1], [], []>} : vector<176x128xbf16>, vector<128x256xbf16>, vector<176x256xf32> -> vector<176x256xf32>
    %cst_121 = arith.constant dense<0.000000e+00> : vector<176x256xf32>
    %125 = tpu.matmul %121, %95, %cst_121 {dimension_numbers = #tpu.dot_dimension_numbers<[1], [0], [0], [1], [0, 0, 1, 1], [], []>} : vector<176x128xbf16>, vector<128x256xbf16>, vector<176x256xf32> -> vector<176x256xf32>
    %126 = arith.addf %124, %125 : vector<176x256xf32>
    %cst_122 = arith.constant dense<0.000000e+00> : vector<176x256xf32>
    %127 = tpu.matmul %123, %96, %cst_122 {dimension_numbers = #tpu.dot_dimension_numbers<[1], [0], [0], [1], [0, 0, 1, 1], [], []>} : vector<176x128xbf16>, vector<128x256xbf16>, vector<176x256xf32> -> vector<176x256xf32>
    %128 = arith.addf %126, %127 : vector<176x256xf32>
    %129 = vector.broadcast %97 : vector<1x256xf32> to vector<176x256xf32>
    %130 = arith.addf %128, %129 : vector<176x256xf32>
    %cst_123 = arith.constant 1.000000e-01 : f32
    %131 = vector.broadcast %cst_123 : f32 to vector<176x256xf32>
    %132 = arith.mulf %131, %130 : vector<176x256xf32>
    %133 = arith.maximumf %130, %132 : vector<176x256xf32>
    %134 = arith.truncf %133 : vector<176x256xf32> to vector<176x256xbf16>
    %c1_124 = arith.constant 1 : index
    %c16_125 = arith.constant 16 : index
    %c0_126 = arith.constant 0 : index
    %135 = vector.load %arg33[%c1_124, %c16_125, %c0_126] : memref<2x208x256xbf16, #tpu.memory_space<vmem>>, vector<1x176x256xbf16>
    %136 = vector.shape_cast %135 : vector<1x176x256xbf16> to vector<176x256xbf16>
    %137 = vector.shape_cast %134 : vector<176x256xbf16> to vector<1x176x256xbf16>
    tpu.vector_store %arg33[%c1_124, %c16_125, %c0_126], %137 {strides = array<i32>} : memref<2x208x256xbf16, #tpu.memory_space<vmem>>, vector<1x176x256xbf16>,
    %cst_127 = arith.constant 0.000000e+00 : f32
    %138 = vector.broadcast %cst_127 : f32 to vector<32x256xf32>
    %c0_128 = arith.constant 0 : index
    %c0_129 = arith.constant 0 : index
    %139 = vector.load %arg15[%c0_128, %c0_129] : memref<1x256xf32, #tpu.memory_space<vmem>>, vector<1x256xf32>
    %140 = vector.broadcast %139 : vector<1x256xf32> to vector<32x256xf32>
    %141 = arith.addf %138, %140 : vector<32x256xf32>
    %c0_130 = arith.constant 0 : index
    %c16_131 = arith.constant 16 : index
    %c0_132 = arith.constant 0 : index
    %142 = vector.load %arg33[%c0_130, %c16_131, %c0_132] : memref<2x208x256xbf16, #tpu.memory_space<vmem>>, vector<2x16x256xbf16>
    %143 = vector.shape_cast %142 : vector<2x16x256xbf16> to vector<32x256xbf16>
    %c0_133 = arith.constant 0 : index
    %c0_134 = arith.constant 0 : index
    %144 = vector.load %arg14[%c0_133, %c0_134] : memref<2816x256xbf16, #tpu.memory_space<vmem>>, vector<256x256xbf16>
    %cst_135 = arith.constant dense<0.000000e+00> : vector<32x256xf32>
    %145 = tpu.matmul %143, %144, %cst_135 {dimension_numbers = #tpu.dot_dimension_numbers<[1], [0], [0], [1], [0, 0, 1, 1], [], []>} : vector<32x256xbf16>, vector<256x256xbf16>, vector<32x256xf32> -> vector<32x256xf32>
    %146 = arith.addf %141, %145 : vector<32x256xf32>
    %c0_136 = arith.constant 0 : index
    %c32_137 = arith.constant 32 : index
    %c0_138 = arith.constant 0 : index
    %147 = vector.load %arg33[%c0_136, %c32_137, %c0_138] : memref<2x208x256xbf16, #tpu.memory_space<vmem>>, vector<2x16x256xbf16>
    %148 = vector.shape_cast %147 : vector<2x16x256xbf16> to vector<32x256xbf16>
    %c256 = arith.constant 256 : index
    %c0_139 = arith.constant 0 : index
    %149 = vector.load %arg14[%c256, %c0_139] : memref<2816x256xbf16, #tpu.memory_space<vmem>>, vector<256x256xbf16>
    %cst_140 = arith.constant dense<0.000000e+00> : vector<32x256xf32>
    %150 = tpu.matmul %148, %149, %cst_140 {dimension_numbers = #tpu.dot_dimension_numbers<[1], [0], [0], [1], [0, 0, 1, 1], [], []>} : vector<32x256xbf16>, vector<256x256xbf16>, vector<32x256xf32> -> vector<32x256xf32>
    %151 = arith.addf %146, %150 : vector<32x256xf32>
    %c0_141 = arith.constant 0 : index
    %c48 = arith.constant 48 : index
    %c0_142 = arith.constant 0 : index
    %152 = vector.load %arg33[%c0_141, %c48, %c0_142] : memref<2x208x256xbf16, #tpu.memory_space<vmem>>, vector<2x16x256xbf16>
    %153 = vector.shape_cast %152 : vector<2x16x256xbf16> to vector<32x256xbf16>
    %c512 = arith.constant 512 : index
    %c0_143 = arith.constant 0 : index
    %154 = vector.load %arg14[%c512, %c0_143] : memref<2816x256xbf16, #tpu.memory_space<vmem>>, vector<256x256xbf16>
    %cst_144 = arith.constant dense<0.000000e+00> : vector<32x256xf32>
    %155 = tpu.matmul %153, %154, %cst_144 {dimension_numbers = #tpu.dot_dimension_numbers<[1], [0], [0], [1], [0, 0, 1, 1], [], []>} : vector<32x256xbf16>, vector<256x256xbf16>, vector<32x256xf32> -> vector<32x256xf32>
    %156 = arith.addf %151, %155 : vector<32x256xf32>
    %c0_145 = arith.constant 0 : index
    %c64 = arith.constant 64 : index
    %c0_146 = arith.constant 0 : index
    %157 = vector.load %arg33[%c0_145, %c64, %c0_146] : memref<2x208x256xbf16, #tpu.memory_space<vmem>>, vector<2x16x256xbf16>
    %158 = vector.shape_cast %157 : vector<2x16x256xbf16> to vector<32x256xbf16>
    %c768 = arith.constant 768 : index
    %c0_147 = arith.constant 0 : index
    %159 = vector.load %arg14[%c768, %c0_147] : memref<2816x256xbf16, #tpu.memory_space<vmem>>, vector<256x256xbf16>
    %cst_148 = arith.constant dense<0.000000e+00> : vector<32x256xf32>
    %160 = tpu.matmul %158, %159, %cst_148 {dimension_numbers = #tpu.dot_dimension_numbers<[1], [0], [0], [1], [0, 0, 1, 1], [], []>} : vector<32x256xbf16>, vector<256x256xbf16>, vector<32x256xf32> -> vector<32x256xf32>
    %161 = arith.addf %156, %160 : vector<32x256xf32>
    %c0_149 = arith.constant 0 : index
    %c80 = arith.constant 80 : index
    %c0_150 = arith.constant 0 : index
    %162 = vector.load %arg33[%c0_149, %c80, %c0_150] : memref<2x208x256xbf16, #tpu.memory_space<vmem>>, vector<2x16x256xbf16>
    %163 = vector.shape_cast %162 : vector<2x16x256xbf16> to vector<32x256xbf16>
    %c1024 = arith.constant 1024 : index
    %c0_151 = arith.constant 0 : index
    %164 = vector.load %arg14[%c1024, %c0_151] : memref<2816x256xbf16, #tpu.memory_space<vmem>>, vector<256x256xbf16>
    %cst_152 = arith.constant dense<0.000000e+00> : vector<32x256xf32>
    %165 = tpu.matmul %163, %164, %cst_152 {dimension_numbers = #tpu.dot_dimension_numbers<[1], [0], [0], [1], [0, 0, 1, 1], [], []>} : vector<32x256xbf16>, vector<256x256xbf16>, vector<32x256xf32> -> vector<32x256xf32>
    %166 = arith.addf %161, %165 : vector<32x256xf32>
    %c0_153 = arith.constant 0 : index
    %c96 = arith.constant 96 : index
    %c0_154 = arith.constant 0 : index
    %167 = vector.load %arg33[%c0_153, %c96, %c0_154] : memref<2x208x256xbf16, #tpu.memory_space<vmem>>, vector<2x16x256xbf16>
    %168 = vector.shape_cast %167 : vector<2x16x256xbf16> to vector<32x256xbf16>
    %c1280 = arith.constant 1280 : index
    %c0_155 = arith.constant 0 : index
    %169 = vector.load %arg14[%c1280, %c0_155] : memref<2816x256xbf16, #tpu.memory_space<vmem>>, vector<256x256xbf16>
    %cst_156 = arith.constant dense<0.000000e+00> : vector<32x256xf32>
    %170 = tpu.matmul %168, %169, %cst_156 {dimension_numbers = #tpu.dot_dimension_numbers<[1], [0], [0], [1], [0, 0, 1, 1], [], []>} : vector<32x256xbf16>, vector<256x256xbf16>, vector<32x256xf32> -> vector<32x256xf32>
    %171 = arith.addf %166, %170 : vector<32x256xf32>
    %c0_157 = arith.constant 0 : index
    %c112 = arith.constant 112 : index
    %c0_158 = arith.constant 0 : index
    %172 = vector.load %arg33[%c0_157, %c112, %c0_158] : memref<2x208x256xbf16, #tpu.memory_space<vmem>>, vector<2x16x256xbf16>
    %173 = vector.shape_cast %172 : vector<2x16x256xbf16> to vector<32x256xbf16>
    %c1536 = arith.constant 1536 : index
    %c0_159 = arith.constant 0 : index
    %174 = vector.load %arg14[%c1536, %c0_159] : memref<2816x256xbf16, #tpu.memory_space<vmem>>, vector<256x256xbf16>
    %cst_160 = arith.constant dense<0.000000e+00> : vector<32x256xf32>
    %175 = tpu.matmul %173, %174, %cst_160 {dimension_numbers = #tpu.dot_dimension_numbers<[1], [0], [0], [1], [0, 0, 1, 1], [], []>} : vector<32x256xbf16>, vector<256x256xbf16>, vector<32x256xf32> -> vector<32x256xf32>
    %176 = arith.addf %171, %175 : vector<32x256xf32>
    %c0_161 = arith.constant 0 : index
    %c128 = arith.constant 128 : index
    %c0_162 = arith.constant 0 : index
    %177 = vector.load %arg33[%c0_161, %c128, %c0_162] : memref<2x208x256xbf16, #tpu.memory_space<vmem>>, vector<2x16x256xbf16>
    %178 = vector.shape_cast %177 : vector<2x16x256xbf16> to vector<32x256xbf16>
    %c1792 = arith.constant 1792 : index
    %c0_163 = arith.constant 0 : index
    %179 = vector.load %arg14[%c1792, %c0_163] : memref<2816x256xbf16, #tpu.memory_space<vmem>>, vector<256x256xbf16>
    %cst_164 = arith.constant dense<0.000000e+00> : vector<32x256xf32>
    %180 = tpu.matmul %178, %179, %cst_164 {dimension_numbers = #tpu.dot_dimension_numbers<[1], [0], [0], [1], [0, 0, 1, 1], [], []>} : vector<32x256xbf16>, vector<256x256xbf16>, vector<32x256xf32> -> vector<32x256xf32>
    %181 = arith.addf %176, %180 : vector<32x256xf32>
    %c0_165 = arith.constant 0 : index
    %c144 = arith.constant 144 : index
    %c0_166 = arith.constant 0 : index
    %182 = vector.load %arg33[%c0_165, %c144, %c0_166] : memref<2x208x256xbf16, #tpu.memory_space<vmem>>, vector<2x16x256xbf16>
    %183 = vector.shape_cast %182 : vector<2x16x256xbf16> to vector<32x256xbf16>
    %c2048 = arith.constant 2048 : index
    %c0_167 = arith.constant 0 : index
    %184 = vector.load %arg14[%c2048, %c0_167] : memref<2816x256xbf16, #tpu.memory_space<vmem>>, vector<256x256xbf16>
    %cst_168 = arith.constant dense<0.000000e+00> : vector<32x256xf32>
    %185 = tpu.matmul %183, %184, %cst_168 {dimension_numbers = #tpu.dot_dimension_numbers<[1], [0], [0], [1], [0, 0, 1, 1], [], []>} : vector<32x256xbf16>, vector<256x256xbf16>, vector<32x256xf32> -> vector<32x256xf32>
    %186 = arith.addf %181, %185 : vector<32x256xf32>
    %c0_169 = arith.constant 0 : index
    %c160 = arith.constant 160 : index
    %c0_170 = arith.constant 0 : index
    %187 = vector.load %arg33[%c0_169, %c160, %c0_170] : memref<2x208x256xbf16, #tpu.memory_space<vmem>>, vector<2x16x256xbf16>
    %188 = vector.shape_cast %187 : vector<2x16x256xbf16> to vector<32x256xbf16>
    %c2304 = arith.constant 2304 : index
    %c0_171 = arith.constant 0 : index
    %189 = vector.load %arg14[%c2304, %c0_171] : memref<2816x256xbf16, #tpu.memory_space<vmem>>, vector<256x256xbf16>
    %cst_172 = arith.constant dense<0.000000e+00> : vector<32x256xf32>
    %190 = tpu.matmul %188, %189, %cst_172 {dimension_numbers = #tpu.dot_dimension_numbers<[1], [0], [0], [1], [0, 0, 1, 1], [], []>} : vector<32x256xbf16>, vector<256x256xbf16>, vector<32x256xf32> -> vector<32x256xf32>
    %191 = arith.addf %186, %190 : vector<32x256xf32>
    %c0_173 = arith.constant 0 : index
    %c176 = arith.constant 176 : index
    %c0_174 = arith.constant 0 : index
    %192 = vector.load %arg33[%c0_173, %c176, %c0_174] : memref<2x208x256xbf16, #tpu.memory_space<vmem>>, vector<2x16x256xbf16>
    %193 = vector.shape_cast %192 : vector<2x16x256xbf16> to vector<32x256xbf16>
    %c2560 = arith.constant 2560 : index
    %c0_175 = arith.constant 0 : index
    %194 = vector.load %arg14[%c2560, %c0_175] : memref<2816x256xbf16, #tpu.memory_space<vmem>>, vector<256x256xbf16>
    %cst_176 = arith.constant dense<0.000000e+00> : vector<32x256xf32>
    %195 = tpu.matmul %193, %194, %cst_176 {dimension_numbers = #tpu.dot_dimension_numbers<[1], [0], [0], [1], [0, 0, 1, 1], [], []>} : vector<32x256xbf16>, vector<256x256xbf16>, vector<32x256xf32> -> vector<32x256xf32>
    %196 = arith.addf %191, %195 : vector<32x256xf32>
    %197 = arith.truncf %196 : vector<32x256xf32> to vector<32x256xbf16>
    %c0_177 = arith.constant 0 : index
    %c0_178 = arith.constant 0 : index
    %198 = vector.load %arg16[%c0_177, %c0_178] : memref<256x512xbf16, #tpu.memory_space<vmem>>, vector<256x512xbf16>
    %cst_179 = arith.constant dense<0.000000e+00> : vector<32x512xf32>
    %199 = tpu.matmul %197, %198, %cst_179 {dimension_numbers = #tpu.dot_dimension_numbers<[1], [0], [0], [1], [0, 0, 1, 1], [], []>} : vector<32x256xbf16>, vector<256x512xbf16>, vector<32x512xf32> -> vector<32x512xf32>
    %c0_180 = arith.constant 0 : index
    %c0_181 = arith.constant 0 : index
    %200 = vector.load %arg17[%c0_180, %c0_181] : memref<1x512xf32, #tpu.memory_space<vmem>>, vector<1x512xf32>
    %201 = vector.broadcast %200 : vector<1x512xf32> to vector<32x512xf32>
    %202 = arith.addf %199, %201 : vector<32x512xf32>
    %cst_182 = arith.constant dense<0.000000e+00> : vector<32xf32>
    %203 = vector.multi_reduction <add>, %202, %cst_182 [1] : vector<32x512xf32> to vector<32xf32>
    %204 = vector.shape_cast %203 : vector<32xf32> to vector<32x1xf32>
    %cst_183 = arith.constant 5.120000e+02 : f32
    %205 = vector.broadcast %cst_183 : f32 to vector<32x1xf32>
    %206 = arith.divf %204, %205 : vector<32x1xf32>
    %207 = vector.broadcast %206 : vector<32x1xf32> to vector<32x512xf32>
    %208 = arith.subf %202, %207 : vector<32x512xf32>
    %209 = arith.mulf %208, %208 : vector<32x512xf32>
    %cst_184 = arith.constant dense<0.000000e+00> : vector<32xf32>
    %210 = vector.multi_reduction <add>, %209, %cst_184 [1] : vector<32x512xf32> to vector<32xf32>
    %211 = vector.shape_cast %210 : vector<32xf32> to vector<32x1xf32>
    %cst_185 = arith.constant 5.120000e+02 : f32
    %212 = vector.broadcast %cst_185 : f32 to vector<32x1xf32>
    %213 = arith.divf %211, %212 : vector<32x1xf32>
    %214 = vector.broadcast %206 : vector<32x1xf32> to vector<32x512xf32>
    %215 = arith.subf %202, %214 : vector<32x512xf32>
    %cst_186 = arith.constant 9.99999974E-6 : f32
    %216 = vector.broadcast %cst_186 : f32 to vector<32x1xf32>
    %217 = arith.addf %213, %216 : vector<32x1xf32>
    %218 = math.rsqrt %217 : vector<32x1xf32>
    %219 = vector.broadcast %218 : vector<32x1xf32> to vector<32x512xf32>
    %220 = arith.mulf %215, %219 : vector<32x512xf32>
    %c0_187 = arith.constant 0 : index
    %c0_188 = arith.constant 0 : index
    %221 = vector.load %arg18[%c0_187, %c0_188] : memref<1x512xf32, #tpu.memory_space<vmem>>, vector<1x512xf32>
    %222 = vector.broadcast %221 : vector<1x512xf32> to vector<32x512xf32>
    %223 = arith.mulf %220, %222 : vector<32x512xf32>
    %c0_189 = arith.constant 0 : index
    %c0_190 = arith.constant 0 : index
    %224 = vector.load %arg19[%c0_189, %c0_190] : memref<1x512xf32, #tpu.memory_space<vmem>>, vector<1x512xf32>
    %225 = vector.broadcast %224 : vector<1x512xf32> to vector<32x512xf32>
    %226 = arith.addf %223, %225 : vector<32x512xf32>
    %cst_191 = arith.constant 0.000000e+00 : f32
    %227 = vector.broadcast %cst_191 : f32 to vector<32x512xf32>
    %228 = arith.maximumf %226, %227 : vector<32x512xf32>
    %229 = arith.truncf %228 : vector<32x512xf32> to vector<32x512xbf16>
    %c0_192 = arith.constant 0 : index
    %c0_193 = arith.constant 0 : index
    %230 = vector.load %arg20[%c0_192, %c0_193] : memref<512x512xbf16, #tpu.memory_space<vmem>>, vector<512x512xbf16>
    %cst_194 = arith.constant dense<0.000000e+00> : vector<32x512xf32>
    %231 = tpu.matmul %229, %230, %cst_194 {dimension_numbers = #tpu.dot_dimension_numbers<[1], [0], [0], [1], [0, 0, 1, 1], [], []>} : vector<32x512xbf16>, vector<512x512xbf16>, vector<32x512xf32> -> vector<32x512xf32>
    %c0_195 = arith.constant 0 : index
    %c0_196 = arith.constant 0 : index
    %232 = vector.load %arg21[%c0_195, %c0_196] : memref<1x512xf32, #tpu.memory_space<vmem>>, vector<1x512xf32>
    %233 = vector.broadcast %232 : vector<1x512xf32> to vector<32x512xf32>
    %234 = arith.addf %231, %233 : vector<32x512xf32>
    %cst_197 = arith.constant dense<0.000000e+00> : vector<32xf32>
    %235 = vector.multi_reduction <add>, %234, %cst_197 [1] : vector<32x512xf32> to vector<32xf32>
    %236 = vector.shape_cast %235 : vector<32xf32> to vector<32x1xf32>
    %cst_198 = arith.constant 5.120000e+02 : f32
    %237 = vector.broadcast %cst_198 : f32 to vector<32x1xf32>
    %238 = arith.divf %236, %237 : vector<32x1xf32>
    %239 = vector.broadcast %238 : vector<32x1xf32> to vector<32x512xf32>
    %240 = arith.subf %234, %239 : vector<32x512xf32>
    %241 = arith.mulf %240, %240 : vector<32x512xf32>
    %cst_199 = arith.constant dense<0.000000e+00> : vector<32xf32>
    %242 = vector.multi_reduction <add>, %241, %cst_199 [1] : vector<32x512xf32> to vector<32xf32>
    %243 = vector.shape_cast %242 : vector<32xf32> to vector<32x1xf32>
    %cst_200 = arith.constant 5.120000e+02 : f32
    %244 = vector.broadcast %cst_200 : f32 to vector<32x1xf32>
    %245 = arith.divf %243, %244 : vector<32x1xf32>
    %246 = vector.broadcast %238 : vector<32x1xf32> to vector<32x512xf32>
    %247 = arith.subf %234, %246 : vector<32x512xf32>
    %cst_201 = arith.constant 9.99999974E-6 : f32
    %248 = vector.broadcast %cst_201 : f32 to vector<32x1xf32>
    %249 = arith.addf %245, %248 : vector<32x1xf32>
    %250 = math.rsqrt %249 : vector<32x1xf32>
    %251 = vector.broadcast %250 : vector<32x1xf32> to vector<32x512xf32>
    %252 = arith.mulf %247, %251 : vector<32x512xf32>
    %c0_202 = arith.constant 0 : index
    %c0_203 = arith.constant 0 : index
    %253 = vector.load %arg22[%c0_202, %c0_203] : memref<1x512xf32, #tpu.memory_space<vmem>>, vector<1x512xf32>
    %254 = vector.broadcast %253 : vector<1x512xf32> to vector<32x512xf32>
    %255 = arith.mulf %252, %254 : vector<32x512xf32>
    %c0_204 = arith.constant 0 : index
    %c0_205 = arith.constant 0 : index
    %256 = vector.load %arg23[%c0_204, %c0_205] : memref<1x512xf32, #tpu.memory_space<vmem>>, vector<1x512xf32>
    %257 = vector.broadcast %256 : vector<1x512xf32> to vector<32x512xf32>
    %258 = arith.addf %255, %257 : vector<32x512xf32>
    %cst_206 = arith.constant 0.000000e+00 : f32
    %259 = vector.broadcast %cst_206 : f32 to vector<32x512xf32>
    %260 = arith.maximumf %258, %259 : vector<32x512xf32>
    %261 = arith.truncf %260 : vector<32x512xf32> to vector<32x512xbf16>
    %c0_207 = arith.constant 0 : index
    %c0_208 = arith.constant 0 : index
    %262 = vector.load %arg24[%c0_207, %c0_208] : memref<512x512xbf16, #tpu.memory_space<vmem>>, vector<512x512xbf16>
    %cst_209 = arith.constant dense<0.000000e+00> : vector<32x512xf32>
    %263 = tpu.matmul %261, %262, %cst_209 {dimension_numbers = #tpu.dot_dimension_numbers<[1], [0], [0], [1], [0, 0, 1, 1], [], []>} : vector<32x512xbf16>, vector<512x512xbf16>, vector<32x512xf32> -> vector<32x512xf32>
    %c0_210 = arith.constant 0 : index
    %c0_211 = arith.constant 0 : index
    %264 = vector.load %arg25[%c0_210, %c0_211] : memref<1x512xf32, #tpu.memory_space<vmem>>, vector<1x512xf32>
    %265 = vector.broadcast %264 : vector<1x512xf32> to vector<32x512xf32>
    %266 = arith.addf %263, %265 : vector<32x512xf32>
    %cst_212 = arith.constant dense<0.000000e+00> : vector<32xf32>
    %267 = vector.multi_reduction <add>, %266, %cst_212 [1] : vector<32x512xf32> to vector<32xf32>
    %268 = vector.shape_cast %267 : vector<32xf32> to vector<32x1xf32>
    %cst_213 = arith.constant 5.120000e+02 : f32
    %269 = vector.broadcast %cst_213 : f32 to vector<32x1xf32>
    %270 = arith.divf %268, %269 : vector<32x1xf32>
    %271 = vector.broadcast %270 : vector<32x1xf32> to vector<32x512xf32>
    %272 = arith.subf %266, %271 : vector<32x512xf32>
    %273 = arith.mulf %272, %272 : vector<32x512xf32>
    %cst_214 = arith.constant dense<0.000000e+00> : vector<32xf32>
    %274 = vector.multi_reduction <add>, %273, %cst_214 [1] : vector<32x512xf32> to vector<32xf32>
    %275 = vector.shape_cast %274 : vector<32xf32> to vector<32x1xf32>
    %cst_215 = arith.constant 5.120000e+02 : f32
    %276 = vector.broadcast %cst_215 : f32 to vector<32x1xf32>
    %277 = arith.divf %275, %276 : vector<32x1xf32>
    %278 = vector.broadcast %270 : vector<32x1xf32> to vector<32x512xf32>
    %279 = arith.subf %266, %278 : vector<32x512xf32>
    %cst_216 = arith.constant 9.99999974E-6 : f32
    %280 = vector.broadcast %cst_216 : f32 to vector<32x1xf32>
    %281 = arith.addf %277, %280 : vector<32x1xf32>
    %282 = math.rsqrt %281 : vector<32x1xf32>
    %283 = vector.broadcast %282 : vector<32x1xf32> to vector<32x512xf32>
    %284 = arith.mulf %279, %283 : vector<32x512xf32>
    %c0_217 = arith.constant 0 : index
    %c0_218 = arith.constant 0 : index
    %285 = vector.load %arg26[%c0_217, %c0_218] : memref<1x512xf32, #tpu.memory_space<vmem>>, vector<1x512xf32>
    %286 = vector.broadcast %285 : vector<1x512xf32> to vector<32x512xf32>
    %287 = arith.mulf %284, %286 : vector<32x512xf32>
    %c0_219 = arith.constant 0 : index
    %c0_220 = arith.constant 0 : index
    %288 = vector.load %arg27[%c0_219, %c0_220] : memref<1x512xf32, #tpu.memory_space<vmem>>, vector<1x512xf32>
    %289 = vector.broadcast %288 : vector<1x512xf32> to vector<32x512xf32>
    %290 = arith.addf %287, %289 : vector<32x512xf32>
    %cst_221 = arith.constant 0.000000e+00 : f32
    %291 = vector.broadcast %cst_221 : f32 to vector<32x512xf32>
    %292 = arith.maximumf %290, %291 : vector<32x512xf32>
    %293 = arith.truncf %292 : vector<32x512xf32> to vector<32x512xbf16>
    %c0_222 = arith.constant 0 : index
    %c0_223 = arith.constant 0 : index
    %294 = vector.load %arg28[%c0_222, %c0_223] : memref<512x256xbf16, #tpu.memory_space<vmem>>, vector<512x256xbf16>
    %cst_224 = arith.constant dense<0.000000e+00> : vector<32x256xf32>
    %295 = tpu.matmul %293, %294, %cst_224 {dimension_numbers = #tpu.dot_dimension_numbers<[1], [0], [0], [1], [0, 0, 1, 1], [], []>} : vector<32x512xbf16>, vector<512x256xbf16>, vector<32x256xf32> -> vector<32x256xf32>
    %c0_225 = arith.constant 0 : index
    %c0_226 = arith.constant 0 : index
    %296 = vector.load %arg29[%c0_225, %c0_226] : memref<1x256xf32, #tpu.memory_space<vmem>>, vector<1x256xf32>
    %297 = vector.broadcast %296 : vector<1x256xf32> to vector<32x256xf32>
    %298 = arith.addf %295, %297 : vector<32x256xf32>
    %cst_227 = arith.constant 0.000000e+00 : f32
    %299 = vector.broadcast %cst_227 : f32 to vector<32x256xf32>
    %300 = arith.maximumf %298, %299 : vector<32x256xf32>
    %301 = arith.truncf %300 : vector<32x256xf32> to vector<32x256xbf16>
    %c0_228 = arith.constant 0 : index
    %c0_229 = arith.constant 0 : index
    %302 = vector.load %arg30[%c0_228, %c0_229] : memref<256x7xbf16, #tpu.memory_space<vmem>>, vector<256x7xbf16>
    %cst_230 = arith.constant dense<0.000000e+00> : vector<32x7xf32>
    %303 = tpu.matmul %301, %302, %cst_230 {dimension_numbers = #tpu.dot_dimension_numbers<[1], [0], [0], [1], [0, 0, 1, 1], [], []>} : vector<32x256xbf16>, vector<256x7xbf16>, vector<32x7xf32> -> vector<32x7xf32>
    %c0_231 = arith.constant 0 : index
    %c0_232 = arith.constant 0 : index
    %304 = vector.load %arg31[%c0_231, %c0_232] : memref<1x7xf32, #tpu.memory_space<vmem>>, vector<1x7xf32>
    %305 = vector.broadcast %304 : vector<1x7xf32> to vector<32x7xf32>
    %306 = arith.addf %303, %305 : vector<32x7xf32>
    %307 = tpu.iota {dimensions = array<i32: 1>} : vector<32x7xi32>
    %c3_i32 = arith.constant 3 : i32
    %308 = vector.broadcast %c3_i32 : i32 to vector<32x7xi32>
    %309 = arith.cmpi sge, %307, %308 : vector<32x7xi32>
    %310 = arith.mulf %306, %306 : vector<32x7xf32>
    %cst_233 = arith.constant 0.000000e+00 : f32
    %311 = vector.broadcast %cst_233 : f32 to vector<32x7xf32>
    %312 = arith.select %309, %310, %311 : vector<32x7xi1>, vector<32x7xf32>
    %cst_234 = arith.constant dense<0.000000e+00> : vector<32xf32>
    %313 = vector.multi_reduction <add>, %312, %cst_234 [1] : vector<32x7xf32> to vector<32xf32>
    %314 = vector.shape_cast %313 : vector<32xf32> to vector<32x1xf32>
    %315 = math.sqrt %314 : vector<32x1xf32>
    %cst_235 = arith.constant 9.99999996E-13 : f32
    %316 = vector.broadcast %cst_235 : f32 to vector<32x1xf32>
    %317 = arith.maximumf %315, %316 : vector<32x1xf32>
    %cst_236 = arith.constant 1.000000e+00 : f32
    %318 = vector.broadcast %cst_236 : f32 to vector<32x1xf32>
    %319 = arith.divf %318, %317 : vector<32x1xf32>
    %320 = vector.broadcast %319 : vector<32x1xf32> to vector<32x7xf32>
    %321 = arith.mulf %306, %320 : vector<32x7xf32>
    %322 = arith.select %309, %321, %306 : vector<32x7xi1>, vector<32x7xf32>
    %323 = vector.shape_cast %322 : vector<32x7xf32> to vector<2x16x7xf32>
    %324 = vector.extract_strided_slice %323 {offsets = [0, 0, 0], sizes = [2, 10, 7], strides = [1, 1, 1]} : vector<2x16x7xf32> to vector<2x10x7xf32>
    %c0_237 = arith.constant 0 : index
    %c0_238 = arith.constant 0 : index
    %c0_239 = arith.constant 0 : index
    %325 = vector.load %arg32[%c0_237, %c0_238, %c0_239] : memref<2x10x7xf32, #tpu.memory_space<vmem>>, vector<2x10x7xf32>
    tpu.vector_store %arg32[%c0_237, %c0_238, %c0_239], %324 {strides = array<i32>} : memref<2x10x7xf32, #tpu.memory_space<vmem>>, vector<2x10x7xf32>,
    return
  }
  func.func @transform_0(%arg0: i32) -> (i32, i32, i32) {
    %c0_i32 = arith.constant 0 : i32
    %c0_i32_0 = arith.constant 0 : i32
    %c0_i32_1 = arith.constant 0 : i32
    return %arg0, %c0_i32, %c0_i32_0 : i32, i32, i32
  }
  func.func @transform_1(%arg0: i32) -> (i32, i32) {
    %c0_i32 = arith.constant 0 : i32
    %c0_i32_0 = arith.constant 0 : i32
    %c0_i32_1 = arith.constant 0 : i32
    return %c0_i32, %c0_i32_0 : i32, i32
  }
  func.func @transform_2(%arg0: i32) -> (i32, i32) {
    %c0_i32 = arith.constant 0 : i32
    %c0_i32_0 = arith.constant 0 : i32
    %c0_i32_1 = arith.constant 0 : i32
    return %c0_i32, %c0_i32_0 : i32, i32
  }
  func.func @transform_3(%arg0: i32) -> (i32, i32) {
    %c0_i32 = arith.constant 0 : i32
    %c0_i32_0 = arith.constant 0 : i32
    %c0_i32_1 = arith.constant 0 : i32
    return %c0_i32, %c0_i32_0 : i32, i32
  }
  func.func @transform_4(%arg0: i32) -> (i32, i32) {
    %c0_i32 = arith.constant 0 : i32
    %c0_i32_0 = arith.constant 0 : i32
    %c0_i32_1 = arith.constant 0 : i32
    return %c0_i32, %c0_i32_0 : i32, i32
  }
  func.func @transform_5(%arg0: i32) -> (i32, i32) {
    %c0_i32 = arith.constant 0 : i32
    %c0_i32_0 = arith.constant 0 : i32
    %c0_i32_1 = arith.constant 0 : i32
    return %c0_i32, %c0_i32_0 : i32, i32
  }
  func.func @transform_6(%arg0: i32) -> (i32, i32) {
    %c0_i32 = arith.constant 0 : i32
    %c0_i32_0 = arith.constant 0 : i32
    %c0_i32_1 = arith.constant 0 : i32
    return %c0_i32, %c0_i32_0 : i32, i32
  }
  func.func @transform_7(%arg0: i32) -> (i32, i32) {
    %c0_i32 = arith.constant 0 : i32
    %c0_i32_0 = arith.constant 0 : i32
    %c0_i32_1 = arith.constant 0 : i32
    return %c0_i32, %c0_i32_0 : i32, i32
  }
  func.func @transform_8(%arg0: i32) -> (i32, i32) {
    %c0_i32 = arith.constant 0 : i32
    %c0_i32_0 = arith.constant 0 : i32
    %c0_i32_1 = arith.constant 0 : i32
    return %c0_i32, %c0_i32_0 : i32, i32
  }
  func.func @transform_9(%arg0: i32) -> (i32, i32) {
    %c0_i32 = arith.constant 0 : i32
    %c0_i32_0 = arith.constant 0 : i32
    %c0_i32_1 = arith.constant 0 : i32
    return %c0_i32, %c0_i32_0 : i32, i32
  }
  func.func @transform_10(%arg0: i32) -> (i32, i32) {
    %c0_i32 = arith.constant 0 : i32
    %c0_i32_0 = arith.constant 0 : i32
    %c0_i32_1 = arith.constant 0 : i32
    return %c0_i32, %c0_i32_0 : i32, i32
  }
  func.func @transform_11(%arg0: i32) -> (i32, i32) {
    %c0_i32 = arith.constant 0 : i32
    %c0_i32_0 = arith.constant 0 : i32
    %c0_i32_1 = arith.constant 0 : i32
    return %c0_i32, %c0_i32_0 : i32, i32
  }
  func.func @transform_12(%arg0: i32) -> (i32, i32) {
    %c0_i32 = arith.constant 0 : i32
    %c0_i32_0 = arith.constant 0 : i32
    %c0_i32_1 = arith.constant 0 : i32
    return %c0_i32, %c0_i32_0 : i32, i32
  }
  func.func @transform_13(%arg0: i32) -> (i32, i32) {
    %c0_i32 = arith.constant 0 : i32
    %c0_i32_0 = arith.constant 0 : i32
    %c0_i32_1 = arith.constant 0 : i32
    return %c0_i32, %c0_i32_0 : i32, i32
  }
  func.func @transform_14(%arg0: i32) -> (i32, i32) {
    %c0_i32 = arith.constant 0 : i32
    %c0_i32_0 = arith.constant 0 : i32
    %c0_i32_1 = arith.constant 0 : i32
    return %c0_i32, %c0_i32_0 : i32, i32
  }
  func.func @transform_15(%arg0: i32) -> (i32, i32) {
    %c0_i32 = arith.constant 0 : i32
    %c0_i32_0 = arith.constant 0 : i32
    %c0_i32_1 = arith.constant 0 : i32
    return %c0_i32, %c0_i32_0 : i32, i32
  }
  func.func @transform_16(%arg0: i32) -> (i32, i32) {
    %c0_i32 = arith.constant 0 : i32
    %c0_i32_0 = arith.constant 0 : i32
    %c0_i32_1 = arith.constant 0 : i32
    return %c0_i32, %c0_i32_0 : i32, i32
  }
  func.func @transform_17(%arg0: i32) -> (i32, i32) {
    %c0_i32 = arith.constant 0 : i32
    %c0_i32_0 = arith.constant 0 : i32
    %c0_i32_1 = arith.constant 0 : i32
    return %c0_i32, %c0_i32_0 : i32, i32
  }
  func.func @transform_18(%arg0: i32) -> (i32, i32) {
    %c0_i32 = arith.constant 0 : i32
    %c0_i32_0 = arith.constant 0 : i32
    %c0_i32_1 = arith.constant 0 : i32
    return %c0_i32, %c0_i32_0 : i32, i32
  }
  func.func @transform_19(%arg0: i32) -> (i32, i32) {
    %c0_i32 = arith.constant 0 : i32
    %c0_i32_0 = arith.constant 0 : i32
    %c0_i32_1 = arith.constant 0 : i32
    return %c0_i32, %c0_i32_0 : i32, i32
  }
  func.func @transform_20(%arg0: i32) -> (i32, i32) {
    %c0_i32 = arith.constant 0 : i32
    %c0_i32_0 = arith.constant 0 : i32
    %c0_i32_1 = arith.constant 0 : i32
    return %c0_i32, %c0_i32_0 : i32, i32
  }
  func.func @transform_21(%arg0: i32) -> (i32, i32) {
    %c0_i32 = arith.constant 0 : i32
    %c0_i32_0 = arith.constant 0 : i32
    %c0_i32_1 = arith.constant 0 : i32
    return %c0_i32, %c0_i32_0 : i32, i32
  }
  func.func @transform_22(%arg0: i32) -> (i32, i32) {
    %c0_i32 = arith.constant 0 : i32
    %c0_i32_0 = arith.constant 0 : i32
    %c0_i32_1 = arith.constant 0 : i32
    return %c0_i32, %c0_i32_0 : i32, i32
  }
  func.func @transform_23(%arg0: i32) -> (i32, i32) {
    %c0_i32 = arith.constant 0 : i32
    %c0_i32_0 = arith.constant 0 : i32
    %c0_i32_1 = arith.constant 0 : i32
    return %c0_i32, %c0_i32_0 : i32, i32
  }
  func.func @transform_24(%arg0: i32) -> (i32, i32) {
    %c0_i32 = arith.constant 0 : i32
    %c0_i32_0 = arith.constant 0 : i32
    %c0_i32_1 = arith.constant 0 : i32
    return %c0_i32, %c0_i32_0 : i32, i32
  }
  func.func @transform_25(%arg0: i32) -> (i32, i32) {
    %c0_i32 = arith.constant 0 : i32
    %c0_i32_0 = arith.constant 0 : i32
    %c0_i32_1 = arith.constant 0 : i32
    return %c0_i32, %c0_i32_0 : i32, i32
  }
  func.func @transform_26(%arg0: i32) -> (i32, i32) {
    %c0_i32 = arith.constant 0 : i32
    %c0_i32_0 = arith.constant 0 : i32
    %c0_i32_1 = arith.constant 0 : i32
    return %c0_i32, %c0_i32_0 : i32, i32
  }
  func.func @transform_27(%arg0: i32) -> (i32, i32) {
    %c0_i32 = arith.constant 0 : i32
    %c0_i32_0 = arith.constant 0 : i32
    %c0_i32_1 = arith.constant 0 : i32
    return %c0_i32, %c0_i32_0 : i32, i32
  }
  func.func @transform_28(%arg0: i32) -> (i32, i32) {
    %c0_i32 = arith.constant 0 : i32
    %c0_i32_0 = arith.constant 0 : i32
    %c0_i32_1 = arith.constant 0 : i32
    return %c0_i32, %c0_i32_0 : i32, i32
  }
  func.func @transform_29(%arg0: i32) -> (i32, i32) {
    %c0_i32 = arith.constant 0 : i32
    %c0_i32_0 = arith.constant 0 : i32
    %c0_i32_1 = arith.constant 0 : i32
    return %c0_i32, %c0_i32_0 : i32, i32
  }
  func.func @transform_30(%arg0: i32) -> (i32, i32) {
    %c0_i32 = arith.constant 0 : i32
    %c0_i32_0 = arith.constant 0 : i32
    %c0_i32_1 = arith.constant 0 : i32
    return %c0_i32, %c0_i32_0 : i32, i32
  }
  func.func @transform_31(%arg0: i32) -> (i32, i32, i32) {
    %c0_i32 = arith.constant 0 : i32
    %c0_i32_0 = arith.constant 0 : i32
    %c0_i32_1 = arith.constant 0 : i32
    return %arg0, %c0_i32, %c0_i32_0 : i32, i32, i32
  }
}

</mosaic_0001>

<llo_original>
// kernel: imu_only_forward.1
$region0: #{imu_only_forward.1}
  #allocation0 [shape = 'u32[]', space=smem, size = 0x4, offset = 0x4, fixed_abs, tag = 'smem constant byte address 0x4 - core index']
  #allocation1 [shape = 'u32[144,128]{1,0:T(1,128)}', space=vmem, size = 0x12000, scoped, tag = 'internal scratch']
  #allocation2 [shape = 'bf16[2,208,256]{2,1,0:T(8,128)(2,1)}', space=vmem, size = 0x34000, scoped, tag = 'scratch operand']
  %s0 = inlined_call_operand.smem [shape: u32[32], index: -1, kind: input, shape index: {}]
  %s1 = sld [smem:[%s0]]
  %s2 = scalar_lea.smem %s0, 1
  %s3 = sld [smem:[%s2]]
  %s4 = scalar_lea.smem %s0, 2
  %s5 = sld [smem:[%s4]]
  %s6 = scalar_lea.smem %s0, 3
  %s7 = sld [smem:[%s6]]
  %s8 = scalar_lea.smem %s0, 4
  %s9 = sld [smem:[%s8]]
  %s10 = scalar_lea.smem %s0, 5
  %s11 = sld [smem:[%s10]]
  %s12 = scalar_lea.smem %s0, 6
  %s13 = sld [smem:[%s12]]
  %s14 = scalar_lea.smem %s0, 7
  %s15 = sld [smem:[%s14]]
  %s16 = scalar_lea.smem %s0, 8
  %s17 = sld [smem:[%s16]]
  %s18 = scalar_lea.smem %s0, 9
  %s19 = sld [smem:[%s18]]
  %s20 = scalar_lea.smem %s0, 10
  %s21 = sld [smem:[%s20]]
  %s22 = scalar_lea.smem %s0, 11
  %s23 = sld [smem:[%s22]]
  %s24 = scalar_lea.smem %s0, 12
  %s25 = sld [smem:[%s24]]
  %s26 = scalar_lea.smem %s0, 13
  %s27 = sld [smem:[%s26]]
  %s28 = scalar_lea.smem %s0, 14
  %s29 = sld [smem:[%s28]]
  %s30 = scalar_lea.smem %s0, 15
  %s31 = sld [smem:[%s30]]
  %s32 = scalar_lea.smem %s0, 16
  %s33 = sld [smem:[%s32]]
  %s34 = scalar_lea.smem %s0, 17
  %s35 = sld [smem:[%s34]]
  %s36 = scalar_lea.smem %s0, 18
  %s37 = sld [smem:[%s36]]
  %s38 = scalar_lea.smem %s0, 19
  %s39 = sld [smem:[%s38]]
  %s40 = scalar_lea.smem %s0, 20
  %s41 = sld [smem:[%s40]]
  %s42 = scalar_lea.smem %s0, 21
  %s43 = sld [smem:[%s42]]
  %s44 = scalar_lea.smem %s0, 22
  %s45 = sld [smem:[%s44]]
  %s46 = scalar_lea.smem %s0, 23
  %s47 = sld [smem:[%s46]]
  %s48 = scalar_lea.smem %s0, 24
  %s49 = sld [smem:[%s48]]
  %s50 = scalar_lea.smem %s0, 25
  %s51 = sld [smem:[%s50]]
  %s52 = scalar_lea.smem %s0, 26
  %s53 = sld [smem:[%s52]]
  %s54 = scalar_lea.smem %s0, 27
  %s55 = sld [smem:[%s54]]
  %s56 = scalar_lea.smem %s0, 28
  %s57 = sld [smem:[%s56]]
  %s58 = scalar_lea.smem %s0, 29
  %s59 = sld [smem:[%s58]]
  %s60 = scalar_lea.smem %s0, 30
  %s61 = sld [smem:[%s60]]
  %s62 = scalar_lea.smem %s0, 31
  %s63 = sld [smem:[%s62]]
  %s64 = sld [smem:[#allocation0]]
  $region134: #{imu_only_forward.1} parent=0
    _
  %s66 = ssub.s32 1, %s64
  %s67 = scalar_select 0, %s66, %s64
  // Predicated region
  $region2: #{imu_only_forward.1} parent=0 // pred_check
    _
  $region3: #{imu_only_forward.1} parent=0 // pred_check_branch
    %69 = sbr.rel (0) target = $region5
  $region4: #{imu_only_forward.1} parent=0 // pred_region
    _
  $region5: #{imu_only_forward.1} parent=0 // pred_fallthru
    _
  // Predicated region
  $region6: #{imu_only_forward.1} parent=0 // pred_check
    _
  $region7: #{imu_only_forward.1} parent=0 // pred_check_branch
    %71 = sbr.rel (0) target = $region9
  $region8: #{imu_only_forward.1} parent=0 // pred_region
    _
  $region9: #{imu_only_forward.1} parent=0 // pred_fallthru
    _
  // Predicated region
  $region10: #{imu_only_forward.1} parent=0 // pred_check
    _
  $region11: #{imu_only_forward.1} parent=0 // pred_check_branch
    %73 = sbr.rel (0) target = $region13
  $region12: #{imu_only_forward.1} parent=0 // pred_region
    _
  $region13: #{imu_only_forward.1} parent=0 // pred_fallthru
    _
  // Predicated region
  $region14: #{imu_only_forward.1} parent=0 // pred_check
    _
  $region15: #{imu_only_forward.1} parent=0 // pred_check_branch
    %75 = sbr.rel (0) target = $region17
  $region16: #{imu_only_forward.1} parent=0 // pred_region
    _
  $region17: #{imu_only_forward.1} parent=0 // pred_fallthru
    _
  // Predicated region
  $region18: #{imu_only_forward.1} parent=0 // pred_check
    _
  $region19: #{imu_only_forward.1} parent=0 // pred_check_branch
    %77 = sbr.rel (0) target = $region21
  $region20: #{imu_only_forward.1} parent=0 // pred_region
    _
  $region21: #{imu_only_forward.1} parent=0 // pred_fallthru
    _
  // Predicated region
  $region22: #{imu_only_forward.1} parent=0 // pred_check
    _
  $region23: #{imu_only_forward.1} parent=0 // pred_check_branch
    %79 = sbr.rel (0) target = $region25
  $region24: #{imu_only_forward.1} parent=0 // pred_region
    _
  $region25: #{imu_only_forward.1} parent=0 // pred_fallthru
    _
  // Predicated region
  $region26: #{imu_only_forward.1} parent=0 // pred_check
    _
  $region27: #{imu_only_forward.1} parent=0 // pred_check_branch
    %81 = sbr.rel (0) target = $region29
  $region28: #{imu_only_forward.1} parent=0 // pred_region
    _
  $region29: #{imu_only_forward.1} parent=0 // pred_fallthru
    _
  // Predicated region
  $region30: #{imu_only_forward.1} parent=0 // pred_check
    _
  $region31: #{imu_only_forward.1} parent=0 // pred_check_branch
    %83 = sbr.rel (0) target = $region33
  $region32: #{imu_only_forward.1} parent=0 // pred_region
    _
  $region33: #{imu_only_forward.1} parent=0 // pred_fallthru
    _
  // Predicated region
  $region34: #{imu_only_forward.1} parent=0 // pred_check
    _
  $region35: #{imu_only_forward.1} parent=0 // pred_check_branch
    %85 = sbr.rel (0) target = $region37
  $region36: #{imu_only_forward.1} parent=0 // pred_region
    _
  $region37: #{imu_only_forward.1} parent=0 // pred_fallthru
    _
  // Predicated region
  $region38: #{imu_only_forward.1} parent=0 // pred_check
    _
  $region39: #{imu_only_forward.1} parent=0 // pred_check_branch
    %87 = sbr.rel (0) target = $region41
  $region40: #{imu_only_forward.1} parent=0 // pred_region
    _
  $region41: #{imu_only_forward.1} parent=0 // pred_fallthru
    _
  // Predicated region
  $region42: #{imu_only_forward.1} parent=0 // pred_check
    _
  $region43: #{imu_only_forward.1} parent=0 // pred_check_branch
    %89 = sbr.rel (0) target = $region45
  $region44: #{imu_only_forward.1} parent=0 // pred_region
    _
  $region45: #{imu_only_forward.1} parent=0 // pred_fallthru
    _
  // Predicated region
  $region46: #{imu_only_forward.1} parent=0 // pred_check
    _
  $region47: #{imu_only_forward.1} parent=0 // pred_check_branch
    %91 = sbr.rel (0) target = $region49
  $region48: #{imu_only_forward.1} parent=0 // pred_region
    _
  $region49: #{imu_only_forward.1} parent=0 // pred_fallthru
    _
  // Predicated region
  $region50: #{imu_only_forward.1} parent=0 // pred_check
    _
  $region51: #{imu_only_forward.1} parent=0 // pred_check_branch
    %93 = sbr.rel (0) target = $region53
  $region52: #{imu_only_forward.1} parent=0 // pred_region
    _
  $region53: #{imu_only_forward.1} parent=0 // pred_fallthru
    _
  // Predicated region
  $region54: #{imu_only_forward.1} parent=0 // pred_check
    _
  $region55: #{imu_only_forward.1} parent=0 // pred_check_branch
    %95 = sbr.rel (0) target = $region57
  $region56: #{imu_only_forward.1} parent=0 // pred_region
    _
  $region57: #{imu_only_forward.1} parent=0 // pred_fallthru
    _
  // Predicated region
  $region58: #{imu_only_forward.1} parent=0 // pred_check
    _
  $region59: #{imu_only_forward.1} parent=0 // pred_check_branch
    %97 = sbr.rel (0) target = $region61
  $region60: #{imu_only_forward.1} parent=0 // pred_region
    _
  $region61: #{imu_only_forward.1} parent=0 // pred_fallthru
    _
  // Predicated region
  $region62: #{imu_only_forward.1} parent=0 // pred_check
    _
  $region63: #{imu_only_forward.1} parent=0 // pred_check_branch
    %99 = sbr.rel (0) target = $region65
  $region64: #{imu_only_forward.1} parent=0 // pred_region
    _
  $region65: #{imu_only_forward.1} parent=0 // pred_fallthru
    _
  // Predicated region
  $region66: #{imu_only_forward.1} parent=0 // pred_check
    _
  $region67: #{imu_only_forward.1} parent=0 // pred_check_branch
    %101 = sbr.rel (0) target = $region69
  $region68: #{imu_only_forward.1} parent=0 // pred_region
    _
  $region69: #{imu_only_forward.1} parent=0 // pred_fallthru
    _
  // Predicated region
  $region70: #{imu_only_forward.1} parent=0 // pred_check
    _
  $region71: #{imu_only_forward.1} parent=0 // pred_check_branch
    %103 = sbr.rel (0) target = $region73
  $region72: #{imu_only_forward.1} parent=0 // pred_region
    _
  $region73: #{imu_only_forward.1} parent=0 // pred_fallthru
    _
  // Predicated region
  $region74: #{imu_only_forward.1} parent=0 // pred_check
    _
  $region75: #{imu_only_forward.1} parent=0 // pred_check_branch
    %105 = sbr.rel (0) target = $region77
  $region76: #{imu_only_forward.1} parent=0 // pred_region
    _
  $region77: #{imu_only_forward.1} parent=0 // pred_fallthru
    _
  // Predicated region
  $region78: #{imu_only_forward.1} parent=0 // pred_check
    _
  $region79: #{imu_only_forward.1} parent=0 // pred_check_branch
    %107 = sbr.rel (0) target = $region81
  $region80: #{imu_only_forward.1} parent=0 // pred_region
    _
  $region81: #{imu_only_forward.1} parent=0 // pred_fallthru
    _
  // Predicated region
  $region82: #{imu_only_forward.1} parent=0 // pred_check
    _
  $region83: #{imu_only_forward.1} parent=0 // pred_check_branch
    %109 = sbr.rel (0) target = $region85
  $region84: #{imu_only_forward.1} parent=0 // pred_region
    _
  $region85: #{imu_only_forward.1} parent=0 // pred_fallthru
    _
  // Predicated region
  $region86: #{imu_only_forward.1} parent=0 // pred_check
    _
  $region87: #{imu_only_forward.1} parent=0 // pred_check_branch
    %111 = sbr.rel (0) target = $region89
  $region88: #{imu_only_forward.1} parent=0 // pred_region
    _
  $region89: #{imu_only_forward.1} parent=0 // pred_fallthru
    _
  // Predicated region
  $region90: #{imu_only_forward.1} parent=0 // pred_check
    _
  $region91: #{imu_only_forward.1} parent=0 // pred_check_branch
    %113 = sbr.rel (0) target = $region93
  $region92: #{imu_only_forward.1} parent=0 // pred_region
    _
  $region93: #{imu_only_forward.1} parent=0 // pred_fallthru
    _
  // Predicated region
  $region94: #{imu_only_forward.1} parent=0 // pred_check
    _
  $region95: #{imu_only_forward.1} parent=0 // pred_check_branch
    %115 = sbr.rel (0) target = $region97
  $region96: #{imu_only_forward.1} parent=0 // pred_region
    _
  $region97: #{imu_only_forward.1} parent=0 // pred_fallthru
    _
  // Predicated region
  $region98: #{imu_only_forward.1} parent=0 // pred_check
    _
  $region99: #{imu_only_forward.1} parent=0 // pred_check_branch
    %117 = sbr.rel (0) target = $region101
  $region100: #{imu_only_forward.1} parent=0 // pred_region
    _
  $region101: #{imu_only_forward.1} parent=0 // pred_fallthru
    _
  // Predicated region
  $region102: #{imu_only_forward.1} parent=0 // pred_check
    _
  $region103: #{imu_only_forward.1} parent=0 // pred_check_branch
    %119 = sbr.rel (0) target = $region105
  $region104: #{imu_only_forward.1} parent=0 // pred_region
    _
  $region105: #{imu_only_forward.1} parent=0 // pred_fallthru
    _
  // Predicated region
  $region106: #{imu_only_forward.1} parent=0 // pred_check
    _
  $region107: #{imu_only_forward.1} parent=0 // pred_check_branch
    %121 = sbr.rel (0) target = $region109
  $region108: #{imu_only_forward.1} parent=0 // pred_region
    _
  $region109: #{imu_only_forward.1} parent=0 // pred_fallthru
    _
  // Predicated region
  $region110: #{imu_only_forward.1} parent=0 // pred_check
    _
  $region111: #{imu_only_forward.1} parent=0 // pred_check_branch
    %123 = sbr.rel (0) target = $region113
  $region112: #{imu_only_forward.1} parent=0 // pred_region
    _
  $region113: #{imu_only_forward.1} parent=0 // pred_fallthru
    _
  // Predicated region
  $region114: #{imu_only_forward.1} parent=0 // pred_check
    _
  $region115: #{imu_only_forward.1} parent=0 // pred_check_branch
    %125 = sbr.rel (0) target = $region117
  $region116: #{imu_only_forward.1} parent=0 // pred_region
    _
  $region117: #{imu_only_forward.1} parent=0 // pred_fallthru
    _
  // Predicated region
  $region118: #{imu_only_forward.1} parent=0 // pred_check
    _
  $region119: #{imu_only_forward.1} parent=0 // pred_check_branch
    %127 = sbr.rel (0) target = $region121
  $region120: #{imu_only_forward.1} parent=0 // pred_region
    _
  $region121: #{imu_only_forward.1} parent=0 // pred_fallthru
    _
  // Predicated region
  $region122: #{imu_only_forward.1} parent=0 // pred_check
    _
  $region123: #{imu_only_forward.1} parent=0 // pred_check_branch
    %129 = sbr.rel (0) target = $region125
  $region124: #{imu_only_forward.1} parent=0 // pred_region
    _
  $region125: #{imu_only_forward.1} parent=0 // pred_fallthru
    _
  %131 = vst [vmem:[#allocation2] sm:$0xff] 0
  %132 = vst [vmem:[#allocation2 + $0x8] sm:$0xff] 0
  %133 = vst [vmem:[#allocation2 + $0xd0] sm:$0xff] 0
  %134 = vst [vmem:[#allocation2 + $0xd8] sm:$0xff] 0
  %135 = vst [vmem:[#allocation2 + $0xc0] sm:$0xff] 0
  %136 = vst [vmem:[#allocation2 + $0xc8] sm:$0xff] 0
  %137 = vst [vmem:[#allocation2 + $0x190] sm:$0xff] 0
  %138 = vst [vmem:[#allocation2 + $0x198] sm:$0xff] 0
  %v139 = vld [vmem:[%s1] sm:$0xff]
  %v140 = vld [vmem:[%s1 + $0x8] sm:$0xff]
  %v141 = vld [vmem:[%s1 + $0x10] sm:$0xff]
  %v142 = vld [vmem:[%s1 + $0x18] sm:$0xff]
  %v143 = vld [vmem:[%s1 + $0x20] sm:$0xff]
  %v144 = vld [vmem:[%s1 + $0x28] sm:$0xff]
  %v145 = vld [vmem:[%s1 + $0x30] sm:$0xff]
  %v146 = vld [vmem:[%s1 + $0x38] sm:$0xff]
  %v147 = vld [vmem:[%s1 + $0x40] sm:$0xff]
  %v148 = vld [vmem:[%s1 + $0x48] sm:$0xff]
  %v149 = vld [vmem:[%s1 + $0x50] sm:$0xff]
  %v150 = vld [vmem:[%s1 + $0x58] sm:$0xff]
  %v151 = vld [vmem:[%s1 + $0x60] sm:$0xff]
  %v152 = vld [vmem:[%s1 + $0x68] sm:$0xff]
  %v153 = vld [vmem:[%s1 + $0x70] sm:$0xff]
  %v154 = vld [vmem:[%s1 + $0x78] sm:$0xff]
  %v155 = vld [vmem:[%s1 + $0x80] sm:$0xff]
  %v156 = vld [vmem:[%s1 + $0x88] sm:$0xff]
  %v157 = vld [vmem:[%s1 + $0x90] sm:$0xff]
  %v158 = vld [vmem:[%s1 + $0x98] sm:$0xff]
  %v159 = vld [vmem:[%s1 + $0xa0] sm:$0xff]
  %v160 = vld [vmem:[%s1 + $0xa8] sm:$0xff]
  %v161 = vld [vmem:[%s1 + $0xb0] sm:$0xff]
  %v162 = vld [vmem:[%s1 + $0xb8] sm:$0xff]
  %v163 = vld [vmem:[%s1 + $0xc0] sm:$0xff]
  %v164 = vld [vmem:[%s1 + $0xc8] sm:$0xff]
  %v165 = vld [vmem:[%s1 + $0xd0] sm:$0xff]
  %v166 = vld [vmem:[%s1 + $0xd8] sm:$0xff]
  %v167 = vld [vmem:[%s1 + $0xe0] sm:$0xff]
  %v168 = vld [vmem:[%s1 + $0xe8] sm:$0xff]
  %v169 = vld [vmem:[%s1 + $0xf0] sm:$0xff]
  %v170 = vld [vmem:[%s1 + $0xf8] sm:$0xff]
  %v171 = vld [vmem:[%s1 + $0x100] sm:$0xff]
  %v172 = vld [vmem:[%s1 + $0x108] sm:$0xff]
  %v173 = vld [vmem:[%s1 + $0x110] sm:$0xff]
  %v174 = vld [vmem:[%s1 + $0x118] sm:$0xff]
  %v175 = vld [vmem:[%s1 + $0x120] sm:$0xff]
  %v176 = vld [vmem:[%s1 + $0x128] sm:$0xff]
  %v177 = vld [vmem:[%s1 + $0x130] sm:$0xff]
  %v178 = vld [vmem:[%s1 + $0x138] sm:$0xff]
  %v179 = vld [vmem:[%s1 + $0x140] sm:$0xff]
  %v180 = vld [vmem:[%s1 + $0x148] sm:$0xff]
  %v181 = vld [vmem:[%s1 + $0x150] sm:$0xff]
  %v182 = vld [vmem:[%s1 + $0x158] sm:$0xff]
  %v183 = vpack.c.bf16 %v140, %v139
  %v184 = vpack.c.bf16 %v142, %v141
  %v185 = vpack.c.bf16 %v144, %v143
  %v186 = vpack.c.bf16 %v146, %v145
  %v187 = vpack.c.bf16 %v148, %v147
  %v188 = vpack.c.bf16 %v150, %v149
  %v189 = vpack.c.bf16 %v152, %v151
  %v190 = vpack.c.bf16 %v154, %v153
  %v191 = vpack.c.bf16 %v156, %v155
  %v192 = vpack.c.bf16 %v158, %v157
  %v193 = vpack.c.bf16 %v160, %v159
  %v194 = vpack.c.bf16 %v162, %v161
  %v195 = vpack.c.bf16 %v164, %v163
  %v196 = vpack.c.bf16 %v166, %v165
  %v197 = vpack.c.bf16 %v168, %v167
  %v198 = vpack.c.bf16 %v170, %v169
  %v199 = vpack.c.bf16 %v172, %v171
  %v200 = vpack.c.bf16 %v174, %v173
  %v201 = vpack.c.bf16 %v176, %v175
  %v202 = vpack.c.bf16 %v178, %v177
  %v203 = vpack.c.bf16 %v180, %v179
  %v204 = vpack.c.bf16 %v182, %v181
  %v227 = vunpack.c.l.b16 %v183
  %v228 = vunpack.c.h.b16 %v183
  %v229 = vunpack.c.l.b16 %v184
  %v230 = vunpack.c.h.b16 %v184
  %v231 = vunpack.c.l.b16 %v185
  %v232 = vunpack.c.h.b16 %v185
  %v233 = vunpack.c.l.b16 %v186
  %v234 = vunpack.c.h.b16 %v186
  %v235 = vunpack.c.l.b16 %v187
  %v236 = vunpack.c.h.b16 %v187
  %v237 = vunpack.c.l.b16 %v188
  %v238 = vunpack.c.h.b16 %v188
  %v239 = vunpack.c.l.b16 %v189
  %v240 = vunpack.c.h.b16 %v189
  %v241 = vunpack.c.l.b16 %v190
  %v242 = vunpack.c.h.b16 %v190
  %v243 = vunpack.c.l.b16 %v191
  %v244 = vunpack.c.h.b16 %v191
  %v245 = vunpack.c.l.b16 %v192
  %v246 = vunpack.c.h.b16 %v192
  %v247 = vunpack.c.l.b16 %v193
  %v248 = vunpack.c.h.b16 %v193
  %v249 = vunpack.c.l.b16 %v194
  %v250 = vunpack.c.h.b16 %v194
  %v251 = vunpack.c.l.b16 %v195
  %v252 = vunpack.c.h.b16 %v195
  %v253 = vunpack.c.l.b16 %v196
  %v254 = vunpack.c.h.b16 %v196
  %v255 = vunpack.c.l.b16 %v197
  %v256 = vunpack.c.h.b16 %v197
  %v257 = vunpack.c.l.b16 %v198
  %v258 = vunpack.c.h.b16 %v198
  %v259 = vunpack.c.l.b16 %v199
  %v260 = vunpack.c.h.b16 %v199
  %v261 = vunpack.c.l.b16 %v200
  %v262 = vunpack.c.h.b16 %v200
  %v263 = vunpack.c.l.b16 %v201
  %v264 = vunpack.c.h.b16 %v201
  %v265 = vunpack.c.l.b16 %v202
  %v266 = vunpack.c.h.b16 %v202
  %v267 = vunpack.c.l.b16 %v203
  %v268 = vunpack.c.h.b16 %v203
  %v269 = vunpack.c.l.b16 %v204
  %v270 = vunpack.c.h.b16 %v204
  %v271 = vpack.c.b16 %v227, %v227
  %v272 = vpack.c.b16 %v228, %v228
  %v273 = vpack.c.b16 %v229, %v229
  %v274 = vpack.c.b16 %v230, %v230
  %v275 = vpack.c.b16 %v231, %v231
  %v276 = vpack.c.b16 %v232, %v232
  %v277 = vpack.c.b16 %v233, %v233
  %v278 = vpack.c.b16 %v234, %v234
  %v279 = vpack.c.b16 %v235, %v235
  %v280 = vpack.c.b16 %v236, %v236
  %v281 = vpack.c.b16 %v237, %v237
  %v282 = vpack.c.b16 %v238, %v238
  %v283 = vpack.c.b16 %v239, %v239
  %v284 = vpack.c.b16 %v240, %v240
  %v285 = vpack.c.b16 %v241, %v241
  %v286 = vpack.c.b16 %v242, %v242
  %v287 = vpack.c.b16 %v243, %v243
  %v288 = vpack.c.b16 %v244, %v244
  %v289 = vpack.c.b16 %v245, %v245
  %v290 = vpack.c.b16 %v246, %v246
  %v291 = vpack.c.b16 %v247, %v247
  %v292 = vpack.c.b16 %v248, %v248
  %v293 = vpack.c.b16 %v249, %v249
  %v294 = vpack.c.b16 %v250, %v250
  %v295 = vpack.c.b16 %v251, %v251
  %v296 = vpack.c.b16 %v252, %v252
  %v297 = vpack.c.b16 %v253, %v253
  %v298 = vpack.c.b16 %v254, %v254
  %v299 = vpack.c.b16 %v255, %v255
  %v300 = vpack.c.b16 %v256, %v256
  %v301 = vpack.c.b16 %v257, %v257
  %v302 = vpack.c.b16 %v258, %v258
  %v303 = vpack.c.b16 %v259, %v259
  %v304 = vpack.c.b16 %v260, %v260
  %v305 = vpack.c.b16 %v261, %v261
  %v306 = vpack.c.b16 %v262, %v262
  %v307 = vpack.c.b16 %v263, %v263
  %v308 = vpack.c.b16 %v264, %v264
  %v309 = vpack.c.b16 %v265, %v265
  %v310 = vpack.c.b16 %v266, %v266
  %v311 = vpack.c.b16 %v267, %v267
  %v312 = vpack.c.b16 %v268, %v268
  %v313 = vpack.c.b16 %v269, %v269
  %v314 = vpack.c.b16 %v270, %v270
  %vm359 = vcmask 60416
  %360 = vst.msk [vmem:[#allocation2 + $0x10] sm:$0xf] %vm359, %v271
  %361 = vst.msk [vmem:[#allocation2 + $0x18] sm:$0xf] %vm359, %v272
  %362 = vst.msk [vmem:[#allocation2 + $0x20] sm:$0xf] %vm359, %v273
  %363 = vst.msk [vmem:[#allocation2 + $0x28] sm:$0xf] %vm359, %v274
  %364 = vst.msk [vmem:[#allocation2 + $0x30] sm:$0xf] %vm359, %v275
  %365 = vst.msk [vmem:[#allocation2 + $0x38] sm:$0xf] %vm359, %v276
  %366 = vst.msk [vmem:[#allocation2 + $0x40] sm:$0xf] %vm359, %v277
  %367 = vst.msk [vmem:[#allocation2 + $0x48] sm:$0xf] %vm359, %v278
  %368 = vst.msk [vmem:[#allocation2 + $0x50] sm:$0xf] %vm359, %v279
  %369 = vst.msk [vmem:[#allocation2 + $0x58] sm:$0xf] %vm359, %v280
  %370 = vst.msk [vmem:[#allocation2 + $0x60] sm:$0xf] %vm359, %v281
  %371 = vst.msk [vmem:[#allocation2 + $0x68] sm:$0xf] %vm359, %v282
  %372 = vst.msk [vmem:[#allocation2 + $0x70] sm:$0xf] %vm359, %v283
  %373 = vst.msk [vmem:[#allocation2 + $0x78] sm:$0xf] %vm359, %v284
  %374 = vst.msk [vmem:[#allocation2 + $0x80] sm:$0xf] %vm359, %v285
  %375 = vst.msk [vmem:[#allocation2 + $0x88] sm:$0xf] %vm359, %v286
  %376 = vst.msk [vmem:[#allocation2 + $0x90] sm:$0xf] %vm359, %v287
  %377 = vst.msk [vmem:[#allocation2 + $0x98] sm:$0xf] %vm359, %v288
  %378 = vst.msk [vmem:[#allocation2 + $0xa0] sm:$0xf] %vm359, %v289
  %379 = vst.msk [vmem:[#allocation2 + $0xa8] sm:$0xf] %vm359, %v290
  %380 = vst.msk [vmem:[#allocation2 + $0xb0] sm:$0xf] %vm359, %v291
  %381 = vst.msk [vmem:[#allocation2 + $0xb8] sm:$0xf] %vm359, %v292
  %382 = vst.msk [vmem:[#allocation2 + $0xe0] sm:$0xf] %vm359, %v293
  %383 = vst.msk [vmem:[#allocation2 + $0xe8] sm:$0xf] %vm359, %v294
  %384 = vst.msk [vmem:[#allocation2 + $0xf0] sm:$0xf] %vm359, %v295
  %385 = vst.msk [vmem:[#allocation2 + $0xf8] sm:$0xf] %vm359, %v296
  %386 = vst.msk [vmem:[#allocation2 + $0x100] sm:$0xf] %vm359, %v297
  %387 = vst.msk [vmem:[#allocation2 + $0x108] sm:$0xf] %vm359, %v298
  %388 = vst.msk [vmem:[#allocation2 + $0x110] sm:$0xf] %vm359, %v299
  %389 = vst.msk [vmem:[#allocation2 + $0x118] sm:$0xf] %vm359, %v300
  %390 = vst.msk [vmem:[#allocation2 + $0x120] sm:$0xf] %vm359, %v301
  %391 = vst.msk [vmem:[#allocation2 + $0x128] sm:$0xf] %vm359, %v302
  %392 = vst.msk [vmem:[#allocation2 + $0x130] sm:$0xf] %vm359, %v303
  %393 = vst.msk [vmem:[#allocation2 + $0x138] sm:$0xf] %vm359, %v304
  %394 = vst.msk [vmem:[#allocation2 + $0x140] sm:$0xf] %vm359, %v305
  %395 = vst.msk [vmem:[#allocation2 + $0x148] sm:$0xf] %vm359, %v306
  %396 = vst.msk [vmem:[#allocation2 + $0x150] sm:$0xf] %vm359, %v307
  %397 = vst.msk [vmem:[#allocation2 + $0x158] sm:$0xf] %vm359, %v308
  %398 = vst.msk [vmem:[#allocation2 + $0x160] sm:$0xf] %vm359, %v309
  %399 = vst.msk [vmem:[#allocation2 + $0x168] sm:$0xf] %vm359, %v310
  %400 = vst.msk [vmem:[#allocation2 + $0x170] sm:$0xf] %vm359, %v311
  %401 = vst.msk [vmem:[#allocation2 + $0x178] sm:$0xf] %vm359, %v312
  %402 = vst.msk [vmem:[#allocation2 + $0x180] sm:$0xf] %vm359, %v313
  %403 = vst.msk [vmem:[#allocation2 + $0x188] sm:$0xf] %vm359, %v314
  %v404 = vld [vmem:[%s3] sm:$0xf]
  %v405 = vld [vmem:[%s5] sm:$0xf]
  %v406 = vld [vmem:[%s7] sm:$0xf]
  %v407 = vld [vmem:[%s9] sm:$0x1]
  %v408 = vld [vmem:[#allocation2] sm:$0xf]
  %v409 = vld [vmem:[#allocation2 + $0x8] sm:$0xf]
  %v410 = vld [vmem:[#allocation2 + $0x10] sm:$0xf]
  %v411 = vld [vmem:[#allocation2 + $0x18] sm:$0xf]
  %v412 = vld [vmem:[#allocation2 + $0x20] sm:$0xf]
  %v413 = vld [vmem:[#allocation2 + $0x28] sm:$0xf]
  %v414 = vld [vmem:[#allocation2 + $0x30] sm:$0xf]
  %v415 = vld [vmem:[#allocation2 + $0x38] sm:$0xf]
  %v416 = vld [vmem:[#allocation2 + $0x40] sm:$0xf]
  %v417 = vld [vmem:[#allocation2 + $0x48] sm:$0xf]
  %v418 = vld [vmem:[#allocation2 + $0x50] sm:$0xf]
  %v419 = vld [vmem:[#allocation2 + $0x58] sm:$0xf]
  %v420 = vld [vmem:[#allocation2 + $0x60] sm:$0xf]
  %v421 = vld [vmem:[#allocation2 + $0x68] sm:$0xf]
  %v422 = vld [vmem:[#allocation2 + $0x70] sm:$0xf]
  %v423 = vld [vmem:[#allocation2 + $0x78] sm:$0xf]
  %v424 = vld [vmem:[#allocation2 + $0x80] sm:$0xf]
  %v425 = vld [vmem:[#allocation2 + $0x88] sm:$0xf]
  %v426 = vld [vmem:[#allocation2 + $0x90] sm:$0xf]
  %v427 = vld [vmem:[#allocation2 + $0x98] sm:$0xf]
  %v428 = vld [vmem:[#allocation2 + $0xa0] sm:$0xf]
  %v429 = vld [vmem:[#allocation2 + $0xa8] sm:$0xf]
  %v430 = vld [vmem:[#allocation2 + $0xb0] sm:$0xf]
  %v431 = vld [vmem:[#allocation2 + $0xb8] sm:$0xf]
  %v432 = vld [vmem:[#allocation2 + $0xc0] sm:$0xf]
  %v433 = vld [vmem:[#allocation2 + $0xc8] sm:$0xf]
  %v456 = vunpack.c.l.b16 %v410
  %v457 = vunpack.c.l.b16 %v411
  %v458 = vunpack.c.l.b16 %v412
  %v459 = vunpack.c.l.b16 %v413
  %v460 = vunpack.c.l.b16 %v414
  %v461 = vunpack.c.l.b16 %v415
  %v462 = vunpack.c.l.b16 %v416
  %v463 = vunpack.c.l.b16 %v417
  %v464 = vunpack.c.l.b16 %v418
  %v465 = vunpack.c.l.b16 %v419
  %v466 = vunpack.c.l.b16 %v420
  %v467 = vunpack.c.l.b16 %v421
  %v468 = vunpack.c.l.b16 %v422
  %v469 = vunpack.c.l.b16 %v423
  %v470 = vunpack.c.l.b16 %v424
  %v471 = vunpack.c.l.b16 %v425
  %v472 = vunpack.c.l.b16 %v426
  %v473 = vunpack.c.l.b16 %v427
  %v474 = vunpack.c.l.b16 %v428
  %v475 = vunpack.c.l.b16 %v429
  %v476 = vunpack.c.l.b16 %v430
  %v477 = vunpack.c.l.b16 %v431
  %v478 = vpack.c.b16 %v457, %v456
  %v479 = vpack.c.b16 %v459, %v458
  %v480 = vpack.c.b16 %v461, %v460
  %v481 = vpack.c.b16 %v463, %v462
  %v482 = vpack.c.b16 %v465, %v464
  %v483 = vpack.c.b16 %v467, %v466
  %v484 = vpack.c.b16 %v469, %v468
  %v485 = vpack.c.b16 %v471, %v470
  %v486 = vpack.c.b16 %v473, %v472
  %v487 = vpack.c.b16 %v475, %v474
  %v488 = vpack.c.b16 %v477, %v476
  %vm489 = vcmask 64512
  %v491 = vsel %vm489, %v478, 0
  %v494 = vsel %vm489, %v479, 0
  %v497 = vsel %vm489, %v480, 0
  %v500 = vsel %vm489, %v481, 0
  %v503 = vsel %vm489, %v482, 0
  %v506 = vsel %vm489, %v483, 0
  %v509 = vsel %vm489, %v484, 0
  %v512 = vsel %vm489, %v485, 0
  %v515 = vsel %vm489, %v486, 0
  %v518 = vsel %vm489, %v487, 0
  %v521 = vsel %vm489, %v488, 0
  %vm523 = vcmask 1043456
  %v525 = vsel %vm523, %v405, 0
  %527 = vmatprep.subr.bf16.mxu0 0
  %528 = vmatpush1.bf16.msra.mxu0 0
  %529 = vmatprep.subr.bf16.mxu0 0
  %530 = vmatpush1.bf16.msra.mxu0 0
  %531 = vmatprep.subr.bf16.mxu0 0
  %532 = vmatpush1.bf16.msra.mxu0 0
  %533 = vmatprep.subr.bf16.mxu0 0
  %534 = vmatpush1.bf16.msra.mxu0 0
  %535 = vmatprep.subr.bf16.mxu0 0
  %536 = vmatpush1.bf16.msra.mxu0 0
  %537 = vmatprep.subr.bf16.mxu0 0
  %538 = vmatpush1.bf16.msra.mxu0 0
  %539 = vmatprep.subr.bf16.mxu0 0
  %540 = vmatpush1.bf16.msra.mxu0 0
  %541 = vmatprep.subr.bf16.mxu0 0
  %542 = vmatpush1.bf16.msra.mxu0 %v525
  %543 = vmatprep.subr.bf16.mxu0 0
  %544 = vmatpush2.bf16.msra.mxu0 0
  %545 = vmatprep.subr.bf16.mxu0 0
  %546 = vmatpush2.bf16.msra.mxu0 0
  %547 = vmatprep.subr.bf16.mxu0 0
  %548 = vmatpush2.bf16.msra.mxu0 0
  %549 = vmatprep.subr.bf16.mxu0 0
  %550 = vmatpush2.bf16.msra.mxu0 0
  %551 = vmatprep.subr.bf16.mxu0 0
  %552 = vmatpush2.bf16.msra.mxu0 0
  %553 = vmatprep.subr.bf16.mxu0 0
  %554 = vmatpush2.bf16.msra.mxu0 0
  %555 = vmatprep.subr.bf16.mxu0 0
  %556 = vmatpush2.bf16.msra.mxu0 0
  %557 = vmatprep.subr.bf16.mxu0 0
  %558 = vmatpush2.bf16.msra.mxu0 0
  %559 = vmatprep.mubr.bf16.mxu0 0
  %560 = vmatmul.mubr.bf16.gmra.mxu0 %v491
  %v561 = vpop.f32.mrf.mxu0
  %v562 = vadd.f32 0.0, %v561
  %v563 = vpop.f32.mrf.mxu0
  %v564 = vpop.f32.mrf.mxu0
  %v565 = vadd.f32 0.0, %v564
  %v566 = vpop.f32.mrf.mxu0
  %567 = vmatprep.mubr.bf16.mxu0 0
  %568 = vmatmul.mubr.bf16.gmra.mxu0 %v494
  %v569 = vpop.f32.mrf.mxu0
  %v570 = vadd.f32 0.0, %v569
  %v571 = vpop.f32.mrf.mxu0
  %v572 = vpop.f32.mrf.mxu0
  %v573 = vadd.f32 0.0, %v572
  %v574 = vpop.f32.mrf.mxu0
  %575 = vmatprep.mubr.bf16.mxu0 0
  %576 = vmatmul.mubr.bf16.gmra.mxu0 %v497
  %v577 = vpop.f32.mrf.mxu0
  %v578 = vadd.f32 0.0, %v577
  %v579 = vpop.f32.mrf.mxu0
  %v580 = vpop.f32.mrf.mxu0
  %v581 = vadd.f32 0.0, %v580
  %v582 = vpop.f32.mrf.mxu0
  %583 = vmatprep.mubr.bf16.mxu0 0
  %584 = vmatmul.mubr.bf16.gmra.mxu0 %v500
  %v585 = vpop.f32.mrf.mxu0
  %v586 = vadd.f32 0.0, %v585
  %v587 = vpop.f32.mrf.mxu0
  %v588 = vpop.f32.mrf.mxu0
  %v589 = vadd.f32 0.0, %v588
  %v590 = vpop.f32.mrf.mxu0
  %591 = vmatprep.mubr.bf16.mxu0 0
  %592 = vmatmul.mubr.bf16.gmra.mxu0 %v503
  %v593 = vpop.f32.mrf.mxu0
  %v594 = vadd.f32 0.0, %v593
  %v595 = vpop.f32.mrf.mxu0
  %v596 = vpop.f32.mrf.mxu0
  %v597 = vadd.f32 0.0, %v596
  %v598 = vpop.f32.mrf.mxu0
  %599 = vmatprep.mubr.bf16.mxu0 0
  %600 = vmatmul.mubr.bf16.gmra.mxu0 %v506
  %v601 = vpop.f32.mrf.mxu0
  %v602 = vadd.f32 0.0, %v601
  %v603 = vpop.f32.mrf.mxu0
  %v604 = vpop.f32.mrf.mxu0
  %v605 = vadd.f32 0.0, %v604
  %v606 = vpop.f32.mrf.mxu0
  %607 = vmatprep.mubr.bf16.mxu0 0
  %608 = vmatmul.mubr.bf16.gmra.mxu0 %v509
  %v609 = vpop.f32.mrf.mxu0
  %v610 = vadd.f32 0.0, %v609
  %v611 = vpop.f32.mrf.mxu0
  %v612 = vpop.f32.mrf.mxu0
  %v613 = vadd.f32 0.0, %v612
  %v614 = vpop.f32.mrf.mxu0
  %615 = vmatprep.mubr.bf16.mxu0 0
  %616 = vmatmul.mubr.bf16.gmra.mxu0 %v512
  %v617 = vpop.f32.mrf.mxu0
  %v618 = vadd.f32 0.0, %v617
  %v619 = vpop.f32.mrf.mxu0
  %v620 = vpop.f32.mrf.mxu0
  %v621 = vadd.f32 0.0, %v620
  %v622 = vpop.f32.mrf.mxu0
  %623 = vmatprep.mubr.bf16.mxu0 0
  %624 = vmatmul.mubr.bf16.gmra.mxu0 %v515
  %v625 = vpop.f32.mrf.mxu0
  %v626 = vadd.f32 0.0, %v625
  %v627 = vpop.f32.mrf.mxu0
  %v628 = vpop.f32.mrf.mxu0
  %v629 = vadd.f32 0.0, %v628
  %v630 = vpop.f32.mrf.mxu0
  %631 = vmatprep.mubr.bf16.mxu0 0
  %632 = vmatmul.mubr.bf16.gmra.mxu0 %v518
  %v633 = vpop.f32.mrf.mxu0
  %v634 = vadd.f32 0.0, %v633
  %v635 = vpop.f32.mrf.mxu0
  %v636 = vpop.f32.mrf.mxu0
  %v637 = vadd.f32 0.0, %v636
  %v638 = vpop.f32.mrf.mxu0
  %639 = vmatprep.mubr.bf16.mxu0 0
  %640 = vmatmul.mubr.bf16.gmra.mxu0 %v521
  %v641 = vpop.f32.mrf.mxu0
  %v642 = vadd.f32 0.0, %v641
  %v643 = vpop.f32.mrf.mxu0
  %v644 = vpop.f32.mrf.mxu0
  %v645 = vadd.f32 0.0, %v644
  %v646 = vpop.f32.mrf.mxu0
  %647 = vdwg.mxu0
  %v650 = vunpack.c.l.b16 %v408
  %v651 = vunpack.c.l.b16 %v409
  %v652 = vpack.c.b16 %v651, %v650
  %v654 = vsel %vm489, %v652, 0
  %v657 = vsel %vm523, %v404, 0
  %659 = vmatprep.subr.bf16.mxu0 0
  %660 = vmatpush1.bf16.msra.mxu0 0
  %661 = vmatprep.subr.bf16.mxu0 0
  %662 = vmatpush1.bf16.msra.mxu0 0
  %663 = vmatprep.subr.bf16.mxu0 0
  %664 = vmatpush1.bf16.msra.mxu0 0
  %665 = vmatprep.subr.bf16.mxu0 0
  %666 = vmatpush1.bf16.msra.mxu0 0
  %667 = vmatprep.subr.bf16.mxu0 0
  %668 = vmatpush1.bf16.msra.mxu0 0
  %669 = vmatprep.subr.bf16.mxu0 0
  %670 = vmatpush1.bf16.msra.mxu0 0
  %671 = vmatprep.subr.bf16.mxu0 0
  %672 = vmatpush1.bf16.msra.mxu0 0
  %673 = vmatprep.subr.bf16.mxu0 0
  %674 = vmatpush1.bf16.msra.mxu0 %v657
  %675 = vmatprep.subr.bf16.mxu0 0
  %676 = vmatpush2.bf16.msra.mxu0 0
  %677 = vmatprep.subr.bf16.mxu0 0
  %678 = vmatpush2.bf16.msra.mxu0 0
  %679 = vmatprep.subr.bf16.mxu0 0
  %680 = vmatpush2.bf16.msra.mxu0 0
  %681 = vmatprep.subr.bf16.mxu0 0
  %682 = vmatpush2.bf16.msra.mxu0 0
  %683 = vmatprep.subr.bf16.mxu0 0
  %684 = vmatpush2.bf16.msra.mxu0 0
  %685 = vmatprep.subr.bf16.mxu0 0
  %686 = vmatpush2.bf16.msra.mxu0 0
  %687 = vmatprep.subr.bf16.mxu0 0
  %688 = vmatpush2.bf16.msra.mxu0 0
  %689 = vmatprep.subr.bf16.mxu0 0
  %690 = vmatpush2.bf16.msra.mxu0 0
  %691 = vmatprep.mubr.bf16.mxu0 0
  %692 = vmatmul.mubr.bf16.gmra.mxu0 %v654
  %v693 = vpop.f32.mrf.mxu0
  %v694 = vadd.f32 %v562, %v693
  %v695 = vpop.f32.mrf.mxu0
  %v696 = vpop.f32.mrf.mxu0
  %v697 = vadd.f32 %v565, %v696
  %v698 = vpop.f32.mrf.mxu0
  %699 = vmatprep.mubr.bf16.mxu0 0
  %700 = vmatmul.mubr.bf16.gmra.mxu0 %v491
  %v701 = vpop.f32.mrf.mxu0
  %v702 = vadd.f32 %v570, %v701
  %v703 = vpop.f32.mrf.mxu0
  %v704 = vpop.f32.mrf.mxu0
  %v705 = vadd.f32 %v573, %v704
  %v706 = vpop.f32.mrf.mxu0
  %707 = vmatprep.mubr.bf16.mxu0 0
  %708 = vmatmul.mubr.bf16.gmra.mxu0 %v494
  %v709 = vpop.f32.mrf.mxu0
  %v710 = vadd.f32 %v578, %v709
  %v711 = vpop.f32.mrf.mxu0
  %v712 = vpop.f32.mrf.mxu0
  %v713 = vadd.f32 %v581, %v712
  %v714 = vpop.f32.mrf.mxu0
  %715 = vmatprep.mubr.bf16.mxu0 0
  %716 = vmatmul.mubr.bf16.gmra.mxu0 %v497
  %v717 = vpop.f32.mrf.mxu0
  %v718 = vadd.f32 %v586, %v717
  %v719 = vpop.f32.mrf.mxu0
  %v720 = vpop.f32.mrf.mxu0
  %v721 = vadd.f32 %v589, %v720
  %v722 = vpop.f32.mrf.mxu0
  %723 = vmatprep.mubr.bf16.mxu0 0
  %724 = vmatmul.mubr.bf16.gmra.mxu0 %v500
  %v725 = vpop.f32.mrf.mxu0
  %v726 = vadd.f32 %v594, %v725
  %v727 = vpop.f32.mrf.mxu0
  %v728 = vpop.f32.mrf.mxu0
  %v729 = vadd.f32 %v597, %v728
  %v730 = vpop.f32.mrf.mxu0
  %731 = vmatprep.mubr.bf16.mxu0 0
  %732 = vmatmul.mubr.bf16.gmra.mxu0 %v503
  %v733 = vpop.f32.mrf.mxu0
  %v734 = vadd.f32 %v602, %v733
  %v735 = vpop.f32.mrf.mxu0
  %v736 = vpop.f32.mrf.mxu0
  %v737 = vadd.f32 %v605, %v736
  %v738 = vpop.f32.mrf.mxu0
  %739 = vmatprep.mubr.bf16.mxu0 0
  %740 = vmatmul.mubr.bf16.gmra.mxu0 %v506
  %v741 = vpop.f32.mrf.mxu0
  %v742 = vadd.f32 %v610, %v741
  %v743 = vpop.f32.mrf.mxu0
  %v744 = vpop.f32.mrf.mxu0
  %v745 = vadd.f32 %v613, %v744
  %v746 = vpop.f32.mrf.mxu0
  %747 = vmatprep.mubr.bf16.mxu0 0
  %748 = vmatmul.mubr.bf16.gmra.mxu0 %v509
  %v749 = vpop.f32.mrf.mxu0
  %v750 = vadd.f32 %v618, %v749
  %v751 = vpop.f32.mrf.mxu0
  %v752 = vpop.f32.mrf.mxu0
  %v753 = vadd.f32 %v621, %v752
  %v754 = vpop.f32.mrf.mxu0
  %755 = vmatprep.mubr.bf16.mxu0 0
  %756 = vmatmul.mubr.bf16.gmra.mxu0 %v512
  %v757 = vpop.f32.mrf.mxu0
  %v758 = vadd.f32 %v626, %v757
  %v759 = vpop.f32.mrf.mxu0
  %v760 = vpop.f32.mrf.mxu0
  %v761 = vadd.f32 %v629, %v760
  %v762 = vpop.f32.mrf.mxu0
  %763 = vmatprep.mubr.bf16.mxu0 0
  %764 = vmatmul.mubr.bf16.gmra.mxu0 %v515
  %v765 = vpop.f32.mrf.mxu0
  %v766 = vadd.f32 %v634, %v765
  %v767 = vpop.f32.mrf.mxu0
  %v768 = vpop.f32.mrf.mxu0
  %v769 = vadd.f32 %v637, %v768
  %v770 = vpop.f32.mrf.mxu0
  %771 = vmatprep.mubr.bf16.mxu0 0
  %772 = vmatmul.mubr.bf16.gmra.mxu0 %v518
  %v773 = vpop.f32.mrf.mxu0
  %v774 = vadd.f32 %v642, %v773
  %v775 = vpop.f32.mrf.mxu0
  %v776 = vpop.f32.mrf.mxu0
  %v777 = vadd.f32 %v645, %v776
  %v778 = vpop.f32.mrf.mxu0
  %779 = vdwg.mxu0
  %v782 = vunpack.c.l.b16 %v432
  %v783 = vunpack.c.l.b16 %v433
  %v784 = vpack.c.b16 %v783, %v782
  %v786 = vsel %vm489, %v784, 0
  %v789 = vsel %vm523, %v406, 0
  %791 = vmatprep.subr.bf16.mxu0 0
  %792 = vmatpush1.bf16.msra.mxu0 0
  %793 = vmatprep.subr.bf16.mxu0 0
  %794 = vmatpush1.bf16.msra.mxu0 0
  %795 = vmatprep.subr.bf16.mxu0 0
  %796 = vmatpush1.bf16.msra.mxu0 0
  %797 = vmatprep.subr.bf16.mxu0 0
  %798 = vmatpush1.bf16.msra.mxu0 0
  %799 = vmatprep.subr.bf16.mxu0 0
  %800 = vmatpush1.bf16.msra.mxu0 0
  %801 = vmatprep.subr.bf16.mxu0 0
  %802 = vmatpush1.bf16.msra.mxu0 0
  %803 = vmatprep.subr.bf16.mxu0 0
  %804 = vmatpush1.bf16.msra.mxu0 0
  %805 = vmatprep.subr.bf16.mxu0 0
  %806 = vmatpush1.bf16.msra.mxu0 %v789
  %807 = vmatprep.subr.bf16.mxu0 0
  %808 = vmatpush2.bf16.msra.mxu0 0
  %809 = vmatprep.subr.bf16.mxu0 0
  %810 = vmatpush2.bf16.msra.mxu0 0
  %811 = vmatprep.subr.bf16.mxu0 0
  %812 = vmatpush2.bf16.msra.mxu0 0
  %813 = vmatprep.subr.bf16.mxu0 0
  %814 = vmatpush2.bf16.msra.mxu0 0
  %815 = vmatprep.subr.bf16.mxu0 0
  %816 = vmatpush2.bf16.msra.mxu0 0
  %817 = vmatprep.subr.bf16.mxu0 0
  %818 = vmatpush2.bf16.msra.mxu0 0
  %819 = vmatprep.subr.bf16.mxu0 0
  %820 = vmatpush2.bf16.msra.mxu0 0
  %821 = vmatprep.subr.bf16.mxu0 0
  %822 = vmatpush2.bf16.msra.mxu0 0
  %823 = vmatprep.mubr.bf16.mxu0 0
  %824 = vmatmul.mubr.bf16.gmra.mxu0 %v494
  %v825 = vpop.f32.mrf.mxu0
  %v826 = vadd.f32 0.0, %v825
  %v827 = vpop.f32.mrf.mxu0
  %v828 = vpop.f32.mrf.mxu0
  %v829 = vadd.f32 0.0, %v828
  %v830 = vpop.f32.mrf.mxu0
  %831 = vmatprep.mubr.bf16.mxu0 0
  %832 = vmatmul.mubr.bf16.gmra.mxu0 %v497
  %v833 = vpop.f32.mrf.mxu0
  %v834 = vadd.f32 0.0, %v833
  %v835 = vpop.f32.mrf.mxu0
  %v836 = vpop.f32.mrf.mxu0
  %v837 = vadd.f32 0.0, %v836
  %v838 = vpop.f32.mrf.mxu0
  %839 = vmatprep.mubr.bf16.mxu0 0
  %840 = vmatmul.mubr.bf16.gmra.mxu0 %v500
  %v841 = vpop.f32.mrf.mxu0
  %v842 = vadd.f32 0.0, %v841
  %v843 = vpop.f32.mrf.mxu0
  %v844 = vpop.f32.mrf.mxu0
  %v845 = vadd.f32 0.0, %v844
  %v846 = vpop.f32.mrf.mxu0
  %847 = vmatprep.mubr.bf16.mxu0 0
  %848 = vmatmul.mubr.bf16.gmra.mxu0 %v503
  %v849 = vpop.f32.mrf.mxu0
  %v850 = vadd.f32 0.0, %v849
  %v851 = vpop.f32.mrf.mxu0
  %v852 = vpop.f32.mrf.mxu0
  %v853 = vadd.f32 0.0, %v852
  %v854 = vpop.f32.mrf.mxu0
  %855 = vmatprep.mubr.bf16.mxu0 0
  %856 = vmatmul.mubr.bf16.gmra.mxu0 %v506
  %v857 = vpop.f32.mrf.mxu0
  %v858 = vadd.f32 0.0, %v857
  %v859 = vpop.f32.mrf.mxu0
  %v860 = vpop.f32.mrf.mxu0
  %v861 = vadd.f32 0.0, %v860
  %v862 = vpop.f32.mrf.mxu0
  %863 = vmatprep.mubr.bf16.mxu0 0
  %864 = vmatmul.mubr.bf16.gmra.mxu0 %v509
  %v865 = vpop.f32.mrf.mxu0
  %v866 = vadd.f32 0.0, %v865
  %v867 = vpop.f32.mrf.mxu0
  %v868 = vpop.f32.mrf.mxu0
  %v869 = vadd.f32 0.0, %v868
  %v870 = vpop.f32.mrf.mxu0
  %871 = vmatprep.mubr.bf16.mxu0 0
  %872 = vmatmul.mubr.bf16.gmra.mxu0 %v512
  %v873 = vpop.f32.mrf.mxu0
  %v874 = vadd.f32 0.0, %v873
  %v875 = vpop.f32.mrf.mxu0
  %v876 = vpop.f32.mrf.mxu0
  %v877 = vadd.f32 0.0, %v876
  %v878 = vpop.f32.mrf.mxu0
  %879 = vmatprep.mubr.bf16.mxu0 0
  %880 = vmatmul.mubr.bf16.gmra.mxu0 %v515
  %v881 = vpop.f32.mrf.mxu0
  %v882 = vadd.f32 0.0, %v881
  %v883 = vpop.f32.mrf.mxu0
  %v884 = vpop.f32.mrf.mxu0
  %v885 = vadd.f32 0.0, %v884
  %v886 = vpop.f32.mrf.mxu0
  %887 = vmatprep.mubr.bf16.mxu0 0
  %888 = vmatmul.mubr.bf16.gmra.mxu0 %v518
  %v889 = vpop.f32.mrf.mxu0
  %v890 = vadd.f32 0.0, %v889
  %v891 = vpop.f32.mrf.mxu0
  %v892 = vpop.f32.mrf.mxu0
  %v893 = vadd.f32 0.0, %v892
  %v894 = vpop.f32.mrf.mxu0
  %895 = vmatprep.mubr.bf16.mxu0 0
  %896 = vmatmul.mubr.bf16.gmra.mxu0 %v521
  %v897 = vpop.f32.mrf.mxu0
  %v898 = vadd.f32 0.0, %v897
  %v899 = vpop.f32.mrf.mxu0
  %v900 = vpop.f32.mrf.mxu0
  %v901 = vadd.f32 0.0, %v900
  %v902 = vpop.f32.mrf.mxu0
  %903 = vmatprep.mubr.bf16.mxu0 0
  %904 = vmatmul.mubr.bf16.gmra.mxu0 %v786
  %v905 = vpop.f32.mrf.mxu0
  %v906 = vadd.f32 0.0, %v905
  %v907 = vpop.f32.mrf.mxu0
  %v908 = vpop.f32.mrf.mxu0
  %v909 = vadd.f32 0.0, %v908
  %v910 = vpop.f32.mrf.mxu0
  %911 = vdwg.mxu0
  %v912 = vadd.f32 %v694, %v826
  %v913 = vadd.f32 %v697, %v829
  %v914 = vadd.f32 %v702, %v834
  %v915 = vadd.f32 %v705, %v837
  %v916 = vadd.f32 %v710, %v842
  %v917 = vadd.f32 %v713, %v845
  %v918 = vadd.f32 %v718, %v850
  %v919 = vadd.f32 %v721, %v853
  %v920 = vadd.f32 %v726, %v858
  %v921 = vadd.f32 %v729, %v861
  %v922 = vadd.f32 %v734, %v866
  %v923 = vadd.f32 %v737, %v869
  %v924 = vadd.f32 %v742, %v874
  %v925 = vadd.f32 %v745, %v877
  %v926 = vadd.f32 %v750, %v882
  %v927 = vadd.f32 %v753, %v885
  %v928 = vadd.f32 %v758, %v890
  %v929 = vadd.f32 %v761, %v893
  %v930 = vadd.f32 %v766, %v898
  %v931 = vadd.f32 %v769, %v901
  %v932 = vadd.f32 %v774, %v906
  %v933 = vadd.f32 %v777, %v909
  %v935 = vlaneseq
  %v936 = vshrl.u32 %v935, 7
  %v937 = vsub.s32 0, %v936
  %v938 = vrot.slane %v407, %v937
  %v940 = vadd.f32 %v912, %v938
  %v941 = vadd.f32 %v913, %v938
  %v942 = vadd.f32 %v914, %v938
  %v943 = vadd.f32 %v915, %v938
  %v944 = vadd.f32 %v916, %v938
  %v945 = vadd.f32 %v917, %v938
  %v946 = vadd.f32 %v918, %v938
  %v947 = vadd.f32 %v919, %v938
  %v948 = vadd.f32 %v920, %v938
  %v949 = vadd.f32 %v921, %v938
  %v950 = vadd.f32 %v922, %v938
  %v951 = vadd.f32 %v923, %v938
  %v952 = vadd.f32 %v924, %v938
  %v953 = vadd.f32 %v925, %v938
  %v954 = vadd.f32 %v926, %v938
  %v955 = vadd.f32 %v927, %v938
  %v956 = vadd.f32 %v928, %v938
  %v957 = vadd.f32 %v929, %v938
  %v958 = vadd.f32 %v930, %v938
  %v959 = vadd.f32 %v931, %v938
  %v960 = vadd.f32 %v932, %v938
  %v961 = vadd.f32 %v933, %v938
  %v962 = vmul.f32 %v940, 0.1
  %v963 = vmul.f32 %v941, 0.1
  %v964 = vmul.f32 %v942, 0.1
  %v965 = vmul.f32 %v943, 0.1
  %v966 = vmul.f32 %v944, 0.1
  %v967 = vmul.f32 %v945, 0.1
  %v968 = vmul.f32 %v946, 0.1
  %v969 = vmul.f32 %v947, 0.1
  %v970 = vmul.f32 %v948, 0.1
  %v971 = vmul.f32 %v949, 0.1
  %v972 = vmul.f32 %v950, 0.1
  %v973 = vmul.f32 %v951, 0.1
  %v974 = vmul.f32 %v952, 0.1
  %v975 = vmul.f32 %v953, 0.1
  %v976 = vmul.f32 %v954, 0.1
  %v977 = vmul.f32 %v955, 0.1
  %v978 = vmul.f32 %v956, 0.1
  %v979 = vmul.f32 %v957, 0.1
  %v980 = vmul.f32 %v958, 0.1
  %v981 = vmul.f32 %v959, 0.1
  %v982 = vmul.f32 %v960, 0.1
  %v983 = vmul.f32 %v961, 0.1
  %v984 = vmax.f32 %v940, %v962
  %v985 = vmax.f32 %v941, %v963
  %v986 = vmax.f32 %v942, %v964
  %v987 = vmax.f32 %v943, %v965
  %v988 = vmax.f32 %v944, %v966
  %v989 = vmax.f32 %v945, %v967
  %v990 = vmax.f32 %v946, %v968
  %v991 = vmax.f32 %v947, %v969
  %v992 = vmax.f32 %v948, %v970
  %v993 = vmax.f32 %v949, %v971
  %v994 = vmax.f32 %v950, %v972
  %v995 = vmax.f32 %v951, %v973
  %v996 = vmax.f32 %v952, %v974
  %v997 = vmax.f32 %v953, %v975
  %v998 = vmax.f32 %v954, %v976
  %v999 = vmax.f32 %v955, %v977
  %v1000 = vmax.f32 %v956, %v978
  %v1001 = vmax.f32 %v957, %v979
  %v1002 = vmax.f32 %v958, %v980
  %v1003 = vmax.f32 %v959, %v981
  %v1004 = vmax.f32 %v960, %v982
  %v1005 = vmax.f32 %v961, %v983
  %v1006 = vpack.c.bf16 %v985, %v984
  %v1007 = vpack.c.bf16 %v987, %v986
  %v1008 = vpack.c.bf16 %v989, %v988
  %v1009 = vpack.c.bf16 %v991, %v990
  %v1010 = vpack.c.bf16 %v993, %v992
  %v1011 = vpack.c.bf16 %v995, %v994
  %v1012 = vpack.c.bf16 %v997, %v996
  %v1013 = vpack.c.bf16 %v999, %v998
  %v1014 = vpack.c.bf16 %v1001, %v1000
  %v1015 = vpack.c.bf16 %v1003, %v1002
  %v1016 = vpack.c.bf16 %v1005, %v1004
  %v1028 = vunpack.c.l.b16 %v1006
  %v1029 = vunpack.c.h.b16 %v1006
  %v1030 = vunpack.c.l.b16 %v1007
  %v1031 = vunpack.c.h.b16 %v1007
  %v1032 = vunpack.c.l.b16 %v1008
  %v1033 = vunpack.c.h.b16 %v1008
  %v1034 = vunpack.c.l.b16 %v1009
  %v1035 = vunpack.c.h.b16 %v1009
  %v1036 = vunpack.c.l.b16 %v1010
  %v1037 = vunpack.c.h.b16 %v1010
  %v1038 = vunpack.c.l.b16 %v1011
  %v1039 = vunpack.c.h.b16 %v1011
  %v1040 = vunpack.c.l.b16 %v1012
  %v1041 = vunpack.c.h.b16 %v1012
  %v1042 = vunpack.c.l.b16 %v1013
  %v1043 = vunpack.c.h.b16 %v1013
  %v1044 = vunpack.c.l.b16 %v1014
  %v1045 = vunpack.c.h.b16 %v1014
  %v1046 = vunpack.c.l.b16 %v1015
  %v1047 = vunpack.c.h.b16 %v1015
  %v1048 = vunpack.c.l.b16 %v1016
  %v1049 = vunpack.c.h.b16 %v1016
  %v1050 = vpack.c.b16 %v1028, %v1028
  %v1051 = vpack.c.b16 %v1029, %v1029
  %v1052 = vpack.c.b16 %v1030, %v1030
  %v1053 = vpack.c.b16 %v1031, %v1031
  %v1054 = vpack.c.b16 %v1032, %v1032
  %v1055 = vpack.c.b16 %v1033, %v1033
  %v1056 = vpack.c.b16 %v1034, %v1034
  %v1057 = vpack.c.b16 %v1035, %v1035
  %v1058 = vpack.c.b16 %v1036, %v1036
  %v1059 = vpack.c.b16 %v1037, %v1037
  %v1060 = vpack.c.b16 %v1038, %v1038
  %v1061 = vpack.c.b16 %v1039, %v1039
  %v1062 = vpack.c.b16 %v1040, %v1040
  %v1063 = vpack.c.b16 %v1041, %v1041
  %v1064 = vpack.c.b16 %v1042, %v1042
  %v1065 = vpack.c.b16 %v1043, %v1043
  %v1066 = vpack.c.b16 %v1044, %v1044
  %v1067 = vpack.c.b16 %v1045, %v1045
  %v1068 = vpack.c.b16 %v1046, %v1046
  %v1069 = vpack.c.b16 %v1047, %v1047
  %v1070 = vpack.c.b16 %v1048, %v1048
  %v1071 = vpack.c.b16 %v1049, %v1049
  %vm1094 = vcmask 519168
  %1095 = vst.msk [vmem:[#allocation2 + $0x10] sm:$0xf] %vm1094, %v1050
  %1096 = vst.msk [vmem:[#allocation2 + $0x18] sm:$0xf] %vm1094, %v1051
  %1097 = vst.msk [vmem:[#allocation2 + $0x20] sm:$0xf] %vm1094, %v1052
  %1098 = vst.msk [vmem:[#allocation2 + $0x28] sm:$0xf] %vm1094, %v1053
  %1099 = vst.msk [vmem:[#allocation2 + $0x30] sm:$0xf] %vm1094, %v1054
  %1100 = vst.msk [vmem:[#allocation2 + $0x38] sm:$0xf] %vm1094, %v1055
  %1101 = vst.msk [vmem:[#allocation2 + $0x40] sm:$0xf] %vm1094, %v1056
  %1102 = vst.msk [vmem:[#allocation2 + $0x48] sm:$0xf] %vm1094, %v1057
  %1103 = vst.msk [vmem:[#allocation2 + $0x50] sm:$0xf] %vm1094, %v1058
  %1104 = vst.msk [vmem:[#allocation2 + $0x58] sm:$0xf] %vm1094, %v1059
  %1105 = vst.msk [vmem:[#allocation2 + $0x60] sm:$0xf] %vm1094, %v1060
  %1106 = vst.msk [vmem:[#allocation2 + $0x68] sm:$0xf] %vm1094, %v1061
  %1107 = vst.msk [vmem:[#allocation2 + $0x70] sm:$0xf] %vm1094, %v1062
  %1108 = vst.msk [vmem:[#allocation2 + $0x78] sm:$0xf] %vm1094, %v1063
  %1109 = vst.msk [vmem:[#allocation2 + $0x80] sm:$0xf] %vm1094, %v1064
  %1110 = vst.msk [vmem:[#allocation2 + $0x88] sm:$0xf] %vm1094, %v1065
  %1111 = vst.msk [vmem:[#allocation2 + $0x90] sm:$0xf] %vm1094, %v1066
  %1112 = vst.msk [vmem:[#allocation2 + $0x98] sm:$0xf] %vm1094, %v1067
  %1113 = vst.msk [vmem:[#allocation2 + $0xa0] sm:$0xf] %vm1094, %v1068
  %1114 = vst.msk [vmem:[#allocation2 + $0xa8] sm:$0xf] %vm1094, %v1069
  %1115 = vst.msk [vmem:[#allocation2 + $0xb0] sm:$0xf] %vm1094, %v1070
  %1116 = vst.msk [vmem:[#allocation2 + $0xb8] sm:$0xf] %vm1094, %v1071
  %s1117 = scalar_lea.vmem [#allocation2], 208
  %v1118 = vld [vmem:[%s1117] sm:$0xf]
  %v1119 = vld [vmem:[%s1117 + $0x8] sm:$0xf]
  %v1120 = vld [vmem:[%s1117 + $0x10] sm:$0xf]
  %v1121 = vld [vmem:[%s1117 + $0x18] sm:$0xf]
  %v1122 = vld [vmem:[%s1117 + $0x20] sm:$0xf]
  %v1123 = vld [vmem:[%s1117 + $0x28] sm:$0xf]
  %v1124 = vld [vmem:[%s1117 + $0x30] sm:$0xf]
  %v1125 = vld [vmem:[%s1117 + $0x38] sm:$0xf]
  %v1126 = vld [vmem:[%s1117 + $0x40] sm:$0xf]
  %v1127 = vld [vmem:[%s1117 + $0x48] sm:$0xf]
  %v1128 = vld [vmem:[%s1117 + $0x50] sm:$0xf]
  %v1129 = vld [vmem:[%s1117 + $0x58] sm:$0xf]
  %v1130 = vld [vmem:[%s1117 + $0x60] sm:$0xf]
  %v1131 = vld [vmem:[%s1117 + $0x68] sm:$0xf]
  %v1132 = vld [vmem:[%s1117 + $0x70] sm:$0xf]
  %v1133 = vld [vmem:[%s1117 + $0x78] sm:$0xf]
  %v1134 = vld [vmem:[%s1117 + $0x80] sm:$0xf]
  %v1135 = vld [vmem:[%s1117 + $0x88] sm:$0xf]
  %v1136 = vld [vmem:[%s1117 + $0x90] sm:$0xf]
  %v1137 = vld [vmem:[%s1117 + $0x98] sm:$0xf]
  %v1138 = vld [vmem:[%s1117 + $0xa0] sm:$0xf]
  %v1139 = vld [vmem:[%s1117 + $0xa8] sm:$0xf]
  %v1140 = vld [vmem:[%s1117 + $0xb0] sm:$0xf]
  %v1141 = vld [vmem:[%s1117 + $0xb8] sm:$0xf]
  %v1142 = vld [vmem:[%s1117 + $0xc0] sm:$0xf]
  %v1143 = vld [vmem:[%s1117 + $0xc8] sm:$0xf]
  %v1166 = vunpack.c.l.b16 %v1120
  %v1167 = vunpack.c.l.b16 %v1121
  %v1168 = vunpack.c.l.b16 %v1122
  %v1169 = vunpack.c.l.b16 %v1123
  %v1170 = vunpack.c.l.b16 %v1124
  %v1171 = vunpack.c.l.b16 %v1125
  %v1172 = vunpack.c.l.b16 %v1126
  %v1173 = vunpack.c.l.b16 %v1127
  %v1174 = vunpack.c.l.b16 %v1128
  %v1175 = vunpack.c.l.b16 %v1129
  %v1176 = vunpack.c.l.b16 %v1130
  %v1177 = vunpack.c.l.b16 %v1131
  %v1178 = vunpack.c.l.b16 %v1132
  %v1179 = vunpack.c.l.b16 %v1133
  %v1180 = vunpack.c.l.b16 %v1134
  %v1181 = vunpack.c.l.b16 %v1135
  %v1182 = vunpack.c.l.b16 %v1136
  %v1183 = vunpack.c.l.b16 %v1137
  %v1184 = vunpack.c.l.b16 %v1138
  %v1185 = vunpack.c.l.b16 %v1139
  %v1186 = vunpack.c.l.b16 %v1140
  %v1187 = vunpack.c.l.b16 %v1141
  %v1188 = vpack.c.b16 %v1167, %v1166
  %v1189 = vpack.c.b16 %v1169, %v1168
  %v1190 = vpack.c.b16 %v1171, %v1170
  %v1191 = vpack.c.b16 %v1173, %v1172
  %v1192 = vpack.c.b16 %v1175, %v1174
  %v1193 = vpack.c.b16 %v1177, %v1176
  %v1194 = vpack.c.b16 %v1179, %v1178
  %v1195 = vpack.c.b16 %v1181, %v1180
  %v1196 = vpack.c.b16 %v1183, %v1182
  %v1197 = vpack.c.b16 %v1185, %v1184
  %v1198 = vpack.c.b16 %v1187, %v1186
  %v1200 = vsel %vm489, %v1188, 0
  %v1203 = vsel %vm489, %v1189, 0
  %v1206 = vsel %vm489, %v1190, 0
  %v1209 = vsel %vm489, %v1191, 0
  %v1212 = vsel %vm489, %v1192, 0
  %v1215 = vsel %vm489, %v1193, 0
  %v1218 = vsel %vm489, %v1194, 0
  %v1221 = vsel %vm489, %v1195, 0
  %v1224 = vsel %vm489, %v1196, 0
  %v1227 = vsel %vm489, %v1197, 0
  %v1230 = vsel %vm489, %v1198, 0
  %1232 = vmatprep.subr.bf16.mxu0 0
  %1233 = vmatpush1.bf16.msra.mxu0 0
  %1234 = vmatprep.subr.bf16.mxu0 0
  %1235 = vmatpush1.bf16.msra.mxu0 0
  %1236 = vmatprep.subr.bf16.mxu0 0
  %1237 = vmatpush1.bf16.msra.mxu0 0
  %1238 = vmatprep.subr.bf16.mxu0 0
  %1239 = vmatpush1.bf16.msra.mxu0 0
  %1240 = vmatprep.subr.bf16.mxu0 0
  %1241 = vmatpush1.bf16.msra.mxu0 0
  %1242 = vmatprep.subr.bf16.mxu0 0
  %1243 = vmatpush1.bf16.msra.mxu0 0
  %1244 = vmatprep.subr.bf16.mxu0 0
  %1245 = vmatpush1.bf16.msra.mxu0 0
  %1246 = vmatprep.subr.bf16.mxu0 0
  %1247 = vmatpush1.bf16.msra.mxu0 %v525
  %1248 = vmatprep.subr.bf16.mxu0 0
  %1249 = vmatpush2.bf16.msra.mxu0 0
  %1250 = vmatprep.subr.bf16.mxu0 0
  %1251 = vmatpush2.bf16.msra.mxu0 0
  %1252 = vmatprep.subr.bf16.mxu0 0
  %1253 = vmatpush2.bf16.msra.mxu0 0
  %1254 = vmatprep.subr.bf16.mxu0 0
  %1255 = vmatpush2.bf16.msra.mxu0 0
  %1256 = vmatprep.subr.bf16.mxu0 0
  %1257 = vmatpush2.bf16.msra.mxu0 0
  %1258 = vmatprep.subr.bf16.mxu0 0
  %1259 = vmatpush2.bf16.msra.mxu0 0
  %1260 = vmatprep.subr.bf16.mxu0 0
  %1261 = vmatpush2.bf16.msra.mxu0 0
  %1262 = vmatprep.subr.bf16.mxu0 0
  %1263 = vmatpush2.bf16.msra.mxu0 0
  %1264 = vmatprep.mubr.bf16.mxu0 0
  %1265 = vmatmul.mubr.bf16.gmra.mxu0 %v1200
  %v1266 = vpop.f32.mrf.mxu0
  %v1267 = vadd.f32 0.0, %v1266
  %v1268 = vpop.f32.mrf.mxu0
  %v1269 = vpop.f32.mrf.mxu0
  %v1270 = vadd.f32 0.0, %v1269
  %v1271 = vpop.f32.mrf.mxu0
  %1272 = vmatprep.mubr.bf16.mxu0 0
  %1273 = vmatmul.mubr.bf16.gmra.mxu0 %v1203
  %v1274 = vpop.f32.mrf.mxu0
  %v1275 = vadd.f32 0.0, %v1274
  %v1276 = vpop.f32.mrf.mxu0
  %v1277 = vpop.f32.mrf.mxu0
  %v1278 = vadd.f32 0.0, %v1277
  %v1279 = vpop.f32.mrf.mxu0
  %1280 = vmatprep.mubr.bf16.mxu0 0
  %1281 = vmatmul.mubr.bf16.gmra.mxu0 %v1206
  %v1282 = vpop.f32.mrf.mxu0
  %v1283 = vadd.f32 0.0, %v1282
  %v1284 = vpop.f32.mrf.mxu0
  %v1285 = vpop.f32.mrf.mxu0
  %v1286 = vadd.f32 0.0, %v1285
  %v1287 = vpop.f32.mrf.mxu0
  %1288 = vmatprep.mubr.bf16.mxu0 0
  %1289 = vmatmul.mubr.bf16.gmra.mxu0 %v1209
  %v1290 = vpop.f32.mrf.mxu0
  %v1291 = vadd.f32 0.0, %v1290
  %v1292 = vpop.f32.mrf.mxu0
  %v1293 = vpop.f32.mrf.mxu0
  %v1294 = vadd.f32 0.0, %v1293
  %v1295 = vpop.f32.mrf.mxu0
  %1296 = vmatprep.mubr.bf16.mxu0 0
  %1297 = vmatmul.mubr.bf16.gmra.mxu0 %v1212
  %v1298 = vpop.f32.mrf.mxu0
  %v1299 = vadd.f32 0.0, %v1298
  %v1300 = vpop.f32.mrf.mxu0
  %v1301 = vpop.f32.mrf.mxu0
  %v1302 = vadd.f32 0.0, %v1301
  %v1303 = vpop.f32.mrf.mxu0
  %1304 = vmatprep.mubr.bf16.mxu0 0
  %1305 = vmatmul.mubr.bf16.gmra.mxu0 %v1215
  %v1306 = vpop.f32.mrf.mxu0
  %v1307 = vadd.f32 0.0, %v1306
  %v1308 = vpop.f32.mrf.mxu0
  %v1309 = vpop.f32.mrf.mxu0
  %v1310 = vadd.f32 0.0, %v1309
  %v1311 = vpop.f32.mrf.mxu0
  %1312 = vmatprep.mubr.bf16.mxu0 0
  %1313 = vmatmul.mubr.bf16.gmra.mxu0 %v1218
  %v1314 = vpop.f32.mrf.mxu0
  %v1315 = vadd.f32 0.0, %v1314
  %v1316 = vpop.f32.mrf.mxu0
  %v1317 = vpop.f32.mrf.mxu0
  %v1318 = vadd.f32 0.0, %v1317
  %v1319 = vpop.f32.mrf.mxu0
  %1320 = vmatprep.mubr.bf16.mxu0 0
  %1321 = vmatmul.mubr.bf16.gmra.mxu0 %v1221
  %v1322 = vpop.f32.mrf.mxu0
  %v1323 = vadd.f32 0.0, %v1322
  %v1324 = vpop.f32.mrf.mxu0
  %v1325 = vpop.f32.mrf.mxu0
  %v1326 = vadd.f32 0.0, %v1325
  %v1327 = vpop.f32.mrf.mxu0
  %1328 = vmatprep.mubr.bf16.mxu0 0
  %1329 = vmatmul.mubr.bf16.gmra.mxu0 %v1224
  %v1330 = vpop.f32.mrf.mxu0
  %v1331 = vadd.f32 0.0, %v1330
  %v1332 = vpop.f32.mrf.mxu0
  %v1333 = vpop.f32.mrf.mxu0
  %v1334 = vadd.f32 0.0, %v1333
  %v1335 = vpop.f32.mrf.mxu0
  %1336 = vmatprep.mubr.bf16.mxu0 0
  %1337 = vmatmul.mubr.bf16.gmra.mxu0 %v1227
  %v1338 = vpop.f32.mrf.mxu0
  %v1339 = vadd.f32 0.0, %v1338
  %v1340 = vpop.f32.mrf.mxu0
  %v1341 = vpop.f32.mrf.mxu0
  %v1342 = vadd.f32 0.0, %v1341
  %v1343 = vpop.f32.mrf.mxu0
  %1344 = vmatprep.mubr.bf16.mxu0 0
  %1345 = vmatmul.mubr.bf16.gmra.mxu0 %v1230
  %v1346 = vpop.f32.mrf.mxu0
  %v1347 = vadd.f32 0.0, %v1346
  %v1348 = vpop.f32.mrf.mxu0
  %v1349 = vpop.f32.mrf.mxu0
  %v1350 = vadd.f32 0.0, %v1349
  %v1351 = vpop.f32.mrf.mxu0
  %1352 = vdwg.mxu0
  %v1355 = vunpack.c.l.b16 %v1118
  %v1356 = vunpack.c.l.b16 %v1119
  %v1357 = vpack.c.b16 %v1356, %v1355
  %v1359 = vsel %vm489, %v1357, 0
  %1361 = vmatprep.subr.bf16.mxu0 0
  %1362 = vmatpush1.bf16.msra.mxu0 0
  %1363 = vmatprep.subr.bf16.mxu0 0
  %1364 = vmatpush1.bf16.msra.mxu0 0
  %1365 = vmatprep.subr.bf16.mxu0 0
  %1366 = vmatpush1.bf16.msra.mxu0 0
  %1367 = vmatprep.subr.bf16.mxu0 0
  %1368 = vmatpush1.bf16.msra.mxu0 0
  %1369 = vmatprep.subr.bf16.mxu0 0
  %1370 = vmatpush1.bf16.msra.mxu0 0
  %1371 = vmatprep.subr.bf16.mxu0 0
  %1372 = vmatpush1.bf16.msra.mxu0 0
  %1373 = vmatprep.subr.bf16.mxu0 0
  %1374 = vmatpush1.bf16.msra.mxu0 0
  %1375 = vmatprep.subr.bf16.mxu0 0
  %1376 = vmatpush1.bf16.msra.mxu0 %v657
  %1377 = vmatprep.subr.bf16.mxu0 0
  %1378 = vmatpush2.bf16.msra.mxu0 0
  %1379 = vmatprep.subr.bf16.mxu0 0
  %1380 = vmatpush2.bf16.msra.mxu0 0
  %1381 = vmatprep.subr.bf16.mxu0 0
  %1382 = vmatpush2.bf16.msra.mxu0 0
  %1383 = vmatprep.subr.bf16.mxu0 0
  %1384 = vmatpush2.bf16.msra.mxu0 0
  %1385 = vmatprep.subr.bf16.mxu0 0
  %1386 = vmatpush2.bf16.msra.mxu0 0
  %1387 = vmatprep.subr.bf16.mxu0 0
  %1388 = vmatpush2.bf16.msra.mxu0 0
  %1389 = vmatprep.subr.bf16.mxu0 0
  %1390 = vmatpush2.bf16.msra.mxu0 0
  %1391 = vmatprep.subr.bf16.mxu0 0
  %1392 = vmatpush2.bf16.msra.mxu0 0
  %1393 = vmatprep.mubr.bf16.mxu0 0
  %1394 = vmatmul.mubr.bf16.gmra.mxu0 %v1359
  %v1395 = vpop.f32.mrf.mxu0
  %v1396 = vadd.f32 %v1267, %v1395
  %v1397 = vpop.f32.mrf.mxu0
  %v1398 = vpop.f32.mrf.mxu0
  %v1399 = vadd.f32 %v1270, %v1398
  %v1400 = vpop.f32.mrf.mxu0
  %1401 = vmatprep.mubr.bf16.mxu0 0
  %1402 = vmatmul.mubr.bf16.gmra.mxu0 %v1200
  %v1403 = vpop.f32.mrf.mxu0
  %v1404 = vadd.f32 %v1275, %v1403
  %v1405 = vpop.f32.mrf.mxu0
  %v1406 = vpop.f32.mrf.mxu0
  %v1407 = vadd.f32 %v1278, %v1406
  %v1408 = vpop.f32.mrf.mxu0
  %1409 = vmatprep.mubr.bf16.mxu0 0
  %1410 = vmatmul.mubr.bf16.gmra.mxu0 %v1203
  %v1411 = vpop.f32.mrf.mxu0
  %v1412 = vadd.f32 %v1283, %v1411
  %v1413 = vpop.f32.mrf.mxu0
  %v1414 = vpop.f32.mrf.mxu0
  %v1415 = vadd.f32 %v1286, %v1414
  %v1416 = vpop.f32.mrf.mxu0
  %1417 = vmatprep.mubr.bf16.mxu0 0
  %1418 = vmatmul.mubr.bf16.gmra.mxu0 %v1206
  %v1419 = vpop.f32.mrf.mxu0
  %v1420 = vadd.f32 %v1291, %v1419
  %v1421 = vpop.f32.mrf.mxu0
  %v1422 = vpop.f32.mrf.mxu0
  %v1423 = vadd.f32 %v1294, %v1422
  %v1424 = vpop.f32.mrf.mxu0
  %1425 = vmatprep.mubr.bf16.mxu0 0
  %1426 = vmatmul.mubr.bf16.gmra.mxu0 %v1209
  %v1427 = vpop.f32.mrf.mxu0
  %v1428 = vadd.f32 %v1299, %v1427
  %v1429 = vpop.f32.mrf.mxu0
  %v1430 = vpop.f32.mrf.mxu0
  %v1431 = vadd.f32 %v1302, %v1430
  %v1432 = vpop.f32.mrf.mxu0
  %1433 = vmatprep.mubr.bf16.mxu0 0
  %1434 = vmatmul.mubr.bf16.gmra.mxu0 %v1212
  %v1435 = vpop.f32.mrf.mxu0
  %v1436 = vadd.f32 %v1307, %v1435
  %v1437 = vpop.f32.mrf.mxu0
  %v1438 = vpop.f32.mrf.mxu0
  %v1439 = vadd.f32 %v1310, %v1438
  %v1440 = vpop.f32.mrf.mxu0
  %1441 = vmatprep.mubr.bf16.mxu0 0
  %1442 = vmatmul.mubr.bf16.gmra.mxu0 %v1215
  %v1443 = vpop.f32.mrf.mxu0
  %v1444 = vadd.f32 %v1315, %v1443
  %v1445 = vpop.f32.mrf.mxu0
  %v1446 = vpop.f32.mrf.mxu0
  %v1447 = vadd.f32 %v1318, %v1446
  %v1448 = vpop.f32.mrf.mxu0
  %1449 = vmatprep.mubr.bf16.mxu0 0
  %1450 = vmatmul.mubr.bf16.gmra.mxu0 %v1218
  %v1451 = vpop.f32.mrf.mxu0
  %v1452 = vadd.f32 %v1323, %v1451
  %v1453 = vpop.f32.mrf.mxu0
  %v1454 = vpop.f32.mrf.mxu0
  %v1455 = vadd.f32 %v1326, %v1454
  %v1456 = vpop.f32.mrf.mxu0
  %1457 = vmatprep.mubr.bf16.mxu0 0
  %1458 = vmatmul.mubr.bf16.gmra.mxu0 %v1221
  %v1459 = vpop.f32.mrf.mxu0
  %v1460 = vadd.f32 %v1331, %v1459
  %v1461 = vpop.f32.mrf.mxu0
  %v1462 = vpop.f32.mrf.mxu0
  %v1463 = vadd.f32 %v1334, %v1462
  %v1464 = vpop.f32.mrf.mxu0
  %1465 = vmatprep.mubr.bf16.mxu0 0
  %1466 = vmatmul.mubr.bf16.gmra.mxu0 %v1224
  %v1467 = vpop.f32.mrf.mxu0
  %v1468 = vadd.f32 %v1339, %v1467
  %v1469 = vpop.f32.mrf.mxu0
  %v1470 = vpop.f32.mrf.mxu0
  %v1471 = vadd.f32 %v1342, %v1470
  %v1472 = vpop.f32.mrf.mxu0
  %1473 = vmatprep.mubr.bf16.mxu0 0
  %1474 = vmatmul.mubr.bf16.gmra.mxu0 %v1227
  %v1475 = vpop.f32.mrf.mxu0
  %v1476 = vadd.f32 %v1347, %v1475
  %v1477 = vpop.f32.mrf.mxu0
  %v1478 = vpop.f32.mrf.mxu0
  %v1479 = vadd.f32 %v1350, %v1478
  %v1480 = vpop.f32.mrf.mxu0
  %1481 = vdwg.mxu0
  %v1484 = vunpack.c.l.b16 %v1142
  %v1485 = vunpack.c.l.b16 %v1143
  %v1486 = vpack.c.b16 %v1485, %v1484
  %v1488 = vsel %vm489, %v1486, 0
  %1490 = vmatprep.subr.bf16.mxu0 0
  %1491 = vmatpush1.bf16.msra.mxu0 0
  %1492 = vmatprep.subr.bf16.mxu0 0
  %1493 = vmatpush1.bf16.msra.mxu0 0
  %1494 = vmatprep.subr.bf16.mxu0 0
  %1495 = vmatpush1.bf16.msra.mxu0 0
  %1496 = vmatprep.subr.bf16.mxu0 0
  %1497 = vmatpush1.bf16.msra.mxu0 0
  %1498 = vmatprep.subr.bf16.mxu0 0
  %1499 = vmatpush1.bf16.msra.mxu0 0
  %1500 = vmatprep.subr.bf16.mxu0 0
  %1501 = vmatpush1.bf16.msra.mxu0 0
  %1502 = vmatprep.subr.bf16.mxu0 0
  %1503 = vmatpush1.bf16.msra.mxu0 0
  %1504 = vmatprep.subr.bf16.mxu0 0
  %1505 = vmatpush1.bf16.msra.mxu0 %v789
  %1506 = vmatprep.subr.bf16.mxu0 0
  %1507 = vmatpush2.bf16.msra.mxu0 0
  %1508 = vmatprep.subr.bf16.mxu0 0
  %1509 = vmatpush2.bf16.msra.mxu0 0
  %1510 = vmatprep.subr.bf16.mxu0 0
  %1511 = vmatpush2.bf16.msra.mxu0 0
  %1512 = vmatprep.subr.bf16.mxu0 0
  %1513 = vmatpush2.bf16.msra.mxu0 0
  %1514 = vmatprep.subr.bf16.mxu0 0
  %1515 = vmatpush2.bf16.msra.mxu0 0
  %1516 = vmatprep.subr.bf16.mxu0 0
  %1517 = vmatpush2.bf16.msra.mxu0 0
  %1518 = vmatprep.subr.bf16.mxu0 0
  %1519 = vmatpush2.bf16.msra.mxu0 0
  %1520 = vmatprep.subr.bf16.mxu0 0
  %1521 = vmatpush2.bf16.msra.mxu0 0
  %1522 = vmatprep.mubr.bf16.mxu0 0
  %1523 = vmatmul.mubr.bf16.gmra.mxu0 %v1203
  %v1524 = vpop.f32.mrf.mxu0
  %v1525 = vadd.f32 0.0, %v1524
  %v1526 = vpop.f32.mrf.mxu0
  %v1527 = vpop.f32.mrf.mxu0
  %v1528 = vadd.f32 0.0, %v1527
  %v1529 = vpop.f32.mrf.mxu0
  %1530 = vmatprep.mubr.bf16.mxu0 0
  %1531 = vmatmul.mubr.bf16.gmra.mxu0 %v1206
  %v1532 = vpop.f32.mrf.mxu0
  %v1533 = vadd.f32 0.0, %v1532
  %v1534 = vpop.f32.mrf.mxu0
  %v1535 = vpop.f32.mrf.mxu0
  %v1536 = vadd.f32 0.0, %v1535
  %v1537 = vpop.f32.mrf.mxu0
  %1538 = vmatprep.mubr.bf16.mxu0 0
  %1539 = vmatmul.mubr.bf16.gmra.mxu0 %v1209
  %v1540 = vpop.f32.mrf.mxu0
  %v1541 = vadd.f32 0.0, %v1540
  %v1542 = vpop.f32.mrf.mxu0
  %v1543 = vpop.f32.mrf.mxu0
  %v1544 = vadd.f32 0.0, %v1543
  %v1545 = vpop.f32.mrf.mxu0
  %1546 = vmatprep.mubr.bf16.mxu0 0
  %1547 = vmatmul.mubr.bf16.gmra.mxu0 %v1212
  %v1548 = vpop.f32.mrf.mxu0
  %v1549 = vadd.f32 0.0, %v1548
  %v1550 = vpop.f32.mrf.mxu0
  %v1551 = vpop.f32.mrf.mxu0
  %v1552 = vadd.f32 0.0, %v1551
  %v1553 = vpop.f32.mrf.mxu0
  %1554 = vmatprep.mubr.bf16.mxu0 0
  %1555 = vmatmul.mubr.bf16.gmra.mxu0 %v1215
  %v1556 = vpop.f32.mrf.mxu0
  %v1557 = vadd.f32 0.0, %v1556
  %v1558 = vpop.f32.mrf.mxu0
  %v1559 = vpop.f32.mrf.mxu0
  %v1560 = vadd.f32 0.0, %v1559
  %v1561 = vpop.f32.mrf.mxu0
  %1562 = vmatprep.mubr.bf16.mxu0 0
  %1563 = vmatmul.mubr.bf16.gmra.mxu0 %v1218
  %v1564 = vpop.f32.mrf.mxu0
  %v1565 = vadd.f32 0.0, %v1564
  %v1566 = vpop.f32.mrf.mxu0
  %v1567 = vpop.f32.mrf.mxu0
  %v1568 = vadd.f32 0.0, %v1567
  %v1569 = vpop.f32.mrf.mxu0
  %1570 = vmatprep.mubr.bf16.mxu0 0
  %1571 = vmatmul.mubr.bf16.gmra.mxu0 %v1221
  %v1572 = vpop.f32.mrf.mxu0
  %v1573 = vadd.f32 0.0, %v1572
  %v1574 = vpop.f32.mrf.mxu0
  %v1575 = vpop.f32.mrf.mxu0
  %v1576 = vadd.f32 0.0, %v1575
  %v1577 = vpop.f32.mrf.mxu0
  %1578 = vmatprep.mubr.bf16.mxu0 0
  %1579 = vmatmul.mubr.bf16.gmra.mxu0 %v1224
  %v1580 = vpop.f32.mrf.mxu0
  %v1581 = vadd.f32 0.0, %v1580
  %v1582 = vpop.f32.mrf.mxu0
  %v1583 = vpop.f32.mrf.mxu0
  %v1584 = vadd.f32 0.0, %v1583
  %v1585 = vpop.f32.mrf.mxu0
  %1586 = vmatprep.mubr.bf16.mxu0 0
  %1587 = vmatmul.mubr.bf16.gmra.mxu0 %v1227
  %v1588 = vpop.f32.mrf.mxu0
  %v1589 = vadd.f32 0.0, %v1588
  %v1590 = vpop.f32.mrf.mxu0
  %v1591 = vpop.f32.mrf.mxu0
  %v1592 = vadd.f32 0.0, %v1591
  %v1593 = vpop.f32.mrf.mxu0
  %1594 = vmatprep.mubr.bf16.mxu0 0
  %1595 = vmatmul.mubr.bf16.gmra.mxu0 %v1230
  %v1596 = vpop.f32.mrf.mxu0
  %v1597 = vadd.f32 0.0, %v1596
  %v1598 = vpop.f32.mrf.mxu0
  %v1599 = vpop.f32.mrf.mxu0
  %v1600 = vadd.f32 0.0, %v1599
  %v1601 = vpop.f32.mrf.mxu0
  %1602 = vmatprep.mubr.bf16.mxu0 0
  %1603 = vmatmul.mubr.bf16.gmra.mxu0 %v1488
  %v1604 = vpop.f32.mrf.mxu0
  %v1605 = vadd.f32 0.0, %v1604
  %v1606 = vpop.f32.mrf.mxu0
  %v1607 = vpop.f32.mrf.mxu0
  %v1608 = vadd.f32 0.0, %v1607
  %v1609 = vpop.f32.mrf.mxu0
  %1610 = vdwg.mxu0
  %v1611 = vadd.f32 %v1396, %v1525
  %v1612 = vadd.f32 %v1399, %v1528
  %v1613 = vadd.f32 %v1404, %v1533
  %v1614 = vadd.f32 %v1407, %v1536
  %v1615 = vadd.f32 %v1412, %v1541
  %v1616 = vadd.f32 %v1415, %v1544
  %v1617 = vadd.f32 %v1420, %v1549
  %v1618 = vadd.f32 %v1423, %v1552
  %v1619 = vadd.f32 %v1428, %v1557
  %v1620 = vadd.f32 %v1431, %v1560
  %v1621 = vadd.f32 %v1436, %v1565
  %v1622 = vadd.f32 %v1439, %v1568
  %v1623 = vadd.f32 %v1444, %v1573
  %v1624 = vadd.f32 %v1447, %v1576
  %v1625 = vadd.f32 %v1452, %v1581
  %v1626 = vadd.f32 %v1455, %v1584
  %v1627 = vadd.f32 %v1460, %v1589
  %v1628 = vadd.f32 %v1463, %v1592
  %v1629 = vadd.f32 %v1468, %v1597
  %v1630 = vadd.f32 %v1471, %v1600
  %v1631 = vadd.f32 %v1476, %v1605
  %v1632 = vadd.f32 %v1479, %v1608
  %v1633 = vadd.f32 %v1611, %v938
  %v1634 = vadd.f32 %v1612, %v938
  %v1635 = vadd.f32 %v1613, %v938
  %v1636 = vadd.f32 %v1614, %v938
  %v1637 = vadd.f32 %v1615, %v938
  %v1638 = vadd.f32 %v1616, %v938
  %v1639 = vadd.f32 %v1617, %v938
  %v1640 = vadd.f32 %v1618, %v938
  %v1641 = vadd.f32 %v1619, %v938
  %v1642 = vadd.f32 %v1620, %v938
  %v1643 = vadd.f32 %v1621, %v938
  %v1644 = vadd.f32 %v1622, %v938
  %v1645 = vadd.f32 %v1623, %v938
  %v1646 = vadd.f32 %v1624, %v938
  %v1647 = vadd.f32 %v1625, %v938
  %v1648 = vadd.f32 %v1626, %v938
  %v1649 = vadd.f32 %v1627, %v938
  %v1650 = vadd.f32 %v1628, %v938
  %v1651 = vadd.f32 %v1629, %v938
  %v1652 = vadd.f32 %v1630, %v938
  %v1653 = vadd.f32 %v1631, %v938
  %v1654 = vadd.f32 %v1632, %v938
  %v1655 = vmul.f32 %v1633, 0.1
  %v1656 = vmul.f32 %v1634, 0.1
  %v1657 = vmul.f32 %v1635, 0.1
  %v1658 = vmul.f32 %v1636, 0.1
  %v1659 = vmul.f32 %v1637, 0.1
  %v1660 = vmul.f32 %v1638, 0.1
  %v1661 = vmul.f32 %v1639, 0.1
  %v1662 = vmul.f32 %v1640, 0.1
  %v1663 = vmul.f32 %v1641, 0.1
  %v1664 = vmul.f32 %v1642, 0.1
  %v1665 = vmul.f32 %v1643, 0.1
  %v1666 = vmul.f32 %v1644, 0.1
  %v1667 = vmul.f32 %v1645, 0.1
  %v1668 = vmul.f32 %v1646, 0.1
  %v1669 = vmul.f32 %v1647, 0.1
  %v1670 = vmul.f32 %v1648, 0.1
  %v1671 = vmul.f32 %v1649, 0.1
  %v1672 = vmul.f32 %v1650, 0.1
  %v1673 = vmul.f32 %v1651, 0.1
  %v1674 = vmul.f32 %v1652, 0.1
  %v1675 = vmul.f32 %v1653, 0.1
  %v1676 = vmul.f32 %v1654, 0.1
  %v1677 = vmax.f32 %v1633, %v1655
  %v1678 = vmax.f32 %v1634, %v1656
  %v1679 = vmax.f32 %v1635, %v1657
  %v1680 = vmax.f32 %v1636, %v1658
  %v1681 = vmax.f32 %v1637, %v1659
  %v1682 = vmax.f32 %v1638, %v1660
  %v1683 = vmax.f32 %v1639, %v1661
  %v1684 = vmax.f32 %v1640, %v1662
  %v1685 = vmax.f32 %v1641, %v1663
  %v1686 = vmax.f32 %v1642, %v1664
  %v1687 = vmax.f32 %v1643, %v1665
  %v1688 = vmax.f32 %v1644, %v1666
  %v1689 = vmax.f32 %v1645, %v1667
  %v1690 = vmax.f32 %v1646, %v1668
  %v1691 = vmax.f32 %v1647, %v1669
  %v1692 = vmax.f32 %v1648, %v1670
  %v1693 = vmax.f32 %v1649, %v1671
  %v1694 = vmax.f32 %v1650, %v1672
  %v1695 = vmax.f32 %v1651, %v1673
  %v1696 = vmax.f32 %v1652, %v1674
  %v1697 = vmax.f32 %v1653, %v1675
  %v1698 = vmax.f32 %v1654, %v1676
  %v1699 = vpack.c.bf16 %v1678, %v1677
  %v1700 = vpack.c.bf16 %v1680, %v1679
  %v1701 = vpack.c.bf16 %v1682, %v1681
  %v1702 = vpack.c.bf16 %v1684, %v1683
  %v1703 = vpack.c.bf16 %v1686, %v1685
  %v1704 = vpack.c.bf16 %v1688, %v1687
  %v1705 = vpack.c.bf16 %v1690, %v1689
  %v1706 = vpack.c.bf16 %v1692, %v1691
  %v1707 = vpack.c.bf16 %v1694, %v1693
  %v1708 = vpack.c.bf16 %v1696, %v1695
  %v1709 = vpack.c.bf16 %v1698, %v1697
  %v1721 = vunpack.c.l.b16 %v1699
  %v1722 = vunpack.c.h.b16 %v1699
  %v1723 = vunpack.c.l.b16 %v1700
  %v1724 = vunpack.c.h.b16 %v1700
  %v1725 = vunpack.c.l.b16 %v1701
  %v1726 = vunpack.c.h.b16 %v1701
  %v1727 = vunpack.c.l.b16 %v1702
  %v1728 = vunpack.c.h.b16 %v1702
  %v1729 = vunpack.c.l.b16 %v1703
  %v1730 = vunpack.c.h.b16 %v1703
  %v1731 = vunpack.c.l.b16 %v1704
  %v1732 = vunpack.c.h.b16 %v1704
  %v1733 = vunpack.c.l.b16 %v1705
  %v1734 = vunpack.c.h.b16 %v1705
  %v1735 = vunpack.c.l.b16 %v1706
  %v1736 = vunpack.c.h.b16 %v1706
  %v1737 = vunpack.c.l.b16 %v1707
  %v1738 = vunpack.c.h.b16 %v1707
  %v1739 = vunpack.c.l.b16 %v1708
  %v1740 = vunpack.c.h.b16 %v1708
  %v1741 = vunpack.c.l.b16 %v1709
  %v1742 = vunpack.c.h.b16 %v1709
  %v1743 = vpack.c.b16 %v1721, %v1721
  %v1744 = vpack.c.b16 %v1722, %v1722
  %v1745 = vpack.c.b16 %v1723, %v1723
  %v1746 = vpack.c.b16 %v1724, %v1724
  %v1747 = vpack.c.b16 %v1725, %v1725
  %v1748 = vpack.c.b16 %v1726, %v1726
  %v1749 = vpack.c.b16 %v1727, %v1727
  %v1750 = vpack.c.b16 %v1728, %v1728
  %v1751 = vpack.c.b16 %v1729, %v1729
  %v1752 = vpack.c.b16 %v1730, %v1730
  %v1753 = vpack.c.b16 %v1731, %v1731
  %v1754 = vpack.c.b16 %v1732, %v1732
  %v1755 = vpack.c.b16 %v1733, %v1733
  %v1756 = vpack.c.b16 %v1734, %v1734
  %v1757 = vpack.c.b16 %v1735, %v1735
  %v1758 = vpack.c.b16 %v1736, %v1736
  %v1759 = vpack.c.b16 %v1737, %v1737
  %v1760 = vpack.c.b16 %v1738, %v1738
  %v1761 = vpack.c.b16 %v1739, %v1739
  %v1762 = vpack.c.b16 %v1740, %v1740
  %v1763 = vpack.c.b16 %v1741, %v1741
  %v1764 = vpack.c.b16 %v1742, %v1742
  %1787 = vst.msk [vmem:[%s1117 + $0x10] sm:$0xf] %vm1094, %v1743
  %1788 = vst.msk [vmem:[%s1117 + $0x18] sm:$0xf] %vm1094, %v1744
  %1789 = vst.msk [vmem:[%s1117 + $0x20] sm:$0xf] %vm1094, %v1745
  %1790 = vst.msk [vmem:[%s1117 + $0x28] sm:$0xf] %vm1094, %v1746
  %1791 = vst.msk [vmem:[%s1117 + $0x30] sm:$0xf] %vm1094, %v1747
  %1792 = vst.msk [vmem:[%s1117 + $0x38] sm:$0xf] %vm1094, %v1748
  %1793 = vst.msk [vmem:[%s1117 + $0x40] sm:$0xf] %vm1094, %v1749
  %1794 = vst.msk [vmem:[%s1117 + $0x48] sm:$0xf] %vm1094, %v1750
  %1795 = vst.msk [vmem:[%s1117 + $0x50] sm:$0xf] %vm1094, %v1751
  %1796 = vst.msk [vmem:[%s1117 + $0x58] sm:$0xf] %vm1094, %v1752
  %1797 = vst.msk [vmem:[%s1117 + $0x60] sm:$0xf] %vm1094, %v1753
  %1798 = vst.msk [vmem:[%s1117 + $0x68] sm:$0xf] %vm1094, %v1754
  %1799 = vst.msk [vmem:[%s1117 + $0x70] sm:$0xf] %vm1094, %v1755
  %1800 = vst.msk [vmem:[%s1117 + $0x78] sm:$0xf] %vm1094, %v1756
  %1801 = vst.msk [vmem:[%s1117 + $0x80] sm:$0xf] %vm1094, %v1757
  %1802 = vst.msk [vmem:[%s1117 + $0x88] sm:$0xf] %vm1094, %v1758
  %1803 = vst.msk [vmem:[%s1117 + $0x90] sm:$0xf] %vm1094, %v1759
  %1804 = vst.msk [vmem:[%s1117 + $0x98] sm:$0xf] %vm1094, %v1760
  %1805 = vst.msk [vmem:[%s1117 + $0xa0] sm:$0xf] %vm1094, %v1761
  %1806 = vst.msk [vmem:[%s1117 + $0xa8] sm:$0xf] %vm1094, %v1762
  %1807 = vst.msk [vmem:[%s1117 + $0xb0] sm:$0xf] %vm1094, %v1763
  %1808 = vst.msk [vmem:[%s1117 + $0xb8] sm:$0xf] %vm1094, %v1764
  %v1809 = vld [vmem:[%s11] sm:$0xf]
  %v1810 = vld [vmem:[%s11 + $0x4] sm:$0xf]
  %v1811 = vld [vmem:[%s11 + $0x8] sm:$0xf]
  %v1812 = vld [vmem:[%s11 + $0xc] sm:$0xf]
  %v1813 = vld [vmem:[%s11 + $0x10] sm:$0xf]
  %v1814 = vld [vmem:[%s11 + $0x14] sm:$0xf]
  %v1815 = vld [vmem:[%s11 + $0x18] sm:$0xf]
  %v1816 = vld [vmem:[%s11 + $0x1c] sm:$0xf]
  %v1817 = vld [vmem:[%s13] sm:$0xf]
  %v1818 = vld [vmem:[%s13 + $0x4] sm:$0xf]
  %v1819 = vld [vmem:[%s13 + $0x8] sm:$0xf]
  %v1820 = vld [vmem:[%s13 + $0xc] sm:$0xf]
  %v1821 = vld [vmem:[%s13 + $0x10] sm:$0xf]
  %v1822 = vld [vmem:[%s13 + $0x14] sm:$0xf]
  %v1823 = vld [vmem:[%s13 + $0x18] sm:$0xf]
  %v1824 = vld [vmem:[%s13 + $0x1c] sm:$0xf]
  %v1825 = vld [vmem:[%s15] sm:$0xf]
  %v1826 = vld [vmem:[%s15 + $0x4] sm:$0xf]
  %v1827 = vld [vmem:[%s15 + $0x8] sm:$0xf]
  %v1828 = vld [vmem:[%s15 + $0xc] sm:$0xf]
  %v1829 = vld [vmem:[%s15 + $0x10] sm:$0xf]
  %v1830 = vld [vmem:[%s15 + $0x14] sm:$0xf]
  %v1831 = vld [vmem:[%s15 + $0x18] sm:$0xf]
  %v1832 = vld [vmem:[%s15 + $0x1c] sm:$0xf]
  %v1833 = vld [vmem:[%s17] sm:$0x1]
  %v1834 = vld [vmem:[#allocation2] sm:$0xf]
  %v1835 = vld [vmem:[#allocation2 + $0x8] sm:$0xf]
  %v1836 = vld [vmem:[#allocation2 + $0x10] sm:$0xf]
  %v1837 = vld [vmem:[#allocation2 + $0x18] sm:$0xf]
  %v1838 = vld [vmem:[#allocation2 + $0x20] sm:$0xf]
  %v1839 = vld [vmem:[#allocation2 + $0x28] sm:$0xf]
  %v1840 = vld [vmem:[#allocation2 + $0x30] sm:$0xf]
  %v1841 = vld [vmem:[#allocation2 + $0x38] sm:$0xf]
  %v1842 = vld [vmem:[#allocation2 + $0x40] sm:$0xf]
  %v1843 = vld [vmem:[#allocation2 + $0x48] sm:$0xf]
  %v1844 = vld [vmem:[#allocation2 + $0x50] sm:$0xf]
  %v1845 = vld [vmem:[#allocation2 + $0x58] sm:$0xf]
  %v1846 = vld [vmem:[#allocation2 + $0x60] sm:$0xf]
  %v1847 = vld [vmem:[#allocation2 + $0x68] sm:$0xf]
  %v1848 = vld [vmem:[#allocation2 + $0x70] sm:$0xf]
  %v1849 = vld [vmem:[#allocation2 + $0x78] sm:$0xf]
  %v1850 = vld [vmem:[#allocation2 + $0x80] sm:$0xf]
  %v1851 = vld [vmem:[#allocation2 + $0x88] sm:$0xf]
  %v1852 = vld [vmem:[#allocation2 + $0x90] sm:$0xf]
  %v1853 = vld [vmem:[#allocation2 + $0x98] sm:$0xf]
  %v1854 = vld [vmem:[#allocation2 + $0xa0] sm:$0xf]
  %v1855 = vld [vmem:[#allocation2 + $0xa8] sm:$0xf]
  %v1856 = vld [vmem:[#allocation2 + $0xb0] sm:$0xf]
  %v1857 = vld [vmem:[#allocation2 + $0xb8] sm:$0xf]
  %v1858 = vld [vmem:[#allocation2 + $0xc0] sm:$0xf]
  %v1859 = vld [vmem:[#allocation2 + $0xc8] sm:$0xf]
  %v1882 = vunpack.c.l.b16 %v1836
  %v1883 = vunpack.c.l.b16 %v1837
  %v1884 = vunpack.c.l.b16 %v1838
  %v1885 = vunpack.c.l.b16 %v1839
  %v1886 = vunpack.c.l.b16 %v1840
  %v1887 = vunpack.c.l.b16 %v1841
  %v1888 = vunpack.c.l.b16 %v1842
  %v1889 = vunpack.c.l.b16 %v1843
  %v1890 = vunpack.c.l.b16 %v1844
  %v1891 = vunpack.c.l.b16 %v1845
  %v1892 = vunpack.c.l.b16 %v1846
  %v1893 = vunpack.c.l.b16 %v1847
  %v1894 = vunpack.c.l.b16 %v1848
  %v1895 = vunpack.c.l.b16 %v1849
  %v1896 = vunpack.c.l.b16 %v1850
  %v1897 = vunpack.c.l.b16 %v1851
  %v1898 = vunpack.c.l.b16 %v1852
  %v1899 = vunpack.c.l.b16 %v1853
  %v1900 = vunpack.c.l.b16 %v1854
  %v1901 = vunpack.c.l.b16 %v1855
  %v1902 = vunpack.c.l.b16 %v1856
  %v1903 = vunpack.c.l.b16 %v1857
  %v1904 = vpack.c.b16 %v1883, %v1882
  %v1905 = vpack.c.b16 %v1885, %v1884
  %v1906 = vpack.c.b16 %v1887, %v1886
  %v1907 = vpack.c.b16 %v1889, %v1888
  %v1908 = vpack.c.b16 %v1891, %v1890
  %v1909 = vpack.c.b16 %v1893, %v1892
  %v1910 = vpack.c.b16 %v1895, %v1894
  %v1911 = vpack.c.b16 %v1897, %v1896
  %v1912 = vpack.c.b16 %v1899, %v1898
  %v1913 = vpack.c.b16 %v1901, %v1900
  %v1914 = vpack.c.b16 %v1903, %v1902
  %v1923 = vunpack.c.l.b16 %v1817
  %v1924 = vunpack.c.l.b16 %v1818
  %v1925 = vunpack.c.l.b16 %v1819
  %v1926 = vunpack.c.l.b16 %v1820
  %v1927 = vunpack.c.l.b16 %v1821
  %v1928 = vunpack.c.l.b16 %v1822
  %v1929 = vunpack.c.l.b16 %v1823
  %v1930 = vunpack.c.l.b16 %v1824
  %v1931 = vpack.c.b16 %v1924, %v1923
  %v1932 = vpack.c.b16 %v1926, %v1925
  %v1933 = vpack.c.b16 %v1928, %v1927
  %v1934 = vpack.c.b16 %v1930, %v1929
  %vm1939 = vcmask 523264
  %v1941 = vsel %vm1939, %v1904, 0
  %v1944 = vsel %vm1939, %v1905, 0
  %v1947 = vsel %vm1939, %v1906, 0
  %v1950 = vsel %vm1939, %v1907, 0
  %v1953 = vsel %vm1939, %v1908, 0
  %v1956 = vsel %vm1939, %v1909, 0
  %v1959 = vsel %vm1939, %v1910, 0
  %v1962 = vsel %vm1939, %v1911, 0
  %v1965 = vsel %vm1939, %v1912, 0
  %v1968 = vsel %vm1939, %v1913, 0
  %v1971 = vsel %vm1939, %v1914, 0
  %1973 = vmatprep.subr.bf16.mxu0 0
  %1974 = vmatpush1.bf16.msra.mxu0 0
  %1975 = vmatprep.subr.bf16.mxu0 0
  %1976 = vmatpush1.bf16.msra.mxu0 0
  %1977 = vmatprep.subr.bf16.mxu0 0
  %1978 = vmatpush1.bf16.msra.mxu0 0
  %1979 = vmatprep.subr.bf16.mxu0 0
  %1980 = vmatpush1.bf16.msra.mxu0 0
  %1981 = vmatprep.subr.bf16.mxu0 0
  %1982 = vmatpush1.bf16.msra.mxu0 %v1934
  %1983 = vmatprep.subr.bf16.mxu0 0
  %1984 = vmatpush1.bf16.msra.mxu0 %v1933
  %1985 = vmatprep.subr.bf16.mxu0 0
  %1986 = vmatpush1.bf16.msra.mxu0 %v1932
  %1987 = vmatprep.subr.bf16.mxu0 0
  %1988 = vmatpush1.bf16.msra.mxu0 %v1931
  %1989 = vmatprep.subr.bf16.mxu0 0
  %1990 = vmatpush2.bf16.msra.mxu0 0
  %1991 = vmatprep.subr.bf16.mxu0 0
  %1992 = vmatpush2.bf16.msra.mxu0 0
  %1993 = vmatprep.subr.bf16.mxu0 0
  %1994 = vmatpush2.bf16.msra.mxu0 0
  %1995 = vmatprep.subr.bf16.mxu0 0
  %1996 = vmatpush2.bf16.msra.mxu0 0
  %1997 = vmatprep.subr.bf16.mxu0 0
  %1998 = vmatpush2.bf16.msra.mxu0 0
  %1999 = vmatprep.subr.bf16.mxu0 0
  %2000 = vmatpush2.bf16.msra.mxu0 0
  %2001 = vmatprep.subr.bf16.mxu0 0
  %2002 = vmatpush2.bf16.msra.mxu0 0
  %2003 = vmatprep.subr.bf16.mxu0 0
  %2004 = vmatpush2.bf16.msra.mxu0 0
  %2005 = vmatprep.mubr.bf16.mxu0 0
  %2006 = vmatmul.mubr.bf16.gmra.mxu0 %v1941
  %v2007 = vpop.f32.mrf.mxu0
  %v2008 = vadd.f32 0.0, %v2007
  %v2009 = vpop.f32.mrf.mxu0
  %v2010 = vpop.f32.mrf.mxu0
  %v2011 = vadd.f32 0.0, %v2010
  %v2012 = vpop.f32.mrf.mxu0
  %2013 = vmatprep.mubr.bf16.mxu0 0
  %2014 = vmatmul.mubr.bf16.gmra.mxu0 %v1944
  %v2015 = vpop.f32.mrf.mxu0
  %v2016 = vadd.f32 0.0, %v2015
  %v2017 = vpop.f32.mrf.mxu0
  %v2018 = vpop.f32.mrf.mxu0
  %v2019 = vadd.f32 0.0, %v2018
  %v2020 = vpop.f32.mrf.mxu0
  %2021 = vmatprep.mubr.bf16.mxu0 0
  %2022 = vmatmul.mubr.bf16.gmra.mxu0 %v1947
  %v2023 = vpop.f32.mrf.mxu0
  %v2024 = vadd.f32 0.0, %v2023
  %v2025 = vpop.f32.mrf.mxu0
  %v2026 = vpop.f32.mrf.mxu0
  %v2027 = vadd.f32 0.0, %v2026
  %v2028 = vpop.f32.mrf.mxu0
  %2029 = vmatprep.mubr.bf16.mxu0 0
  %2030 = vmatmul.mubr.bf16.gmra.mxu0 %v1950
  %v2031 = vpop.f32.mrf.mxu0
  %v2032 = vadd.f32 0.0, %v2031
  %v2033 = vpop.f32.mrf.mxu0
  %v2034 = vpop.f32.mrf.mxu0
  %v2035 = vadd.f32 0.0, %v2034
  %v2036 = vpop.f32.mrf.mxu0
  %2037 = vmatprep.mubr.bf16.mxu0 0
  %2038 = vmatmul.mubr.bf16.gmra.mxu0 %v1953
  %v2039 = vpop.f32.mrf.mxu0
  %v2040 = vadd.f32 0.0, %v2039
  %v2041 = vpop.f32.mrf.mxu0
  %v2042 = vpop.f32.mrf.mxu0
  %v2043 = vadd.f32 0.0, %v2042
  %v2044 = vpop.f32.mrf.mxu0
  %2045 = vmatprep.mubr.bf16.mxu0 0
  %2046 = vmatmul.mubr.bf16.gmra.mxu0 %v1956
  %v2047 = vpop.f32.mrf.mxu0
  %v2048 = vadd.f32 0.0, %v2047
  %v2049 = vpop.f32.mrf.mxu0
  %v2050 = vpop.f32.mrf.mxu0
  %v2051 = vadd.f32 0.0, %v2050
  %v2052 = vpop.f32.mrf.mxu0
  %2053 = vmatprep.mubr.bf16.mxu0 0
  %2054 = vmatmul.mubr.bf16.gmra.mxu0 %v1959
  %v2055 = vpop.f32.mrf.mxu0
  %v2056 = vadd.f32 0.0, %v2055
  %v2057 = vpop.f32.mrf.mxu0
  %v2058 = vpop.f32.mrf.mxu0
  %v2059 = vadd.f32 0.0, %v2058
  %v2060 = vpop.f32.mrf.mxu0
  %2061 = vmatprep.mubr.bf16.mxu0 0
  %2062 = vmatmul.mubr.bf16.gmra.mxu0 %v1962
  %v2063 = vpop.f32.mrf.mxu0
  %v2064 = vadd.f32 0.0, %v2063
  %v2065 = vpop.f32.mrf.mxu0
  %v2066 = vpop.f32.mrf.mxu0
  %v2067 = vadd.f32 0.0, %v2066
  %v2068 = vpop.f32.mrf.mxu0
  %2069 = vmatprep.mubr.bf16.mxu0 0
  %2070 = vmatmul.mubr.bf16.gmra.mxu0 %v1965
  %v2071 = vpop.f32.mrf.mxu0
  %v2072 = vadd.f32 0.0, %v2071
  %v2073 = vpop.f32.mrf.mxu0
  %v2074 = vpop.f32.mrf.mxu0
  %v2075 = vadd.f32 0.0, %v2074
  %v2076 = vpop.f32.mrf.mxu0
  %2077 = vmatprep.mubr.bf16.mxu0 0
  %2078 = vmatmul.mubr.bf16.gmra.mxu0 %v1968
  %v2079 = vpop.f32.mrf.mxu0
  %v2080 = vadd.f32 0.0, %v2079
  %v2081 = vpop.f32.mrf.mxu0
  %v2082 = vpop.f32.mrf.mxu0
  %v2083 = vadd.f32 0.0, %v2082
  %v2084 = vpop.f32.mrf.mxu0
  %2085 = vmatprep.mubr.bf16.mxu0 0
  %2086 = vmatmul.mubr.bf16.gmra.mxu0 %v1971
  %v2087 = vpop.f32.mrf.mxu0
  %v2088 = vadd.f32 0.0, %v2087
  %v2089 = vpop.f32.mrf.mxu0
  %v2090 = vpop.f32.mrf.mxu0
  %v2091 = vadd.f32 0.0, %v2090
  %v2092 = vpop.f32.mrf.mxu0
  %2093 = vdwg.mxu0
  %v2096 = vunpack.c.l.b16 %v1834
  %v2097 = vunpack.c.l.b16 %v1835
  %v2098 = vpack.c.b16 %v2097, %v2096
  %v2107 = vunpack.c.l.b16 %v1809
  %v2108 = vunpack.c.l.b16 %v1810
  %v2109 = vunpack.c.l.b16 %v1811
  %v2110 = vunpack.c.l.b16 %v1812
  %v2111 = vunpack.c.l.b16 %v1813
  %v2112 = vunpack.c.l.b16 %v1814
  %v2113 = vunpack.c.l.b16 %v1815
  %v2114 = vunpack.c.l.b16 %v1816
  %v2115 = vpack.c.b16 %v2108, %v2107
  %v2116 = vpack.c.b16 %v2110, %v2109
  %v2117 = vpack.c.b16 %v2112, %v2111
  %v2118 = vpack.c.b16 %v2114, %v2113
  %v2124 = vsel %vm1939, %v2098, 0
  %2126 = vmatprep.subr.bf16.mxu0 0
  %2127 = vmatpush1.bf16.msra.mxu0 0
  %2128 = vmatprep.subr.bf16.mxu0 0
  %2129 = vmatpush1.bf16.msra.mxu0 0
  %2130 = vmatprep.subr.bf16.mxu0 0
  %2131 = vmatpush1.bf16.msra.mxu0 0
  %2132 = vmatprep.subr.bf16.mxu0 0
  %2133 = vmatpush1.bf16.msra.mxu0 0
  %2134 = vmatprep.subr.bf16.mxu0 0
  %2135 = vmatpush1.bf16.msra.mxu0 %v2118
  %2136 = vmatprep.subr.bf16.mxu0 0
  %2137 = vmatpush1.bf16.msra.mxu0 %v2117
  %2138 = vmatprep.subr.bf16.mxu0 0
  %2139 = vmatpush1.bf16.msra.mxu0 %v2116
  %2140 = vmatprep.subr.bf16.mxu0 0
  %2141 = vmatpush1.bf16.msra.mxu0 %v2115
  %2142 = vmatprep.subr.bf16.mxu0 0
  %2143 = vmatpush2.bf16.msra.mxu0 0
  %2144 = vmatprep.subr.bf16.mxu0 0
  %2145 = vmatpush2.bf16.msra.mxu0 0
  %2146 = vmatprep.subr.bf16.mxu0 0
  %2147 = vmatpush2.bf16.msra.mxu0 0
  %2148 = vmatprep.subr.bf16.mxu0 0
  %2149 = vmatpush2.bf16.msra.mxu0 0
  %2150 = vmatprep.subr.bf16.mxu0 0
  %2151 = vmatpush2.bf16.msra.mxu0 0
  %2152 = vmatprep.subr.bf16.mxu0 0
  %2153 = vmatpush2.bf16.msra.mxu0 0
  %2154 = vmatprep.subr.bf16.mxu0 0
  %2155 = vmatpush2.bf16.msra.mxu0 0
  %2156 = vmatprep.subr.bf16.mxu0 0
  %2157 = vmatpush2.bf16.msra.mxu0 0
  %2158 = vmatprep.mubr.bf16.mxu0 0
  %2159 = vmatmul.mubr.bf16.gmra.mxu0 %v2124
  %v2160 = vpop.f32.mrf.mxu0
  %v2161 = vadd.f32 %v2008, %v2160
  %v2162 = vpop.f32.mrf.mxu0
  %v2163 = vpop.f32.mrf.mxu0
  %v2164 = vadd.f32 %v2011, %v2163
  %v2165 = vpop.f32.mrf.mxu0
  %2166 = vmatprep.mubr.bf16.mxu0 0
  %2167 = vmatmul.mubr.bf16.gmra.mxu0 %v1941
  %v2168 = vpop.f32.mrf.mxu0
  %v2169 = vadd.f32 %v2016, %v2168
  %v2170 = vpop.f32.mrf.mxu0
  %v2171 = vpop.f32.mrf.mxu0
  %v2172 = vadd.f32 %v2019, %v2171
  %v2173 = vpop.f32.mrf.mxu0
  %2174 = vmatprep.mubr.bf16.mxu0 0
  %2175 = vmatmul.mubr.bf16.gmra.mxu0 %v1944
  %v2176 = vpop.f32.mrf.mxu0
  %v2177 = vadd.f32 %v2024, %v2176
  %v2178 = vpop.f32.mrf.mxu0
  %v2179 = vpop.f32.mrf.mxu0
  %v2180 = vadd.f32 %v2027, %v2179
  %v2181 = vpop.f32.mrf.mxu0
  %2182 = vmatprep.mubr.bf16.mxu0 0
  %2183 = vmatmul.mubr.bf16.gmra.mxu0 %v1947
  %v2184 = vpop.f32.mrf.mxu0
  %v2185 = vadd.f32 %v2032, %v2184
  %v2186 = vpop.f32.mrf.mxu0
  %v2187 = vpop.f32.mrf.mxu0
  %v2188 = vadd.f32 %v2035, %v2187
  %v2189 = vpop.f32.mrf.mxu0
  %2190 = vmatprep.mubr.bf16.mxu0 0
  %2191 = vmatmul.mubr.bf16.gmra.mxu0 %v1950
  %v2192 = vpop.f32.mrf.mxu0
  %v2193 = vadd.f32 %v2040, %v2192
  %v2194 = vpop.f32.mrf.mxu0
  %v2195 = vpop.f32.mrf.mxu0
  %v2196 = vadd.f32 %v2043, %v2195
  %v2197 = vpop.f32.mrf.mxu0
  %2198 = vmatprep.mubr.bf16.mxu0 0
  %2199 = vmatmul.mubr.bf16.gmra.mxu0 %v1953
  %v2200 = vpop.f32.mrf.mxu0
  %v2201 = vadd.f32 %v2048, %v2200
  %v2202 = vpop.f32.mrf.mxu0
  %v2203 = vpop.f32.mrf.mxu0
  %v2204 = vadd.f32 %v2051, %v2203
  %v2205 = vpop.f32.mrf.mxu0
  %2206 = vmatprep.mubr.bf16.mxu0 0
  %2207 = vmatmul.mubr.bf16.gmra.mxu0 %v1956
  %v2208 = vpop.f32.mrf.mxu0
  %v2209 = vadd.f32 %v2056, %v2208
  %v2210 = vpop.f32.mrf.mxu0
  %v2211 = vpop.f32.mrf.mxu0
  %v2212 = vadd.f32 %v2059, %v2211
  %v2213 = vpop.f32.mrf.mxu0
  %2214 = vmatprep.mubr.bf16.mxu0 0
  %2215 = vmatmul.mubr.bf16.gmra.mxu0 %v1959
  %v2216 = vpop.f32.mrf.mxu0
  %v2217 = vadd.f32 %v2064, %v2216
  %v2218 = vpop.f32.mrf.mxu0
  %v2219 = vpop.f32.mrf.mxu0
  %v2220 = vadd.f32 %v2067, %v2219
  %v2221 = vpop.f32.mrf.mxu0
  %2222 = vmatprep.mubr.bf16.mxu0 0
  %2223 = vmatmul.mubr.bf16.gmra.mxu0 %v1962
  %v2224 = vpop.f32.mrf.mxu0
  %v2225 = vadd.f32 %v2072, %v2224
  %v2226 = vpop.f32.mrf.mxu0
  %v2227 = vpop.f32.mrf.mxu0
  %v2228 = vadd.f32 %v2075, %v2227
  %v2229 = vpop.f32.mrf.mxu0
  %2230 = vmatprep.mubr.bf16.mxu0 0
  %2231 = vmatmul.mubr.bf16.gmra.mxu0 %v1965
  %v2232 = vpop.f32.mrf.mxu0
  %v2233 = vadd.f32 %v2080, %v2232
  %v2234 = vpop.f32.mrf.mxu0
  %v2235 = vpop.f32.mrf.mxu0
  %v2236 = vadd.f32 %v2083, %v2235
  %v2237 = vpop.f32.mrf.mxu0
  %2238 = vmatprep.mubr.bf16.mxu0 0
  %2239 = vmatmul.mubr.bf16.gmra.mxu0 %v1968
  %v2240 = vpop.f32.mrf.mxu0
  %v2241 = vadd.f32 %v2088, %v2240
  %v2242 = vpop.f32.mrf.mxu0
  %v2243 = vpop.f32.mrf.mxu0
  %v2244 = vadd.f32 %v2091, %v2243
  %v2245 = vpop.f32.mrf.mxu0
  %2246 = vdwg.mxu0
  %v2249 = vunpack.c.l.b16 %v1858
  %v2250 = vunpack.c.l.b16 %v1859
  %v2251 = vpack.c.b16 %v2250, %v2249
  %v2260 = vunpack.c.l.b16 %v1825
  %v2261 = vunpack.c.l.b16 %v1826
  %v2262 = vunpack.c.l.b16 %v1827
  %v2263 = vunpack.c.l.b16 %v1828
  %v2264 = vunpack.c.l.b16 %v1829
  %v2265 = vunpack.c.l.b16 %v1830
  %v2266 = vunpack.c.l.b16 %v1831
  %v2267 = vunpack.c.l.b16 %v1832
  %v2268 = vpack.c.b16 %v2261, %v2260
  %v2269 = vpack.c.b16 %v2263, %v2262
  %v2270 = vpack.c.b16 %v2265, %v2264
  %v2271 = vpack.c.b16 %v2267, %v2266
  %v2277 = vsel %vm1939, %v2251, 0
  %2279 = vmatprep.subr.bf16.mxu0 0
  %2280 = vmatpush1.bf16.msra.mxu0 0
  %2281 = vmatprep.subr.bf16.mxu0 0
  %2282 = vmatpush1.bf16.msra.mxu0 0
  %2283 = vmatprep.subr.bf16.mxu0 0
  %2284 = vmatpush1.bf16.msra.mxu0 0
  %2285 = vmatprep.subr.bf16.mxu0 0
  %2286 = vmatpush1.bf16.msra.mxu0 0
  %2287 = vmatprep.subr.bf16.mxu0 0
  %2288 = vmatpush1.bf16.msra.mxu0 %v2271
  %2289 = vmatprep.subr.bf16.mxu0 0
  %2290 = vmatpush1.bf16.msra.mxu0 %v2270
  %2291 = vmatprep.subr.bf16.mxu0 0
  %2292 = vmatpush1.bf16.msra.mxu0 %v2269
  %2293 = vmatprep.subr.bf16.mxu0 0
  %2294 = vmatpush1.bf16.msra.mxu0 %v2268
  %2295 = vmatprep.subr.bf16.mxu0 0
  %2296 = vmatpush2.bf16.msra.mxu0 0
  %2297 = vmatprep.subr.bf16.mxu0 0
  %2298 = vmatpush2.bf16.msra.mxu0 0
  %2299 = vmatprep.subr.bf16.mxu0 0
  %2300 = vmatpush2.bf16.msra.mxu0 0
  %2301 = vmatprep.subr.bf16.mxu0 0
  %2302 = vmatpush2.bf16.msra.mxu0 0
  %2303 = vmatprep.subr.bf16.mxu0 0
  %2304 = vmatpush2.bf16.msra.mxu0 0
  %2305 = vmatprep.subr.bf16.mxu0 0
  %2306 = vmatpush2.bf16.msra.mxu0 0
  %2307 = vmatprep.subr.bf16.mxu0 0
  %2308 = vmatpush2.bf16.msra.mxu0 0
  %2309 = vmatprep.subr.bf16.mxu0 0
  %2310 = vmatpush2.bf16.msra.mxu0 0
  %2311 = vmatprep.mubr.bf16.mxu0 0
  %2312 = vmatmul.mubr.bf16.gmra.mxu0 %v1944
  %v2313 = vpop.f32.mrf.mxu0
  %v2314 = vadd.f32 0.0, %v2313
  %v2315 = vpop.f32.mrf.mxu0
  %v2316 = vpop.f32.mrf.mxu0
  %v2317 = vadd.f32 0.0, %v2316
  %v2318 = vpop.f32.mrf.mxu0
  %2319 = vmatprep.mubr.bf16.mxu0 0
  %2320 = vmatmul.mubr.bf16.gmra.mxu0 %v1947
  %v2321 = vpop.f32.mrf.mxu0
  %v2322 = vadd.f32 0.0, %v2321
  %v2323 = vpop.f32.mrf.mxu0
  %v2324 = vpop.f32.mrf.mxu0
  %v2325 = vadd.f32 0.0, %v2324
  %v2326 = vpop.f32.mrf.mxu0
  %2327 = vmatprep.mubr.bf16.mxu0 0
  %2328 = vmatmul.mubr.bf16.gmra.mxu0 %v1950
  %v2329 = vpop.f32.mrf.mxu0
  %v2330 = vadd.f32 0.0, %v2329
  %v2331 = vpop.f32.mrf.mxu0
  %v2332 = vpop.f32.mrf.mxu0
  %v2333 = vadd.f32 0.0, %v2332
  %v2334 = vpop.f32.mrf.mxu0
  %2335 = vmatprep.mubr.bf16.mxu0 0
  %2336 = vmatmul.mubr.bf16.gmra.mxu0 %v1953
  %v2337 = vpop.f32.mrf.mxu0
  %v2338 = vadd.f32 0.0, %v2337
  %v2339 = vpop.f32.mrf.mxu0
  %v2340 = vpop.f32.mrf.mxu0
  %v2341 = vadd.f32 0.0, %v2340
  %v2342 = vpop.f32.mrf.mxu0
  %2343 = vmatprep.mubr.bf16.mxu0 0
  %2344 = vmatmul.mubr.bf16.gmra.mxu0 %v1956
  %v2345 = vpop.f32.mrf.mxu0
  %v2346 = vadd.f32 0.0, %v2345
  %v2347 = vpop.f32.mrf.mxu0
  %v2348 = vpop.f32.mrf.mxu0
  %v2349 = vadd.f32 0.0, %v2348
  %v2350 = vpop.f32.mrf.mxu0
  %2351 = vmatprep.mubr.bf16.mxu0 0
  %2352 = vmatmul.mubr.bf16.gmra.mxu0 %v1959
  %v2353 = vpop.f32.mrf.mxu0
  %v2354 = vadd.f32 0.0, %v2353
  %v2355 = vpop.f32.mrf.mxu0
  %v2356 = vpop.f32.mrf.mxu0
  %v2357 = vadd.f32 0.0, %v2356
  %v2358 = vpop.f32.mrf.mxu0
  %2359 = vmatprep.mubr.bf16.mxu0 0
  %2360 = vmatmul.mubr.bf16.gmra.mxu0 %v1962
  %v2361 = vpop.f32.mrf.mxu0
  %v2362 = vadd.f32 0.0, %v2361
  %v2363 = vpop.f32.mrf.mxu0
  %v2364 = vpop.f32.mrf.mxu0
  %v2365 = vadd.f32 0.0, %v2364
  %v2366 = vpop.f32.mrf.mxu0
  %2367 = vmatprep.mubr.bf16.mxu0 0
  %2368 = vmatmul.mubr.bf16.gmra.mxu0 %v1965
  %v2369 = vpop.f32.mrf.mxu0
  %v2370 = vadd.f32 0.0, %v2369
  %v2371 = vpop.f32.mrf.mxu0
  %v2372 = vpop.f32.mrf.mxu0
  %v2373 = vadd.f32 0.0, %v2372
  %v2374 = vpop.f32.mrf.mxu0
  %2375 = vmatprep.mubr.bf16.mxu0 0
  %2376 = vmatmul.mubr.bf16.gmra.mxu0 %v1968
  %v2377 = vpop.f32.mrf.mxu0
  %v2378 = vadd.f32 0.0, %v2377
  %v2379 = vpop.f32.mrf.mxu0
  %v2380 = vpop.f32.mrf.mxu0
  %v2381 = vadd.f32 0.0, %v2380
  %v2382 = vpop.f32.mrf.mxu0
  %2383 = vmatprep.mubr.bf16.mxu0 0
  %2384 = vmatmul.mubr.bf16.gmra.mxu0 %v1971
  %v2385 = vpop.f32.mrf.mxu0
  %v2386 = vadd.f32 0.0, %v2385
  %v2387 = vpop.f32.mrf.mxu0
  %v2388 = vpop.f32.mrf.mxu0
  %v2389 = vadd.f32 0.0, %v2388
  %v2390 = vpop.f32.mrf.mxu0
  %2391 = vmatprep.mubr.bf16.mxu0 0
  %2392 = vmatmul.mubr.bf16.gmra.mxu0 %v2277
  %v2393 = vpop.f32.mrf.mxu0
  %v2394 = vadd.f32 0.0, %v2393
  %v2395 = vpop.f32.mrf.mxu0
  %v2396 = vpop.f32.mrf.mxu0
  %v2397 = vadd.f32 0.0, %v2396
  %v2398 = vpop.f32.mrf.mxu0
  %2399 = vdwg.mxu0
  %v2400 = vadd.f32 %v2161, %v2314
  %v2401 = vadd.f32 %v2164, %v2317
  %v2402 = vadd.f32 %v2169, %v2322
  %v2403 = vadd.f32 %v2172, %v2325
  %v2404 = vadd.f32 %v2177, %v2330
  %v2405 = vadd.f32 %v2180, %v2333
  %v2406 = vadd.f32 %v2185, %v2338
  %v2407 = vadd.f32 %v2188, %v2341
  %v2408 = vadd.f32 %v2193, %v2346
  %v2409 = vadd.f32 %v2196, %v2349
  %v2410 = vadd.f32 %v2201, %v2354
  %v2411 = vadd.f32 %v2204, %v2357
  %v2412 = vadd.f32 %v2209, %v2362
  %v2413 = vadd.f32 %v2212, %v2365
  %v2414 = vadd.f32 %v2217, %v2370
  %v2415 = vadd.f32 %v2220, %v2373
  %v2416 = vadd.f32 %v2225, %v2378
  %v2417 = vadd.f32 %v2228, %v2381
  %v2418 = vadd.f32 %v2233, %v2386
  %v2419 = vadd.f32 %v2236, %v2389
  %v2420 = vadd.f32 %v2241, %v2394
  %v2421 = vadd.f32 %v2244, %v2397
  %v2423 = vlaneseq
  %v2424 = vshrl.u32 %v2423, 7
  %v2425 = vsub.s32 0, %v2424
  %v2426 = vrot.slane %v1833, %v2425
  %v2428 = vadd.f32 %v2400, %v2426
  %v2429 = vadd.f32 %v2401, %v2426
  %v2430 = vadd.f32 %v2402, %v2426
  %v2431 = vadd.f32 %v2403, %v2426
  %v2432 = vadd.f32 %v2404, %v2426
  %v2433 = vadd.f32 %v2405, %v2426
  %v2434 = vadd.f32 %v2406, %v2426
  %v2435 = vadd.f32 %v2407, %v2426
  %v2436 = vadd.f32 %v2408, %v2426
  %v2437 = vadd.f32 %v2409, %v2426
  %v2438 = vadd.f32 %v2410, %v2426
  %v2439 = vadd.f32 %v2411, %v2426
  %v2440 = vadd.f32 %v2412, %v2426
  %v2441 = vadd.f32 %v2413, %v2426
  %v2442 = vadd.f32 %v2414, %v2426
  %v2443 = vadd.f32 %v2415, %v2426
  %v2444 = vadd.f32 %v2416, %v2426
  %v2445 = vadd.f32 %v2417, %v2426
  %v2446 = vadd.f32 %v2418, %v2426
  %v2447 = vadd.f32 %v2419, %v2426
  %v2448 = vadd.f32 %v2420, %v2426
  %v2449 = vadd.f32 %v2421, %v2426
  %v2450 = vmul.f32 %v2428, 0.1
  %v2451 = vmul.f32 %v2429, 0.1
  %v2452 = vmul.f32 %v2430, 0.1
  %v2453 = vmul.f32 %v2431, 0.1
  %v2454 = vmul.f32 %v2432, 0.1
  %v2455 = vmul.f32 %v2433, 0.1
  %v2456 = vmul.f32 %v2434, 0.1
  %v2457 = vmul.f32 %v2435, 0.1
  %v2458 = vmul.f32 %v2436, 0.1
  %v2459 = vmul.f32 %v2437, 0.1
  %v2460 = vmul.f32 %v2438, 0.1
  %v2461 = vmul.f32 %v2439, 0.1
  %v2462 = vmul.f32 %v2440, 0.1
  %v2463 = vmul.f32 %v2441, 0.1
  %v2464 = vmul.f32 %v2442, 0.1
  %v2465 = vmul.f32 %v2443, 0.1
  %v2466 = vmul.f32 %v2444, 0.1
  %v2467 = vmul.f32 %v2445, 0.1
  %v2468 = vmul.f32 %v2446, 0.1
  %v2469 = vmul.f32 %v2447, 0.1
  %v2470 = vmul.f32 %v2448, 0.1
  %v2471 = vmul.f32 %v2449, 0.1
  %v2472 = vmax.f32 %v2428, %v2450
  %v2473 = vmax.f32 %v2429, %v2451
  %v2474 = vmax.f32 %v2430, %v2452
  %v2475 = vmax.f32 %v2431, %v2453
  %v2476 = vmax.f32 %v2432, %v2454
  %v2477 = vmax.f32 %v2433, %v2455
  %v2478 = vmax.f32 %v2434, %v2456
  %v2479 = vmax.f32 %v2435, %v2457
  %v2480 = vmax.f32 %v2436, %v2458
  %v2481 = vmax.f32 %v2437, %v2459
  %v2482 = vmax.f32 %v2438, %v2460
  %v2483 = vmax.f32 %v2439, %v2461
  %v2484 = vmax.f32 %v2440, %v2462
  %v2485 = vmax.f32 %v2441, %v2463
  %v2486 = vmax.f32 %v2442, %v2464
  %v2487 = vmax.f32 %v2443, %v2465
  %v2488 = vmax.f32 %v2444, %v2466
  %v2489 = vmax.f32 %v2445, %v2467
  %v2490 = vmax.f32 %v2446, %v2468
  %v2491 = vmax.f32 %v2447, %v2469
  %v2492 = vmax.f32 %v2448, %v2470
  %v2493 = vmax.f32 %v2449, %v2471
  %v2494 = vpack.c.bf16 %v2473, %v2472
  %v2495 = vpack.c.bf16 %v2475, %v2474
  %v2496 = vpack.c.bf16 %v2477, %v2476
  %v2497 = vpack.c.bf16 %v2479, %v2478
  %v2498 = vpack.c.bf16 %v2481, %v2480
  %v2499 = vpack.c.bf16 %v2483, %v2482
  %v2500 = vpack.c.bf16 %v2485, %v2484
  %v2501 = vpack.c.bf16 %v2487, %v2486
  %v2502 = vpack.c.bf16 %v2489, %v2488
  %v2503 = vpack.c.bf16 %v2491, %v2490
  %v2504 = vpack.c.bf16 %v2493, %v2492
  %v2516 = vunpack.c.l.b16 %v2494
  %v2517 = vunpack.c.h.b16 %v2494
  %v2518 = vunpack.c.l.b16 %v2495
  %v2519 = vunpack.c.h.b16 %v2495
  %v2520 = vunpack.c.l.b16 %v2496
  %v2521 = vunpack.c.h.b16 %v2496
  %v2522 = vunpack.c.l.b16 %v2497
  %v2523 = vunpack.c.h.b16 %v2497
  %v2524 = vunpack.c.l.b16 %v2498
  %v2525 = vunpack.c.h.b16 %v2498
  %v2526 = vunpack.c.l.b16 %v2499
  %v2527 = vunpack.c.h.b16 %v2499
  %v2528 = vunpack.c.l.b16 %v2500
  %v2529 = vunpack.c.h.b16 %v2500
  %v2530 = vunpack.c.l.b16 %v2501
  %v2531 = vunpack.c.h.b16 %v2501
  %v2532 = vunpack.c.l.b16 %v2502
  %v2533 = vunpack.c.h.b16 %v2502
  %v2534 = vunpack.c.l.b16 %v2503
  %v2535 = vunpack.c.h.b16 %v2503
  %v2536 = vunpack.c.l.b16 %v2504
  %v2537 = vunpack.c.h.b16 %v2504
  %v2538 = vpack.c.b16 %v2516, %v2516
  %v2539 = vpack.c.b16 %v2517, %v2517
  %v2540 = vpack.c.b16 %v2518, %v2518
  %v2541 = vpack.c.b16 %v2519, %v2519
  %v2542 = vpack.c.b16 %v2520, %v2520
  %v2543 = vpack.c.b16 %v2521, %v2521
  %v2544 = vpack.c.b16 %v2522, %v2522
  %v2545 = vpack.c.b16 %v2523, %v2523
  %v2546 = vpack.c.b16 %v2524, %v2524
  %v2547 = vpack.c.b16 %v2525, %v2525
  %v2548 = vpack.c.b16 %v2526, %v2526
  %v2549 = vpack.c.b16 %v2527, %v2527
  %v2550 = vpack.c.b16 %v2528, %v2528
  %v2551 = vpack.c.b16 %v2529, %v2529
  %v2552 = vpack.c.b16 %v2530, %v2530
  %v2553 = vpack.c.b16 %v2531, %v2531
  %v2554 = vpack.c.b16 %v2532, %v2532
  %v2555 = vpack.c.b16 %v2533, %v2533
  %v2556 = vpack.c.b16 %v2534, %v2534
  %v2557 = vpack.c.b16 %v2535, %v2535
  %v2558 = vpack.c.b16 %v2536, %v2536
  %v2559 = vpack.c.b16 %v2537, %v2537
  %2582 = vst [vmem:[#allocation2 + $0x10] sm:$0xf] %v2538
  %2583 = vst [vmem:[#allocation2 + $0x18] sm:$0xf] %v2539
  %2584 = vst [vmem:[#allocation2 + $0x20] sm:$0xf] %v2540
  %2585 = vst [vmem:[#allocation2 + $0x28] sm:$0xf] %v2541
  %2586 = vst [vmem:[#allocation2 + $0x30] sm:$0xf] %v2542
  %2587 = vst [vmem:[#allocation2 + $0x38] sm:$0xf] %v2543
  %2588 = vst [vmem:[#allocation2 + $0x40] sm:$0xf] %v2544
  %2589 = vst [vmem:[#allocation2 + $0x48] sm:$0xf] %v2545
  %2590 = vst [vmem:[#allocation2 + $0x50] sm:$0xf] %v2546
  %2591 = vst [vmem:[#allocation2 + $0x58] sm:$0xf] %v2547
  %2592 = vst [vmem:[#allocation2 + $0x60] sm:$0xf] %v2548
  %2593 = vst [vmem:[#allocation2 + $0x68] sm:$0xf] %v2549
  %2594 = vst [vmem:[#allocation2 + $0x70] sm:$0xf] %v2550
  %2595 = vst [vmem:[#allocation2 + $0x78] sm:$0xf] %v2551
  %2596 = vst [vmem:[#allocation2 + $0x80] sm:$0xf] %v2552
  %2597 = vst [vmem:[#allocation2 + $0x88] sm:$0xf] %v2553
  %2598 = vst [vmem:[#allocation2 + $0x90] sm:$0xf] %v2554
  %2599 = vst [vmem:[#allocation2 + $0x98] sm:$0xf] %v2555
  %2600 = vst [vmem:[#allocation2 + $0xa0] sm:$0xf] %v2556
  %2601 = vst [vmem:[#allocation2 + $0xa8] sm:$0xf] %v2557
  %2602 = vst [vmem:[#allocation2 + $0xb0] sm:$0xf] %v2558
  %2603 = vst [vmem:[#allocation2 + $0xb8] sm:$0xf] %v2559
  %v2604 = vld [vmem:[%s1117] sm:$0xf]
  %v2605 = vld [vmem:[%s1117 + $0x8] sm:$0xf]
  %v2606 = vld [vmem:[%s1117 + $0x10] sm:$0xf]
  %v2607 = vld [vmem:[%s1117 + $0x18] sm:$0xf]
  %v2608 = vld [vmem:[%s1117 + $0x20] sm:$0xf]
  %v2609 = vld [vmem:[%s1117 + $0x28] sm:$0xf]
  %v2610 = vld [vmem:[%s1117 + $0x30] sm:$0xf]
  %v2611 = vld [vmem:[%s1117 + $0x38] sm:$0xf]
  %v2612 = vld [vmem:[%s1117 + $0x40] sm:$0xf]
  %v2613 = vld [vmem:[%s1117 + $0x48] sm:$0xf]
  %v2614 = vld [vmem:[%s1117 + $0x50] sm:$0xf]
  %v2615 = vld [vmem:[%s1117 + $0x58] sm:$0xf]
  %v2616 = vld [vmem:[%s1117 + $0x60] sm:$0xf]
  %v2617 = vld [vmem:[%s1117 + $0x68] sm:$0xf]
  %v2618 = vld [vmem:[%s1117 + $0x70] sm:$0xf]
  %v2619 = vld [vmem:[%s1117 + $0x78] sm:$0xf]
  %v2620 = vld [vmem:[%s1117 + $0x80] sm:$0xf]
  %v2621 = vld [vmem:[%s1117 + $0x88] sm:$0xf]
  %v2622 = vld [vmem:[%s1117 + $0x90] sm:$0xf]
  %v2623 = vld [vmem:[%s1117 + $0x98] sm:$0xf]
  %v2624 = vld [vmem:[%s1117 + $0xa0] sm:$0xf]
  %v2625 = vld [vmem:[%s1117 + $0xa8] sm:$0xf]
  %v2626 = vld [vmem:[%s1117 + $0xb0] sm:$0xf]
  %v2627 = vld [vmem:[%s1117 + $0xb8] sm:$0xf]
  %v2628 = vld [vmem:[%s1117 + $0xc0] sm:$0xf]
  %v2629 = vld [vmem:[%s1117 + $0xc8] sm:$0xf]
  %v2652 = vunpack.c.l.b16 %v2606
  %v2653 = vunpack.c.l.b16 %v2607
  %v2654 = vunpack.c.l.b16 %v2608
  %v2655 = vunpack.c.l.b16 %v2609
  %v2656 = vunpack.c.l.b16 %v2610
  %v2657 = vunpack.c.l.b16 %v2611
  %v2658 = vunpack.c.l.b16 %v2612
  %v2659 = vunpack.c.l.b16 %v2613
  %v2660 = vunpack.c.l.b16 %v2614
  %v2661 = vunpack.c.l.b16 %v2615
  %v2662 = vunpack.c.l.b16 %v2616
  %v2663 = vunpack.c.l.b16 %v2617
  %v2664 = vunpack.c.l.b16 %v2618
  %v2665 = vunpack.c.l.b16 %v2619
  %v2666 = vunpack.c.l.b16 %v2620
  %v2667 = vunpack.c.l.b16 %v2621
  %v2668 = vunpack.c.l.b16 %v2622
  %v2669 = vunpack.c.l.b16 %v2623
  %v2670 = vunpack.c.l.b16 %v2624
  %v2671 = vunpack.c.l.b16 %v2625
  %v2672 = vunpack.c.l.b16 %v2626
  %v2673 = vunpack.c.l.b16 %v2627
  %v2674 = vpack.c.b16 %v2653, %v2652
  %v2675 = vpack.c.b16 %v2655, %v2654
  %v2676 = vpack.c.b16 %v2657, %v2656
  %v2677 = vpack.c.b16 %v2659, %v2658
  %v2678 = vpack.c.b16 %v2661, %v2660
  %v2679 = vpack.c.b16 %v2663, %v2662
  %v2680 = vpack.c.b16 %v2665, %v2664
  %v2681 = vpack.c.b16 %v2667, %v2666
  %v2682 = vpack.c.b16 %v2669, %v2668
  %v2683 = vpack.c.b16 %v2671, %v2670
  %v2684 = vpack.c.b16 %v2673, %v2672
  %v2686 = vsel %vm1939, %v2674, 0
  %v2689 = vsel %vm1939, %v2675, 0
  %v2692 = vsel %vm1939, %v2676, 0
  %v2695 = vsel %vm1939, %v2677, 0
  %v2698 = vsel %vm1939, %v2678, 0
  %v2701 = vsel %vm1939, %v2679, 0
  %v2704 = vsel %vm1939, %v2680, 0
  %v2707 = vsel %vm1939, %v2681, 0
  %v2710 = vsel %vm1939, %v2682, 0
  %v2713 = vsel %vm1939, %v2683, 0
  %v2716 = vsel %vm1939, %v2684, 0
  %2718 = vmatprep.subr.bf16.mxu0 0
  %2719 = vmatpush1.bf16.msra.mxu0 0
  %2720 = vmatprep.subr.bf16.mxu0 0
  %2721 = vmatpush1.bf16.msra.mxu0 0
  %2722 = vmatprep.subr.bf16.mxu0 0
  %2723 = vmatpush1.bf16.msra.mxu0 0
  %2724 = vmatprep.subr.bf16.mxu0 0
  %2725 = vmatpush1.bf16.msra.mxu0 0
  %2726 = vmatprep.subr.bf16.mxu0 0
  %2727 = vmatpush1.bf16.msra.mxu0 %v1934
  %2728 = vmatprep.subr.bf16.mxu0 0
  %2729 = vmatpush1.bf16.msra.mxu0 %v1933
  %2730 = vmatprep.subr.bf16.mxu0 0
  %2731 = vmatpush1.bf16.msra.mxu0 %v1932
  %2732 = vmatprep.subr.bf16.mxu0 0
  %2733 = vmatpush1.bf16.msra.mxu0 %v1931
  %2734 = vmatprep.subr.bf16.mxu0 0
  %2735 = vmatpush2.bf16.msra.mxu0 0
  %2736 = vmatprep.subr.bf16.mxu0 0
  %2737 = vmatpush2.bf16.msra.mxu0 0
  %2738 = vmatprep.subr.bf16.mxu0 0
  %2739 = vmatpush2.bf16.msra.mxu0 0
  %2740 = vmatprep.subr.bf16.mxu0 0
  %2741 = vmatpush2.bf16.msra.mxu0 0
  %2742 = vmatprep.subr.bf16.mxu0 0
  %2743 = vmatpush2.bf16.msra.mxu0 0
  %2744 = vmatprep.subr.bf16.mxu0 0
  %2745 = vmatpush2.bf16.msra.mxu0 0
  %2746 = vmatprep.subr.bf16.mxu0 0
  %2747 = vmatpush2.bf16.msra.mxu0 0
  %2748 = vmatprep.subr.bf16.mxu0 0
  %2749 = vmatpush2.bf16.msra.mxu0 0
  %2750 = vmatprep.mubr.bf16.mxu0 0
  %2751 = vmatmul.mubr.bf16.gmra.mxu0 %v2686
  %v2752 = vpop.f32.mrf.mxu0
  %v2753 = vadd.f32 0.0, %v2752
  %v2754 = vpop.f32.mrf.mxu0
  %v2755 = vpop.f32.mrf.mxu0
  %v2756 = vadd.f32 0.0, %v2755
  %v2757 = vpop.f32.mrf.mxu0
  %2758 = vmatprep.mubr.bf16.mxu0 0
  %2759 = vmatmul.mubr.bf16.gmra.mxu0 %v2689
  %v2760 = vpop.f32.mrf.mxu0
  %v2761 = vadd.f32 0.0, %v2760
  %v2762 = vpop.f32.mrf.mxu0
  %v2763 = vpop.f32.mrf.mxu0
  %v2764 = vadd.f32 0.0, %v2763
  %v2765 = vpop.f32.mrf.mxu0
  %2766 = vmatprep.mubr.bf16.mxu0 0
  %2767 = vmatmul.mubr.bf16.gmra.mxu0 %v2692
  %v2768 = vpop.f32.mrf.mxu0
  %v2769 = vadd.f32 0.0, %v2768
  %v2770 = vpop.f32.mrf.mxu0
  %v2771 = vpop.f32.mrf.mxu0
  %v2772 = vadd.f32 0.0, %v2771
  %v2773 = vpop.f32.mrf.mxu0
  %2774 = vmatprep.mubr.bf16.mxu0 0
  %2775 = vmatmul.mubr.bf16.gmra.mxu0 %v2695
  %v2776 = vpop.f32.mrf.mxu0
  %v2777 = vadd.f32 0.0, %v2776
  %v2778 = vpop.f32.mrf.mxu0
  %v2779 = vpop.f32.mrf.mxu0
  %v2780 = vadd.f32 0.0, %v2779
  %v2781 = vpop.f32.mrf.mxu0
  %2782 = vmatprep.mubr.bf16.mxu0 0
  %2783 = vmatmul.mubr.bf16.gmra.mxu0 %v2698
  %v2784 = vpop.f32.mrf.mxu0
  %v2785 = vadd.f32 0.0, %v2784
  %v2786 = vpop.f32.mrf.mxu0
  %v2787 = vpop.f32.mrf.mxu0
  %v2788 = vadd.f32 0.0, %v2787
  %v2789 = vpop.f32.mrf.mxu0
  %2790 = vmatprep.mubr.bf16.mxu0 0
  %2791 = vmatmul.mubr.bf16.gmra.mxu0 %v2701
  %v2792 = vpop.f32.mrf.mxu0
  %v2793 = vadd.f32 0.0, %v2792
  %v2794 = vpop.f32.mrf.mxu0
  %v2795 = vpop.f32.mrf.mxu0
  %v2796 = vadd.f32 0.0, %v2795
  %v2797 = vpop.f32.mrf.mxu0
  %2798 = vmatprep.mubr.bf16.mxu0 0
  %2799 = vmatmul.mubr.bf16.gmra.mxu0 %v2704
  %v2800 = vpop.f32.mrf.mxu0
  %v2801 = vadd.f32 0.0, %v2800
  %v2802 = vpop.f32.mrf.mxu0
  %v2803 = vpop.f32.mrf.mxu0
  %v2804 = vadd.f32 0.0, %v2803
  %v2805 = vpop.f32.mrf.mxu0
  %2806 = vmatprep.mubr.bf16.mxu0 0
  %2807 = vmatmul.mubr.bf16.gmra.mxu0 %v2707
  %v2808 = vpop.f32.mrf.mxu0
  %v2809 = vadd.f32 0.0, %v2808
  %v2810 = vpop.f32.mrf.mxu0
  %v2811 = vpop.f32.mrf.mxu0
  %v2812 = vadd.f32 0.0, %v2811
  %v2813 = vpop.f32.mrf.mxu0
  %2814 = vmatprep.mubr.bf16.mxu0 0
  %2815 = vmatmul.mubr.bf16.gmra.mxu0 %v2710
  %v2816 = vpop.f32.mrf.mxu0
  %v2817 = vadd.f32 0.0, %v2816
  %v2818 = vpop.f32.mrf.mxu0
  %v2819 = vpop.f32.mrf.mxu0
  %v2820 = vadd.f32 0.0, %v2819
  %v2821 = vpop.f32.mrf.mxu0
  %2822 = vmatprep.mubr.bf16.mxu0 0
  %2823 = vmatmul.mubr.bf16.gmra.mxu0 %v2713
  %v2824 = vpop.f32.mrf.mxu0
  %v2825 = vadd.f32 0.0, %v2824
  %v2826 = vpop.f32.mrf.mxu0
  %v2827 = vpop.f32.mrf.mxu0
  %v2828 = vadd.f32 0.0, %v2827
  %v2829 = vpop.f32.mrf.mxu0
  %2830 = vmatprep.mubr.bf16.mxu0 0
  %2831 = vmatmul.mubr.bf16.gmra.mxu0 %v2716
  %v2832 = vpop.f32.mrf.mxu0
  %v2833 = vadd.f32 0.0, %v2832
  %v2834 = vpop.f32.mrf.mxu0
  %v2835 = vpop.f32.mrf.mxu0
  %v2836 = vadd.f32 0.0, %v2835
  %v2837 = vpop.f32.mrf.mxu0
  %2838 = vdwg.mxu0
  %v2841 = vunpack.c.l.b16 %v2604
  %v2842 = vunpack.c.l.b16 %v2605
  %v2843 = vpack.c.b16 %v2842, %v2841
  %v2845 = vsel %vm1939, %v2843, 0
  %2847 = vmatprep.subr.bf16.mxu0 0
  %2848 = vmatpush1.bf16.msra.mxu0 0
  %2849 = vmatprep.subr.bf16.mxu0 0
  %2850 = vmatpush1.bf16.msra.mxu0 0
  %2851 = vmatprep.subr.bf16.mxu0 0
  %2852 = vmatpush1.bf16.msra.mxu0 0
  %2853 = vmatprep.subr.bf16.mxu0 0
  %2854 = vmatpush1.bf16.msra.mxu0 0
  %2855 = vmatprep.subr.bf16.mxu0 0
  %2856 = vmatpush1.bf16.msra.mxu0 %v2118
  %2857 = vmatprep.subr.bf16.mxu0 0
  %2858 = vmatpush1.bf16.msra.mxu0 %v2117
  %2859 = vmatprep.subr.bf16.mxu0 0
  %2860 = vmatpush1.bf16.msra.mxu0 %v2116
  %2861 = vmatprep.subr.bf16.mxu0 0
  %2862 = vmatpush1.bf16.msra.mxu0 %v2115
  %2863 = vmatprep.subr.bf16.mxu0 0
  %2864 = vmatpush2.bf16.msra.mxu0 0
  %2865 = vmatprep.subr.bf16.mxu0 0
  %2866 = vmatpush2.bf16.msra.mxu0 0
  %2867 = vmatprep.subr.bf16.mxu0 0
  %2868 = vmatpush2.bf16.msra.mxu0 0
  %2869 = vmatprep.subr.bf16.mxu0 0
  %2870 = vmatpush2.bf16.msra.mxu0 0
  %2871 = vmatprep.subr.bf16.mxu0 0
  %2872 = vmatpush2.bf16.msra.mxu0 0
  %2873 = vmatprep.subr.bf16.mxu0 0
  %2874 = vmatpush2.bf16.msra.mxu0 0
  %2875 = vmatprep.subr.bf16.mxu0 0
  %2876 = vmatpush2.bf16.msra.mxu0 0
  %2877 = vmatprep.subr.bf16.mxu0 0
  %2878 = vmatpush2.bf16.msra.mxu0 0
  %2879 = vmatprep.mubr.bf16.mxu0 0
  %2880 = vmatmul.mubr.bf16.gmra.mxu0 %v2845
  %v2881 = vpop.f32.mrf.mxu0
  %v2882 = vadd.f32 %v2753, %v2881
  %v2883 = vpop.f32.mrf.mxu0
  %v2884 = vpop.f32.mrf.mxu0
  %v2885 = vadd.f32 %v2756, %v2884
  %v2886 = vpop.f32.mrf.mxu0
  %2887 = vmatprep.mubr.bf16.mxu0 0
  %2888 = vmatmul.mubr.bf16.gmra.mxu0 %v2686
  %v2889 = vpop.f32.mrf.mxu0
  %v2890 = vadd.f32 %v2761, %v2889
  %v2891 = vpop.f32.mrf.mxu0
  %v2892 = vpop.f32.mrf.mxu0
  %v2893 = vadd.f32 %v2764, %v2892
  %v2894 = vpop.f32.mrf.mxu0
  %2895 = vmatprep.mubr.bf16.mxu0 0
  %2896 = vmatmul.mubr.bf16.gmra.mxu0 %v2689
  %v2897 = vpop.f32.mrf.mxu0
  %v2898 = vadd.f32 %v2769, %v2897
  %v2899 = vpop.f32.mrf.mxu0
  %v2900 = vpop.f32.mrf.mxu0
  %v2901 = vadd.f32 %v2772, %v2900
  %v2902 = vpop.f32.mrf.mxu0
  %2903 = vmatprep.mubr.bf16.mxu0 0
  %2904 = vmatmul.mubr.bf16.gmra.mxu0 %v2692
  %v2905 = vpop.f32.mrf.mxu0
  %v2906 = vadd.f32 %v2777, %v2905
  %v2907 = vpop.f32.mrf.mxu0
  %v2908 = vpop.f32.mrf.mxu0
  %v2909 = vadd.f32 %v2780, %v2908
  %v2910 = vpop.f32.mrf.mxu0
  %2911 = vmatprep.mubr.bf16.mxu0 0
  %2912 = vmatmul.mubr.bf16.gmra.mxu0 %v2695
  %v2913 = vpop.f32.mrf.mxu0
  %v2914 = vadd.f32 %v2785, %v2913
  %v2915 = vpop.f32.mrf.mxu0
  %v2916 = vpop.f32.mrf.mxu0
  %v2917 = vadd.f32 %v2788, %v2916
  %v2918 = vpop.f32.mrf.mxu0
  %2919 = vmatprep.mubr.bf16.mxu0 0
  %2920 = vmatmul.mubr.bf16.gmra.mxu0 %v2698
  %v2921 = vpop.f32.mrf.mxu0
  %v2922 = vadd.f32 %v2793, %v2921
  %v2923 = vpop.f32.mrf.mxu0
  %v2924 = vpop.f32.mrf.mxu0
  %v2925 = vadd.f32 %v2796, %v2924
  %v2926 = vpop.f32.mrf.mxu0
  %2927 = vmatprep.mubr.bf16.mxu0 0
  %2928 = vmatmul.mubr.bf16.gmra.mxu0 %v2701
  %v2929 = vpop.f32.mrf.mxu0
  %v2930 = vadd.f32 %v2801, %v2929
  %v2931 = vpop.f32.mrf.mxu0
  %v2932 = vpop.f32.mrf.mxu0
  %v2933 = vadd.f32 %v2804, %v2932
  %v2934 = vpop.f32.mrf.mxu0
  %2935 = vmatprep.mubr.bf16.mxu0 0
  %2936 = vmatmul.mubr.bf16.gmra.mxu0 %v2704
  %v2937 = vpop.f32.mrf.mxu0
  %v2938 = vadd.f32 %v2809, %v2937
  %v2939 = vpop.f32.mrf.mxu0
  %v2940 = vpop.f32.mrf.mxu0
  %v2941 = vadd.f32 %v2812, %v2940
  %v2942 = vpop.f32.mrf.mxu0
  %2943 = vmatprep.mubr.bf16.mxu0 0
  %2944 = vmatmul.mubr.bf16.gmra.mxu0 %v2707
  %v2945 = vpop.f32.mrf.mxu0
  %v2946 = vadd.f32 %v2817, %v2945
  %v2947 = vpop.f32.mrf.mxu0
  %v2948 = vpop.f32.mrf.mxu0
  %v2949 = vadd.f32 %v2820, %v2948
  %v2950 = vpop.f32.mrf.mxu0
  %2951 = vmatprep.mubr.bf16.mxu0 0
  %2952 = vmatmul.mubr.bf16.gmra.mxu0 %v2710
  %v2953 = vpop.f32.mrf.mxu0
  %v2954 = vadd.f32 %v2825, %v2953
  %v2955 = vpop.f32.mrf.mxu0
  %v2956 = vpop.f32.mrf.mxu0
  %v2957 = vadd.f32 %v2828, %v2956
  %v2958 = vpop.f32.mrf.mxu0
  %2959 = vmatprep.mubr.bf16.mxu0 0
  %2960 = vmatmul.mubr.bf16.gmra.mxu0 %v2713
  %v2961 = vpop.f32.mrf.mxu0
  %v2962 = vadd.f32 %v2833, %v2961
  %v2963 = vpop.f32.mrf.mxu0
  %v2964 = vpop.f32.mrf.mxu0
  %v2965 = vadd.f32 %v2836, %v2964
  %v2966 = vpop.f32.mrf.mxu0
  %2967 = vdwg.mxu0
  %v2970 = vunpack.c.l.b16 %v2628
  %v2971 = vunpack.c.l.b16 %v2629
  %v2972 = vpack.c.b16 %v2971, %v2970
  %v2974 = vsel %vm1939, %v2972, 0
  %2976 = vmatprep.subr.bf16.mxu0 0
  %2977 = vmatpush1.bf16.msra.mxu0 0
  %2978 = vmatprep.subr.bf16.mxu0 0
  %2979 = vmatpush1.bf16.msra.mxu0 0
  %2980 = vmatprep.subr.bf16.mxu0 0
  %2981 = vmatpush1.bf16.msra.mxu0 0
  %2982 = vmatprep.subr.bf16.mxu0 0
  %2983 = vmatpush1.bf16.msra.mxu0 0
  %2984 = vmatprep.subr.bf16.mxu0 0
  %2985 = vmatpush1.bf16.msra.mxu0 %v2271
  %2986 = vmatprep.subr.bf16.mxu0 0
  %2987 = vmatpush1.bf16.msra.mxu0 %v2270
  %2988 = vmatprep.subr.bf16.mxu0 0
  %2989 = vmatpush1.bf16.msra.mxu0 %v2269
  %2990 = vmatprep.subr.bf16.mxu0 0
  %2991 = vmatpush1.bf16.msra.mxu0 %v2268
  %2992 = vmatprep.subr.bf16.mxu0 0
  %2993 = vmatpush2.bf16.msra.mxu0 0
  %2994 = vmatprep.subr.bf16.mxu0 0
  %2995 = vmatpush2.bf16.msra.mxu0 0
  %2996 = vmatprep.subr.bf16.mxu0 0
  %2997 = vmatpush2.bf16.msra.mxu0 0
  %2998 = vmatprep.subr.bf16.mxu0 0
  %2999 = vmatpush2.bf16.msra.mxu0 0
  %3000 = vmatprep.subr.bf16.mxu0 0
  %3001 = vmatpush2.bf16.msra.mxu0 0
  %3002 = vmatprep.subr.bf16.mxu0 0
  %3003 = vmatpush2.bf16.msra.mxu0 0
  %3004 = vmatprep.subr.bf16.mxu0 0
  %3005 = vmatpush2.bf16.msra.mxu0 0
  %3006 = vmatprep.subr.bf16.mxu0 0
  %3007 = vmatpush2.bf16.msra.mxu0 0
  %3008 = vmatprep.mubr.bf16.mxu0 0
  %3009 = vmatmul.mubr.bf16.gmra.mxu0 %v2689
  %v3010 = vpop.f32.mrf.mxu0
  %v3011 = vadd.f32 0.0, %v3010
  %v3012 = vpop.f32.mrf.mxu0
  %v3013 = vpop.f32.mrf.mxu0
  %v3014 = vadd.f32 0.0, %v3013
  %v3015 = vpop.f32.mrf.mxu0
  %3016 = vmatprep.mubr.bf16.mxu0 0
  %3017 = vmatmul.mubr.bf16.gmra.mxu0 %v2692
  %v3018 = vpop.f32.mrf.mxu0
  %v3019 = vadd.f32 0.0, %v3018
  %v3020 = vpop.f32.mrf.mxu0
  %v3021 = vpop.f32.mrf.mxu0
  %v3022 = vadd.f32 0.0, %v3021
  %v3023 = vpop.f32.mrf.mxu0
  %3024 = vmatprep.mubr.bf16.mxu0 0
  %3025 = vmatmul.mubr.bf16.gmra.mxu0 %v2695
  %v3026 = vpop.f32.mrf.mxu0
  %v3027 = vadd.f32 0.0, %v3026
  %v3028 = vpop.f32.mrf.mxu0
  %v3029 = vpop.f32.mrf.mxu0
  %v3030 = vadd.f32 0.0, %v3029
  %v3031 = vpop.f32.mrf.mxu0
  %3032 = vmatprep.mubr.bf16.mxu0 0
  %3033 = vmatmul.mubr.bf16.gmra.mxu0 %v2698
  %v3034 = vpop.f32.mrf.mxu0
  %v3035 = vadd.f32 0.0, %v3034
  %v3036 = vpop.f32.mrf.mxu0
  %v3037 = vpop.f32.mrf.mxu0
  %v3038 = vadd.f32 0.0, %v3037
  %v3039 = vpop.f32.mrf.mxu0
  %3040 = vmatprep.mubr.bf16.mxu0 0
  %3041 = vmatmul.mubr.bf16.gmra.mxu0 %v2701
  %v3042 = vpop.f32.mrf.mxu0
  %v3043 = vadd.f32 0.0, %v3042
  %v3044 = vpop.f32.mrf.mxu0
  %v3045 = vpop.f32.mrf.mxu0
  %v3046 = vadd.f32 0.0, %v3045
  %v3047 = vpop.f32.mrf.mxu0
  %3048 = vmatprep.mubr.bf16.mxu0 0
  %3049 = vmatmul.mubr.bf16.gmra.mxu0 %v2704
  %v3050 = vpop.f32.mrf.mxu0
  %v3051 = vadd.f32 0.0, %v3050
  %v3052 = vpop.f32.mrf.mxu0
  %v3053 = vpop.f32.mrf.mxu0
  %v3054 = vadd.f32 0.0, %v3053
  %v3055 = vpop.f32.mrf.mxu0
  %3056 = vmatprep.mubr.bf16.mxu0 0
  %3057 = vmatmul.mubr.bf16.gmra.mxu0 %v2707
  %v3058 = vpop.f32.mrf.mxu0
  %v3059 = vadd.f32 0.0, %v3058
  %v3060 = vpop.f32.mrf.mxu0
  %v3061 = vpop.f32.mrf.mxu0
  %v3062 = vadd.f32 0.0, %v3061
  %v3063 = vpop.f32.mrf.mxu0
  %3064 = vmatprep.mubr.bf16.mxu0 0
  %3065 = vmatmul.mubr.bf16.gmra.mxu0 %v2710
  %v3066 = vpop.f32.mrf.mxu0
  %v3067 = vadd.f32 0.0, %v3066
  %v3068 = vpop.f32.mrf.mxu0
  %v3069 = vpop.f32.mrf.mxu0
  %v3070 = vadd.f32 0.0, %v3069
  %v3071 = vpop.f32.mrf.mxu0
  %3072 = vmatprep.mubr.bf16.mxu0 0
  %3073 = vmatmul.mubr.bf16.gmra.mxu0 %v2713
  %v3074 = vpop.f32.mrf.mxu0
  %v3075 = vadd.f32 0.0, %v3074
  %v3076 = vpop.f32.mrf.mxu0
  %v3077 = vpop.f32.mrf.mxu0
  %v3078 = vadd.f32 0.0, %v3077
  %v3079 = vpop.f32.mrf.mxu0
  %3080 = vmatprep.mubr.bf16.mxu0 0
  %3081 = vmatmul.mubr.bf16.gmra.mxu0 %v2716
  %v3082 = vpop.f32.mrf.mxu0
  %v3083 = vadd.f32 0.0, %v3082
  %v3084 = vpop.f32.mrf.mxu0
  %v3085 = vpop.f32.mrf.mxu0
  %v3086 = vadd.f32 0.0, %v3085
  %v3087 = vpop.f32.mrf.mxu0
  %3088 = vmatprep.mubr.bf16.mxu0 0
  %3089 = vmatmul.mubr.bf16.gmra.mxu0 %v2974
  %v3090 = vpop.f32.mrf.mxu0
  %v3091 = vadd.f32 0.0, %v3090
  %v3092 = vpop.f32.mrf.mxu0
  %v3093 = vpop.f32.mrf.mxu0
  %v3094 = vadd.f32 0.0, %v3093
  %v3095 = vpop.f32.mrf.mxu0
  %3096 = vdwg.mxu0
  %v3097 = vadd.f32 %v2882, %v3011
  %v3098 = vadd.f32 %v2885, %v3014
  %v3099 = vadd.f32 %v2890, %v3019
  %v3100 = vadd.f32 %v2893, %v3022
  %v3101 = vadd.f32 %v2898, %v3027
  %v3102 = vadd.f32 %v2901, %v3030
  %v3103 = vadd.f32 %v2906, %v3035
  %v3104 = vadd.f32 %v2909, %v3038
  %v3105 = vadd.f32 %v2914, %v3043
  %v3106 = vadd.f32 %v2917, %v3046
  %v3107 = vadd.f32 %v2922, %v3051
  %v3108 = vadd.f32 %v2925, %v3054
  %v3109 = vadd.f32 %v2930, %v3059
  %v3110 = vadd.f32 %v2933, %v3062
  %v3111 = vadd.f32 %v2938, %v3067
  %v3112 = vadd.f32 %v2941, %v3070
  %v3113 = vadd.f32 %v2946, %v3075
  %v3114 = vadd.f32 %v2949, %v3078
  %v3115 = vadd.f32 %v2954, %v3083
  %v3116 = vadd.f32 %v2957, %v3086
  %v3117 = vadd.f32 %v2962, %v3091
  %v3118 = vadd.f32 %v2965, %v3094
  %v3119 = vadd.f32 %v3097, %v2426
  %v3120 = vadd.f32 %v3098, %v2426
  %v3121 = vadd.f32 %v3099, %v2426
  %v3122 = vadd.f32 %v3100, %v2426
  %v3123 = vadd.f32 %v3101, %v2426
  %v3124 = vadd.f32 %v3102, %v2426
  %v3125 = vadd.f32 %v3103, %v2426
  %v3126 = vadd.f32 %v3104, %v2426
  %v3127 = vadd.f32 %v3105, %v2426
  %v3128 = vadd.f32 %v3106, %v2426
  %v3129 = vadd.f32 %v3107, %v2426
  %v3130 = vadd.f32 %v3108, %v2426
  %v3131 = vadd.f32 %v3109, %v2426
  %v3132 = vadd.f32 %v3110, %v2426
  %v3133 = vadd.f32 %v3111, %v2426
  %v3134 = vadd.f32 %v3112, %v2426
  %v3135 = vadd.f32 %v3113, %v2426
  %v3136 = vadd.f32 %v3114, %v2426
  %v3137 = vadd.f32 %v3115, %v2426
  %v3138 = vadd.f32 %v3116, %v2426
  %v3139 = vadd.f32 %v3117, %v2426
  %v3140 = vadd.f32 %v3118, %v2426
  %v3141 = vmul.f32 %v3119, 0.1
  %v3142 = vmul.f32 %v3120, 0.1
  %v3143 = vmul.f32 %v3121, 0.1
  %v3144 = vmul.f32 %v3122, 0.1
  %v3145 = vmul.f32 %v3123, 0.1
  %v3146 = vmul.f32 %v3124, 0.1
  %v3147 = vmul.f32 %v3125, 0.1
  %v3148 = vmul.f32 %v3126, 0.1
  %v3149 = vmul.f32 %v3127, 0.1
  %v3150 = vmul.f32 %v3128, 0.1
  %v3151 = vmul.f32 %v3129, 0.1
  %v3152 = vmul.f32 %v3130, 0.1
  %v3153 = vmul.f32 %v3131, 0.1
  %v3154 = vmul.f32 %v3132, 0.1
  %v3155 = vmul.f32 %v3133, 0.1
  %v3156 = vmul.f32 %v3134, 0.1
  %v3157 = vmul.f32 %v3135, 0.1
  %v3158 = vmul.f32 %v3136, 0.1
  %v3159 = vmul.f32 %v3137, 0.1
  %v3160 = vmul.f32 %v3138, 0.1
  %v3161 = vmul.f32 %v3139, 0.1
  %v3162 = vmul.f32 %v3140, 0.1
  %v3163 = vmax.f32 %v3119, %v3141
  %v3164 = vmax.f32 %v3120, %v3142
  %v3165 = vmax.f32 %v3121, %v3143
  %v3166 = vmax.f32 %v3122, %v3144
  %v3167 = vmax.f32 %v3123, %v3145
  %v3168 = vmax.f32 %v3124, %v3146
  %v3169 = vmax.f32 %v3125, %v3147
  %v3170 = vmax.f32 %v3126, %v3148
  %v3171 = vmax.f32 %v3127, %v3149
  %v3172 = vmax.f32 %v3128, %v3150
  %v3173 = vmax.f32 %v3129, %v3151
  %v3174 = vmax.f32 %v3130, %v3152
  %v3175 = vmax.f32 %v3131, %v3153
  %v3176 = vmax.f32 %v3132, %v3154
  %v3177 = vmax.f32 %v3133, %v3155
  %v3178 = vmax.f32 %v3134, %v3156
  %v3179 = vmax.f32 %v3135, %v3157
  %v3180 = vmax.f32 %v3136, %v3158
  %v3181 = vmax.f32 %v3137, %v3159
  %v3182 = vmax.f32 %v3138, %v3160
  %v3183 = vmax.f32 %v3139, %v3161
  %v3184 = vmax.f32 %v3140, %v3162
  %v3185 = vpack.c.bf16 %v3164, %v3163
  %v3186 = vpack.c.bf16 %v3166, %v3165
  %v3187 = vpack.c.bf16 %v3168, %v3167
  %v3188 = vpack.c.bf16 %v3170, %v3169
  %v3189 = vpack.c.bf16 %v3172, %v3171
  %v3190 = vpack.c.bf16 %v3174, %v3173
  %v3191 = vpack.c.bf16 %v3176, %v3175
  %v3192 = vpack.c.bf16 %v3178, %v3177
  %v3193 = vpack.c.bf16 %v3180, %v3179
  %v3194 = vpack.c.bf16 %v3182, %v3181
  %v3195 = vpack.c.bf16 %v3184, %v3183
  %v3207 = vunpack.c.l.b16 %v3185
  %v3208 = vunpack.c.h.b16 %v3185
  %v3209 = vunpack.c.l.b16 %v3186
  %v3210 = vunpack.c.h.b16 %v3186
  %v3211 = vunpack.c.l.b16 %v3187
  %v3212 = vunpack.c.h.b16 %v3187
  %v3213 = vunpack.c.l.b16 %v3188
  %v3214 = vunpack.c.h.b16 %v3188
  %v3215 = vunpack.c.l.b16 %v3189
  %v3216 = vunpack.c.h.b16 %v3189
  %v3217 = vunpack.c.l.b16 %v3190
  %v3218 = vunpack.c.h.b16 %v3190
  %v3219 = vunpack.c.l.b16 %v3191
  %v3220 = vunpack.c.h.b16 %v3191
  %v3221 = vunpack.c.l.b16 %v3192
  %v3222 = vunpack.c.h.b16 %v3192
  %v3223 = vunpack.c.l.b16 %v3193
  %v3224 = vunpack.c.h.b16 %v3193
  %v3225 = vunpack.c.l.b16 %v3194
  %v3226 = vunpack.c.h.b16 %v3194
  %v3227 = vunpack.c.l.b16 %v3195
  %v3228 = vunpack.c.h.b16 %v3195
  %v3229 = vpack.c.b16 %v3207, %v3207
  %v3230 = vpack.c.b16 %v3208, %v3208
  %v3231 = vpack.c.b16 %v3209, %v3209
  %v3232 = vpack.c.b16 %v3210, %v3210
  %v3233 = vpack.c.b16 %v3211, %v3211
  %v3234 = vpack.c.b16 %v3212, %v3212
  %v3235 = vpack.c.b16 %v3213, %v3213
  %v3236 = vpack.c.b16 %v3214, %v3214
  %v3237 = vpack.c.b16 %v3215, %v3215
  %v3238 = vpack.c.b16 %v3216, %v3216
  %v3239 = vpack.c.b16 %v3217, %v3217
  %v3240 = vpack.c.b16 %v3218, %v3218
  %v3241 = vpack.c.b16 %v3219, %v3219
  %v3242 = vpack.c.b16 %v3220, %v3220
  %v3243 = vpack.c.b16 %v3221, %v3221
  %v3244 = vpack.c.b16 %v3222, %v3222
  %v3245 = vpack.c.b16 %v3223, %v3223
  %v3246 = vpack.c.b16 %v3224, %v3224
  %v3247 = vpack.c.b16 %v3225, %v3225
  %v3248 = vpack.c.b16 %v3226, %v3226
  %v3249 = vpack.c.b16 %v3227, %v3227
  %v3250 = vpack.c.b16 %v3228, %v3228
  %3273 = vst [vmem:[%s1117 + $0x10] sm:$0xf] %v3229
  %3274 = vst [vmem:[%s1117 + $0x18] sm:$0xf] %v3230
  %3275 = vst [vmem:[%s1117 + $0x20] sm:$0xf] %v3231
  %3276 = vst [vmem:[%s1117 + $0x28] sm:$0xf] %v3232
  %3277 = vst [vmem:[%s1117 + $0x30] sm:$0xf] %v3233
  %3278 = vst [vmem:[%s1117 + $0x38] sm:$0xf] %v3234
  %3279 = vst [vmem:[%s1117 + $0x40] sm:$0xf] %v3235
  %3280 = vst [vmem:[%s1117 + $0x48] sm:$0xf] %v3236
  %3281 = vst [vmem:[%s1117 + $0x50] sm:$0xf] %v3237
  %3282 = vst [vmem:[%s1117 + $0x58] sm:$0xf] %v3238
  %3283 = vst [vmem:[%s1117 + $0x60] sm:$0xf] %v3239
  %3284 = vst [vmem:[%s1117 + $0x68] sm:$0xf] %v3240
  %3285 = vst [vmem:[%s1117 + $0x70] sm:$0xf] %v3241
  %3286 = vst [vmem:[%s1117 + $0x78] sm:$0xf] %v3242
  %3287 = vst [vmem:[%s1117 + $0x80] sm:$0xf] %v3243
  %3288 = vst [vmem:[%s1117 + $0x88] sm:$0xf] %v3244
  %3289 = vst [vmem:[%s1117 + $0x90] sm:$0xf] %v3245
  %3290 = vst [vmem:[%s1117 + $0x98] sm:$0xf] %v3246
  %3291 = vst [vmem:[%s1117 + $0xa0] sm:$0xf] %v3247
  %3292 = vst [vmem:[%s1117 + $0xa8] sm:$0xf] %v3248
  %3293 = vst [vmem:[%s1117 + $0xb0] sm:$0xf] %v3249
  %3294 = vst [vmem:[%s1117 + $0xb8] sm:$0xf] %v3250
  %v3295 = vld [vmem:[%s19] sm:$0xff]
  %v3296 = vld [vmem:[%s19 + $0x8] sm:$0xff]
  %v3297 = vld [vmem:[%s19 + $0x10] sm:$0xff]
  %v3298 = vld [vmem:[%s19 + $0x18] sm:$0xff]
  %v3299 = vld [vmem:[%s19 + $0x20] sm:$0xff]
  %v3300 = vld [vmem:[%s19 + $0x28] sm:$0xff]
  %v3301 = vld [vmem:[%s19 + $0x30] sm:$0xff]
  %v3302 = vld [vmem:[%s19 + $0x38] sm:$0xff]
  %v3303 = vld [vmem:[%s19 + $0x40] sm:$0xff]
  %v3304 = vld [vmem:[%s19 + $0x48] sm:$0xff]
  %v3305 = vld [vmem:[%s19 + $0x50] sm:$0xff]
  %v3306 = vld [vmem:[%s19 + $0x58] sm:$0xff]
  %v3307 = vld [vmem:[%s19 + $0x60] sm:$0xff]
  %v3308 = vld [vmem:[%s19 + $0x68] sm:$0xff]
  %v3309 = vld [vmem:[%s19 + $0x70] sm:$0xff]
  %v3310 = vld [vmem:[%s19 + $0x78] sm:$0xff]
  %v3311 = vld [vmem:[%s21] sm:$0xff]
  %v3312 = vld [vmem:[%s21 + $0x8] sm:$0xff]
  %v3313 = vld [vmem:[%s21 + $0x10] sm:$0xff]
  %v3314 = vld [vmem:[%s21 + $0x18] sm:$0xff]
  %v3315 = vld [vmem:[%s21 + $0x20] sm:$0xff]
  %v3316 = vld [vmem:[%s21 + $0x28] sm:$0xff]
  %v3317 = vld [vmem:[%s21 + $0x30] sm:$0xff]
  %v3318 = vld [vmem:[%s21 + $0x38] sm:$0xff]
  %v3319 = vld [vmem:[%s21 + $0x40] sm:$0xff]
  %v3320 = vld [vmem:[%s21 + $0x48] sm:$0xff]
  %v3321 = vld [vmem:[%s21 + $0x50] sm:$0xff]
  %v3322 = vld [vmem:[%s21 + $0x58] sm:$0xff]
  %v3323 = vld [vmem:[%s21 + $0x60] sm:$0xff]
  %v3324 = vld [vmem:[%s21 + $0x68] sm:$0xff]
  %v3325 = vld [vmem:[%s21 + $0x70] sm:$0xff]
  %v3326 = vld [vmem:[%s21 + $0x78] sm:$0xff]
  %v3327 = vld [vmem:[%s23] sm:$0xff]
  %v3328 = vld [vmem:[%s23 + $0x8] sm:$0xff]
  %v3329 = vld [vmem:[%s23 + $0x10] sm:$0xff]
  %v3330 = vld [vmem:[%s23 + $0x18] sm:$0xff]
  %v3331 = vld [vmem:[%s23 + $0x20] sm:$0xff]
  %v3332 = vld [vmem:[%s23 + $0x28] sm:$0xff]
  %v3333 = vld [vmem:[%s23 + $0x30] sm:$0xff]
  %v3334 = vld [vmem:[%s23 + $0x38] sm:$0xff]
  %v3335 = vld [vmem:[%s23 + $0x40] sm:$0xff]
  %v3336 = vld [vmem:[%s23 + $0x48] sm:$0xff]
  %v3337 = vld [vmem:[%s23 + $0x50] sm:$0xff]
  %v3338 = vld [vmem:[%s23 + $0x58] sm:$0xff]
  %v3339 = vld [vmem:[%s23 + $0x60] sm:$0xff]
  %v3340 = vld [vmem:[%s23 + $0x68] sm:$0xff]
  %v3341 = vld [vmem:[%s23 + $0x70] sm:$0xff]
  %v3342 = vld [vmem:[%s23 + $0x78] sm:$0xff]
  %v3343 = vld [vmem:[%s25] sm:$0x3]
  %v3344 = vld [vmem:[#allocation2] sm:$0xf]
  %v3345 = vld [vmem:[#allocation2 + $0x8] sm:$0xf]
  %v3346 = vld [vmem:[#allocation2 + $0x10] sm:$0xf]
  %v3347 = vld [vmem:[#allocation2 + $0x18] sm:$0xf]
  %v3348 = vld [vmem:[#allocation2 + $0x20] sm:$0xf]
  %v3349 = vld [vmem:[#allocation2 + $0x28] sm:$0xf]
  %v3350 = vld [vmem:[#allocation2 + $0x30] sm:$0xf]
  %v3351 = vld [vmem:[#allocation2 + $0x38] sm:$0xf]
  %v3352 = vld [vmem:[#allocation2 + $0x40] sm:$0xf]
  %v3353 = vld [vmem:[#allocation2 + $0x48] sm:$0xf]
  %v3354 = vld [vmem:[#allocation2 + $0x50] sm:$0xf]
  %v3355 = vld [vmem:[#allocation2 + $0x58] sm:$0xf]
  %v3356 = vld [vmem:[#allocation2 + $0x60] sm:$0xf]
  %v3357 = vld [vmem:[#allocation2 + $0x68] sm:$0xf]
  %v3358 = vld [vmem:[#allocation2 + $0x70] sm:$0xf]
  %v3359 = vld [vmem:[#allocation2 + $0x78] sm:$0xf]
  %v3360 = vld [vmem:[#allocation2 + $0x80] sm:$0xf]
  %v3361 = vld [vmem:[#allocation2 + $0x88] sm:$0xf]
  %v3362 = vld [vmem:[#allocation2 + $0x90] sm:$0xf]
  %v3363 = vld [vmem:[#allocation2 + $0x98] sm:$0xf]
  %v3364 = vld [vmem:[#allocation2 + $0xa0] sm:$0xf]
  %v3365 = vld [vmem:[#allocation2 + $0xa8] sm:$0xf]
  %v3366 = vld [vmem:[#allocation2 + $0xb0] sm:$0xf]
  %v3367 = vld [vmem:[#allocation2 + $0xb8] sm:$0xf]
  %v3368 = vld [vmem:[#allocation2 + $0xc0] sm:$0xf]
  %v3369 = vld [vmem:[#allocation2 + $0xc8] sm:$0xf]
  %v3392 = vunpack.c.l.b16 %v3346
  %v3393 = vunpack.c.l.b16 %v3347
  %v3394 = vunpack.c.l.b16 %v3348
  %v3395 = vunpack.c.l.b16 %v3349
  %v3396 = vunpack.c.l.b16 %v3350
  %v3397 = vunpack.c.l.b16 %v3351
  %v3398 = vunpack.c.l.b16 %v3352
  %v3399 = vunpack.c.l.b16 %v3353
  %v3400 = vunpack.c.l.b16 %v3354
  %v3401 = vunpack.c.l.b16 %v3355
  %v3402 = vunpack.c.l.b16 %v3356
  %v3403 = vunpack.c.l.b16 %v3357
  %v3404 = vunpack.c.l.b16 %v3358
  %v3405 = vunpack.c.l.b16 %v3359
  %v3406 = vunpack.c.l.b16 %v3360
  %v3407 = vunpack.c.l.b16 %v3361
  %v3408 = vunpack.c.l.b16 %v3362
  %v3409 = vunpack.c.l.b16 %v3363
  %v3410 = vunpack.c.l.b16 %v3364
  %v3411 = vunpack.c.l.b16 %v3365
  %v3412 = vunpack.c.l.b16 %v3366
  %v3413 = vunpack.c.l.b16 %v3367
  %v3414 = vpack.c.b16 %v3393, %v3392
  %v3415 = vpack.c.b16 %v3395, %v3394
  %v3416 = vpack.c.b16 %v3397, %v3396
  %v3417 = vpack.c.b16 %v3399, %v3398
  %v3418 = vpack.c.b16 %v3401, %v3400
  %v3419 = vpack.c.b16 %v3403, %v3402
  %v3420 = vpack.c.b16 %v3405, %v3404
  %v3421 = vpack.c.b16 %v3407, %v3406
  %v3422 = vpack.c.b16 %v3409, %v3408
  %v3423 = vpack.c.b16 %v3411, %v3410
  %v3424 = vpack.c.b16 %v3413, %v3412
  %v3452 = vunpack.c.l.b16 %v3311
  %v3453 = vunpack.c.h.b16 %v3311
  %v3454 = vunpack.c.l.b16 %v3312
  %v3455 = vunpack.c.h.b16 %v3312
  %v3456 = vunpack.c.l.b16 %v3313
  %v3457 = vunpack.c.h.b16 %v3313
  %v3458 = vunpack.c.l.b16 %v3314
  %v3459 = vunpack.c.h.b16 %v3314
  %v3460 = vunpack.c.l.b16 %v3315
  %v3461 = vunpack.c.h.b16 %v3315
  %v3462 = vunpack.c.l.b16 %v3316
  %v3463 = vunpack.c.h.b16 %v3316
  %v3464 = vunpack.c.l.b16 %v3317
  %v3465 = vunpack.c.h.b16 %v3317
  %v3466 = vunpack.c.l.b16 %v3318
  %v3467 = vunpack.c.h.b16 %v3318
  %v3468 = vunpack.c.l.b16 %v3319
  %v3469 = vunpack.c.h.b16 %v3319
  %v3470 = vunpack.c.l.b16 %v3320
  %v3471 = vunpack.c.h.b16 %v3320
  %v3472 = vunpack.c.l.b16 %v3321
  %v3473 = vunpack.c.h.b16 %v3321
  %v3474 = vunpack.c.l.b16 %v3322
  %v3475 = vunpack.c.h.b16 %v3322
  %v3476 = vunpack.c.l.b16 %v3323
  %v3477 = vunpack.c.h.b16 %v3323
  %v3478 = vunpack.c.l.b16 %v3324
  %v3479 = vunpack.c.h.b16 %v3324
  %v3480 = vunpack.c.l.b16 %v3325
  %v3481 = vunpack.c.h.b16 %v3325
  %v3482 = vunpack.c.l.b16 %v3326
  %v3483 = vunpack.c.h.b16 %v3326
  %v3484 = vpack.c.b16 %v3454, %v3452
  %v3485 = vpack.c.b16 %v3455, %v3453
  %v3486 = vpack.c.b16 %v3458, %v3456
  %v3487 = vpack.c.b16 %v3459, %v3457
  %v3488 = vpack.c.b16 %v3462, %v3460
  %v3489 = vpack.c.b16 %v3463, %v3461
  %v3490 = vpack.c.b16 %v3466, %v3464
  %v3491 = vpack.c.b16 %v3467, %v3465
  %v3492 = vpack.c.b16 %v3470, %v3468
  %v3493 = vpack.c.b16 %v3471, %v3469
  %v3494 = vpack.c.b16 %v3474, %v3472
  %v3495 = vpack.c.b16 %v3475, %v3473
  %v3496 = vpack.c.b16 %v3478, %v3476
  %v3497 = vpack.c.b16 %v3479, %v3477
  %v3498 = vpack.c.b16 %v3482, %v3480
  %v3499 = vpack.c.b16 %v3483, %v3481
  %3516 = vmatprep.subr.bf16.mxu0 %v3499
  %3517 = vmatpush1.bf16.msra.mxu0 %v3498
  %3518 = vmatprep.subr.bf16.mxu0 %v3497
  %3519 = vmatpush1.bf16.msra.mxu0 %v3496
  %3520 = vmatprep.subr.bf16.mxu0 %v3495
  %3521 = vmatpush1.bf16.msra.mxu0 %v3494
  %3522 = vmatprep.subr.bf16.mxu0 %v3493
  %3523 = vmatpush1.bf16.msra.mxu0 %v3492
  %3524 = vmatprep.subr.bf16.mxu0 %v3491
  %3525 = vmatpush1.bf16.msra.mxu0 %v3490
  %3526 = vmatprep.subr.bf16.mxu0 %v3489
  %3527 = vmatpush1.bf16.msra.mxu0 %v3488
  %3528 = vmatprep.subr.bf16.mxu0 %v3487
  %3529 = vmatpush1.bf16.msra.mxu0 %v3486
  %3530 = vmatprep.subr.bf16.mxu0 %v3485
  %3531 = vmatpush1.bf16.msra.mxu0 %v3484
  %3532 = vmatprep.subr.bf16.mxu0 0
  %3533 = vmatpush2.bf16.msra.mxu0 0
  %3534 = vmatprep.subr.bf16.mxu0 0
  %3535 = vmatpush2.bf16.msra.mxu0 0
  %3536 = vmatprep.subr.bf16.mxu0 0
  %3537 = vmatpush2.bf16.msra.mxu0 0
  %3538 = vmatprep.subr.bf16.mxu0 0
  %3539 = vmatpush2.bf16.msra.mxu0 0
  %3540 = vmatprep.subr.bf16.mxu0 0
  %3541 = vmatpush2.bf16.msra.mxu0 0
  %3542 = vmatprep.subr.bf16.mxu0 0
  %3543 = vmatpush2.bf16.msra.mxu0 0
  %3544 = vmatprep.subr.bf16.mxu0 0
  %3545 = vmatpush2.bf16.msra.mxu0 0
  %3546 = vmatprep.subr.bf16.mxu0 0
  %3547 = vmatpush2.bf16.msra.mxu0 0
  %3548 = vmatprep.mubr.bf16.mxu0 0
  %3549 = vmatmul.mubr.bf16.gmra.mxu0 %v3414
  %v3550 = vpop.f32.mrf.mxu0
  %v3551 = vadd.f32 0.0, %v3550
  %v3552 = vpop.f32.mrf.mxu0
  %v3553 = vadd.f32 0.0, %v3552
  %v3554 = vpop.f32.mrf.mxu0
  %v3555 = vadd.f32 0.0, %v3554
  %v3556 = vpop.f32.mrf.mxu0
  %v3557 = vadd.f32 0.0, %v3556
  %3558 = vmatprep.mubr.bf16.mxu0 0
  %3559 = vmatmul.mubr.bf16.gmra.mxu0 %v3415
  %v3560 = vpop.f32.mrf.mxu0
  %v3561 = vadd.f32 0.0, %v3560
  %v3562 = vpop.f32.mrf.mxu0
  %v3563 = vadd.f32 0.0, %v3562
  %v3564 = vpop.f32.mrf.mxu0
  %v3565 = vadd.f32 0.0, %v3564
  %v3566 = vpop.f32.mrf.mxu0
  %v3567 = vadd.f32 0.0, %v3566
  %3568 = vmatprep.mubr.bf16.mxu0 0
  %3569 = vmatmul.mubr.bf16.gmra.mxu0 %v3416
  %v3570 = vpop.f32.mrf.mxu0
  %v3571 = vadd.f32 0.0, %v3570
  %v3572 = vpop.f32.mrf.mxu0
  %v3573 = vadd.f32 0.0, %v3572
  %v3574 = vpop.f32.mrf.mxu0
  %v3575 = vadd.f32 0.0, %v3574
  %v3576 = vpop.f32.mrf.mxu0
  %v3577 = vadd.f32 0.0, %v3576
  %3578 = vmatprep.mubr.bf16.mxu0 0
  %3579 = vmatmul.mubr.bf16.gmra.mxu0 %v3417
  %v3580 = vpop.f32.mrf.mxu0
  %v3581 = vadd.f32 0.0, %v3580
  %v3582 = vpop.f32.mrf.mxu0
  %v3583 = vadd.f32 0.0, %v3582
  %v3584 = vpop.f32.mrf.mxu0
  %v3585 = vadd.f32 0.0, %v3584
  %v3586 = vpop.f32.mrf.mxu0
  %v3587 = vadd.f32 0.0, %v3586
  %3588 = vmatprep.mubr.bf16.mxu0 0
  %3589 = vmatmul.mubr.bf16.gmra.mxu0 %v3418
  %v3590 = vpop.f32.mrf.mxu0
  %v3591 = vadd.f32 0.0, %v3590
  %v3592 = vpop.f32.mrf.mxu0
  %v3593 = vadd.f32 0.0, %v3592
  %v3594 = vpop.f32.mrf.mxu0
  %v3595 = vadd.f32 0.0, %v3594
  %v3596 = vpop.f32.mrf.mxu0
  %v3597 = vadd.f32 0.0, %v3596
  %3598 = vmatprep.mubr.bf16.mxu0 0
  %3599 = vmatmul.mubr.bf16.gmra.mxu0 %v3419
  %v3600 = vpop.f32.mrf.mxu0
  %v3601 = vadd.f32 0.0, %v3600
  %v3602 = vpop.f32.mrf.mxu0
  %v3603 = vadd.f32 0.0, %v3602
  %v3604 = vpop.f32.mrf.mxu0
  %v3605 = vadd.f32 0.0, %v3604
  %v3606 = vpop.f32.mrf.mxu0
  %v3607 = vadd.f32 0.0, %v3606
  %3608 = vmatprep.mubr.bf16.mxu0 0
  %3609 = vmatmul.mubr.bf16.gmra.mxu0 %v3420
  %v3610 = vpop.f32.mrf.mxu0
  %v3611 = vadd.f32 0.0, %v3610
  %v3612 = vpop.f32.mrf.mxu0
  %v3613 = vadd.f32 0.0, %v3612
  %v3614 = vpop.f32.mrf.mxu0
  %v3615 = vadd.f32 0.0, %v3614
  %v3616 = vpop.f32.mrf.mxu0
  %v3617 = vadd.f32 0.0, %v3616
  %3618 = vmatprep.mubr.bf16.mxu0 0
  %3619 = vmatmul.mubr.bf16.gmra.mxu0 %v3421
  %v3620 = vpop.f32.mrf.mxu0
  %v3621 = vadd.f32 0.0, %v3620
  %v3622 = vpop.f32.mrf.mxu0
  %v3623 = vadd.f32 0.0, %v3622
  %v3624 = vpop.f32.mrf.mxu0
  %v3625 = vadd.f32 0.0, %v3624
  %v3626 = vpop.f32.mrf.mxu0
  %v3627 = vadd.f32 0.0, %v3626
  %3628 = vmatprep.mubr.bf16.mxu0 0
  %3629 = vmatmul.mubr.bf16.gmra.mxu0 %v3422
  %v3630 = vpop.f32.mrf.mxu0
  %v3631 = vadd.f32 0.0, %v3630
  %v3632 = vpop.f32.mrf.mxu0
  %v3633 = vadd.f32 0.0, %v3632
  %v3634 = vpop.f32.mrf.mxu0
  %v3635 = vadd.f32 0.0, %v3634
  %v3636 = vpop.f32.mrf.mxu0
  %v3637 = vadd.f32 0.0, %v3636
  %3638 = vmatprep.mubr.bf16.mxu0 0
  %3639 = vmatmul.mubr.bf16.gmra.mxu0 %v3423
  %v3640 = vpop.f32.mrf.mxu0
  %v3641 = vadd.f32 0.0, %v3640
  %v3642 = vpop.f32.mrf.mxu0
  %v3643 = vadd.f32 0.0, %v3642
  %v3644 = vpop.f32.mrf.mxu0
  %v3645 = vadd.f32 0.0, %v3644
  %v3646 = vpop.f32.mrf.mxu0
  %v3647 = vadd.f32 0.0, %v3646
  %3648 = vmatprep.mubr.bf16.mxu0 0
  %3649 = vmatmul.mubr.bf16.gmra.mxu0 %v3424
  %v3650 = vpop.f32.mrf.mxu0
  %v3651 = vadd.f32 0.0, %v3650
  %v3652 = vpop.f32.mrf.mxu0
  %v3653 = vadd.f32 0.0, %v3652
  %v3654 = vpop.f32.mrf.mxu0
  %v3655 = vadd.f32 0.0, %v3654
  %v3656 = vpop.f32.mrf.mxu0
  %v3657 = vadd.f32 0.0, %v3656
  %3658 = vdwg.mxu0
  %v3661 = vunpack.c.l.b16 %v3344
  %v3662 = vunpack.c.l.b16 %v3345
  %v3663 = vpack.c.b16 %v3662, %v3661
  %v3681 = vunpack.c.l.b16 %v3295
  %v3682 = vunpack.c.h.b16 %v3295
  %v3683 = vunpack.c.l.b16 %v3296
  %v3684 = vunpack.c.h.b16 %v3296
  %v3685 = vunpack.c.l.b16 %v3297
  %v3686 = vunpack.c.h.b16 %v3297
  %v3687 = vunpack.c.l.b16 %v3298
  %v3688 = vunpack.c.h.b16 %v3298
  %v3689 = vunpack.c.l.b16 %v3299
  %v3690 = vunpack.c.h.b16 %v3299
  %v3691 = vunpack.c.l.b16 %v3300
  %v3692 = vunpack.c.h.b16 %v3300
  %v3693 = vunpack.c.l.b16 %v3301
  %v3694 = vunpack.c.h.b16 %v3301
  %v3695 = vunpack.c.l.b16 %v3302
  %v3696 = vunpack.c.h.b16 %v3302
  %v3697 = vunpack.c.l.b16 %v3303
  %v3698 = vunpack.c.h.b16 %v3303
  %v3699 = vunpack.c.l.b16 %v3304
  %v3700 = vunpack.c.h.b16 %v3304
  %v3701 = vunpack.c.l.b16 %v3305
  %v3702 = vunpack.c.h.b16 %v3305
  %v3703 = vunpack.c.l.b16 %v3306
  %v3704 = vunpack.c.h.b16 %v3306
  %v3705 = vunpack.c.l.b16 %v3307
  %v3706 = vunpack.c.h.b16 %v3307
  %v3707 = vunpack.c.l.b16 %v3308
  %v3708 = vunpack.c.h.b16 %v3308
  %v3709 = vunpack.c.l.b16 %v3309
  %v3710 = vunpack.c.h.b16 %v3309
  %v3711 = vunpack.c.l.b16 %v3310
  %v3712 = vunpack.c.h.b16 %v3310
  %v3713 = vpack.c.b16 %v3683, %v3681
  %v3714 = vpack.c.b16 %v3684, %v3682
  %v3715 = vpack.c.b16 %v3687, %v3685
  %v3716 = vpack.c.b16 %v3688, %v3686
  %v3717 = vpack.c.b16 %v3691, %v3689
  %v3718 = vpack.c.b16 %v3692, %v3690
  %v3719 = vpack.c.b16 %v3695, %v3693
  %v3720 = vpack.c.b16 %v3696, %v3694
  %v3721 = vpack.c.b16 %v3699, %v3697
  %v3722 = vpack.c.b16 %v3700, %v3698
  %v3723 = vpack.c.b16 %v3703, %v3701
  %v3724 = vpack.c.b16 %v3704, %v3702
  %v3725 = vpack.c.b16 %v3707, %v3705
  %v3726 = vpack.c.b16 %v3708, %v3706
  %v3727 = vpack.c.b16 %v3711, %v3709
  %v3728 = vpack.c.b16 %v3712, %v3710
  %3745 = vmatprep.subr.bf16.mxu0 %v3728
  %3746 = vmatpush1.bf16.msra.mxu0 %v3727
  %3747 = vmatprep.subr.bf16.mxu0 %v3726
  %3748 = vmatpush1.bf16.msra.mxu0 %v3725
  %3749 = vmatprep.subr.bf16.mxu0 %v3724
  %3750 = vmatpush1.bf16.msra.mxu0 %v3723
  %3751 = vmatprep.subr.bf16.mxu0 %v3722
  %3752 = vmatpush1.bf16.msra.mxu0 %v3721
  %3753 = vmatprep.subr.bf16.mxu0 %v3720
  %3754 = vmatpush1.bf16.msra.mxu0 %v3719
  %3755 = vmatprep.subr.bf16.mxu0 %v3718
  %3756 = vmatpush1.bf16.msra.mxu0 %v3717
  %3757 = vmatprep.subr.bf16.mxu0 %v3716
  %3758 = vmatpush1.bf16.msra.mxu0 %v3715
  %3759 = vmatprep.subr.bf16.mxu0 %v3714
  %3760 = vmatpush1.bf16.msra.mxu0 %v3713
  %3761 = vmatprep.subr.bf16.mxu0 0
  %3762 = vmatpush2.bf16.msra.mxu0 0
  %3763 = vmatprep.subr.bf16.mxu0 0
  %3764 = vmatpush2.bf16.msra.mxu0 0
  %3765 = vmatprep.subr.bf16.mxu0 0
  %3766 = vmatpush2.bf16.msra.mxu0 0
  %3767 = vmatprep.subr.bf16.mxu0 0
  %3768 = vmatpush2.bf16.msra.mxu0 0
  %3769 = vmatprep.subr.bf16.mxu0 0
  %3770 = vmatpush2.bf16.msra.mxu0 0
  %3771 = vmatprep.subr.bf16.mxu0 0
  %3772 = vmatpush2.bf16.msra.mxu0 0
  %3773 = vmatprep.subr.bf16.mxu0 0
  %3774 = vmatpush2.bf16.msra.mxu0 0
  %3775 = vmatprep.subr.bf16.mxu0 0
  %3776 = vmatpush2.bf16.msra.mxu0 0
  %3777 = vmatprep.mubr.bf16.mxu0 0
  %3778 = vmatmul.mubr.bf16.gmra.mxu0 %v3663
  %v3779 = vpop.f32.mrf.mxu0
  %v3780 = vadd.f32 %v3551, %v3779
  %v3781 = vpop.f32.mrf.mxu0
  %v3782 = vadd.f32 %v3553, %v3781
  %v3783 = vpop.f32.mrf.mxu0
  %v3784 = vadd.f32 %v3555, %v3783
  %v3785 = vpop.f32.mrf.mxu0
  %v3786 = vadd.f32 %v3557, %v3785
  %3787 = vmatprep.mubr.bf16.mxu0 0
  %3788 = vmatmul.mubr.bf16.gmra.mxu0 %v3414
  %v3789 = vpop.f32.mrf.mxu0
  %v3790 = vadd.f32 %v3561, %v3789
  %v3791 = vpop.f32.mrf.mxu0
  %v3792 = vadd.f32 %v3563, %v3791
  %v3793 = vpop.f32.mrf.mxu0
  %v3794 = vadd.f32 %v3565, %v3793
  %v3795 = vpop.f32.mrf.mxu0
  %v3796 = vadd.f32 %v3567, %v3795
  %3797 = vmatprep.mubr.bf16.mxu0 0
  %3798 = vmatmul.mubr.bf16.gmra.mxu0 %v3415
  %v3799 = vpop.f32.mrf.mxu0
  %v3800 = vadd.f32 %v3571, %v3799
  %v3801 = vpop.f32.mrf.mxu0
  %v3802 = vadd.f32 %v3573, %v3801
  %v3803 = vpop.f32.mrf.mxu0
  %v3804 = vadd.f32 %v3575, %v3803
  %v3805 = vpop.f32.mrf.mxu0
  %v3806 = vadd.f32 %v3577, %v3805
  %3807 = vmatprep.mubr.bf16.mxu0 0
  %3808 = vmatmul.mubr.bf16.gmra.mxu0 %v3416
  %v3809 = vpop.f32.mrf.mxu0
  %v3810 = vadd.f32 %v3581, %v3809
  %v3811 = vpop.f32.mrf.mxu0
  %v3812 = vadd.f32 %v3583, %v3811
  %v3813 = vpop.f32.mrf.mxu0
  %v3814 = vadd.f32 %v3585, %v3813
  %v3815 = vpop.f32.mrf.mxu0
  %v3816 = vadd.f32 %v3587, %v3815
  %3817 = vmatprep.mubr.bf16.mxu0 0
  %3818 = vmatmul.mubr.bf16.gmra.mxu0 %v3417
  %v3819 = vpop.f32.mrf.mxu0
  %v3820 = vadd.f32 %v3591, %v3819
  %v3821 = vpop.f32.mrf.mxu0
  %v3822 = vadd.f32 %v3593, %v3821
  %v3823 = vpop.f32.mrf.mxu0
  %v3824 = vadd.f32 %v3595, %v3823
  %v3825 = vpop.f32.mrf.mxu0
  %v3826 = vadd.f32 %v3597, %v3825
  %3827 = vmatprep.mubr.bf16.mxu0 0
  %3828 = vmatmul.mubr.bf16.gmra.mxu0 %v3418
  %v3829 = vpop.f32.mrf.mxu0
  %v3830 = vadd.f32 %v3601, %v3829
  %v3831 = vpop.f32.mrf.mxu0
  %v3832 = vadd.f32 %v3603, %v3831
  %v3833 = vpop.f32.mrf.mxu0
  %v3834 = vadd.f32 %v3605, %v3833
  %v3835 = vpop.f32.mrf.mxu0
  %v3836 = vadd.f32 %v3607, %v3835
  %3837 = vmatprep.mubr.bf16.mxu0 0
  %3838 = vmatmul.mubr.bf16.gmra.mxu0 %v3419
  %v3839 = vpop.f32.mrf.mxu0
  %v3840 = vadd.f32 %v3611, %v3839
  %v3841 = vpop.f32.mrf.mxu0
  %v3842 = vadd.f32 %v3613, %v3841
  %v3843 = vpop.f32.mrf.mxu0
  %v3844 = vadd.f32 %v3615, %v3843
  %v3845 = vpop.f32.mrf.mxu0
  %v3846 = vadd.f32 %v3617, %v3845
  %3847 = vmatprep.mubr.bf16.mxu0 0
  %3848 = vmatmul.mubr.bf16.gmra.mxu0 %v3420
  %v3849 = vpop.f32.mrf.mxu0
  %v3850 = vadd.f32 %v3621, %v3849
  %v3851 = vpop.f32.mrf.mxu0
  %v3852 = vadd.f32 %v3623, %v3851
  %v3853 = vpop.f32.mrf.mxu0
  %v3854 = vadd.f32 %v3625, %v3853
  %v3855 = vpop.f32.mrf.mxu0
  %v3856 = vadd.f32 %v3627, %v3855
  %3857 = vmatprep.mubr.bf16.mxu0 0
  %3858 = vmatmul.mubr.bf16.gmra.mxu0 %v3421
  %v3859 = vpop.f32.mrf.mxu0
  %v3860 = vadd.f32 %v3631, %v3859
  %v3861 = vpop.f32.mrf.mxu0
  %v3862 = vadd.f32 %v3633, %v3861
  %v3863 = vpop.f32.mrf.mxu0
  %v3864 = vadd.f32 %v3635, %v3863
  %v3865 = vpop.f32.mrf.mxu0
  %v3866 = vadd.f32 %v3637, %v3865
  %3867 = vmatprep.mubr.bf16.mxu0 0
  %3868 = vmatmul.mubr.bf16.gmra.mxu0 %v3422
  %v3869 = vpop.f32.mrf.mxu0
  %v3870 = vadd.f32 %v3641, %v3869
  %v3871 = vpop.f32.mrf.mxu0
  %v3872 = vadd.f32 %v3643, %v3871
  %v3873 = vpop.f32.mrf.mxu0
  %v3874 = vadd.f32 %v3645, %v3873
  %v3875 = vpop.f32.mrf.mxu0
  %v3876 = vadd.f32 %v3647, %v3875
  %3877 = vmatprep.mubr.bf16.mxu0 0
  %3878 = vmatmul.mubr.bf16.gmra.mxu0 %v3423
  %v3879 = vpop.f32.mrf.mxu0
  %v3880 = vadd.f32 %v3651, %v3879
  %v3881 = vpop.f32.mrf.mxu0
  %v3882 = vadd.f32 %v3653, %v3881
  %v3883 = vpop.f32.mrf.mxu0
  %v3884 = vadd.f32 %v3655, %v3883
  %v3885 = vpop.f32.mrf.mxu0
  %v3886 = vadd.f32 %v3657, %v3885
  %3887 = vdwg.mxu0
  %v3890 = vunpack.c.l.b16 %v3368
  %v3891 = vunpack.c.l.b16 %v3369
  %v3892 = vpack.c.b16 %v3891, %v3890
  %v3910 = vunpack.c.l.b16 %v3327
  %v3911 = vunpack.c.h.b16 %v3327
  %v3912 = vunpack.c.l.b16 %v3328
  %v3913 = vunpack.c.h.b16 %v3328
  %v3914 = vunpack.c.l.b16 %v3329
  %v3915 = vunpack.c.h.b16 %v3329
  %v3916 = vunpack.c.l.b16 %v3330
  %v3917 = vunpack.c.h.b16 %v3330
  %v3918 = vunpack.c.l.b16 %v3331
  %v3919 = vunpack.c.h.b16 %v3331
  %v3920 = vunpack.c.l.b16 %v3332
  %v3921 = vunpack.c.h.b16 %v3332
  %v3922 = vunpack.c.l.b16 %v3333
  %v3923 = vunpack.c.h.b16 %v3333
  %v3924 = vunpack.c.l.b16 %v3334
  %v3925 = vunpack.c.h.b16 %v3334
  %v3926 = vunpack.c.l.b16 %v3335
  %v3927 = vunpack.c.h.b16 %v3335
  %v3928 = vunpack.c.l.b16 %v3336
  %v3929 = vunpack.c.h.b16 %v3336
  %v3930 = vunpack.c.l.b16 %v3337
  %v3931 = vunpack.c.h.b16 %v3337
  %v3932 = vunpack.c.l.b16 %v3338
  %v3933 = vunpack.c.h.b16 %v3338
  %v3934 = vunpack.c.l.b16 %v3339
  %v3935 = vunpack.c.h.b16 %v3339
  %v3936 = vunpack.c.l.b16 %v3340
  %v3937 = vunpack.c.h.b16 %v3340
  %v3938 = vunpack.c.l.b16 %v3341
  %v3939 = vunpack.c.h.b16 %v3341
  %v3940 = vunpack.c.l.b16 %v3342
  %v3941 = vunpack.c.h.b16 %v3342
  %v3942 = vpack.c.b16 %v3912, %v3910
  %v3943 = vpack.c.b16 %v3913, %v3911
  %v3944 = vpack.c.b16 %v3916, %v3914
  %v3945 = vpack.c.b16 %v3917, %v3915
  %v3946 = vpack.c.b16 %v3920, %v3918
  %v3947 = vpack.c.b16 %v3921, %v3919
  %v3948 = vpack.c.b16 %v3924, %v3922
  %v3949 = vpack.c.b16 %v3925, %v3923
  %v3950 = vpack.c.b16 %v3928, %v3926
  %v3951 = vpack.c.b16 %v3929, %v3927
  %v3952 = vpack.c.b16 %v3932, %v3930
  %v3953 = vpack.c.b16 %v3933, %v3931
  %v3954 = vpack.c.b16 %v3936, %v3934
  %v3955 = vpack.c.b16 %v3937, %v3935
  %v3956 = vpack.c.b16 %v3940, %v3938
  %v3957 = vpack.c.b16 %v3941, %v3939
  %3974 = vmatprep.subr.bf16.mxu0 %v3957
  %3975 = vmatpush1.bf16.msra.mxu0 %v3956
  %3976 = vmatprep.subr.bf16.mxu0 %v3955
  %3977 = vmatpush1.bf16.msra.mxu0 %v3954
  %3978 = vmatprep.subr.bf16.mxu0 %v3953
  %3979 = vmatpush1.bf16.msra.mxu0 %v3952
  %3980 = vmatprep.subr.bf16.mxu0 %v3951
  %3981 = vmatpush1.bf16.msra.mxu0 %v3950
  %3982 = vmatprep.subr.bf16.mxu0 %v3949
  %3983 = vmatpush1.bf16.msra.mxu0 %v3948
  %3984 = vmatprep.subr.bf16.mxu0 %v3947
  %3985 = vmatpush1.bf16.msra.mxu0 %v3946
  %3986 = vmatprep.subr.bf16.mxu0 %v3945
  %3987 = vmatpush1.bf16.msra.mxu0 %v3944
  %3988 = vmatprep.subr.bf16.mxu0 %v3943
  %3989 = vmatpush1.bf16.msra.mxu0 %v3942
  %3990 = vmatprep.subr.bf16.mxu0 0
  %3991 = vmatpush2.bf16.msra.mxu0 0
  %3992 = vmatprep.subr.bf16.mxu0 0
  %3993 = vmatpush2.bf16.msra.mxu0 0
  %3994 = vmatprep.subr.bf16.mxu0 0
  %3995 = vmatpush2.bf16.msra.mxu0 0
  %3996 = vmatprep.subr.bf16.mxu0 0
  %3997 = vmatpush2.bf16.msra.mxu0 0
  %3998 = vmatprep.subr.bf16.mxu0 0
  %3999 = vmatpush2.bf16.msra.mxu0 0
  %4000 = vmatprep.subr.bf16.mxu0 0
  %4001 = vmatpush2.bf16.msra.mxu0 0
  %4002 = vmatprep.subr.bf16.mxu0 0
  %4003 = vmatpush2.bf16.msra.mxu0 0
  %4004 = vmatprep.subr.bf16.mxu0 0
  %4005 = vmatpush2.bf16.msra.mxu0 0
  %4006 = vmatprep.mubr.bf16.mxu0 0
  %4007 = vmatmul.mubr.bf16.gmra.mxu0 %v3415
  %v4008 = vpop.f32.mrf.mxu0
  %v4009 = vadd.f32 0.0, %v4008
  %v4010 = vpop.f32.mrf.mxu0
  %v4011 = vadd.f32 0.0, %v4010
  %v4012 = vpop.f32.mrf.mxu0
  %v4013 = vadd.f32 0.0, %v4012
  %v4014 = vpop.f32.mrf.mxu0
  %v4015 = vadd.f32 0.0, %v4014
  %4016 = vmatprep.mubr.bf16.mxu0 0
  %4017 = vmatmul.mubr.bf16.gmra.mxu0 %v3416
  %v4018 = vpop.f32.mrf.mxu0
  %v4019 = vadd.f32 0.0, %v4018
  %v4020 = vpop.f32.mrf.mxu0
  %v4021 = vadd.f32 0.0, %v4020
  %v4022 = vpop.f32.mrf.mxu0
  %v4023 = vadd.f32 0.0, %v4022
  %v4024 = vpop.f32.mrf.mxu0
  %v4025 = vadd.f32 0.0, %v4024
  %4026 = vmatprep.mubr.bf16.mxu0 0
  %4027 = vmatmul.mubr.bf16.gmra.mxu0 %v3417
  %v4028 = vpop.f32.mrf.mxu0
  %v4029 = vadd.f32 0.0, %v4028
  %v4030 = vpop.f32.mrf.mxu0
  %v4031 = vadd.f32 0.0, %v4030
  %v4032 = vpop.f32.mrf.mxu0
  %v4033 = vadd.f32 0.0, %v4032
  %v4034 = vpop.f32.mrf.mxu0
  %v4035 = vadd.f32 0.0, %v4034
  %4036 = vmatprep.mubr.bf16.mxu0 0
  %4037 = vmatmul.mubr.bf16.gmra.mxu0 %v3418
  %v4038 = vpop.f32.mrf.mxu0
  %v4039 = vadd.f32 0.0, %v4038
  %v4040 = vpop.f32.mrf.mxu0
  %v4041 = vadd.f32 0.0, %v4040
  %v4042 = vpop.f32.mrf.mxu0
  %v4043 = vadd.f32 0.0, %v4042
  %v4044 = vpop.f32.mrf.mxu0
  %v4045 = vadd.f32 0.0, %v4044
  %4046 = vmatprep.mubr.bf16.mxu0 0
  %4047 = vmatmul.mubr.bf16.gmra.mxu0 %v3419
  %v4048 = vpop.f32.mrf.mxu0
  %v4049 = vadd.f32 0.0, %v4048
  %v4050 = vpop.f32.mrf.mxu0
  %v4051 = vadd.f32 0.0, %v4050
  %v4052 = vpop.f32.mrf.mxu0
  %v4053 = vadd.f32 0.0, %v4052
  %v4054 = vpop.f32.mrf.mxu0
  %v4055 = vadd.f32 0.0, %v4054
  %4056 = vmatprep.mubr.bf16.mxu0 0
  %4057 = vmatmul.mubr.bf16.gmra.mxu0 %v3420
  %v4058 = vpop.f32.mrf.mxu0
  %v4059 = vadd.f32 0.0, %v4058
  %v4060 = vpop.f32.mrf.mxu0
  %v4061 = vadd.f32 0.0, %v4060
  %v4062 = vpop.f32.mrf.mxu0
  %v4063 = vadd.f32 0.0, %v4062
  %v4064 = vpop.f32.mrf.mxu0
  %v4065 = vadd.f32 0.0, %v4064
  %4066 = vmatprep.mubr.bf16.mxu0 0
  %4067 = vmatmul.mubr.bf16.gmra.mxu0 %v3421
  %v4068 = vpop.f32.mrf.mxu0
  %v4069 = vadd.f32 0.0, %v4068
  %v4070 = vpop.f32.mrf.mxu0
  %v4071 = vadd.f32 0.0, %v4070
  %v4072 = vpop.f32.mrf.mxu0
  %v4073 = vadd.f32 0.0, %v4072
  %v4074 = vpop.f32.mrf.mxu0
  %v4075 = vadd.f32 0.0, %v4074
  %4076 = vmatprep.mubr.bf16.mxu0 0
  %4077 = vmatmul.mubr.bf16.gmra.mxu0 %v3422
  %v4078 = vpop.f32.mrf.mxu0
  %v4079 = vadd.f32 0.0, %v4078
  %v4080 = vpop.f32.mrf.mxu0
  %v4081 = vadd.f32 0.0, %v4080
  %v4082 = vpop.f32.mrf.mxu0
  %v4083 = vadd.f32 0.0, %v4082
  %v4084 = vpop.f32.mrf.mxu0
  %v4085 = vadd.f32 0.0, %v4084
  %4086 = vmatprep.mubr.bf16.mxu0 0
  %4087 = vmatmul.mubr.bf16.gmra.mxu0 %v3423
  %v4088 = vpop.f32.mrf.mxu0
  %v4089 = vadd.f32 0.0, %v4088
  %v4090 = vpop.f32.mrf.mxu0
  %v4091 = vadd.f32 0.0, %v4090
  %v4092 = vpop.f32.mrf.mxu0
  %v4093 = vadd.f32 0.0, %v4092
  %v4094 = vpop.f32.mrf.mxu0
  %v4095 = vadd.f32 0.0, %v4094
  %4096 = vmatprep.mubr.bf16.mxu0 0
  %4097 = vmatmul.mubr.bf16.gmra.mxu0 %v3424
  %v4098 = vpop.f32.mrf.mxu0
  %v4099 = vadd.f32 0.0, %v4098
  %v4100 = vpop.f32.mrf.mxu0
  %v4101 = vadd.f32 0.0, %v4100
  %v4102 = vpop.f32.mrf.mxu0
  %v4103 = vadd.f32 0.0, %v4102
  %v4104 = vpop.f32.mrf.mxu0
  %v4105 = vadd.f32 0.0, %v4104
  %4106 = vmatprep.mubr.bf16.mxu0 0
  %4107 = vmatmul.mubr.bf16.gmra.mxu0 %v3892
  %v4108 = vpop.f32.mrf.mxu0
  %v4109 = vadd.f32 0.0, %v4108
  %v4110 = vpop.f32.mrf.mxu0
  %v4111 = vadd.f32 0.0, %v4110
  %v4112 = vpop.f32.mrf.mxu0
  %v4113 = vadd.f32 0.0, %v4112
  %v4114 = vpop.f32.mrf.mxu0
  %v4115 = vadd.f32 0.0, %v4114
  %4116 = vdwg.mxu0
  %v4117 = vadd.f32 %v3780, %v4009
  %v4118 = vadd.f32 %v3782, %v4011
  %v4119 = vadd.f32 %v3784, %v4013
  %v4120 = vadd.f32 %v3786, %v4015
  %v4121 = vadd.f32 %v3790, %v4019
  %v4122 = vadd.f32 %v3792, %v4021
  %v4123 = vadd.f32 %v3794, %v4023
  %v4124 = vadd.f32 %v3796, %v4025
  %v4125 = vadd.f32 %v3800, %v4029
  %v4126 = vadd.f32 %v3802, %v4031
  %v4127 = vadd.f32 %v3804, %v4033
  %v4128 = vadd.f32 %v3806, %v4035
  %v4129 = vadd.f32 %v3810, %v4039
  %v4130 = vadd.f32 %v3812, %v4041
  %v4131 = vadd.f32 %v3814, %v4043
  %v4132 = vadd.f32 %v3816, %v4045
  %v4133 = vadd.f32 %v3820, %v4049
  %v4134 = vadd.f32 %v3822, %v4051
  %v4135 = vadd.f32 %v3824, %v4053
  %v4136 = vadd.f32 %v3826, %v4055
  %v4137 = vadd.f32 %v3830, %v4059
  %v4138 = vadd.f32 %v3832, %v4061
  %v4139 = vadd.f32 %v3834, %v4063
  %v4140 = vadd.f32 %v3836, %v4065
  %v4141 = vadd.f32 %v3840, %v4069
  %v4142 = vadd.f32 %v3842, %v4071
  %v4143 = vadd.f32 %v3844, %v4073
  %v4144 = vadd.f32 %v3846, %v4075
  %v4145 = vadd.f32 %v3850, %v4079
  %v4146 = vadd.f32 %v3852, %v4081
  %v4147 = vadd.f32 %v3854, %v4083
  %v4148 = vadd.f32 %v3856, %v4085
  %v4149 = vadd.f32 %v3860, %v4089
  %v4150 = vadd.f32 %v3862, %v4091
  %v4151 = vadd.f32 %v3864, %v4093
  %v4152 = vadd.f32 %v3866, %v4095
  %v4153 = vadd.f32 %v3870, %v4099
  %v4154 = vadd.f32 %v3872, %v4101
  %v4155 = vadd.f32 %v3874, %v4103
  %v4156 = vadd.f32 %v3876, %v4105
  %v4157 = vadd.f32 %v3880, %v4109
  %v4158 = vadd.f32 %v3882, %v4111
  %v4159 = vadd.f32 %v3884, %v4113
  %v4160 = vadd.f32 %v3886, %v4115
  %v4162 = vlaneseq
  %v4163 = vshrl.u32 %v4162, 7
  %v4164 = vsub.s32 0, %v4163
  %v4165 = vrot.slane %v3343, %v4164
  %v4166 = vlaneseq
  %v4167 = vshrl.u32 %v4166, 7
  %v4168 = vsub.s32 1, %v4167
  %v4169 = vrot.slane %v3343, %v4168
  %v4172 = vadd.f32 %v4117, %v4165
  %v4173 = vadd.f32 %v4118, %v4169
  %v4174 = vadd.f32 %v4119, %v4165
  %v4175 = vadd.f32 %v4120, %v4169
  %v4176 = vadd.f32 %v4121, %v4165
  %v4177 = vadd.f32 %v4122, %v4169
  %v4178 = vadd.f32 %v4123, %v4165
  %v4179 = vadd.f32 %v4124, %v4169
  %v4180 = vadd.f32 %v4125, %v4165
  %v4181 = vadd.f32 %v4126, %v4169
  %v4182 = vadd.f32 %v4127, %v4165
  %v4183 = vadd.f32 %v4128, %v4169
  %v4184 = vadd.f32 %v4129, %v4165
  %v4185 = vadd.f32 %v4130, %v4169
  %v4186 = vadd.f32 %v4131, %v4165
  %v4187 = vadd.f32 %v4132, %v4169
  %v4188 = vadd.f32 %v4133, %v4165
  %v4189 = vadd.f32 %v4134, %v4169
  %v4190 = vadd.f32 %v4135, %v4165
  %v4191 = vadd.f32 %v4136, %v4169
  %v4192 = vadd.f32 %v4137, %v4165
  %v4193 = vadd.f32 %v4138, %v4169
  %v4194 = vadd.f32 %v4139, %v4165
  %v4195 = vadd.f32 %v4140, %v4169
  %v4196 = vadd.f32 %v4141, %v4165
  %v4197 = vadd.f32 %v4142, %v4169
  %v4198 = vadd.f32 %v4143, %v4165
  %v4199 = vadd.f32 %v4144, %v4169
  %v4200 = vadd.f32 %v4145, %v4165
  %v4201 = vadd.f32 %v4146, %v4169
  %v4202 = vadd.f32 %v4147, %v4165
  %v4203 = vadd.f32 %v4148, %v4169
  %v4204 = vadd.f32 %v4149, %v4165
  %v4205 = vadd.f32 %v4150, %v4169
  %v4206 = vadd.f32 %v4151, %v4165
  %v4207 = vadd.f32 %v4152, %v4169
  %v4208 = vadd.f32 %v4153, %v4165
  %v4209 = vadd.f32 %v4154, %v4169
  %v4210 = vadd.f32 %v4155, %v4165
  %v4211 = vadd.f32 %v4156, %v4169
  %v4212 = vadd.f32 %v4157, %v4165
  %v4213 = vadd.f32 %v4158, %v4169
  %v4214 = vadd.f32 %v4159, %v4165
  %v4215 = vadd.f32 %v4160, %v4169
  %v4216 = vmul.f32 %v4172, 0.1
  %v4217 = vmul.f32 %v4173, 0.1
  %v4218 = vmul.f32 %v4174, 0.1
  %v4219 = vmul.f32 %v4175, 0.1
  %v4220 = vmul.f32 %v4176, 0.1
  %v4221 = vmul.f32 %v4177, 0.1
  %v4222 = vmul.f32 %v4178, 0.1
  %v4223 = vmul.f32 %v4179, 0.1
  %v4224 = vmul.f32 %v4180, 0.1
  %v4225 = vmul.f32 %v4181, 0.1
  %v4226 = vmul.f32 %v4182, 0.1
  %v4227 = vmul.f32 %v4183, 0.1
  %v4228 = vmul.f32 %v4184, 0.1
  %v4229 = vmul.f32 %v4185, 0.1
  %v4230 = vmul.f32 %v4186, 0.1
  %v4231 = vmul.f32 %v4187, 0.1
  %v4232 = vmul.f32 %v4188, 0.1
  %v4233 = vmul.f32 %v4189, 0.1
  %v4234 = vmul.f32 %v4190, 0.1
  %v4235 = vmul.f32 %v4191, 0.1
  %v4236 = vmul.f32 %v4192, 0.1
  %v4237 = vmul.f32 %v4193, 0.1
  %v4238 = vmul.f32 %v4194, 0.1
  %v4239 = vmul.f32 %v4195, 0.1
  %v4240 = vmul.f32 %v4196, 0.1
  %v4241 = vmul.f32 %v4197, 0.1
  %v4242 = vmul.f32 %v4198, 0.1
  %v4243 = vmul.f32 %v4199, 0.1
  %v4244 = vmul.f32 %v4200, 0.1
  %v4245 = vmul.f32 %v4201, 0.1
  %v4246 = vmul.f32 %v4202, 0.1
  %v4247 = vmul.f32 %v4203, 0.1
  %v4248 = vmul.f32 %v4204, 0.1
  %v4249 = vmul.f32 %v4205, 0.1
  %v4250 = vmul.f32 %v4206, 0.1
  %v4251 = vmul.f32 %v4207, 0.1
  %v4252 = vmul.f32 %v4208, 0.1
  %v4253 = vmul.f32 %v4209, 0.1
  %v4254 = vmul.f32 %v4210, 0.1
  %v4255 = vmul.f32 %v4211, 0.1
  %v4256 = vmul.f32 %v4212, 0.1
  %v4257 = vmul.f32 %v4213, 0.1
  %v4258 = vmul.f32 %v4214, 0.1
  %v4259 = vmul.f32 %v4215, 0.1
  %v4260 = vmax.f32 %v4172, %v4216
  %v4261 = vmax.f32 %v4173, %v4217
  %v4262 = vmax.f32 %v4174, %v4218
  %v4263 = vmax.f32 %v4175, %v4219
  %v4264 = vmax.f32 %v4176, %v4220
  %v4265 = vmax.f32 %v4177, %v4221
  %v4266 = vmax.f32 %v4178, %v4222
  %v4267 = vmax.f32 %v4179, %v4223
  %v4268 = vmax.f32 %v4180, %v4224
  %v4269 = vmax.f32 %v4181, %v4225
  %v4270 = vmax.f32 %v4182, %v4226
  %v4271 = vmax.f32 %v4183, %v4227
  %v4272 = vmax.f32 %v4184, %v4228
  %v4273 = vmax.f32 %v4185, %v4229
  %v4274 = vmax.f32 %v4186, %v4230
  %v4275 = vmax.f32 %v4187, %v4231
  %v4276 = vmax.f32 %v4188, %v4232
  %v4277 = vmax.f32 %v4189, %v4233
  %v4278 = vmax.f32 %v4190, %v4234
  %v4279 = vmax.f32 %v4191, %v4235
  %v4280 = vmax.f32 %v4192, %v4236
  %v4281 = vmax.f32 %v4193, %v4237
  %v4282 = vmax.f32 %v4194, %v4238
  %v4283 = vmax.f32 %v4195, %v4239
  %v4284 = vmax.f32 %v4196, %v4240
  %v4285 = vmax.f32 %v4197, %v4241
  %v4286 = vmax.f32 %v4198, %v4242
  %v4287 = vmax.f32 %v4199, %v4243
  %v4288 = vmax.f32 %v4200, %v4244
  %v4289 = vmax.f32 %v4201, %v4245
  %v4290 = vmax.f32 %v4202, %v4246
  %v4291 = vmax.f32 %v4203, %v4247
  %v4292 = vmax.f32 %v4204, %v4248
  %v4293 = vmax.f32 %v4205, %v4249
  %v4294 = vmax.f32 %v4206, %v4250
  %v4295 = vmax.f32 %v4207, %v4251
  %v4296 = vmax.f32 %v4208, %v4252
  %v4297 = vmax.f32 %v4209, %v4253
  %v4298 = vmax.f32 %v4210, %v4254
  %v4299 = vmax.f32 %v4211, %v4255
  %v4300 = vmax.f32 %v4212, %v4256
  %v4301 = vmax.f32 %v4213, %v4257
  %v4302 = vmax.f32 %v4214, %v4258
  %v4303 = vmax.f32 %v4215, %v4259
  %v4304 = vpack.c.bf16 %v4262, %v4260
  %v4305 = vpack.c.bf16 %v4263, %v4261
  %v4306 = vpack.c.bf16 %v4266, %v4264
  %v4307 = vpack.c.bf16 %v4267, %v4265
  %v4308 = vpack.c.bf16 %v4270, %v4268
  %v4309 = vpack.c.bf16 %v4271, %v4269
  %v4310 = vpack.c.bf16 %v4274, %v4272
  %v4311 = vpack.c.bf16 %v4275, %v4273
  %v4312 = vpack.c.bf16 %v4278, %v4276
  %v4313 = vpack.c.bf16 %v4279, %v4277
  %v4314 = vpack.c.bf16 %v4282, %v4280
  %v4315 = vpack.c.bf16 %v4283, %v4281
  %v4316 = vpack.c.bf16 %v4286, %v4284
  %v4317 = vpack.c.bf16 %v4287, %v4285
  %v4318 = vpack.c.bf16 %v4290, %v4288
  %v4319 = vpack.c.bf16 %v4291, %v4289
  %v4320 = vpack.c.bf16 %v4294, %v4292
  %v4321 = vpack.c.bf16 %v4295, %v4293
  %v4322 = vpack.c.bf16 %v4298, %v4296
  %v4323 = vpack.c.bf16 %v4299, %v4297
  %v4324 = vpack.c.bf16 %v4302, %v4300
  %v4325 = vpack.c.bf16 %v4303, %v4301
  %v4348 = vunpack.c.l.b16 %v4304
  %v4349 = vunpack.c.l.b16 %v4305
  %v4350 = vunpack.c.h.b16 %v4304
  %v4351 = vunpack.c.h.b16 %v4305
  %v4352 = vunpack.c.l.b16 %v4306
  %v4353 = vunpack.c.l.b16 %v4307
  %v4354 = vunpack.c.h.b16 %v4306
  %v4355 = vunpack.c.h.b16 %v4307
  %v4356 = vunpack.c.l.b16 %v4308
  %v4357 = vunpack.c.l.b16 %v4309
  %v4358 = vunpack.c.h.b16 %v4308
  %v4359 = vunpack.c.h.b16 %v4309
  %v4360 = vunpack.c.l.b16 %v4310
  %v4361 = vunpack.c.l.b16 %v4311
  %v4362 = vunpack.c.h.b16 %v4310
  %v4363 = vunpack.c.h.b16 %v4311
  %v4364 = vunpack.c.l.b16 %v4312
  %v4365 = vunpack.c.l.b16 %v4313
  %v4366 = vunpack.c.h.b16 %v4312
  %v4367 = vunpack.c.h.b16 %v4313
  %v4368 = vunpack.c.l.b16 %v4314
  %v4369 = vunpack.c.l.b16 %v4315
  %v4370 = vunpack.c.h.b16 %v4314
  %v4371 = vunpack.c.h.b16 %v4315
  %v4372 = vunpack.c.l.b16 %v4316
  %v4373 = vunpack.c.l.b16 %v4317
  %v4374 = vunpack.c.h.b16 %v4316
  %v4375 = vunpack.c.h.b16 %v4317
  %v4376 = vunpack.c.l.b16 %v4318
  %v4377 = vunpack.c.l.b16 %v4319
  %v4378 = vunpack.c.h.b16 %v4318
  %v4379 = vunpack.c.h.b16 %v4319
  %v4380 = vunpack.c.l.b16 %v4320
  %v4381 = vunpack.c.l.b16 %v4321
  %v4382 = vunpack.c.h.b16 %v4320
  %v4383 = vunpack.c.h.b16 %v4321
  %v4384 = vunpack.c.l.b16 %v4322
  %v4385 = vunpack.c.l.b16 %v4323
  %v4386 = vunpack.c.h.b16 %v4322
  %v4387 = vunpack.c.h.b16 %v4323
  %v4388 = vunpack.c.l.b16 %v4324
  %v4389 = vunpack.c.l.b16 %v4325
  %v4390 = vunpack.c.h.b16 %v4324
  %v4391 = vunpack.c.h.b16 %v4325
  %v4392 = vpack.c.b16 %v4349, %v4348
  %v4393 = vpack.c.b16 %v4351, %v4350
  %v4394 = vpack.c.b16 %v4353, %v4352
  %v4395 = vpack.c.b16 %v4355, %v4354
  %v4396 = vpack.c.b16 %v4357, %v4356
  %v4397 = vpack.c.b16 %v4359, %v4358
  %v4398 = vpack.c.b16 %v4361, %v4360
  %v4399 = vpack.c.b16 %v4363, %v4362
  %v4400 = vpack.c.b16 %v4365, %v4364
  %v4401 = vpack.c.b16 %v4367, %v4366
  %v4402 = vpack.c.b16 %v4369, %v4368
  %v4403 = vpack.c.b16 %v4371, %v4370
  %v4404 = vpack.c.b16 %v4373, %v4372
  %v4405 = vpack.c.b16 %v4375, %v4374
  %v4406 = vpack.c.b16 %v4377, %v4376
  %v4407 = vpack.c.b16 %v4379, %v4378
  %v4408 = vpack.c.b16 %v4381, %v4380
  %v4409 = vpack.c.b16 %v4383, %v4382
  %v4410 = vpack.c.b16 %v4385, %v4384
  %v4411 = vpack.c.b16 %v4387, %v4386
  %v4412 = vpack.c.b16 %v4389, %v4388
  %v4413 = vpack.c.b16 %v4391, %v4390
  %4436 = vst [vmem:[#allocation2 + $0x10] sm:$0xff] %v4392
  %4437 = vst [vmem:[#allocation2 + $0x18] sm:$0xff] %v4393
  %4438 = vst [vmem:[#allocation2 + $0x20] sm:$0xff] %v4394
  %4439 = vst [vmem:[#allocation2 + $0x28] sm:$0xff] %v4395
  %4440 = vst [vmem:[#allocation2 + $0x30] sm:$0xff] %v4396
  %4441 = vst [vmem:[#allocation2 + $0x38] sm:$0xff] %v4397
  %4442 = vst [vmem:[#allocation2 + $0x40] sm:$0xff] %v4398
  %4443 = vst [vmem:[#allocation2 + $0x48] sm:$0xff] %v4399
  %4444 = vst [vmem:[#allocation2 + $0x50] sm:$0xff] %v4400
  %4445 = vst [vmem:[#allocation2 + $0x58] sm:$0xff] %v4401
  %4446 = vst [vmem:[#allocation2 + $0x60] sm:$0xff] %v4402
  %4447 = vst [vmem:[#allocation2 + $0x68] sm:$0xff] %v4403
  %4448 = vst [vmem:[#allocation2 + $0x70] sm:$0xff] %v4404
  %4449 = vst [vmem:[#allocation2 + $0x78] sm:$0xff] %v4405
  %4450 = vst [vmem:[#allocation2 + $0x80] sm:$0xff] %v4406
  %4451 = vst [vmem:[#allocation2 + $0x88] sm:$0xff] %v4407
  %4452 = vst [vmem:[#allocation2 + $0x90] sm:$0xff] %v4408
  %4453 = vst [vmem:[#allocation2 + $0x98] sm:$0xff] %v4409
  %4454 = vst [vmem:[#allocation2 + $0xa0] sm:$0xff] %v4410
  %4455 = vst [vmem:[#allocation2 + $0xa8] sm:$0xff] %v4411
  %4456 = vst [vmem:[#allocation2 + $0xb0] sm:$0xff] %v4412
  %4457 = vst [vmem:[#allocation2 + $0xb8] sm:$0xff] %v4413
  %v4458 = vld [vmem:[%s1117] sm:$0xf]
  %v4459 = vld [vmem:[%s1117 + $0x8] sm:$0xf]
  %v4460 = vld [vmem:[%s1117 + $0x10] sm:$0xf]
  %v4461 = vld [vmem:[%s1117 + $0x18] sm:$0xf]
  %v4462 = vld [vmem:[%s1117 + $0x20] sm:$0xf]
  %v4463 = vld [vmem:[%s1117 + $0x28] sm:$0xf]
  %v4464 = vld [vmem:[%s1117 + $0x30] sm:$0xf]
  %v4465 = vld [vmem:[%s1117 + $0x38] sm:$0xf]
  %v4466 = vld [vmem:[%s1117 + $0x40] sm:$0xf]
  %v4467 = vld [vmem:[%s1117 + $0x48] sm:$0xf]
  %v4468 = vld [vmem:[%s1117 + $0x50] sm:$0xf]
  %v4469 = vld [vmem:[%s1117 + $0x58] sm:$0xf]
  %v4470 = vld [vmem:[%s1117 + $0x60] sm:$0xf]
  %v4471 = vld [vmem:[%s1117 + $0x68] sm:$0xf]
  %v4472 = vld [vmem:[%s1117 + $0x70] sm:$0xf]
  %v4473 = vld [vmem:[%s1117 + $0x78] sm:$0xf]
  %v4474 = vld [vmem:[%s1117 + $0x80] sm:$0xf]
  %v4475 = vld [vmem:[%s1117 + $0x88] sm:$0xf]
  %v4476 = vld [vmem:[%s1117 + $0x90] sm:$0xf]
  %v4477 = vld [vmem:[%s1117 + $0x98] sm:$0xf]
  %v4478 = vld [vmem:[%s1117 + $0xa0] sm:$0xf]
  %v4479 = vld [vmem:[%s1117 + $0xa8] sm:$0xf]
  %v4480 = vld [vmem:[%s1117 + $0xb0] sm:$0xf]
  %v4481 = vld [vmem:[%s1117 + $0xb8] sm:$0xf]
  %v4482 = vld [vmem:[%s1117 + $0xc0] sm:$0xf]
  %v4483 = vld [vmem:[%s1117 + $0xc8] sm:$0xf]
  %v4506 = vunpack.c.l.b16 %v4460
  %v4507 = vunpack.c.l.b16 %v4461
  %v4508 = vunpack.c.l.b16 %v4462
  %v4509 = vunpack.c.l.b16 %v4463
  %v4510 = vunpack.c.l.b16 %v4464
  %v4511 = vunpack.c.l.b16 %v4465
  %v4512 = vunpack.c.l.b16 %v4466
  %v4513 = vunpack.c.l.b16 %v4467
  %v4514 = vunpack.c.l.b16 %v4468
  %v4515 = vunpack.c.l.b16 %v4469
  %v4516 = vunpack.c.l.b16 %v4470
  %v4517 = vunpack.c.l.b16 %v4471
  %v4518 = vunpack.c.l.b16 %v4472
  %v4519 = vunpack.c.l.b16 %v4473
  %v4520 = vunpack.c.l.b16 %v4474
  %v4521 = vunpack.c.l.b16 %v4475
  %v4522 = vunpack.c.l.b16 %v4476
  %v4523 = vunpack.c.l.b16 %v4477
  %v4524 = vunpack.c.l.b16 %v4478
  %v4525 = vunpack.c.l.b16 %v4479
  %v4526 = vunpack.c.l.b16 %v4480
  %v4527 = vunpack.c.l.b16 %v4481
  %v4528 = vpack.c.b16 %v4507, %v4506
  %v4529 = vpack.c.b16 %v4509, %v4508
  %v4530 = vpack.c.b16 %v4511, %v4510
  %v4531 = vpack.c.b16 %v4513, %v4512
  %v4532 = vpack.c.b16 %v4515, %v4514
  %v4533 = vpack.c.b16 %v4517, %v4516
  %v4534 = vpack.c.b16 %v4519, %v4518
  %v4535 = vpack.c.b16 %v4521, %v4520
  %v4536 = vpack.c.b16 %v4523, %v4522
  %v4537 = vpack.c.b16 %v4525, %v4524
  %v4538 = vpack.c.b16 %v4527, %v4526
  %4550 = vmatprep.subr.bf16.mxu0 %v3499
  %4551 = vmatpush1.bf16.msra.mxu0 %v3498
  %4552 = vmatprep.subr.bf16.mxu0 %v3497
  %4553 = vmatpush1.bf16.msra.mxu0 %v3496
  %4554 = vmatprep.subr.bf16.mxu0 %v3495
  %4555 = vmatpush1.bf16.msra.mxu0 %v3494
  %4556 = vmatprep.subr.bf16.mxu0 %v3493
  %4557 = vmatpush1.bf16.msra.mxu0 %v3492
  %4558 = vmatprep.subr.bf16.mxu0 %v3491
  %4559 = vmatpush1.bf16.msra.mxu0 %v3490
  %4560 = vmatprep.subr.bf16.mxu0 %v3489
  %4561 = vmatpush1.bf16.msra.mxu0 %v3488
  %4562 = vmatprep.subr.bf16.mxu0 %v3487
  %4563 = vmatpush1.bf16.msra.mxu0 %v3486
  %4564 = vmatprep.subr.bf16.mxu0 %v3485
  %4565 = vmatpush1.bf16.msra.mxu0 %v3484
  %4566 = vmatprep.subr.bf16.mxu0 0
  %4567 = vmatpush2.bf16.msra.mxu0 0
  %4568 = vmatprep.subr.bf16.mxu0 0
  %4569 = vmatpush2.bf16.msra.mxu0 0
  %4570 = vmatprep.subr.bf16.mxu0 0
  %4571 = vmatpush2.bf16.msra.mxu0 0
  %4572 = vmatprep.subr.bf16.mxu0 0
  %4573 = vmatpush2.bf16.msra.mxu0 0
  %4574 = vmatprep.subr.bf16.mxu0 0
  %4575 = vmatpush2.bf16.msra.mxu0 0
  %4576 = vmatprep.subr.bf16.mxu0 0
  %4577 = vmatpush2.bf16.msra.mxu0 0
  %4578 = vmatprep.subr.bf16.mxu0 0
  %4579 = vmatpush2.bf16.msra.mxu0 0
  %4580 = vmatprep.subr.bf16.mxu0 0
  %4581 = vmatpush2.bf16.msra.mxu0 0
  %4582 = vmatprep.mubr.bf16.mxu0 0
  %4583 = vmatmul.mubr.bf16.gmra.mxu0 %v4528
  %v4584 = vpop.f32.mrf.mxu0
  %v4585 = vadd.f32 0.0, %v4584
  %v4586 = vpop.f32.mrf.mxu0
  %v4587 = vadd.f32 0.0, %v4586
  %v4588 = vpop.f32.mrf.mxu0
  %v4589 = vadd.f32 0.0, %v4588
  %v4590 = vpop.f32.mrf.mxu0
  %v4591 = vadd.f32 0.0, %v4590
  %4592 = vmatprep.mubr.bf16.mxu0 0
  %4593 = vmatmul.mubr.bf16.gmra.mxu0 %v4529
  %v4594 = vpop.f32.mrf.mxu0
  %v4595 = vadd.f32 0.0, %v4594
  %v4596 = vpop.f32.mrf.mxu0
  %v4597 = vadd.f32 0.0, %v4596
  %v4598 = vpop.f32.mrf.mxu0
  %v4599 = vadd.f32 0.0, %v4598
  %v4600 = vpop.f32.mrf.mxu0
  %v4601 = vadd.f32 0.0, %v4600
  %4602 = vmatprep.mubr.bf16.mxu0 0
  %4603 = vmatmul.mubr.bf16.gmra.mxu0 %v4530
  %v4604 = vpop.f32.mrf.mxu0
  %v4605 = vadd.f32 0.0, %v4604
  %v4606 = vpop.f32.mrf.mxu0
  %v4607 = vadd.f32 0.0, %v4606
  %v4608 = vpop.f32.mrf.mxu0
  %v4609 = vadd.f32 0.0, %v4608
  %v4610 = vpop.f32.mrf.mxu0
  %v4611 = vadd.f32 0.0, %v4610
  %4612 = vmatprep.mubr.bf16.mxu0 0
  %4613 = vmatmul.mubr.bf16.gmra.mxu0 %v4531
  %v4614 = vpop.f32.mrf.mxu0
  %v4615 = vadd.f32 0.0, %v4614
  %v4616 = vpop.f32.mrf.mxu0
  %v4617 = vadd.f32 0.0, %v4616
  %v4618 = vpop.f32.mrf.mxu0
  %v4619 = vadd.f32 0.0, %v4618
  %v4620 = vpop.f32.mrf.mxu0
  %v4621 = vadd.f32 0.0, %v4620
  %4622 = vmatprep.mubr.bf16.mxu0 0
  %4623 = vmatmul.mubr.bf16.gmra.mxu0 %v4532
  %v4624 = vpop.f32.mrf.mxu0
  %v4625 = vadd.f32 0.0, %v4624
  %v4626 = vpop.f32.mrf.mxu0
  %v4627 = vadd.f32 0.0, %v4626
  %v4628 = vpop.f32.mrf.mxu0
  %v4629 = vadd.f32 0.0, %v4628
  %v4630 = vpop.f32.mrf.mxu0
  %v4631 = vadd.f32 0.0, %v4630
  %4632 = vmatprep.mubr.bf16.mxu0 0
  %4633 = vmatmul.mubr.bf16.gmra.mxu0 %v4533
  %v4634 = vpop.f32.mrf.mxu0
  %v4635 = vadd.f32 0.0, %v4634
  %v4636 = vpop.f32.mrf.mxu0
  %v4637 = vadd.f32 0.0, %v4636
  %v4638 = vpop.f32.mrf.mxu0
  %v4639 = vadd.f32 0.0, %v4638
  %v4640 = vpop.f32.mrf.mxu0
  %v4641 = vadd.f32 0.0, %v4640
  %4642 = vmatprep.mubr.bf16.mxu0 0
  %4643 = vmatmul.mubr.bf16.gmra.mxu0 %v4534
  %v4644 = vpop.f32.mrf.mxu0
  %v4645 = vadd.f32 0.0, %v4644
  %v4646 = vpop.f32.mrf.mxu0
  %v4647 = vadd.f32 0.0, %v4646
  %v4648 = vpop.f32.mrf.mxu0
  %v4649 = vadd.f32 0.0, %v4648
  %v4650 = vpop.f32.mrf.mxu0
  %v4651 = vadd.f32 0.0, %v4650
  %4652 = vmatprep.mubr.bf16.mxu0 0
  %4653 = vmatmul.mubr.bf16.gmra.mxu0 %v4535
  %v4654 = vpop.f32.mrf.mxu0
  %v4655 = vadd.f32 0.0, %v4654
  %v4656 = vpop.f32.mrf.mxu0
  %v4657 = vadd.f32 0.0, %v4656
  %v4658 = vpop.f32.mrf.mxu0
  %v4659 = vadd.f32 0.0, %v4658
  %v4660 = vpop.f32.mrf.mxu0
  %v4661 = vadd.f32 0.0, %v4660
  %4662 = vmatprep.mubr.bf16.mxu0 0
  %4663 = vmatmul.mubr.bf16.gmra.mxu0 %v4536
  %v4664 = vpop.f32.mrf.mxu0
  %v4665 = vadd.f32 0.0, %v4664
  %v4666 = vpop.f32.mrf.mxu0
  %v4667 = vadd.f32 0.0, %v4666
  %v4668 = vpop.f32.mrf.mxu0
  %v4669 = vadd.f32 0.0, %v4668
  %v4670 = vpop.f32.mrf.mxu0
  %v4671 = vadd.f32 0.0, %v4670
  %4672 = vmatprep.mubr.bf16.mxu0 0
  %4673 = vmatmul.mubr.bf16.gmra.mxu0 %v4537
  %v4674 = vpop.f32.mrf.mxu0
  %v4675 = vadd.f32 0.0, %v4674
  %v4676 = vpop.f32.mrf.mxu0
  %v4677 = vadd.f32 0.0, %v4676
  %v4678 = vpop.f32.mrf.mxu0
  %v4679 = vadd.f32 0.0, %v4678
  %v4680 = vpop.f32.mrf.mxu0
  %v4681 = vadd.f32 0.0, %v4680
  %4682 = vmatprep.mubr.bf16.mxu0 0
  %4683 = vmatmul.mubr.bf16.gmra.mxu0 %v4538
  %v4684 = vpop.f32.mrf.mxu0
  %v4685 = vadd.f32 0.0, %v4684
  %v4686 = vpop.f32.mrf.mxu0
  %v4687 = vadd.f32 0.0, %v4686
  %v4688 = vpop.f32.mrf.mxu0
  %v4689 = vadd.f32 0.0, %v4688
  %v4690 = vpop.f32.mrf.mxu0
  %v4691 = vadd.f32 0.0, %v4690
  %4692 = vdwg.mxu0
  %v4695 = vunpack.c.l.b16 %v4458
  %v4696 = vunpack.c.l.b16 %v4459
  %v4697 = vpack.c.b16 %v4696, %v4695
  %4699 = vmatprep.subr.bf16.mxu0 %v3728
  %4700 = vmatpush1.bf16.msra.mxu0 %v3727
  %4701 = vmatprep.subr.bf16.mxu0 %v3726
  %4702 = vmatpush1.bf16.msra.mxu0 %v3725
  %4703 = vmatprep.subr.bf16.mxu0 %v3724
  %4704 = vmatpush1.bf16.msra.mxu0 %v3723
  %4705 = vmatprep.subr.bf16.mxu0 %v3722
  %4706 = vmatpush1.bf16.msra.mxu0 %v3721
  %4707 = vmatprep.subr.bf16.mxu0 %v3720
  %4708 = vmatpush1.bf16.msra.mxu0 %v3719
  %4709 = vmatprep.subr.bf16.mxu0 %v3718
  %4710 = vmatpush1.bf16.msra.mxu0 %v3717
  %4711 = vmatprep.subr.bf16.mxu0 %v3716
  %4712 = vmatpush1.bf16.msra.mxu0 %v3715
  %4713 = vmatprep.subr.bf16.mxu0 %v3714
  %4714 = vmatpush1.bf16.msra.mxu0 %v3713
  %4715 = vmatprep.subr.bf16.mxu0 0
  %4716 = vmatpush2.bf16.msra.mxu0 0
  %4717 = vmatprep.subr.bf16.mxu0 0
  %4718 = vmatpush2.bf16.msra.mxu0 0
  %4719 = vmatprep.subr.bf16.mxu0 0
  %4720 = vmatpush2.bf16.msra.mxu0 0
  %4721 = vmatprep.subr.bf16.mxu0 0
  %4722 = vmatpush2.bf16.msra.mxu0 0
  %4723 = vmatprep.subr.bf16.mxu0 0
  %4724 = vmatpush2.bf16.msra.mxu0 0
  %4725 = vmatprep.subr.bf16.mxu0 0
  %4726 = vmatpush2.bf16.msra.mxu0 0
  %4727 = vmatprep.subr.bf16.mxu0 0
  %4728 = vmatpush2.bf16.msra.mxu0 0
  %4729 = vmatprep.subr.bf16.mxu0 0
  %4730 = vmatpush2.bf16.msra.mxu0 0
  %4731 = vmatprep.mubr.bf16.mxu0 0
  %4732 = vmatmul.mubr.bf16.gmra.mxu0 %v4697
  %v4733 = vpop.f32.mrf.mxu0
  %v4734 = vadd.f32 %v4585, %v4733
  %v4735 = vpop.f32.mrf.mxu0
  %v4736 = vadd.f32 %v4587, %v4735
  %v4737 = vpop.f32.mrf.mxu0
  %v4738 = vadd.f32 %v4589, %v4737
  %v4739 = vpop.f32.mrf.mxu0
  %v4740 = vadd.f32 %v4591, %v4739
  %4741 = vmatprep.mubr.bf16.mxu0 0
  %4742 = vmatmul.mubr.bf16.gmra.mxu0 %v4528
  %v4743 = vpop.f32.mrf.mxu0
  %v4744 = vadd.f32 %v4595, %v4743
  %v4745 = vpop.f32.mrf.mxu0
  %v4746 = vadd.f32 %v4597, %v4745
  %v4747 = vpop.f32.mrf.mxu0
  %v4748 = vadd.f32 %v4599, %v4747
  %v4749 = vpop.f32.mrf.mxu0
  %v4750 = vadd.f32 %v4601, %v4749
  %4751 = vmatprep.mubr.bf16.mxu0 0
  %4752 = vmatmul.mubr.bf16.gmra.mxu0 %v4529
  %v4753 = vpop.f32.mrf.mxu0
  %v4754 = vadd.f32 %v4605, %v4753
  %v4755 = vpop.f32.mrf.mxu0
  %v4756 = vadd.f32 %v4607, %v4755
  %v4757 = vpop.f32.mrf.mxu0
  %v4758 = vadd.f32 %v4609, %v4757
  %v4759 = vpop.f32.mrf.mxu0
  %v4760 = vadd.f32 %v4611, %v4759
  %4761 = vmatprep.mubr.bf16.mxu0 0
  %4762 = vmatmul.mubr.bf16.gmra.mxu0 %v4530
  %v4763 = vpop.f32.mrf.mxu0
  %v4764 = vadd.f32 %v4615, %v4763
  %v4765 = vpop.f32.mrf.mxu0
  %v4766 = vadd.f32 %v4617, %v4765
  %v4767 = vpop.f32.mrf.mxu0
  %v4768 = vadd.f32 %v4619, %v4767
  %v4769 = vpop.f32.mrf.mxu0
  %v4770 = vadd.f32 %v4621, %v4769
  %4771 = vmatprep.mubr.bf16.mxu0 0
  %4772 = vmatmul.mubr.bf16.gmra.mxu0 %v4531
  %v4773 = vpop.f32.mrf.mxu0
  %v4774 = vadd.f32 %v4625, %v4773
  %v4775 = vpop.f32.mrf.mxu0
  %v4776 = vadd.f32 %v4627, %v4775
  %v4777 = vpop.f32.mrf.mxu0
  %v4778 = vadd.f32 %v4629, %v4777
  %v4779 = vpop.f32.mrf.mxu0
  %v4780 = vadd.f32 %v4631, %v4779
  %4781 = vmatprep.mubr.bf16.mxu0 0
  %4782 = vmatmul.mubr.bf16.gmra.mxu0 %v4532
  %v4783 = vpop.f32.mrf.mxu0
  %v4784 = vadd.f32 %v4635, %v4783
  %v4785 = vpop.f32.mrf.mxu0
  %v4786 = vadd.f32 %v4637, %v4785
  %v4787 = vpop.f32.mrf.mxu0
  %v4788 = vadd.f32 %v4639, %v4787
  %v4789 = vpop.f32.mrf.mxu0
  %v4790 = vadd.f32 %v4641, %v4789
  %4791 = vmatprep.mubr.bf16.mxu0 0
  %4792 = vmatmul.mubr.bf16.gmra.mxu0 %v4533
  %v4793 = vpop.f32.mrf.mxu0
  %v4794 = vadd.f32 %v4645, %v4793
  %v4795 = vpop.f32.mrf.mxu0
  %v4796 = vadd.f32 %v4647, %v4795
  %v4797 = vpop.f32.mrf.mxu0
  %v4798 = vadd.f32 %v4649, %v4797
  %v4799 = vpop.f32.mrf.mxu0
  %v4800 = vadd.f32 %v4651, %v4799
  %4801 = vmatprep.mubr.bf16.mxu0 0
  %4802 = vmatmul.mubr.bf16.gmra.mxu0 %v4534
  %v4803 = vpop.f32.mrf.mxu0
  %v4804 = vadd.f32 %v4655, %v4803
  %v4805 = vpop.f32.mrf.mxu0
  %v4806 = vadd.f32 %v4657, %v4805
  %v4807 = vpop.f32.mrf.mxu0
  %v4808 = vadd.f32 %v4659, %v4807
  %v4809 = vpop.f32.mrf.mxu0
  %v4810 = vadd.f32 %v4661, %v4809
  %4811 = vmatprep.mubr.bf16.mxu0 0
  %4812 = vmatmul.mubr.bf16.gmra.mxu0 %v4535
  %v4813 = vpop.f32.mrf.mxu0
  %v4814 = vadd.f32 %v4665, %v4813
  %v4815 = vpop.f32.mrf.mxu0
  %v4816 = vadd.f32 %v4667, %v4815
  %v4817 = vpop.f32.mrf.mxu0
  %v4818 = vadd.f32 %v4669, %v4817
  %v4819 = vpop.f32.mrf.mxu0
  %v4820 = vadd.f32 %v4671, %v4819
  %4821 = vmatprep.mubr.bf16.mxu0 0
  %4822 = vmatmul.mubr.bf16.gmra.mxu0 %v4536
  %v4823 = vpop.f32.mrf.mxu0
  %v4824 = vadd.f32 %v4675, %v4823
  %v4825 = vpop.f32.mrf.mxu0
  %v4826 = vadd.f32 %v4677, %v4825
  %v4827 = vpop.f32.mrf.mxu0
  %v4828 = vadd.f32 %v4679, %v4827
  %v4829 = vpop.f32.mrf.mxu0
  %v4830 = vadd.f32 %v4681, %v4829
  %4831 = vmatprep.mubr.bf16.mxu0 0
  %4832 = vmatmul.mubr.bf16.gmra.mxu0 %v4537
  %v4833 = vpop.f32.mrf.mxu0
  %v4834 = vadd.f32 %v4685, %v4833
  %v4835 = vpop.f32.mrf.mxu0
  %v4836 = vadd.f32 %v4687, %v4835
  %v4837 = vpop.f32.mrf.mxu0
  %v4838 = vadd.f32 %v4689, %v4837
  %v4839 = vpop.f32.mrf.mxu0
  %v4840 = vadd.f32 %v4691, %v4839
  %4841 = vdwg.mxu0
  %v4844 = vunpack.c.l.b16 %v4482
  %v4845 = vunpack.c.l.b16 %v4483
  %v4846 = vpack.c.b16 %v4845, %v4844
  %4848 = vmatprep.subr.bf16.mxu0 %v3957
  %4849 = vmatpush1.bf16.msra.mxu0 %v3956
  %4850 = vmatprep.subr.bf16.mxu0 %v3955
  %4851 = vmatpush1.bf16.msra.mxu0 %v3954
  %4852 = vmatprep.subr.bf16.mxu0 %v3953
  %4853 = vmatpush1.bf16.msra.mxu0 %v3952
  %4854 = vmatprep.subr.bf16.mxu0 %v3951
  %4855 = vmatpush1.bf16.msra.mxu0 %v3950
  %4856 = vmatprep.subr.bf16.mxu0 %v3949
  %4857 = vmatpush1.bf16.msra.mxu0 %v3948
  %4858 = vmatprep.subr.bf16.mxu0 %v3947
  %4859 = vmatpush1.bf16.msra.mxu0 %v3946
  %4860 = vmatprep.subr.bf16.mxu0 %v3945
  %4861 = vmatpush1.bf16.msra.mxu0 %v3944
  %4862 = vmatprep.subr.bf16.mxu0 %v3943
  %4863 = vmatpush1.bf16.msra.mxu0 %v3942
  %4864 = vmatprep.subr.bf16.mxu0 0
  %4865 = vmatpush2.bf16.msra.mxu0 0
  %4866 = vmatprep.subr.bf16.mxu0 0
  %4867 = vmatpush2.bf16.msra.mxu0 0
  %4868 = vmatprep.subr.bf16.mxu0 0
  %4869 = vmatpush2.bf16.msra.mxu0 0
  %4870 = vmatprep.subr.bf16.mxu0 0
  %4871 = vmatpush2.bf16.msra.mxu0 0
  %4872 = vmatprep.subr.bf16.mxu0 0
  %4873 = vmatpush2.bf16.msra.mxu0 0
  %4874 = vmatprep.subr.bf16.mxu0 0
  %4875 = vmatpush2.bf16.msra.mxu0 0
  %4876 = vmatprep.subr.bf16.mxu0 0
  %4877 = vmatpush2.bf16.msra.mxu0 0
  %4878 = vmatprep.subr.bf16.mxu0 0
  %4879 = vmatpush2.bf16.msra.mxu0 0
  %4880 = vmatprep.mubr.bf16.mxu0 0
  %4881 = vmatmul.mubr.bf16.gmra.mxu0 %v4529
  %v4882 = vpop.f32.mrf.mxu0
  %v4883 = vadd.f32 0.0, %v4882
  %v4884 = vpop.f32.mrf.mxu0
  %v4885 = vadd.f32 0.0, %v4884
  %v4886 = vpop.f32.mrf.mxu0
  %v4887 = vadd.f32 0.0, %v4886
  %v4888 = vpop.f32.mrf.mxu0
  %v4889 = vadd.f32 0.0, %v4888
  %4890 = vmatprep.mubr.bf16.mxu0 0
  %4891 = vmatmul.mubr.bf16.gmra.mxu0 %v4530
  %v4892 = vpop.f32.mrf.mxu0
  %v4893 = vadd.f32 0.0, %v4892
  %v4894 = vpop.f32.mrf.mxu0
  %v4895 = vadd.f32 0.0, %v4894
  %v4896 = vpop.f32.mrf.mxu0
  %v4897 = vadd.f32 0.0, %v4896
  %v4898 = vpop.f32.mrf.mxu0
  %v4899 = vadd.f32 0.0, %v4898
  %4900 = vmatprep.mubr.bf16.mxu0 0
  %4901 = vmatmul.mubr.bf16.gmra.mxu0 %v4531
  %v4902 = vpop.f32.mrf.mxu0
  %v4903 = vadd.f32 0.0, %v4902
  %v4904 = vpop.f32.mrf.mxu0
  %v4905 = vadd.f32 0.0, %v4904
  %v4906 = vpop.f32.mrf.mxu0
  %v4907 = vadd.f32 0.0, %v4906
  %v4908 = vpop.f32.mrf.mxu0
  %v4909 = vadd.f32 0.0, %v4908
  %4910 = vmatprep.mubr.bf16.mxu0 0
  %4911 = vmatmul.mubr.bf16.gmra.mxu0 %v4532
  %v4912 = vpop.f32.mrf.mxu0
  %v4913 = vadd.f32 0.0, %v4912
  %v4914 = vpop.f32.mrf.mxu0
  %v4915 = vadd.f32 0.0, %v4914
  %v4916 = vpop.f32.mrf.mxu0
  %v4917 = vadd.f32 0.0, %v4916
  %v4918 = vpop.f32.mrf.mxu0
  %v4919 = vadd.f32 0.0, %v4918
  %4920 = vmatprep.mubr.bf16.mxu0 0
  %4921 = vmatmul.mubr.bf16.gmra.mxu0 %v4533
  %v4922 = vpop.f32.mrf.mxu0
  %v4923 = vadd.f32 0.0, %v4922
  %v4924 = vpop.f32.mrf.mxu0
  %v4925 = vadd.f32 0.0, %v4924
  %v4926 = vpop.f32.mrf.mxu0
  %v4927 = vadd.f32 0.0, %v4926
  %v4928 = vpop.f32.mrf.mxu0
  %v4929 = vadd.f32 0.0, %v4928
  %4930 = vmatprep.mubr.bf16.mxu0 0
  %4931 = vmatmul.mubr.bf16.gmra.mxu0 %v4534
  %v4932 = vpop.f32.mrf.mxu0
  %v4933 = vadd.f32 0.0, %v4932
  %v4934 = vpop.f32.mrf.mxu0
  %v4935 = vadd.f32 0.0, %v4934
  %v4936 = vpop.f32.mrf.mxu0
  %v4937 = vadd.f32 0.0, %v4936
  %v4938 = vpop.f32.mrf.mxu0
  %v4939 = vadd.f32 0.0, %v4938
  %4940 = vmatprep.mubr.bf16.mxu0 0
  %4941 = vmatmul.mubr.bf16.gmra.mxu0 %v4535
  %v4942 = vpop.f32.mrf.mxu0
  %v4943 = vadd.f32 0.0, %v4942
  %v4944 = vpop.f32.mrf.mxu0
  %v4945 = vadd.f32 0.0, %v4944
  %v4946 = vpop.f32.mrf.mxu0
  %v4947 = vadd.f32 0.0, %v4946
  %v4948 = vpop.f32.mrf.mxu0
  %v4949 = vadd.f32 0.0, %v4948
  %4950 = vmatprep.mubr.bf16.mxu0 0
  %4951 = vmatmul.mubr.bf16.gmra.mxu0 %v4536
  %v4952 = vpop.f32.mrf.mxu0
  %v4953 = vadd.f32 0.0, %v4952
  %v4954 = vpop.f32.mrf.mxu0
  %v4955 = vadd.f32 0.0, %v4954
  %v4956 = vpop.f32.mrf.mxu0
  %v4957 = vadd.f32 0.0, %v4956
  %v4958 = vpop.f32.mrf.mxu0
  %v4959 = vadd.f32 0.0, %v4958
  %4960 = vmatprep.mubr.bf16.mxu0 0
  %4961 = vmatmul.mubr.bf16.gmra.mxu0 %v4537
  %v4962 = vpop.f32.mrf.mxu0
  %v4963 = vadd.f32 0.0, %v4962
  %v4964 = vpop.f32.mrf.mxu0
  %v4965 = vadd.f32 0.0, %v4964
  %v4966 = vpop.f32.mrf.mxu0
  %v4967 = vadd.f32 0.0, %v4966
  %v4968 = vpop.f32.mrf.mxu0
  %v4969 = vadd.f32 0.0, %v4968
  %4970 = vmatprep.mubr.bf16.mxu0 0
  %4971 = vmatmul.mubr.bf16.gmra.mxu0 %v4538
  %v4972 = vpop.f32.mrf.mxu0
  %v4973 = vadd.f32 0.0, %v4972
  %v4974 = vpop.f32.mrf.mxu0
  %v4975 = vadd.f32 0.0, %v4974
  %v4976 = vpop.f32.mrf.mxu0
  %v4977 = vadd.f32 0.0, %v4976
  %v4978 = vpop.f32.mrf.mxu0
  %v4979 = vadd.f32 0.0, %v4978
  %4980 = vmatprep.mubr.bf16.mxu0 0
  %4981 = vmatmul.mubr.bf16.gmra.mxu0 %v4846
  %v4982 = vpop.f32.mrf.mxu0
  %v4983 = vadd.f32 0.0, %v4982
  %v4984 = vpop.f32.mrf.mxu0
  %v4985 = vadd.f32 0.0, %v4984
  %v4986 = vpop.f32.mrf.mxu0
  %v4987 = vadd.f32 0.0, %v4986
  %v4988 = vpop.f32.mrf.mxu0
  %v4989 = vadd.f32 0.0, %v4988
  %4990 = vdwg.mxu0
  %v4991 = vadd.f32 %v4734, %v4883
  %v4992 = vadd.f32 %v4736, %v4885
  %v4993 = vadd.f32 %v4738, %v4887
  %v4994 = vadd.f32 %v4740, %v4889
  %v4995 = vadd.f32 %v4744, %v4893
  %v4996 = vadd.f32 %v4746, %v4895
  %v4997 = vadd.f32 %v4748, %v4897
  %v4998 = vadd.f32 %v4750, %v4899
  %v4999 = vadd.f32 %v4754, %v4903
  %v5000 = vadd.f32 %v4756, %v4905
  %v5001 = vadd.f32 %v4758, %v4907
  %v5002 = vadd.f32 %v4760, %v4909
  %v5003 = vadd.f32 %v4764, %v4913
  %v5004 = vadd.f32 %v4766, %v4915
  %v5005 = vadd.f32 %v4768, %v4917
  %v5006 = vadd.f32 %v4770, %v4919
  %v5007 = vadd.f32 %v4774, %v4923
  %v5008 = vadd.f32 %v4776, %v4925
  %v5009 = vadd.f32 %v4778, %v4927
  %v5010 = vadd.f32 %v4780, %v4929
  %v5011 = vadd.f32 %v4784, %v4933
  %v5012 = vadd.f32 %v4786, %v4935
  %v5013 = vadd.f32 %v4788, %v4937
  %v5014 = vadd.f32 %v4790, %v4939
  %v5015 = vadd.f32 %v4794, %v4943
  %v5016 = vadd.f32 %v4796, %v4945
  %v5017 = vadd.f32 %v4798, %v4947
  %v5018 = vadd.f32 %v4800, %v4949
  %v5019 = vadd.f32 %v4804, %v4953
  %v5020 = vadd.f32 %v4806, %v4955
  %v5021 = vadd.f32 %v4808, %v4957
  %v5022 = vadd.f32 %v4810, %v4959
  %v5023 = vadd.f32 %v4814, %v4963
  %v5024 = vadd.f32 %v4816, %v4965
  %v5025 = vadd.f32 %v4818, %v4967
  %v5026 = vadd.f32 %v4820, %v4969
  %v5027 = vadd.f32 %v4824, %v4973
  %v5028 = vadd.f32 %v4826, %v4975
  %v5029 = vadd.f32 %v4828, %v4977
  %v5030 = vadd.f32 %v4830, %v4979
  %v5031 = vadd.f32 %v4834, %v4983
  %v5032 = vadd.f32 %v4836, %v4985
  %v5033 = vadd.f32 %v4838, %v4987
  %v5034 = vadd.f32 %v4840, %v4989
  %v5035 = vadd.f32 %v4991, %v4165
  %v5036 = vadd.f32 %v4992, %v4169
  %v5037 = vadd.f32 %v4993, %v4165
  %v5038 = vadd.f32 %v4994, %v4169
  %v5039 = vadd.f32 %v4995, %v4165
  %v5040 = vadd.f32 %v4996, %v4169
  %v5041 = vadd.f32 %v4997, %v4165
  %v5042 = vadd.f32 %v4998, %v4169
  %v5043 = vadd.f32 %v4999, %v4165
  %v5044 = vadd.f32 %v5000, %v4169
  %v5045 = vadd.f32 %v5001, %v4165
  %v5046 = vadd.f32 %v5002, %v4169
  %v5047 = vadd.f32 %v5003, %v4165
  %v5048 = vadd.f32 %v5004, %v4169
  %v5049 = vadd.f32 %v5005, %v4165
  %v5050 = vadd.f32 %v5006, %v4169
  %v5051 = vadd.f32 %v5007, %v4165
  %v5052 = vadd.f32 %v5008, %v4169
  %v5053 = vadd.f32 %v5009, %v4165
  %v5054 = vadd.f32 %v5010, %v4169
  %v5055 = vadd.f32 %v5011, %v4165
  %v5056 = vadd.f32 %v5012, %v4169
  %v5057 = vadd.f32 %v5013, %v4165
  %v5058 = vadd.f32 %v5014, %v4169
  %v5059 = vadd.f32 %v5015, %v4165
  %v5060 = vadd.f32 %v5016, %v4169
  %v5061 = vadd.f32 %v5017, %v4165
  %v5062 = vadd.f32 %v5018, %v4169
  %v5063 = vadd.f32 %v5019, %v4165
  %v5064 = vadd.f32 %v5020, %v4169
  %v5065 = vadd.f32 %v5021, %v4165
  %v5066 = vadd.f32 %v5022, %v4169
  %v5067 = vadd.f32 %v5023, %v4165
  %v5068 = vadd.f32 %v5024, %v4169
  %v5069 = vadd.f32 %v5025, %v4165
  %v5070 = vadd.f32 %v5026, %v4169
  %v5071 = vadd.f32 %v5027, %v4165
  %v5072 = vadd.f32 %v5028, %v4169
  %v5073 = vadd.f32 %v5029, %v4165
  %v5074 = vadd.f32 %v5030, %v4169
  %v5075 = vadd.f32 %v5031, %v4165
  %v5076 = vadd.f32 %v5032, %v4169
  %v5077 = vadd.f32 %v5033, %v4165
  %v5078 = vadd.f32 %v5034, %v4169
  %v5079 = vmul.f32 %v5035, 0.1
  %v5080 = vmul.f32 %v5036, 0.1
  %v5081 = vmul.f32 %v5037, 0.1
  %v5082 = vmul.f32 %v5038, 0.1
  %v5083 = vmul.f32 %v5039, 0.1
  %v5084 = vmul.f32 %v5040, 0.1
  %v5085 = vmul.f32 %v5041, 0.1
  %v5086 = vmul.f32 %v5042, 0.1
  %v5087 = vmul.f32 %v5043, 0.1
  %v5088 = vmul.f32 %v5044, 0.1
  %v5089 = vmul.f32 %v5045, 0.1
  %v5090 = vmul.f32 %v5046, 0.1
  %v5091 = vmul.f32 %v5047, 0.1
  %v5092 = vmul.f32 %v5048, 0.1
  %v5093 = vmul.f32 %v5049, 0.1
  %v5094 = vmul.f32 %v5050, 0.1
  %v5095 = vmul.f32 %v5051, 0.1
  %v5096 = vmul.f32 %v5052, 0.1
  %v5097 = vmul.f32 %v5053, 0.1
  %v5098 = vmul.f32 %v5054, 0.1
  %v5099 = vmul.f32 %v5055, 0.1
  %v5100 = vmul.f32 %v5056, 0.1
  %v5101 = vmul.f32 %v5057, 0.1
  %v5102 = vmul.f32 %v5058, 0.1
  %v5103 = vmul.f32 %v5059, 0.1
  %v5104 = vmul.f32 %v5060, 0.1
  %v5105 = vmul.f32 %v5061, 0.1
  %v5106 = vmul.f32 %v5062, 0.1
  %v5107 = vmul.f32 %v5063, 0.1
  %v5108 = vmul.f32 %v5064, 0.1
  %v5109 = vmul.f32 %v5065, 0.1
  %v5110 = vmul.f32 %v5066, 0.1
  %v5111 = vmul.f32 %v5067, 0.1
  %v5112 = vmul.f32 %v5068, 0.1
  %v5113 = vmul.f32 %v5069, 0.1
  %v5114 = vmul.f32 %v5070, 0.1
  %v5115 = vmul.f32 %v5071, 0.1
  %v5116 = vmul.f32 %v5072, 0.1
  %v5117 = vmul.f32 %v5073, 0.1
  %v5118 = vmul.f32 %v5074, 0.1
  %v5119 = vmul.f32 %v5075, 0.1
  %v5120 = vmul.f32 %v5076, 0.1
  %v5121 = vmul.f32 %v5077, 0.1
  %v5122 = vmul.f32 %v5078, 0.1
  %v5123 = vmax.f32 %v5035, %v5079
  %v5124 = vmax.f32 %v5036, %v5080
  %v5125 = vmax.f32 %v5037, %v5081
  %v5126 = vmax.f32 %v5038, %v5082
  %v5127 = vmax.f32 %v5039, %v5083
  %v5128 = vmax.f32 %v5040, %v5084
  %v5129 = vmax.f32 %v5041, %v5085
  %v5130 = vmax.f32 %v5042, %v5086
  %v5131 = vmax.f32 %v5043, %v5087
  %v5132 = vmax.f32 %v5044, %v5088
  %v5133 = vmax.f32 %v5045, %v5089
  %v5134 = vmax.f32 %v5046, %v5090
  %v5135 = vmax.f32 %v5047, %v5091
  %v5136 = vmax.f32 %v5048, %v5092
  %v5137 = vmax.f32 %v5049, %v5093
  %v5138 = vmax.f32 %v5050, %v5094
  %v5139 = vmax.f32 %v5051, %v5095
  %v5140 = vmax.f32 %v5052, %v5096
  %v5141 = vmax.f32 %v5053, %v5097
  %v5142 = vmax.f32 %v5054, %v5098
  %v5143 = vmax.f32 %v5055, %v5099
  %v5144 = vmax.f32 %v5056, %v5100
  %v5145 = vmax.f32 %v5057, %v5101
  %v5146 = vmax.f32 %v5058, %v5102
  %v5147 = vmax.f32 %v5059, %v5103
  %v5148 = vmax.f32 %v5060, %v5104
  %v5149 = vmax.f32 %v5061, %v5105
  %v5150 = vmax.f32 %v5062, %v5106
  %v5151 = vmax.f32 %v5063, %v5107
  %v5152 = vmax.f32 %v5064, %v5108
  %v5153 = vmax.f32 %v5065, %v5109
  %v5154 = vmax.f32 %v5066, %v5110
  %v5155 = vmax.f32 %v5067, %v5111
  %v5156 = vmax.f32 %v5068, %v5112
  %v5157 = vmax.f32 %v5069, %v5113
  %v5158 = vmax.f32 %v5070, %v5114
  %v5159 = vmax.f32 %v5071, %v5115
  %v5160 = vmax.f32 %v5072, %v5116
  %v5161 = vmax.f32 %v5073, %v5117
  %v5162 = vmax.f32 %v5074, %v5118
  %v5163 = vmax.f32 %v5075, %v5119
  %v5164 = vmax.f32 %v5076, %v5120
  %v5165 = vmax.f32 %v5077, %v5121
  %v5166 = vmax.f32 %v5078, %v5122
  %v5167 = vpack.c.bf16 %v5125, %v5123
  %v5168 = vpack.c.bf16 %v5126, %v5124
  %v5169 = vpack.c.bf16 %v5129, %v5127
  %v5170 = vpack.c.bf16 %v5130, %v5128
  %v5171 = vpack.c.bf16 %v5133, %v5131
  %v5172 = vpack.c.bf16 %v5134, %v5132
  %v5173 = vpack.c.bf16 %v5137, %v5135
  %v5174 = vpack.c.bf16 %v5138, %v5136
  %v5175 = vpack.c.bf16 %v5141, %v5139
  %v5176 = vpack.c.bf16 %v5142, %v5140
  %v5177 = vpack.c.bf16 %v5145, %v5143
  %v5178 = vpack.c.bf16 %v5146, %v5144
  %v5179 = vpack.c.bf16 %v5149, %v5147
  %v5180 = vpack.c.bf16 %v5150, %v5148
  %v5181 = vpack.c.bf16 %v5153, %v5151
  %v5182 = vpack.c.bf16 %v5154, %v5152
  %v5183 = vpack.c.bf16 %v5157, %v5155
  %v5184 = vpack.c.bf16 %v5158, %v5156
  %v5185 = vpack.c.bf16 %v5161, %v5159
  %v5186 = vpack.c.bf16 %v5162, %v5160
  %v5187 = vpack.c.bf16 %v5165, %v5163
  %v5188 = vpack.c.bf16 %v5166, %v5164
  %v5211 = vunpack.c.l.b16 %v5167
  %v5212 = vunpack.c.l.b16 %v5168
  %v5213 = vunpack.c.h.b16 %v5167
  %v5214 = vunpack.c.h.b16 %v5168
  %v5215 = vunpack.c.l.b16 %v5169
  %v5216 = vunpack.c.l.b16 %v5170
  %v5217 = vunpack.c.h.b16 %v5169
  %v5218 = vunpack.c.h.b16 %v5170
  %v5219 = vunpack.c.l.b16 %v5171
  %v5220 = vunpack.c.l.b16 %v5172
  %v5221 = vunpack.c.h.b16 %v5171
  %v5222 = vunpack.c.h.b16 %v5172
  %v5223 = vunpack.c.l.b16 %v5173
  %v5224 = vunpack.c.l.b16 %v5174
  %v5225 = vunpack.c.h.b16 %v5173
  %v5226 = vunpack.c.h.b16 %v5174
  %v5227 = vunpack.c.l.b16 %v5175
  %v5228 = vunpack.c.l.b16 %v5176
  %v5229 = vunpack.c.h.b16 %v5175
  %v5230 = vunpack.c.h.b16 %v5176
  %v5231 = vunpack.c.l.b16 %v5177
  %v5232 = vunpack.c.l.b16 %v5178
  %v5233 = vunpack.c.h.b16 %v5177
  %v5234 = vunpack.c.h.b16 %v5178
  %v5235 = vunpack.c.l.b16 %v5179
  %v5236 = vunpack.c.l.b16 %v5180
  %v5237 = vunpack.c.h.b16 %v5179
  %v5238 = vunpack.c.h.b16 %v5180
  %v5239 = vunpack.c.l.b16 %v5181
  %v5240 = vunpack.c.l.b16 %v5182
  %v5241 = vunpack.c.h.b16 %v5181
  %v5242 = vunpack.c.h.b16 %v5182
  %v5243 = vunpack.c.l.b16 %v5183
  %v5244 = vunpack.c.l.b16 %v5184
  %v5245 = vunpack.c.h.b16 %v5183
  %v5246 = vunpack.c.h.b16 %v5184
  %v5247 = vunpack.c.l.b16 %v5185
  %v5248 = vunpack.c.l.b16 %v5186
  %v5249 = vunpack.c.h.b16 %v5185
  %v5250 = vunpack.c.h.b16 %v5186
  %v5251 = vunpack.c.l.b16 %v5187
  %v5252 = vunpack.c.l.b16 %v5188
  %v5253 = vunpack.c.h.b16 %v5187
  %v5254 = vunpack.c.h.b16 %v5188
  %v5255 = vpack.c.b16 %v5212, %v5211
  %v5256 = vpack.c.b16 %v5214, %v5213
  %v5257 = vpack.c.b16 %v5216, %v5215
  %v5258 = vpack.c.b16 %v5218, %v5217
  %v5259 = vpack.c.b16 %v5220, %v5219
  %v5260 = vpack.c.b16 %v5222, %v5221
  %v5261 = vpack.c.b16 %v5224, %v5223
  %v5262 = vpack.c.b16 %v5226, %v5225
  %v5263 = vpack.c.b16 %v5228, %v5227
  %v5264 = vpack.c.b16 %v5230, %v5229
  %v5265 = vpack.c.b16 %v5232, %v5231
  %v5266 = vpack.c.b16 %v5234, %v5233
  %v5267 = vpack.c.b16 %v5236, %v5235
  %v5268 = vpack.c.b16 %v5238, %v5237
  %v5269 = vpack.c.b16 %v5240, %v5239
  %v5270 = vpack.c.b16 %v5242, %v5241
  %v5271 = vpack.c.b16 %v5244, %v5243
  %v5272 = vpack.c.b16 %v5246, %v5245
  %v5273 = vpack.c.b16 %v5248, %v5247
  %v5274 = vpack.c.b16 %v5250, %v5249
  %v5275 = vpack.c.b16 %v5252, %v5251
  %v5276 = vpack.c.b16 %v5254, %v5253
  %5299 = vst [vmem:[%s1117 + $0x10] sm:$0xff] %v5255
  %5300 = vst [vmem:[%s1117 + $0x18] sm:$0xff] %v5256
  %5301 = vst [vmem:[%s1117 + $0x20] sm:$0xff] %v5257
  %5302 = vst [vmem:[%s1117 + $0x28] sm:$0xff] %v5258
  %5303 = vst [vmem:[%s1117 + $0x30] sm:$0xff] %v5259
  %5304 = vst [vmem:[%s1117 + $0x38] sm:$0xff] %v5260
  %5305 = vst [vmem:[%s1117 + $0x40] sm:$0xff] %v5261
  %5306 = vst [vmem:[%s1117 + $0x48] sm:$0xff] %v5262
  %5307 = vst [vmem:[%s1117 + $0x50] sm:$0xff] %v5263
  %5308 = vst [vmem:[%s1117 + $0x58] sm:$0xff] %v5264
  %5309 = vst [vmem:[%s1117 + $0x60] sm:$0xff] %v5265
  %5310 = vst [vmem:[%s1117 + $0x68] sm:$0xff] %v5266
  %5311 = vst [vmem:[%s1117 + $0x70] sm:$0xff] %v5267
  %5312 = vst [vmem:[%s1117 + $0x78] sm:$0xff] %v5268
  %5313 = vst [vmem:[%s1117 + $0x80] sm:$0xff] %v5269
  %5314 = vst [vmem:[%s1117 + $0x88] sm:$0xff] %v5270
  %5315 = vst [vmem:[%s1117 + $0x90] sm:$0xff] %v5271
  %5316 = vst [vmem:[%s1117 + $0x98] sm:$0xff] %v5272
  %5317 = vst [vmem:[%s1117 + $0xa0] sm:$0xff] %v5273
  %5318 = vst [vmem:[%s1117 + $0xa8] sm:$0xff] %v5274
  %5319 = vst [vmem:[%s1117 + $0xb0] sm:$0xff] %v5275
  %5320 = vst [vmem:[%s1117 + $0xb8] sm:$0xff] %v5276
  %v5321 = vld [vmem:[%s29] sm:$0x3]
  %v5323 = vlaneseq
  %v5324 = vshrl.u32 %v5323, 7
  %v5325 = vsub.s32 0, %v5324
  %v5326 = vrot.slane %v5321, %v5325
  %v5327 = vlaneseq
  %v5328 = vshrl.u32 %v5327, 7
  %v5329 = vsub.s32 1, %v5328
  %v5330 = vrot.slane %v5321, %v5329
  %v5333 = vadd.f32 %v5326, 0.0
  %v5334 = vadd.f32 %v5330, 0.0
  %v5335 = vld [vmem:[#allocation2 + $0x10] sm:$0xff]
  %v5336 = vld [vmem:[#allocation2 + $0x18] sm:$0xff]
  %v5337 = vld [vmem:[#allocation2 + $0xe0] sm:$0xff]
  %v5338 = vld [vmem:[#allocation2 + $0xe8] sm:$0xff]
  %v5339 = vld [vmem:[%s27] sm:$0xff]
  %v5340 = vld [vmem:[%s27 + $0x8] sm:$0xff]
  %v5341 = vld [vmem:[%s27 + $0x10] sm:$0xff]
  %v5342 = vld [vmem:[%s27 + $0x18] sm:$0xff]
  %v5343 = vld [vmem:[%s27 + $0x20] sm:$0xff]
  %v5344 = vld [vmem:[%s27 + $0x28] sm:$0xff]
  %v5345 = vld [vmem:[%s27 + $0x30] sm:$0xff]
  %v5346 = vld [vmem:[%s27 + $0x38] sm:$0xff]
  %v5347 = vld [vmem:[%s27 + $0x40] sm:$0xff]
  %v5348 = vld [vmem:[%s27 + $0x48] sm:$0xff]
  %v5349 = vld [vmem:[%s27 + $0x50] sm:$0xff]
  %v5350 = vld [vmem:[%s27 + $0x58] sm:$0xff]
  %v5351 = vld [vmem:[%s27 + $0x60] sm:$0xff]
  %v5352 = vld [vmem:[%s27 + $0x68] sm:$0xff]
  %v5353 = vld [vmem:[%s27 + $0x70] sm:$0xff]
  %v5354 = vld [vmem:[%s27 + $0x78] sm:$0xff]
  %v5355 = vld [vmem:[%s27 + $0x80] sm:$0xff]
  %v5356 = vld [vmem:[%s27 + $0x88] sm:$0xff]
  %v5357 = vld [vmem:[%s27 + $0x90] sm:$0xff]
  %v5358 = vld [vmem:[%s27 + $0x98] sm:$0xff]
  %v5359 = vld [vmem:[%s27 + $0xa0] sm:$0xff]
  %v5360 = vld [vmem:[%s27 + $0xa8] sm:$0xff]
  %v5361 = vld [vmem:[%s27 + $0xb0] sm:$0xff]
  %v5362 = vld [vmem:[%s27 + $0xb8] sm:$0xff]
  %v5363 = vld [vmem:[%s27 + $0xc0] sm:$0xff]
  %v5364 = vld [vmem:[%s27 + $0xc8] sm:$0xff]
  %v5365 = vld [vmem:[%s27 + $0xd0] sm:$0xff]
  %v5366 = vld [vmem:[%s27 + $0xd8] sm:$0xff]
  %v5367 = vld [vmem:[%s27 + $0xe0] sm:$0xff]
  %v5368 = vld [vmem:[%s27 + $0xe8] sm:$0xff]
  %v5369 = vld [vmem:[%s27 + $0xf0] sm:$0xff]
  %v5370 = vld [vmem:[%s27 + $0xf8] sm:$0xff]
  %v5375 = vunpack.c.l.b16 %v5335
  %v5376 = vunpack.c.h.b16 %v5335
  %v5377 = vunpack.c.l.b16 %v5336
  %v5378 = vunpack.c.h.b16 %v5336
  %v5379 = vunpack.c.l.b16 %v5337
  %v5380 = vunpack.c.h.b16 %v5337
  %v5381 = vunpack.c.l.b16 %v5338
  %v5382 = vunpack.c.h.b16 %v5338
  %v5383 = vpack.c.b16 %v5377, %v5375
  %v5384 = vpack.c.b16 %v5378, %v5376
  %v5385 = vpack.c.b16 %v5381, %v5379
  %v5386 = vpack.c.b16 %v5382, %v5380
  %v5423 = vunpack.c.l.b16 %v5339
  %v5424 = vunpack.c.h.b16 %v5339
  %v5425 = vunpack.c.l.b16 %v5340
  %v5426 = vunpack.c.h.b16 %v5340
  %v5427 = vunpack.c.l.b16 %v5341
  %v5428 = vunpack.c.h.b16 %v5341
  %v5429 = vunpack.c.l.b16 %v5342
  %v5430 = vunpack.c.h.b16 %v5342
  %v5431 = vunpack.c.l.b16 %v5343
  %v5432 = vunpack.c.h.b16 %v5343
  %v5433 = vunpack.c.l.b16 %v5344
  %v5434 = vunpack.c.h.b16 %v5344
  %v5435 = vunpack.c.l.b16 %v5345
  %v5436 = vunpack.c.h.b16 %v5345
  %v5437 = vunpack.c.l.b16 %v5346
  %v5438 = vunpack.c.h.b16 %v5346
  %v5439 = vunpack.c.l.b16 %v5347
  %v5440 = vunpack.c.h.b16 %v5347
  %v5441 = vunpack.c.l.b16 %v5348
  %v5442 = vunpack.c.h.b16 %v5348
  %v5443 = vunpack.c.l.b16 %v5349
  %v5444 = vunpack.c.h.b16 %v5349
  %v5445 = vunpack.c.l.b16 %v5350
  %v5446 = vunpack.c.h.b16 %v5350
  %v5447 = vunpack.c.l.b16 %v5351
  %v5448 = vunpack.c.h.b16 %v5351
  %v5449 = vunpack.c.l.b16 %v5352
  %v5450 = vunpack.c.h.b16 %v5352
  %v5451 = vunpack.c.l.b16 %v5353
  %v5452 = vunpack.c.h.b16 %v5353
  %v5453 = vunpack.c.l.b16 %v5354
  %v5454 = vunpack.c.h.b16 %v5354
  %v5455 = vunpack.c.l.b16 %v5355
  %v5456 = vunpack.c.h.b16 %v5355
  %v5457 = vunpack.c.l.b16 %v5356
  %v5458 = vunpack.c.h.b16 %v5356
  %v5459 = vunpack.c.l.b16 %v5357
  %v5460 = vunpack.c.h.b16 %v5357
  %v5461 = vunpack.c.l.b16 %v5358
  %v5462 = vunpack.c.h.b16 %v5358
  %v5463 = vunpack.c.l.b16 %v5359
  %v5464 = vunpack.c.h.b16 %v5359
  %v5465 = vunpack.c.l.b16 %v5360
  %v5466 = vunpack.c.h.b16 %v5360
  %v5467 = vunpack.c.l.b16 %v5361
  %v5468 = vunpack.c.h.b16 %v5361
  %v5469 = vunpack.c.l.b16 %v5362
  %v5470 = vunpack.c.h.b16 %v5362
  %v5471 = vunpack.c.l.b16 %v5363
  %v5472 = vunpack.c.h.b16 %v5363
  %v5473 = vunpack.c.l.b16 %v5364
  %v5474 = vunpack.c.h.b16 %v5364
  %v5475 = vunpack.c.l.b16 %v5365
  %v5476 = vunpack.c.h.b16 %v5365
  %v5477 = vunpack.c.l.b16 %v5366
  %v5478 = vunpack.c.h.b16 %v5366
  %v5479 = vunpack.c.l.b16 %v5367
  %v5480 = vunpack.c.h.b16 %v5367
  %v5481 = vunpack.c.l.b16 %v5368
  %v5482 = vunpack.c.h.b16 %v5368
  %v5483 = vunpack.c.l.b16 %v5369
  %v5484 = vunpack.c.h.b16 %v5369
  %v5485 = vunpack.c.l.b16 %v5370
  %v5486 = vunpack.c.h.b16 %v5370
  %v5487 = vpack.c.b16 %v5425, %v5423
  %v5488 = vpack.c.b16 %v5426, %v5424
  %v5489 = vpack.c.b16 %v5429, %v5427
  %v5490 = vpack.c.b16 %v5430, %v5428
  %v5491 = vpack.c.b16 %v5433, %v5431
  %v5492 = vpack.c.b16 %v5434, %v5432
  %v5493 = vpack.c.b16 %v5437, %v5435
  %v5494 = vpack.c.b16 %v5438, %v5436
  %v5495 = vpack.c.b16 %v5441, %v5439
  %v5496 = vpack.c.b16 %v5442, %v5440
  %v5497 = vpack.c.b16 %v5445, %v5443
  %v5498 = vpack.c.b16 %v5446, %v5444
  %v5499 = vpack.c.b16 %v5449, %v5447
  %v5500 = vpack.c.b16 %v5450, %v5448
  %v5501 = vpack.c.b16 %v5453, %v5451
  %v5502 = vpack.c.b16 %v5454, %v5452
  %v5503 = vpack.c.b16 %v5457, %v5455
  %v5504 = vpack.c.b16 %v5458, %v5456
  %v5505 = vpack.c.b16 %v5461, %v5459
  %v5506 = vpack.c.b16 %v5462, %v5460
  %v5507 = vpack.c.b16 %v5465, %v5463
  %v5508 = vpack.c.b16 %v5466, %v5464
  %v5509 = vpack.c.b16 %v5469, %v5467
  %v5510 = vpack.c.b16 %v5470, %v5468
  %v5511 = vpack.c.b16 %v5473, %v5471
  %v5512 = vpack.c.b16 %v5474, %v5472
  %v5513 = vpack.c.b16 %v5477, %v5475
  %v5514 = vpack.c.b16 %v5478, %v5476
  %v5515 = vpack.c.b16 %v5481, %v5479
  %v5516 = vpack.c.b16 %v5482, %v5480
  %v5517 = vpack.c.b16 %v5485, %v5483
  %v5518 = vpack.c.b16 %v5486, %v5484
  %5551 = vmatprep.subr.bf16.mxu0 %v5502
  %5552 = vmatpush1.bf16.msra.mxu0 %v5501
  %5553 = vmatprep.subr.bf16.mxu0 %v5500
  %5554 = vmatpush1.bf16.msra.mxu0 %v5499
  %5555 = vmatprep.subr.bf16.mxu0 %v5498
  %5556 = vmatpush1.bf16.msra.mxu0 %v5497
  %5557 = vmatprep.subr.bf16.mxu0 %v5496
  %5558 = vmatpush1.bf16.msra.mxu0 %v5495
  %5559 = vmatprep.subr.bf16.mxu0 %v5494
  %5560 = vmatpush1.bf16.msra.mxu0 %v5493
  %5561 = vmatprep.subr.bf16.mxu0 %v5492
  %5562 = vmatpush1.bf16.msra.mxu0 %v5491
  %5563 = vmatprep.subr.bf16.mxu0 %v5490
  %5564 = vmatpush1.bf16.msra.mxu0 %v5489
  %5565 = vmatprep.subr.bf16.mxu0 %v5488
  %5566 = vmatpush1.bf16.msra.mxu0 %v5487
  %5567 = vmatprep.subr.bf16.mxu0 %v5518
  %5568 = vmatpush2.bf16.msra.mxu0 %v5517
  %5569 = vmatprep.subr.bf16.mxu0 %v5516
  %5570 = vmatpush2.bf16.msra.mxu0 %v5515
  %5571 = vmatprep.subr.bf16.mxu0 %v5514
  %5572 = vmatpush2.bf16.msra.mxu0 %v5513
  %5573 = vmatprep.subr.bf16.mxu0 %v5512
  %5574 = vmatpush2.bf16.msra.mxu0 %v5511
  %5575 = vmatprep.subr.bf16.mxu0 %v5510
  %5576 = vmatpush2.bf16.msra.mxu0 %v5509
  %5577 = vmatprep.subr.bf16.mxu0 %v5508
  %5578 = vmatpush2.bf16.msra.mxu0 %v5507
  %5579 = vmatprep.subr.bf16.mxu0 %v5506
  %5580 = vmatpush2.bf16.msra.mxu0 %v5505
  %5581 = vmatprep.subr.bf16.mxu0 %v5504
  %5582 = vmatpush2.bf16.msra.mxu0 %v5503
  %5583 = vmatprep.mubr.bf16.mxu0 %v5384
  %5584 = vmatmul.mubr.bf16.gmra.mxu0 %v5383
  %v5585 = vpop.f32.mrf.mxu0
  %v5586 = vadd.f32 0.0, %v5585
  %v5587 = vpop.f32.mrf.mxu0
  %v5588 = vadd.f32 0.0, %v5587
  %v5589 = vpop.f32.mrf.mxu0
  %v5590 = vadd.f32 0.0, %v5589
  %v5591 = vpop.f32.mrf.mxu0
  %v5592 = vadd.f32 0.0, %v5591
  %5593 = vmatprep.mubr.bf16.mxu0 %v5386
  %5594 = vmatmul.mubr.bf16.gmra.mxu0 %v5385
  %v5595 = vpop.f32.mrf.mxu0
  %v5596 = vadd.f32 0.0, %v5595
  %v5597 = vpop.f32.mrf.mxu0
  %v5598 = vadd.f32 0.0, %v5597
  %v5599 = vpop.f32.mrf.mxu0
  %v5600 = vadd.f32 0.0, %v5599
  %v5601 = vpop.f32.mrf.mxu0
  %v5602 = vadd.f32 0.0, %v5601
  %5603 = vdwg.mxu0
  %v5604 = vadd.f32 %v5333, %v5586
  %v5605 = vadd.f32 %v5334, %v5588
  %v5606 = vadd.f32 %v5333, %v5590
  %v5607 = vadd.f32 %v5334, %v5592
  %v5608 = vadd.f32 %v5333, %v5596
  %v5609 = vadd.f32 %v5334, %v5598
  %v5610 = vadd.f32 %v5333, %v5600
  %v5611 = vadd.f32 %v5334, %v5602
  %v5612 = vld [vmem:[#allocation2 + $0x20] sm:$0xff]
  %v5613 = vld [vmem:[#allocation2 + $0x28] sm:$0xff]
  %v5614 = vld [vmem:[#allocation2 + $0xf0] sm:$0xff]
  %v5615 = vld [vmem:[#allocation2 + $0xf8] sm:$0xff]
  %v5616 = vld [vmem:[%s27 + $0x100] sm:$0xff]
  %v5617 = vld [vmem:[%s27 + $0x108] sm:$0xff]
  %v5618 = vld [vmem:[%s27 + $0x110] sm:$0xff]
  %v5619 = vld [vmem:[%s27 + $0x118] sm:$0xff]
  %v5620 = vld [vmem:[%s27 + $0x120] sm:$0xff]
  %v5621 = vld [vmem:[%s27 + $0x128] sm:$0xff]
  %v5622 = vld [vmem:[%s27 + $0x130] sm:$0xff]
  %v5623 = vld [vmem:[%s27 + $0x138] sm:$0xff]
  %v5624 = vld [vmem:[%s27 + $0x140] sm:$0xff]
  %v5625 = vld [vmem:[%s27 + $0x148] sm:$0xff]
  %v5626 = vld [vmem:[%s27 + $0x150] sm:$0xff]
  %v5627 = vld [vmem:[%s27 + $0x158] sm:$0xff]
  %v5628 = vld [vmem:[%s27 + $0x160] sm:$0xff]
  %v5629 = vld [vmem:[%s27 + $0x168] sm:$0xff]
  %v5630 = vld [vmem:[%s27 + $0x170] sm:$0xff]
  %v5631 = vld [vmem:[%s27 + $0x178] sm:$0xff]
  %v5632 = vld [vmem:[%s27 + $0x180] sm:$0xff]
  %v5633 = vld [vmem:[%s27 + $0x188] sm:$0xff]
  %v5634 = vld [vmem:[%s27 + $0x190] sm:$0xff]
  %v5635 = vld [vmem:[%s27 + $0x198] sm:$0xff]
  %v5636 = vld [vmem:[%s27 + $0x1a0] sm:$0xff]
  %v5637 = vld [vmem:[%s27 + $0x1a8] sm:$0xff]
  %v5638 = vld [vmem:[%s27 + $0x1b0] sm:$0xff]
  %v5639 = vld [vmem:[%s27 + $0x1b8] sm:$0xff]
  %v5640 = vld [vmem:[%s27 + $0x1c0] sm:$0xff]
  %v5641 = vld [vmem:[%s27 + $0x1c8] sm:$0xff]
  %v5642 = vld [vmem:[%s27 + $0x1d0] sm:$0xff]
  %v5643 = vld [vmem:[%s27 + $0x1d8] sm:$0xff]
  %v5644 = vld [vmem:[%s27 + $0x1e0] sm:$0xff]
  %v5645 = vld [vmem:[%s27 + $0x1e8] sm:$0xff]
  %v5646 = vld [vmem:[%s27 + $0x1f0] sm:$0xff]
  %v5647 = vld [vmem:[%s27 + $0x1f8] sm:$0xff]
  %v5652 = vunpack.c.l.b16 %v5612
  %v5653 = vunpack.c.h.b16 %v5612
  %v5654 = vunpack.c.l.b16 %v5613
  %v5655 = vunpack.c.h.b16 %v5613
  %v5656 = vunpack.c.l.b16 %v5614
  %v5657 = vunpack.c.h.b16 %v5614
  %v5658 = vunpack.c.l.b16 %v5615
  %v5659 = vunpack.c.h.b16 %v5615
  %v5660 = vpack.c.b16 %v5654, %v5652
  %v5661 = vpack.c.b16 %v5655, %v5653
  %v5662 = vpack.c.b16 %v5658, %v5656
  %v5663 = vpack.c.b16 %v5659, %v5657
  %v5700 = vunpack.c.l.b16 %v5616
  %v5701 = vunpack.c.h.b16 %v5616
  %v5702 = vunpack.c.l.b16 %v5617
  %v5703 = vunpack.c.h.b16 %v5617
  %v5704 = vunpack.c.l.b16 %v5618
  %v5705 = vunpack.c.h.b16 %v5618
  %v5706 = vunpack.c.l.b16 %v5619
  %v5707 = vunpack.c.h.b16 %v5619
  %v5708 = vunpack.c.l.b16 %v5620
  %v5709 = vunpack.c.h.b16 %v5620
  %v5710 = vunpack.c.l.b16 %v5621
  %v5711 = vunpack.c.h.b16 %v5621
  %v5712 = vunpack.c.l.b16 %v5622
  %v5713 = vunpack.c.h.b16 %v5622
  %v5714 = vunpack.c.l.b16 %v5623
  %v5715 = vunpack.c.h.b16 %v5623
  %v5716 = vunpack.c.l.b16 %v5624
  %v5717 = vunpack.c.h.b16 %v5624
  %v5718 = vunpack.c.l.b16 %v5625
  %v5719 = vunpack.c.h.b16 %v5625
  %v5720 = vunpack.c.l.b16 %v5626
  %v5721 = vunpack.c.h.b16 %v5626
  %v5722 = vunpack.c.l.b16 %v5627
  %v5723 = vunpack.c.h.b16 %v5627
  %v5724 = vunpack.c.l.b16 %v5628
  %v5725 = vunpack.c.h.b16 %v5628
  %v5726 = vunpack.c.l.b16 %v5629
  %v5727 = vunpack.c.h.b16 %v5629
  %v5728 = vunpack.c.l.b16 %v5630
  %v5729 = vunpack.c.h.b16 %v5630
  %v5730 = vunpack.c.l.b16 %v5631
  %v5731 = vunpack.c.h.b16 %v5631
  %v5732 = vunpack.c.l.b16 %v5632
  %v5733 = vunpack.c.h.b16 %v5632
  %v5734 = vunpack.c.l.b16 %v5633
  %v5735 = vunpack.c.h.b16 %v5633
  %v5736 = vunpack.c.l.b16 %v5634
  %v5737 = vunpack.c.h.b16 %v5634
  %v5738 = vunpack.c.l.b16 %v5635
  %v5739 = vunpack.c.h.b16 %v5635
  %v5740 = vunpack.c.l.b16 %v5636
  %v5741 = vunpack.c.h.b16 %v5636
  %v5742 = vunpack.c.l.b16 %v5637
  %v5743 = vunpack.c.h.b16 %v5637
  %v5744 = vunpack.c.l.b16 %v5638
  %v5745 = vunpack.c.h.b16 %v5638
  %v5746 = vunpack.c.l.b16 %v5639
  %v5747 = vunpack.c.h.b16 %v5639
  %v5748 = vunpack.c.l.b16 %v5640
  %v5749 = vunpack.c.h.b16 %v5640
  %v5750 = vunpack.c.l.b16 %v5641
  %v5751 = vunpack.c.h.b16 %v5641
  %v5752 = vunpack.c.l.b16 %v5642
  %v5753 = vunpack.c.h.b16 %v5642
  %v5754 = vunpack.c.l.b16 %v5643
  %v5755 = vunpack.c.h.b16 %v5643
  %v5756 = vunpack.c.l.b16 %v5644
  %v5757 = vunpack.c.h.b16 %v5644
  %v5758 = vunpack.c.l.b16 %v5645
  %v5759 = vunpack.c.h.b16 %v5645
  %v5760 = vunpack.c.l.b16 %v5646
  %v5761 = vunpack.c.h.b16 %v5646
  %v5762 = vunpack.c.l.b16 %v5647
  %v5763 = vunpack.c.h.b16 %v5647
  %v5764 = vpack.c.b16 %v5702, %v5700
  %v5765 = vpack.c.b16 %v5703, %v5701
  %v5766 = vpack.c.b16 %v5706, %v5704
  %v5767 = vpack.c.b16 %v5707, %v5705
  %v5768 = vpack.c.b16 %v5710, %v5708
  %v5769 = vpack.c.b16 %v5711, %v5709
  %v5770 = vpack.c.b16 %v5714, %v5712
  %v5771 = vpack.c.b16 %v5715, %v5713
  %v5772 = vpack.c.b16 %v5718, %v5716
  %v5773 = vpack.c.b16 %v5719, %v5717
  %v5774 = vpack.c.b16 %v5722, %v5720
  %v5775 = vpack.c.b16 %v5723, %v5721
  %v5776 = vpack.c.b16 %v5726, %v5724
  %v5777 = vpack.c.b16 %v5727, %v5725
  %v5778 = vpack.c.b16 %v5730, %v5728
  %v5779 = vpack.c.b16 %v5731, %v5729
  %v5780 = vpack.c.b16 %v5734, %v5732
  %v5781 = vpack.c.b16 %v5735, %v5733
  %v5782 = vpack.c.b16 %v5738, %v5736
  %v5783 = vpack.c.b16 %v5739, %v5737
  %v5784 = vpack.c.b16 %v5742, %v5740
  %v5785 = vpack.c.b16 %v5743, %v5741
  %v5786 = vpack.c.b16 %v5746, %v5744
  %v5787 = vpack.c.b16 %v5747, %v5745
  %v5788 = vpack.c.b16 %v5750, %v5748
  %v5789 = vpack.c.b16 %v5751, %v5749
  %v5790 = vpack.c.b16 %v5754, %v5752
  %v5791 = vpack.c.b16 %v5755, %v5753
  %v5792 = vpack.c.b16 %v5758, %v5756
  %v5793 = vpack.c.b16 %v5759, %v5757
  %v5794 = vpack.c.b16 %v5762, %v5760
  %v5795 = vpack.c.b16 %v5763, %v5761
  %5828 = vmatprep.subr.bf16.mxu0 %v5779
  %5829 = vmatpush1.bf16.msra.mxu0 %v5778
  %5830 = vmatprep.subr.bf16.mxu0 %v5777
  %5831 = vmatpush1.bf16.msra.mxu0 %v5776
  %5832 = vmatprep.subr.bf16.mxu0 %v5775
  %5833 = vmatpush1.bf16.msra.mxu0 %v5774
  %5834 = vmatprep.subr.bf16.mxu0 %v5773
  %5835 = vmatpush1.bf16.msra.mxu0 %v5772
  %5836 = vmatprep.subr.bf16.mxu0 %v5771
  %5837 = vmatpush1.bf16.msra.mxu0 %v5770
  %5838 = vmatprep.subr.bf16.mxu0 %v5769
  %5839 = vmatpush1.bf16.msra.mxu0 %v5768
  %5840 = vmatprep.subr.bf16.mxu0 %v5767
  %5841 = vmatpush1.bf16.msra.mxu0 %v5766
  %5842 = vmatprep.subr.bf16.mxu0 %v5765
  %5843 = vmatpush1.bf16.msra.mxu0 %v5764
  %5844 = vmatprep.subr.bf16.mxu0 %v5795
  %5845 = vmatpush2.bf16.msra.mxu0 %v5794
  %5846 = vmatprep.subr.bf16.mxu0 %v5793
  %5847 = vmatpush2.bf16.msra.mxu0 %v5792
  %5848 = vmatprep.subr.bf16.mxu0 %v5791
  %5849 = vmatpush2.bf16.msra.mxu0 %v5790
  %5850 = vmatprep.subr.bf16.mxu0 %v5789
  %5851 = vmatpush2.bf16.msra.mxu0 %v5788
  %5852 = vmatprep.subr.bf16.mxu0 %v5787
  %5853 = vmatpush2.bf16.msra.mxu0 %v5786
  %5854 = vmatprep.subr.bf16.mxu0 %v5785
  %5855 = vmatpush2.bf16.msra.mxu0 %v5784
  %5856 = vmatprep.subr.bf16.mxu0 %v5783
  %5857 = vmatpush2.bf16.msra.mxu0 %v5782
  %5858 = vmatprep.subr.bf16.mxu0 %v5781
  %5859 = vmatpush2.bf16.msra.mxu0 %v5780
  %5860 = vmatprep.mubr.bf16.mxu0 %v5661
  %5861 = vmatmul.mubr.bf16.gmra.mxu0 %v5660
  %v5862 = vpop.f32.mrf.mxu0
  %v5863 = vadd.f32 0.0, %v5862
  %v5864 = vpop.f32.mrf.mxu0
  %v5865 = vadd.f32 0.0, %v5864
  %v5866 = vpop.f32.mrf.mxu0
  %v5867 = vadd.f32 0.0, %v5866
  %v5868 = vpop.f32.mrf.mxu0
  %v5869 = vadd.f32 0.0, %v5868
  %5870 = vmatprep.mubr.bf16.mxu0 %v5663
  %5871 = vmatmul.mubr.bf16.gmra.mxu0 %v5662
  %v5872 = vpop.f32.mrf.mxu0
  %v5873 = vadd.f32 0.0, %v5872
  %v5874 = vpop.f32.mrf.mxu0
  %v5875 = vadd.f32 0.0, %v5874
  %v5876 = vpop.f32.mrf.mxu0
  %v5877 = vadd.f32 0.0, %v5876
  %v5878 = vpop.f32.mrf.mxu0
  %v5879 = vadd.f32 0.0, %v5878
  %5880 = vdwg.mxu0
  %v5881 = vadd.f32 %v5604, %v5863
  %v5882 = vadd.f32 %v5605, %v5865
  %v5883 = vadd.f32 %v5606, %v5867
  %v5884 = vadd.f32 %v5607, %v5869
  %v5885 = vadd.f32 %v5608, %v5873
  %v5886 = vadd.f32 %v5609, %v5875
  %v5887 = vadd.f32 %v5610, %v5877
  %v5888 = vadd.f32 %v5611, %v5879
  %v5889 = vld [vmem:[#allocation2 + $0x30] sm:$0xff]
  %v5890 = vld [vmem:[#allocation2 + $0x38] sm:$0xff]
  %v5891 = vld [vmem:[#allocation2 + $0x100] sm:$0xff]
  %v5892 = vld [vmem:[#allocation2 + $0x108] sm:$0xff]
  %v5893 = vld [vmem:[%s27 + $0x200] sm:$0xff]
  %v5894 = vld [vmem:[%s27 + $0x208] sm:$0xff]
  %v5895 = vld [vmem:[%s27 + $0x210] sm:$0xff]
  %v5896 = vld [vmem:[%s27 + $0x218] sm:$0xff]
  %v5897 = vld [vmem:[%s27 + $0x220] sm:$0xff]
  %v5898 = vld [vmem:[%s27 + $0x228] sm:$0xff]
  %v5899 = vld [vmem:[%s27 + $0x230] sm:$0xff]
  %v5900 = vld [vmem:[%s27 + $0x238] sm:$0xff]
  %v5901 = vld [vmem:[%s27 + $0x240] sm:$0xff]
  %v5902 = vld [vmem:[%s27 + $0x248] sm:$0xff]
  %v5903 = vld [vmem:[%s27 + $0x250] sm:$0xff]
  %v5904 = vld [vmem:[%s27 + $0x258] sm:$0xff]
  %v5905 = vld [vmem:[%s27 + $0x260] sm:$0xff]
  %v5906 = vld [vmem:[%s27 + $0x268] sm:$0xff]
  %v5907 = vld [vmem:[%s27 + $0x270] sm:$0xff]
  %v5908 = vld [vmem:[%s27 + $0x278] sm:$0xff]
  %v5909 = vld [vmem:[%s27 + $0x280] sm:$0xff]
  %v5910 = vld [vmem:[%s27 + $0x288] sm:$0xff]
  %v5911 = vld [vmem:[%s27 + $0x290] sm:$0xff]
  %v5912 = vld [vmem:[%s27 + $0x298] sm:$0xff]
  %v5913 = vld [vmem:[%s27 + $0x2a0] sm:$0xff]
  %v5914 = vld [vmem:[%s27 + $0x2a8] sm:$0xff]
  %v5915 = vld [vmem:[%s27 + $0x2b0] sm:$0xff]
  %v5916 = vld [vmem:[%s27 + $0x2b8] sm:$0xff]
  %v5917 = vld [vmem:[%s27 + $0x2c0] sm:$0xff]
  %v5918 = vld [vmem:[%s27 + $0x2c8] sm:$0xff]
  %v5919 = vld [vmem:[%s27 + $0x2d0] sm:$0xff]
  %v5920 = vld [vmem:[%s27 + $0x2d8] sm:$0xff]
  %v5921 = vld [vmem:[%s27 + $0x2e0] sm:$0xff]
  %v5922 = vld [vmem:[%s27 + $0x2e8] sm:$0xff]
  %v5923 = vld [vmem:[%s27 + $0x2f0] sm:$0xff]
  %v5924 = vld [vmem:[%s27 + $0x2f8] sm:$0xff]
  %v5929 = vunpack.c.l.b16 %v5889
  %v5930 = vunpack.c.h.b16 %v5889
  %v5931 = vunpack.c.l.b16 %v5890
  %v5932 = vunpack.c.h.b16 %v5890
  %v5933 = vunpack.c.l.b16 %v5891
  %v5934 = vunpack.c.h.b16 %v5891
  %v5935 = vunpack.c.l.b16 %v5892
  %v5936 = vunpack.c.h.b16 %v5892
  %v5937 = vpack.c.b16 %v5931, %v5929
  %v5938 = vpack.c.b16 %v5932, %v5930
  %v5939 = vpack.c.b16 %v5935, %v5933
  %v5940 = vpack.c.b16 %v5936, %v5934
  %v5977 = vunpack.c.l.b16 %v5893
  %v5978 = vunpack.c.h.b16 %v5893
  %v5979 = vunpack.c.l.b16 %v5894
  %v5980 = vunpack.c.h.b16 %v5894
  %v5981 = vunpack.c.l.b16 %v5895
  %v5982 = vunpack.c.h.b16 %v5895
  %v5983 = vunpack.c.l.b16 %v5896
  %v5984 = vunpack.c.h.b16 %v5896
  %v5985 = vunpack.c.l.b16 %v5897
  %v5986 = vunpack.c.h.b16 %v5897
  %v5987 = vunpack.c.l.b16 %v5898
  %v5988 = vunpack.c.h.b16 %v5898
  %v5989 = vunpack.c.l.b16 %v5899
  %v5990 = vunpack.c.h.b16 %v5899
  %v5991 = vunpack.c.l.b16 %v5900
  %v5992 = vunpack.c.h.b16 %v5900
  %v5993 = vunpack.c.l.b16 %v5901
  %v5994 = vunpack.c.h.b16 %v5901
  %v5995 = vunpack.c.l.b16 %v5902
  %v5996 = vunpack.c.h.b16 %v5902
  %v5997 = vunpack.c.l.b16 %v5903
  %v5998 = vunpack.c.h.b16 %v5903
  %v5999 = vunpack.c.l.b16 %v5904
  %v6000 = vunpack.c.h.b16 %v5904
  %v6001 = vunpack.c.l.b16 %v5905
  %v6002 = vunpack.c.h.b16 %v5905
  %v6003 = vunpack.c.l.b16 %v5906
  %v6004 = vunpack.c.h.b16 %v5906
  %v6005 = vunpack.c.l.b16 %v5907
  %v6006 = vunpack.c.h.b16 %v5907
  %v6007 = vunpack.c.l.b16 %v5908
  %v6008 = vunpack.c.h.b16 %v5908
  %v6009 = vunpack.c.l.b16 %v5909
  %v6010 = vunpack.c.h.b16 %v5909
  %v6011 = vunpack.c.l.b16 %v5910
  %v6012 = vunpack.c.h.b16 %v5910
  %v6013 = vunpack.c.l.b16 %v5911
  %v6014 = vunpack.c.h.b16 %v5911
  %v6015 = vunpack.c.l.b16 %v5912
  %v6016 = vunpack.c.h.b16 %v5912
  %v6017 = vunpack.c.l.b16 %v5913
  %v6018 = vunpack.c.h.b16 %v5913
  %v6019 = vunpack.c.l.b16 %v5914
  %v6020 = vunpack.c.h.b16 %v5914
  %v6021 = vunpack.c.l.b16 %v5915
  %v6022 = vunpack.c.h.b16 %v5915
  %v6023 = vunpack.c.l.b16 %v5916
  %v6024 = vunpack.c.h.b16 %v5916
  %v6025 = vunpack.c.l.b16 %v5917
  %v6026 = vunpack.c.h.b16 %v5917
  %v6027 = vunpack.c.l.b16 %v5918
  %v6028 = vunpack.c.h.b16 %v5918
  %v6029 = vunpack.c.l.b16 %v5919
  %v6030 = vunpack.c.h.b16 %v5919
  %v6031 = vunpack.c.l.b16 %v5920
  %v6032 = vunpack.c.h.b16 %v5920
  %v6033 = vunpack.c.l.b16 %v5921
  %v6034 = vunpack.c.h.b16 %v5921
  %v6035 = vunpack.c.l.b16 %v5922
  %v6036 = vunpack.c.h.b16 %v5922
  %v6037 = vunpack.c.l.b16 %v5923
  %v6038 = vunpack.c.h.b16 %v5923
  %v6039 = vunpack.c.l.b16 %v5924
  %v6040 = vunpack.c.h.b16 %v5924
  %v6041 = vpack.c.b16 %v5979, %v5977
  %v6042 = vpack.c.b16 %v5980, %v5978
  %v6043 = vpack.c.b16 %v5983, %v5981
  %v6044 = vpack.c.b16 %v5984, %v5982
  %v6045 = vpack.c.b16 %v5987, %v5985
  %v6046 = vpack.c.b16 %v5988, %v5986
  %v6047 = vpack.c.b16 %v5991, %v5989
  %v6048 = vpack.c.b16 %v5992, %v5990
  %v6049 = vpack.c.b16 %v5995, %v5993
  %v6050 = vpack.c.b16 %v5996, %v5994
  %v6051 = vpack.c.b16 %v5999, %v5997
  %v6052 = vpack.c.b16 %v6000, %v5998
  %v6053 = vpack.c.b16 %v6003, %v6001
  %v6054 = vpack.c.b16 %v6004, %v6002
  %v6055 = vpack.c.b16 %v6007, %v6005
  %v6056 = vpack.c.b16 %v6008, %v6006
  %v6057 = vpack.c.b16 %v6011, %v6009
  %v6058 = vpack.c.b16 %v6012, %v6010
  %v6059 = vpack.c.b16 %v6015, %v6013
  %v6060 = vpack.c.b16 %v6016, %v6014
  %v6061 = vpack.c.b16 %v6019, %v6017
  %v6062 = vpack.c.b16 %v6020, %v6018
  %v6063 = vpack.c.b16 %v6023, %v6021
  %v6064 = vpack.c.b16 %v6024, %v6022
  %v6065 = vpack.c.b16 %v6027, %v6025
  %v6066 = vpack.c.b16 %v6028, %v6026
  %v6067 = vpack.c.b16 %v6031, %v6029
  %v6068 = vpack.c.b16 %v6032, %v6030
  %v6069 = vpack.c.b16 %v6035, %v6033
  %v6070 = vpack.c.b16 %v6036, %v6034
  %v6071 = vpack.c.b16 %v6039, %v6037
  %v6072 = vpack.c.b16 %v6040, %v6038
  %6105 = vmatprep.subr.bf16.mxu0 %v6056
  %6106 = vmatpush1.bf16.msra.mxu0 %v6055
  %6107 = vmatprep.subr.bf16.mxu0 %v6054
  %6108 = vmatpush1.bf16.msra.mxu0 %v6053
  %6109 = vmatprep.subr.bf16.mxu0 %v6052
  %6110 = vmatpush1.bf16.msra.mxu0 %v6051
  %6111 = vmatprep.subr.bf16.mxu0 %v6050
  %6112 = vmatpush1.bf16.msra.mxu0 %v6049
  %6113 = vmatprep.subr.bf16.mxu0 %v6048
  %6114 = vmatpush1.bf16.msra.mxu0 %v6047
  %6115 = vmatprep.subr.bf16.mxu0 %v6046
  %6116 = vmatpush1.bf16.msra.mxu0 %v6045
  %6117 = vmatprep.subr.bf16.mxu0 %v6044
  %6118 = vmatpush1.bf16.msra.mxu0 %v6043
  %6119 = vmatprep.subr.bf16.mxu0 %v6042
  %6120 = vmatpush1.bf16.msra.mxu0 %v6041
  %6121 = vmatprep.subr.bf16.mxu0 %v6072
  %6122 = vmatpush2.bf16.msra.mxu0 %v6071
  %6123 = vmatprep.subr.bf16.mxu0 %v6070
  %6124 = vmatpush2.bf16.msra.mxu0 %v6069
  %6125 = vmatprep.subr.bf16.mxu0 %v6068
  %6126 = vmatpush2.bf16.msra.mxu0 %v6067
  %6127 = vmatprep.subr.bf16.mxu0 %v6066
  %6128 = vmatpush2.bf16.msra.mxu0 %v6065
  %6129 = vmatprep.subr.bf16.mxu0 %v6064
  %6130 = vmatpush2.bf16.msra.mxu0 %v6063
  %6131 = vmatprep.subr.bf16.mxu0 %v6062
  %6132 = vmatpush2.bf16.msra.mxu0 %v6061
  %6133 = vmatprep.subr.bf16.mxu0 %v6060
  %6134 = vmatpush2.bf16.msra.mxu0 %v6059
  %6135 = vmatprep.subr.bf16.mxu0 %v6058
  %6136 = vmatpush2.bf16.msra.mxu0 %v6057
  %6137 = vmatprep.mubr.bf16.mxu0 %v5938
  %6138 = vmatmul.mubr.bf16.gmra.mxu0 %v5937
  %v6139 = vpop.f32.mrf.mxu0
  %v6140 = vadd.f32 0.0, %v6139
  %v6141 = vpop.f32.mrf.mxu0
  %v6142 = vadd.f32 0.0, %v6141
  %v6143 = vpop.f32.mrf.mxu0
  %v6144 = vadd.f32 0.0, %v6143
  %v6145 = vpop.f32.mrf.mxu0
  %v6146 = vadd.f32 0.0, %v6145
  %6147 = vmatprep.mubr.bf16.mxu0 %v5940
  %6148 = vmatmul.mubr.bf16.gmra.mxu0 %v5939
  %v6149 = vpop.f32.mrf.mxu0
  %v6150 = vadd.f32 0.0, %v6149
  %v6151 = vpop.f32.mrf.mxu0
  %v6152 = vadd.f32 0.0, %v6151
  %v6153 = vpop.f32.mrf.mxu0
  %v6154 = vadd.f32 0.0, %v6153
  %v6155 = vpop.f32.mrf.mxu0
  %v6156 = vadd.f32 0.0, %v6155
  %6157 = vdwg.mxu0
  %v6158 = vadd.f32 %v5881, %v6140
  %v6159 = vadd.f32 %v5882, %v6142
  %v6160 = vadd.f32 %v5883, %v6144
  %v6161 = vadd.f32 %v5884, %v6146
  %v6162 = vadd.f32 %v5885, %v6150
  %v6163 = vadd.f32 %v5886, %v6152
  %v6164 = vadd.f32 %v5887, %v6154
  %v6165 = vadd.f32 %v5888, %v6156
  %v6166 = vld [vmem:[#allocation2 + $0x40] sm:$0xff]
  %v6167 = vld [vmem:[#allocation2 + $0x48] sm:$0xff]
  %v6168 = vld [vmem:[#allocation2 + $0x110] sm:$0xff]
  %v6169 = vld [vmem:[#allocation2 + $0x118] sm:$0xff]
  %v6170 = vld [vmem:[%s27 + $0x300] sm:$0xff]
  %v6171 = vld [vmem:[%s27 + $0x308] sm:$0xff]
  %v6172 = vld [vmem:[%s27 + $0x310] sm:$0xff]
  %v6173 = vld [vmem:[%s27 + $0x318] sm:$0xff]
  %v6174 = vld [vmem:[%s27 + $0x320] sm:$0xff]
  %v6175 = vld [vmem:[%s27 + $0x328] sm:$0xff]
  %v6176 = vld [vmem:[%s27 + $0x330] sm:$0xff]
  %v6177 = vld [vmem:[%s27 + $0x338] sm:$0xff]
  %v6178 = vld [vmem:[%s27 + $0x340] sm:$0xff]
  %v6179 = vld [vmem:[%s27 + $0x348] sm:$0xff]
  %v6180 = vld [vmem:[%s27 + $0x350] sm:$0xff]
  %v6181 = vld [vmem:[%s27 + $0x358] sm:$0xff]
  %v6182 = vld [vmem:[%s27 + $0x360] sm:$0xff]
  %v6183 = vld [vmem:[%s27 + $0x368] sm:$0xff]
  %v6184 = vld [vmem:[%s27 + $0x370] sm:$0xff]
  %v6185 = vld [vmem:[%s27 + $0x378] sm:$0xff]
  %v6186 = vld [vmem:[%s27 + $0x380] sm:$0xff]
  %v6187 = vld [vmem:[%s27 + $0x388] sm:$0xff]
  %v6188 = vld [vmem:[%s27 + $0x390] sm:$0xff]
  %v6189 = vld [vmem:[%s27 + $0x398] sm:$0xff]
  %v6190 = vld [vmem:[%s27 + $0x3a0] sm:$0xff]
  %v6191 = vld [vmem:[%s27 + $0x3a8] sm:$0xff]
  %v6192 = vld [vmem:[%s27 + $0x3b0] sm:$0xff]
  %v6193 = vld [vmem:[%s27 + $0x3b8] sm:$0xff]
  %v6194 = vld [vmem:[%s27 + $0x3c0] sm:$0xff]
  %v6195 = vld [vmem:[%s27 + $0x3c8] sm:$0xff]
  %v6196 = vld [vmem:[%s27 + $0x3d0] sm:$0xff]
  %v6197 = vld [vmem:[%s27 + $0x3d8] sm:$0xff]
  %v6198 = vld [vmem:[%s27 + $0x3e0] sm:$0xff]
  %v6199 = vld [vmem:[%s27 + $0x3e8] sm:$0xff]
  %v6200 = vld [vmem:[%s27 + $0x3f0] sm:$0xff]
  %v6201 = vld [vmem:[%s27 + $0x3f8] sm:$0xff]
  %v6206 = vunpack.c.l.b16 %v6166
  %v6207 = vunpack.c.h.b16 %v6166
  %v6208 = vunpack.c.l.b16 %v6167
  %v6209 = vunpack.c.h.b16 %v6167
  %v6210 = vunpack.c.l.b16 %v6168
  %v6211 = vunpack.c.h.b16 %v6168
  %v6212 = vunpack.c.l.b16 %v6169
  %v6213 = vunpack.c.h.b16 %v6169
  %v6214 = vpack.c.b16 %v6208, %v6206
  %v6215 = vpack.c.b16 %v6209, %v6207
  %v6216 = vpack.c.b16 %v6212, %v6210
  %v6217 = vpack.c.b16 %v6213, %v6211
  %v6254 = vunpack.c.l.b16 %v6170
  %v6255 = vunpack.c.h.b16 %v6170
  %v6256 = vunpack.c.l.b16 %v6171
  %v6257 = vunpack.c.h.b16 %v6171
  %v6258 = vunpack.c.l.b16 %v6172
  %v6259 = vunpack.c.h.b16 %v6172
  %v6260 = vunpack.c.l.b16 %v6173
  %v6261 = vunpack.c.h.b16 %v6173
  %v6262 = vunpack.c.l.b16 %v6174
  %v6263 = vunpack.c.h.b16 %v6174
  %v6264 = vunpack.c.l.b16 %v6175
  %v6265 = vunpack.c.h.b16 %v6175
  %v6266 = vunpack.c.l.b16 %v6176
  %v6267 = vunpack.c.h.b16 %v6176
  %v6268 = vunpack.c.l.b16 %v6177
  %v6269 = vunpack.c.h.b16 %v6177
  %v6270 = vunpack.c.l.b16 %v6178
  %v6271 = vunpack.c.h.b16 %v6178
  %v6272 = vunpack.c.l.b16 %v6179
  %v6273 = vunpack.c.h.b16 %v6179
  %v6274 = vunpack.c.l.b16 %v6180
  %v6275 = vunpack.c.h.b16 %v6180
  %v6276 = vunpack.c.l.b16 %v6181
  %v6277 = vunpack.c.h.b16 %v6181
  %v6278 = vunpack.c.l.b16 %v6182
  %v6279 = vunpack.c.h.b16 %v6182
  %v6280 = vunpack.c.l.b16 %v6183
  %v6281 = vunpack.c.h.b16 %v6183
  %v6282 = vunpack.c.l.b16 %v6184
  %v6283 = vunpack.c.h.b16 %v6184
  %v6284 = vunpack.c.l.b16 %v6185
  %v6285 = vunpack.c.h.b16 %v6185
  %v6286 = vunpack.c.l.b16 %v6186
  %v6287 = vunpack.c.h.b16 %v6186
  %v6288 = vunpack.c.l.b16 %v6187
  %v6289 = vunpack.c.h.b16 %v6187
  %v6290 = vunpack.c.l.b16 %v6188
  %v6291 = vunpack.c.h.b16 %v6188
  %v6292 = vunpack.c.l.b16 %v6189
  %v6293 = vunpack.c.h.b16 %v6189
  %v6294 = vunpack.c.l.b16 %v6190
  %v6295 = vunpack.c.h.b16 %v6190
  %v6296 = vunpack.c.l.b16 %v6191
  %v6297 = vunpack.c.h.b16 %v6191
  %v6298 = vunpack.c.l.b16 %v6192
  %v6299 = vunpack.c.h.b16 %v6192
  %v6300 = vunpack.c.l.b16 %v6193
  %v6301 = vunpack.c.h.b16 %v6193
  %v6302 = vunpack.c.l.b16 %v6194
  %v6303 = vunpack.c.h.b16 %v6194
  %v6304 = vunpack.c.l.b16 %v6195
  %v6305 = vunpack.c.h.b16 %v6195
  %v6306 = vunpack.c.l.b16 %v6196
  %v6307 = vunpack.c.h.b16 %v6196
  %v6308 = vunpack.c.l.b16 %v6197
  %v6309 = vunpack.c.h.b16 %v6197
  %v6310 = vunpack.c.l.b16 %v6198
  %v6311 = vunpack.c.h.b16 %v6198
  %v6312 = vunpack.c.l.b16 %v6199
  %v6313 = vunpack.c.h.b16 %v6199
  %v6314 = vunpack.c.l.b16 %v6200
  %v6315 = vunpack.c.h.b16 %v6200
  %v6316 = vunpack.c.l.b16 %v6201
  %v6317 = vunpack.c.h.b16 %v6201
  %v6318 = vpack.c.b16 %v6256, %v6254
  %v6319 = vpack.c.b16 %v6257, %v6255
  %v6320 = vpack.c.b16 %v6260, %v6258
  %v6321 = vpack.c.b16 %v6261, %v6259
  %v6322 = vpack.c.b16 %v6264, %v6262
  %v6323 = vpack.c.b16 %v6265, %v6263
  %v6324 = vpack.c.b16 %v6268, %v6266
  %v6325 = vpack.c.b16 %v6269, %v6267
  %v6326 = vpack.c.b16 %v6272, %v6270
  %v6327 = vpack.c.b16 %v6273, %v6271
  %v6328 = vpack.c.b16 %v6276, %v6274
  %v6329 = vpack.c.b16 %v6277, %v6275
  %v6330 = vpack.c.b16 %v6280, %v6278
  %v6331 = vpack.c.b16 %v6281, %v6279
  %v6332 = vpack.c.b16 %v6284, %v6282
  %v6333 = vpack.c.b16 %v6285, %v6283
  %v6334 = vpack.c.b16 %v6288, %v6286
  %v6335 = vpack.c.b16 %v6289, %v6287
  %v6336 = vpack.c.b16 %v6292, %v6290
  %v6337 = vpack.c.b16 %v6293, %v6291
  %v6338 = vpack.c.b16 %v6296, %v6294
  %v6339 = vpack.c.b16 %v6297, %v6295
  %v6340 = vpack.c.b16 %v6300, %v6298
  %v6341 = vpack.c.b16 %v6301, %v6299
  %v6342 = vpack.c.b16 %v6304, %v6302
  %v6343 = vpack.c.b16 %v6305, %v6303
  %v6344 = vpack.c.b16 %v6308, %v6306
  %v6345 = vpack.c.b16 %v6309, %v6307
  %v6346 = vpack.c.b16 %v6312, %v6310
  %v6347 = vpack.c.b16 %v6313, %v6311
  %v6348 = vpack.c.b16 %v6316, %v6314
  %v6349 = vpack.c.b16 %v6317, %v6315
  %6382 = vmatprep.subr.bf16.mxu0 %v6333
  %6383 = vmatpush1.bf16.msra.mxu0 %v6332
  %6384 = vmatprep.subr.bf16.mxu0 %v6331
  %6385 = vmatpush1.bf16.msra.mxu0 %v6330
  %6386 = vmatprep.subr.bf16.mxu0 %v6329
  %6387 = vmatpush1.bf16.msra.mxu0 %v6328
  %6388 = vmatprep.subr.bf16.mxu0 %v6327
  %6389 = vmatpush1.bf16.msra.mxu0 %v6326
  %6390 = vmatprep.subr.bf16.mxu0 %v6325
  %6391 = vmatpush1.bf16.msra.mxu0 %v6324
  %6392 = vmatprep.subr.bf16.mxu0 %v6323
  %6393 = vmatpush1.bf16.msra.mxu0 %v6322
  %6394 = vmatprep.subr.bf16.mxu0 %v6321
  %6395 = vmatpush1.bf16.msra.mxu0 %v6320
  %6396 = vmatprep.subr.bf16.mxu0 %v6319
  %6397 = vmatpush1.bf16.msra.mxu0 %v6318
  %6398 = vmatprep.subr.bf16.mxu0 %v6349
  %6399 = vmatpush2.bf16.msra.mxu0 %v6348
  %6400 = vmatprep.subr.bf16.mxu0 %v6347
  %6401 = vmatpush2.bf16.msra.mxu0 %v6346
  %6402 = vmatprep.subr.bf16.mxu0 %v6345
  %6403 = vmatpush2.bf16.msra.mxu0 %v6344
  %6404 = vmatprep.subr.bf16.mxu0 %v6343
  %6405 = vmatpush2.bf16.msra.mxu0 %v6342
  %6406 = vmatprep.subr.bf16.mxu0 %v6341
  %6407 = vmatpush2.bf16.msra.mxu0 %v6340
  %6408 = vmatprep.subr.bf16.mxu0 %v6339
  %6409 = vmatpush2.bf16.msra.mxu0 %v6338
  %6410 = vmatprep.subr.bf16.mxu0 %v6337
  %6411 = vmatpush2.bf16.msra.mxu0 %v6336
  %6412 = vmatprep.subr.bf16.mxu0 %v6335
  %6413 = vmatpush2.bf16.msra.mxu0 %v6334
  %6414 = vmatprep.mubr.bf16.mxu0 %v6215
  %6415 = vmatmul.mubr.bf16.gmra.mxu0 %v6214
  %v6416 = vpop.f32.mrf.mxu0
  %v6417 = vadd.f32 0.0, %v6416
  %v6418 = vpop.f32.mrf.mxu0
  %v6419 = vadd.f32 0.0, %v6418
  %v6420 = vpop.f32.mrf.mxu0
  %v6421 = vadd.f32 0.0, %v6420
  %v6422 = vpop.f32.mrf.mxu0
  %v6423 = vadd.f32 0.0, %v6422
  %6424 = vmatprep.mubr.bf16.mxu0 %v6217
  %6425 = vmatmul.mubr.bf16.gmra.mxu0 %v6216
  %v6426 = vpop.f32.mrf.mxu0
  %v6427 = vadd.f32 0.0, %v6426
  %v6428 = vpop.f32.mrf.mxu0
  %v6429 = vadd.f32 0.0, %v6428
  %v6430 = vpop.f32.mrf.mxu0
  %v6431 = vadd.f32 0.0, %v6430
  %v6432 = vpop.f32.mrf.mxu0
  %v6433 = vadd.f32 0.0, %v6432
  %6434 = vdwg.mxu0
  %v6435 = vadd.f32 %v6158, %v6417
  %v6436 = vadd.f32 %v6159, %v6419
  %v6437 = vadd.f32 %v6160, %v6421
  %v6438 = vadd.f32 %v6161, %v6423
  %v6439 = vadd.f32 %v6162, %v6427
  %v6440 = vadd.f32 %v6163, %v6429
  %v6441 = vadd.f32 %v6164, %v6431
  %v6442 = vadd.f32 %v6165, %v6433
  %v6443 = vld [vmem:[#allocation2 + $0x50] sm:$0xff]
  %v6444 = vld [vmem:[#allocation2 + $0x58] sm:$0xff]
  %v6445 = vld [vmem:[#allocation2 + $0x120] sm:$0xff]
  %v6446 = vld [vmem:[#allocation2 + $0x128] sm:$0xff]
  %v6447 = vld [vmem:[%s27 + $0x400] sm:$0xff]
  %v6448 = vld [vmem:[%s27 + $0x408] sm:$0xff]
  %v6449 = vld [vmem:[%s27 + $0x410] sm:$0xff]
  %v6450 = vld [vmem:[%s27 + $0x418] sm:$0xff]
  %v6451 = vld [vmem:[%s27 + $0x420] sm:$0xff]
  %v6452 = vld [vmem:[%s27 + $0x428] sm:$0xff]
  %v6453 = vld [vmem:[%s27 + $0x430] sm:$0xff]
  %v6454 = vld [vmem:[%s27 + $0x438] sm:$0xff]
  %v6455 = vld [vmem:[%s27 + $0x440] sm:$0xff]
  %v6456 = vld [vmem:[%s27 + $0x448] sm:$0xff]
  %v6457 = vld [vmem:[%s27 + $0x450] sm:$0xff]
  %v6458 = vld [vmem:[%s27 + $0x458] sm:$0xff]
  %v6459 = vld [vmem:[%s27 + $0x460] sm:$0xff]
  %v6460 = vld [vmem:[%s27 + $0x468] sm:$0xff]
  %v6461 = vld [vmem:[%s27 + $0x470] sm:$0xff]
  %v6462 = vld [vmem:[%s27 + $0x478] sm:$0xff]
  %v6463 = vld [vmem:[%s27 + $0x480] sm:$0xff]
  %v6464 = vld [vmem:[%s27 + $0x488] sm:$0xff]
  %v6465 = vld [vmem:[%s27 + $0x490] sm:$0xff]
  %v6466 = vld [vmem:[%s27 + $0x498] sm:$0xff]
  %v6467 = vld [vmem:[%s27 + $0x4a0] sm:$0xff]
  %v6468 = vld [vmem:[%s27 + $0x4a8] sm:$0xff]
  %v6469 = vld [vmem:[%s27 + $0x4b0] sm:$0xff]
  %v6470 = vld [vmem:[%s27 + $0x4b8] sm:$0xff]
  %v6471 = vld [vmem:[%s27 + $0x4c0] sm:$0xff]
  %v6472 = vld [vmem:[%s27 + $0x4c8] sm:$0xff]
  %v6473 = vld [vmem:[%s27 + $0x4d0] sm:$0xff]
  %v6474 = vld [vmem:[%s27 + $0x4d8] sm:$0xff]
  %v6475 = vld [vmem:[%s27 + $0x4e0] sm:$0xff]
  %v6476 = vld [vmem:[%s27 + $0x4e8] sm:$0xff]
  %v6477 = vld [vmem:[%s27 + $0x4f0] sm:$0xff]
  %v6478 = vld [vmem:[%s27 + $0x4f8] sm:$0xff]
  %v6483 = vunpack.c.l.b16 %v6443
  %v6484 = vunpack.c.h.b16 %v6443
  %v6485 = vunpack.c.l.b16 %v6444
  %v6486 = vunpack.c.h.b16 %v6444
  %v6487 = vunpack.c.l.b16 %v6445
  %v6488 = vunpack.c.h.b16 %v6445
  %v6489 = vunpack.c.l.b16 %v6446
  %v6490 = vunpack.c.h.b16 %v6446
  %v6491 = vpack.c.b16 %v6485, %v6483
  %v6492 = vpack.c.b16 %v6486, %v6484
  %v6493 = vpack.c.b16 %v6489, %v6487
  %v6494 = vpack.c.b16 %v6490, %v6488
  %v6531 = vunpack.c.l.b16 %v6447
  %v6532 = vunpack.c.h.b16 %v6447
  %v6533 = vunpack.c.l.b16 %v6448
  %v6534 = vunpack.c.h.b16 %v6448
  %v6535 = vunpack.c.l.b16 %v6449
  %v6536 = vunpack.c.h.b16 %v6449
  %v6537 = vunpack.c.l.b16 %v6450
  %v6538 = vunpack.c.h.b16 %v6450
  %v6539 = vunpack.c.l.b16 %v6451
  %v6540 = vunpack.c.h.b16 %v6451
  %v6541 = vunpack.c.l.b16 %v6452
  %v6542 = vunpack.c.h.b16 %v6452
  %v6543 = vunpack.c.l.b16 %v6453
  %v6544 = vunpack.c.h.b16 %v6453
  %v6545 = vunpack.c.l.b16 %v6454
  %v6546 = vunpack.c.h.b16 %v6454
  %v6547 = vunpack.c.l.b16 %v6455
  %v6548 = vunpack.c.h.b16 %v6455
  %v6549 = vunpack.c.l.b16 %v6456
  %v6550 = vunpack.c.h.b16 %v6456
  %v6551 = vunpack.c.l.b16 %v6457
  %v6552 = vunpack.c.h.b16 %v6457
  %v6553 = vunpack.c.l.b16 %v6458
  %v6554 = vunpack.c.h.b16 %v6458
  %v6555 = vunpack.c.l.b16 %v6459
  %v6556 = vunpack.c.h.b16 %v6459
  %v6557 = vunpack.c.l.b16 %v6460
  %v6558 = vunpack.c.h.b16 %v6460
  %v6559 = vunpack.c.l.b16 %v6461
  %v6560 = vunpack.c.h.b16 %v6461
  %v6561 = vunpack.c.l.b16 %v6462
  %v6562 = vunpack.c.h.b16 %v6462
  %v6563 = vunpack.c.l.b16 %v6463
  %v6564 = vunpack.c.h.b16 %v6463
  %v6565 = vunpack.c.l.b16 %v6464
  %v6566 = vunpack.c.h.b16 %v6464
  %v6567 = vunpack.c.l.b16 %v6465
  %v6568 = vunpack.c.h.b16 %v6465
  %v6569 = vunpack.c.l.b16 %v6466
  %v6570 = vunpack.c.h.b16 %v6466
  %v6571 = vunpack.c.l.b16 %v6467
  %v6572 = vunpack.c.h.b16 %v6467
  %v6573 = vunpack.c.l.b16 %v6468
  %v6574 = vunpack.c.h.b16 %v6468
  %v6575 = vunpack.c.l.b16 %v6469
  %v6576 = vunpack.c.h.b16 %v6469
  %v6577 = vunpack.c.l.b16 %v6470
  %v6578 = vunpack.c.h.b16 %v6470
  %v6579 = vunpack.c.l.b16 %v6471
  %v6580 = vunpack.c.h.b16 %v6471
  %v6581 = vunpack.c.l.b16 %v6472
  %v6582 = vunpack.c.h.b16 %v6472
  %v6583 = vunpack.c.l.b16 %v6473
  %v6584 = vunpack.c.h.b16 %v6473
  %v6585 = vunpack.c.l.b16 %v6474
  %v6586 = vunpack.c.h.b16 %v6474
  %v6587 = vunpack.c.l.b16 %v6475
  %v6588 = vunpack.c.h.b16 %v6475
  %v6589 = vunpack.c.l.b16 %v6476
  %v6590 = vunpack.c.h.b16 %v6476
  %v6591 = vunpack.c.l.b16 %v6477
  %v6592 = vunpack.c.h.b16 %v6477
  %v6593 = vunpack.c.l.b16 %v6478
  %v6594 = vunpack.c.h.b16 %v6478
  %v6595 = vpack.c.b16 %v6533, %v6531
  %v6596 = vpack.c.b16 %v6534, %v6532
  %v6597 = vpack.c.b16 %v6537, %v6535
  %v6598 = vpack.c.b16 %v6538, %v6536
  %v6599 = vpack.c.b16 %v6541, %v6539
  %v6600 = vpack.c.b16 %v6542, %v6540
  %v6601 = vpack.c.b16 %v6545, %v6543
  %v6602 = vpack.c.b16 %v6546, %v6544
  %v6603 = vpack.c.b16 %v6549, %v6547
  %v6604 = vpack.c.b16 %v6550, %v6548
  %v6605 = vpack.c.b16 %v6553, %v6551
  %v6606 = vpack.c.b16 %v6554, %v6552
  %v6607 = vpack.c.b16 %v6557, %v6555
  %v6608 = vpack.c.b16 %v6558, %v6556
  %v6609 = vpack.c.b16 %v6561, %v6559
  %v6610 = vpack.c.b16 %v6562, %v6560
  %v6611 = vpack.c.b16 %v6565, %v6563
  %v6612 = vpack.c.b16 %v6566, %v6564
  %v6613 = vpack.c.b16 %v6569, %v6567
  %v6614 = vpack.c.b16 %v6570, %v6568
  %v6615 = vpack.c.b16 %v6573, %v6571
  %v6616 = vpack.c.b16 %v6574, %v6572
  %v6617 = vpack.c.b16 %v6577, %v6575
  %v6618 = vpack.c.b16 %v6578, %v6576
  %v6619 = vpack.c.b16 %v6581, %v6579
  %v6620 = vpack.c.b16 %v6582, %v6580
  %v6621 = vpack.c.b16 %v6585, %v6583
  %v6622 = vpack.c.b16 %v6586, %v6584
  %v6623 = vpack.c.b16 %v6589, %v6587
  %v6624 = vpack.c.b16 %v6590, %v6588
  %v6625 = vpack.c.b16 %v6593, %v6591
  %v6626 = vpack.c.b16 %v6594, %v6592
  %6659 = vmatprep.subr.bf16.mxu0 %v6610
  %6660 = vmatpush1.bf16.msra.mxu0 %v6609
  %6661 = vmatprep.subr.bf16.mxu0 %v6608
  %6662 = vmatpush1.bf16.msra.mxu0 %v6607
  %6663 = vmatprep.subr.bf16.mxu0 %v6606
  %6664 = vmatpush1.bf16.msra.mxu0 %v6605
  %6665 = vmatprep.subr.bf16.mxu0 %v6604
  %6666 = vmatpush1.bf16.msra.mxu0 %v6603
  %6667 = vmatprep.subr.bf16.mxu0 %v6602
  %6668 = vmatpush1.bf16.msra.mxu0 %v6601
  %6669 = vmatprep.subr.bf16.mxu0 %v6600
  %6670 = vmatpush1.bf16.msra.mxu0 %v6599
  %6671 = vmatprep.subr.bf16.mxu0 %v6598
  %6672 = vmatpush1.bf16.msra.mxu0 %v6597
  %6673 = vmatprep.subr.bf16.mxu0 %v6596
  %6674 = vmatpush1.bf16.msra.mxu0 %v6595
  %6675 = vmatprep.subr.bf16.mxu0 %v6626
  %6676 = vmatpush2.bf16.msra.mxu0 %v6625
  %6677 = vmatprep.subr.bf16.mxu0 %v6624
  %6678 = vmatpush2.bf16.msra.mxu0 %v6623
  %6679 = vmatprep.subr.bf16.mxu0 %v6622
  %6680 = vmatpush2.bf16.msra.mxu0 %v6621
  %6681 = vmatprep.subr.bf16.mxu0 %v6620
  %6682 = vmatpush2.bf16.msra.mxu0 %v6619
  %6683 = vmatprep.subr.bf16.mxu0 %v6618
  %6684 = vmatpush2.bf16.msra.mxu0 %v6617
  %6685 = vmatprep.subr.bf16.mxu0 %v6616
  %6686 = vmatpush2.bf16.msra.mxu0 %v6615
  %6687 = vmatprep.subr.bf16.mxu0 %v6614
  %6688 = vmatpush2.bf16.msra.mxu0 %v6613
  %6689 = vmatprep.subr.bf16.mxu0 %v6612
  %6690 = vmatpush2.bf16.msra.mxu0 %v6611
  %6691 = vmatprep.mubr.bf16.mxu0 %v6492
  %6692 = vmatmul.mubr.bf16.gmra.mxu0 %v6491
  %v6693 = vpop.f32.mrf.mxu0
  %v6694 = vadd.f32 0.0, %v6693
  %v6695 = vpop.f32.mrf.mxu0
  %v6696 = vadd.f32 0.0, %v6695
  %v6697 = vpop.f32.mrf.mxu0
  %v6698 = vadd.f32 0.0, %v6697
  %v6699 = vpop.f32.mrf.mxu0
  %v6700 = vadd.f32 0.0, %v6699
  %6701 = vmatprep.mubr.bf16.mxu0 %v6494
  %6702 = vmatmul.mubr.bf16.gmra.mxu0 %v6493
  %v6703 = vpop.f32.mrf.mxu0
  %v6704 = vadd.f32 0.0, %v6703
  %v6705 = vpop.f32.mrf.mxu0
  %v6706 = vadd.f32 0.0, %v6705
  %v6707 = vpop.f32.mrf.mxu0
  %v6708 = vadd.f32 0.0, %v6707
  %v6709 = vpop.f32.mrf.mxu0
  %v6710 = vadd.f32 0.0, %v6709
  %6711 = vdwg.mxu0
  %v6712 = vadd.f32 %v6435, %v6694
  %v6713 = vadd.f32 %v6436, %v6696
  %v6714 = vadd.f32 %v6437, %v6698
  %v6715 = vadd.f32 %v6438, %v6700
  %v6716 = vadd.f32 %v6439, %v6704
  %v6717 = vadd.f32 %v6440, %v6706
  %v6718 = vadd.f32 %v6441, %v6708
  %v6719 = vadd.f32 %v6442, %v6710
  %v6720 = vld [vmem:[#allocation2 + $0x60] sm:$0xff]
  %v6721 = vld [vmem:[#allocation2 + $0x68] sm:$0xff]
  %v6722 = vld [vmem:[#allocation2 + $0x130] sm:$0xff]
  %v6723 = vld [vmem:[#allocation2 + $0x138] sm:$0xff]
  %v6724 = vld [vmem:[%s27 + $0x500] sm:$0xff]
  %v6725 = vld [vmem:[%s27 + $0x508] sm:$0xff]
  %v6726 = vld [vmem:[%s27 + $0x510] sm:$0xff]
  %v6727 = vld [vmem:[%s27 + $0x518] sm:$0xff]
  %v6728 = vld [vmem:[%s27 + $0x520] sm:$0xff]
  %v6729 = vld [vmem:[%s27 + $0x528] sm:$0xff]
  %v6730 = vld [vmem:[%s27 + $0x530] sm:$0xff]
  %v6731 = vld [vmem:[%s27 + $0x538] sm:$0xff]
  %v6732 = vld [vmem:[%s27 + $0x540] sm:$0xff]
  %v6733 = vld [vmem:[%s27 + $0x548] sm:$0xff]
  %v6734 = vld [vmem:[%s27 + $0x550] sm:$0xff]
  %v6735 = vld [vmem:[%s27 + $0x558] sm:$0xff]
  %v6736 = vld [vmem:[%s27 + $0x560] sm:$0xff]
  %v6737 = vld [vmem:[%s27 + $0x568] sm:$0xff]
  %v6738 = vld [vmem:[%s27 + $0x570] sm:$0xff]
  %v6739 = vld [vmem:[%s27 + $0x578] sm:$0xff]
  %v6740 = vld [vmem:[%s27 + $0x580] sm:$0xff]
  %v6741 = vld [vmem:[%s27 + $0x588] sm:$0xff]
  %v6742 = vld [vmem:[%s27 + $0x590] sm:$0xff]
  %v6743 = vld [vmem:[%s27 + $0x598] sm:$0xff]
  %v6744 = vld [vmem:[%s27 + $0x5a0] sm:$0xff]
  %v6745 = vld [vmem:[%s27 + $0x5a8] sm:$0xff]
  %v6746 = vld [vmem:[%s27 + $0x5b0] sm:$0xff]
  %v6747 = vld [vmem:[%s27 + $0x5b8] sm:$0xff]
  %v6748 = vld [vmem:[%s27 + $0x5c0] sm:$0xff]
  %v6749 = vld [vmem:[%s27 + $0x5c8] sm:$0xff]
  %v6750 = vld [vmem:[%s27 + $0x5d0] sm:$0xff]
  %v6751 = vld [vmem:[%s27 + $0x5d8] sm:$0xff]
  %v6752 = vld [vmem:[%s27 + $0x5e0] sm:$0xff]
  %v6753 = vld [vmem:[%s27 + $0x5e8] sm:$0xff]
  %v6754 = vld [vmem:[%s27 + $0x5f0] sm:$0xff]
  %v6755 = vld [vmem:[%s27 + $0x5f8] sm:$0xff]
  %v6760 = vunpack.c.l.b16 %v6720
  %v6761 = vunpack.c.h.b16 %v6720
  %v6762 = vunpack.c.l.b16 %v6721
  %v6763 = vunpack.c.h.b16 %v6721
  %v6764 = vunpack.c.l.b16 %v6722
  %v6765 = vunpack.c.h.b16 %v6722
  %v6766 = vunpack.c.l.b16 %v6723
  %v6767 = vunpack.c.h.b16 %v6723
  %v6768 = vpack.c.b16 %v6762, %v6760
  %v6769 = vpack.c.b16 %v6763, %v6761
  %v6770 = vpack.c.b16 %v6766, %v6764
  %v6771 = vpack.c.b16 %v6767, %v6765
  %v6808 = vunpack.c.l.b16 %v6724
  %v6809 = vunpack.c.h.b16 %v6724
  %v6810 = vunpack.c.l.b16 %v6725
  %v6811 = vunpack.c.h.b16 %v6725
  %v6812 = vunpack.c.l.b16 %v6726
  %v6813 = vunpack.c.h.b16 %v6726
  %v6814 = vunpack.c.l.b16 %v6727
  %v6815 = vunpack.c.h.b16 %v6727
  %v6816 = vunpack.c.l.b16 %v6728
  %v6817 = vunpack.c.h.b16 %v6728
  %v6818 = vunpack.c.l.b16 %v6729
  %v6819 = vunpack.c.h.b16 %v6729
  %v6820 = vunpack.c.l.b16 %v6730
  %v6821 = vunpack.c.h.b16 %v6730
  %v6822 = vunpack.c.l.b16 %v6731
  %v6823 = vunpack.c.h.b16 %v6731
  %v6824 = vunpack.c.l.b16 %v6732
  %v6825 = vunpack.c.h.b16 %v6732
  %v6826 = vunpack.c.l.b16 %v6733
  %v6827 = vunpack.c.h.b16 %v6733
  %v6828 = vunpack.c.l.b16 %v6734
  %v6829 = vunpack.c.h.b16 %v6734
  %v6830 = vunpack.c.l.b16 %v6735
  %v6831 = vunpack.c.h.b16 %v6735
  %v6832 = vunpack.c.l.b16 %v6736
  %v6833 = vunpack.c.h.b16 %v6736
  %v6834 = vunpack.c.l.b16 %v6737
  %v6835 = vunpack.c.h.b16 %v6737
  %v6836 = vunpack.c.l.b16 %v6738
  %v6837 = vunpack.c.h.b16 %v6738
  %v6838 = vunpack.c.l.b16 %v6739
  %v6839 = vunpack.c.h.b16 %v6739
  %v6840 = vunpack.c.l.b16 %v6740
  %v6841 = vunpack.c.h.b16 %v6740
  %v6842 = vunpack.c.l.b16 %v6741
  %v6843 = vunpack.c.h.b16 %v6741
  %v6844 = vunpack.c.l.b16 %v6742
  %v6845 = vunpack.c.h.b16 %v6742
  %v6846 = vunpack.c.l.b16 %v6743
  %v6847 = vunpack.c.h.b16 %v6743
  %v6848 = vunpack.c.l.b16 %v6744
  %v6849 = vunpack.c.h.b16 %v6744
  %v6850 = vunpack.c.l.b16 %v6745
  %v6851 = vunpack.c.h.b16 %v6745
  %v6852 = vunpack.c.l.b16 %v6746
  %v6853 = vunpack.c.h.b16 %v6746
  %v6854 = vunpack.c.l.b16 %v6747
  %v6855 = vunpack.c.h.b16 %v6747
  %v6856 = vunpack.c.l.b16 %v6748
  %v6857 = vunpack.c.h.b16 %v6748
  %v6858 = vunpack.c.l.b16 %v6749
  %v6859 = vunpack.c.h.b16 %v6749
  %v6860 = vunpack.c.l.b16 %v6750
  %v6861 = vunpack.c.h.b16 %v6750
  %v6862 = vunpack.c.l.b16 %v6751
  %v6863 = vunpack.c.h.b16 %v6751
  %v6864 = vunpack.c.l.b16 %v6752
  %v6865 = vunpack.c.h.b16 %v6752
  %v6866 = vunpack.c.l.b16 %v6753
  %v6867 = vunpack.c.h.b16 %v6753
  %v6868 = vunpack.c.l.b16 %v6754
  %v6869 = vunpack.c.h.b16 %v6754
  %v6870 = vunpack.c.l.b16 %v6755
  %v6871 = vunpack.c.h.b16 %v6755
  %v6872 = vpack.c.b16 %v6810, %v6808
  %v6873 = vpack.c.b16 %v6811, %v6809
  %v6874 = vpack.c.b16 %v6814, %v6812
  %v6875 = vpack.c.b16 %v6815, %v6813
  %v6876 = vpack.c.b16 %v6818, %v6816
  %v6877 = vpack.c.b16 %v6819, %v6817
  %v6878 = vpack.c.b16 %v6822, %v6820
  %v6879 = vpack.c.b16 %v6823, %v6821
  %v6880 = vpack.c.b16 %v6826, %v6824
  %v6881 = vpack.c.b16 %v6827, %v6825
  %v6882 = vpack.c.b16 %v6830, %v6828
  %v6883 = vpack.c.b16 %v6831, %v6829
  %v6884 = vpack.c.b16 %v6834, %v6832
  %v6885 = vpack.c.b16 %v6835, %v6833
  %v6886 = vpack.c.b16 %v6838, %v6836
  %v6887 = vpack.c.b16 %v6839, %v6837
  %v6888 = vpack.c.b16 %v6842, %v6840
  %v6889 = vpack.c.b16 %v6843, %v6841
  %v6890 = vpack.c.b16 %v6846, %v6844
  %v6891 = vpack.c.b16 %v6847, %v6845
  %v6892 = vpack.c.b16 %v6850, %v6848
  %v6893 = vpack.c.b16 %v6851, %v6849
  %v6894 = vpack.c.b16 %v6854, %v6852
  %v6895 = vpack.c.b16 %v6855, %v6853
  %v6896 = vpack.c.b16 %v6858, %v6856
  %v6897 = vpack.c.b16 %v6859, %v6857
  %v6898 = vpack.c.b16 %v6862, %v6860
  %v6899 = vpack.c.b16 %v6863, %v6861
  %v6900 = vpack.c.b16 %v6866, %v6864
  %v6901 = vpack.c.b16 %v6867, %v6865
  %v6902 = vpack.c.b16 %v6870, %v6868
  %v6903 = vpack.c.b16 %v6871, %v6869
  %6936 = vmatprep.subr.bf16.mxu0 %v6887
  %6937 = vmatpush1.bf16.msra.mxu0 %v6886
  %6938 = vmatprep.subr.bf16.mxu0 %v6885
  %6939 = vmatpush1.bf16.msra.mxu0 %v6884
  %6940 = vmatprep.subr.bf16.mxu0 %v6883
  %6941 = vmatpush1.bf16.msra.mxu0 %v6882
  %6942 = vmatprep.subr.bf16.mxu0 %v6881
  %6943 = vmatpush1.bf16.msra.mxu0 %v6880
  %6944 = vmatprep.subr.bf16.mxu0 %v6879
  %6945 = vmatpush1.bf16.msra.mxu0 %v6878
  %6946 = vmatprep.subr.bf16.mxu0 %v6877
  %6947 = vmatpush1.bf16.msra.mxu0 %v6876
  %6948 = vmatprep.subr.bf16.mxu0 %v6875
  %6949 = vmatpush1.bf16.msra.mxu0 %v6874
  %6950 = vmatprep.subr.bf16.mxu0 %v6873
  %6951 = vmatpush1.bf16.msra.mxu0 %v6872
  %6952 = vmatprep.subr.bf16.mxu0 %v6903
  %6953 = vmatpush2.bf16.msra.mxu0 %v6902
  %6954 = vmatprep.subr.bf16.mxu0 %v6901
  %6955 = vmatpush2.bf16.msra.mxu0 %v6900
  %6956 = vmatprep.subr.bf16.mxu0 %v6899
  %6957 = vmatpush2.bf16.msra.mxu0 %v6898
  %6958 = vmatprep.subr.bf16.mxu0 %v6897
  %6959 = vmatpush2.bf16.msra.mxu0 %v6896
  %6960 = vmatprep.subr.bf16.mxu0 %v6895
  %6961 = vmatpush2.bf16.msra.mxu0 %v6894
  %6962 = vmatprep.subr.bf16.mxu0 %v6893
  %6963 = vmatpush2.bf16.msra.mxu0 %v6892
  %6964 = vmatprep.subr.bf16.mxu0 %v6891
  %6965 = vmatpush2.bf16.msra.mxu0 %v6890
  %6966 = vmatprep.subr.bf16.mxu0 %v6889
  %6967 = vmatpush2.bf16.msra.mxu0 %v6888
  %6968 = vmatprep.mubr.bf16.mxu0 %v6769
  %6969 = vmatmul.mubr.bf16.gmra.mxu0 %v6768
  %v6970 = vpop.f32.mrf.mxu0
  %v6971 = vadd.f32 0.0, %v6970
  %v6972 = vpop.f32.mrf.mxu0
  %v6973 = vadd.f32 0.0, %v6972
  %v6974 = vpop.f32.mrf.mxu0
  %v6975 = vadd.f32 0.0, %v6974
  %v6976 = vpop.f32.mrf.mxu0
  %v6977 = vadd.f32 0.0, %v6976
  %6978 = vmatprep.mubr.bf16.mxu0 %v6771
  %6979 = vmatmul.mubr.bf16.gmra.mxu0 %v6770
  %v6980 = vpop.f32.mrf.mxu0
  %v6981 = vadd.f32 0.0, %v6980
  %v6982 = vpop.f32.mrf.mxu0
  %v6983 = vadd.f32 0.0, %v6982
  %v6984 = vpop.f32.mrf.mxu0
  %v6985 = vadd.f32 0.0, %v6984
  %v6986 = vpop.f32.mrf.mxu0
  %v6987 = vadd.f32 0.0, %v6986
  %6988 = vdwg.mxu0
  %v6989 = vadd.f32 %v6712, %v6971
  %v6990 = vadd.f32 %v6713, %v6973
  %v6991 = vadd.f32 %v6714, %v6975
  %v6992 = vadd.f32 %v6715, %v6977
  %v6993 = vadd.f32 %v6716, %v6981
  %v6994 = vadd.f32 %v6717, %v6983
  %v6995 = vadd.f32 %v6718, %v6985
  %v6996 = vadd.f32 %v6719, %v6987
  %v6997 = vld [vmem:[#allocation2 + $0x70] sm:$0xff]
  %v6998 = vld [vmem:[#allocation2 + $0x78] sm:$0xff]
  %v6999 = vld [vmem:[#allocation2 + $0x140] sm:$0xff]
  %v7000 = vld [vmem:[#allocation2 + $0x148] sm:$0xff]
  %v7001 = vld [vmem:[%s27 + $0x600] sm:$0xff]
  %v7002 = vld [vmem:[%s27 + $0x608] sm:$0xff]
  %v7003 = vld [vmem:[%s27 + $0x610] sm:$0xff]
  %v7004 = vld [vmem:[%s27 + $0x618] sm:$0xff]
  %v7005 = vld [vmem:[%s27 + $0x620] sm:$0xff]
  %v7006 = vld [vmem:[%s27 + $0x628] sm:$0xff]
  %v7007 = vld [vmem:[%s27 + $0x630] sm:$0xff]
  %v7008 = vld [vmem:[%s27 + $0x638] sm:$0xff]
  %v7009 = vld [vmem:[%s27 + $0x640] sm:$0xff]
  %v7010 = vld [vmem:[%s27 + $0x648] sm:$0xff]
  %v7011 = vld [vmem:[%s27 + $0x650] sm:$0xff]
  %v7012 = vld [vmem:[%s27 + $0x658] sm:$0xff]
  %v7013 = vld [vmem:[%s27 + $0x660] sm:$0xff]
  %v7014 = vld [vmem:[%s27 + $0x668] sm:$0xff]
  %v7015 = vld [vmem:[%s27 + $0x670] sm:$0xff]
  %v7016 = vld [vmem:[%s27 + $0x678] sm:$0xff]
  %v7017 = vld [vmem:[%s27 + $0x680] sm:$0xff]
  %v7018 = vld [vmem:[%s27 + $0x688] sm:$0xff]
  %v7019 = vld [vmem:[%s27 + $0x690] sm:$0xff]
  %v7020 = vld [vmem:[%s27 + $0x698] sm:$0xff]
  %v7021 = vld [vmem:[%s27 + $0x6a0] sm:$0xff]
  %v7022 = vld [vmem:[%s27 + $0x6a8] sm:$0xff]
  %v7023 = vld [vmem:[%s27 + $0x6b0] sm:$0xff]
  %v7024 = vld [vmem:[%s27 + $0x6b8] sm:$0xff]
  %v7025 = vld [vmem:[%s27 + $0x6c0] sm:$0xff]
  %v7026 = vld [vmem:[%s27 + $0x6c8] sm:$0xff]
  %v7027 = vld [vmem:[%s27 + $0x6d0] sm:$0xff]
  %v7028 = vld [vmem:[%s27 + $0x6d8] sm:$0xff]
  %v7029 = vld [vmem:[%s27 + $0x6e0] sm:$0xff]
  %v7030 = vld [vmem:[%s27 + $0x6e8] sm:$0xff]
  %v7031 = vld [vmem:[%s27 + $0x6f0] sm:$0xff]
  %v7032 = vld [vmem:[%s27 + $0x6f8] sm:$0xff]
  %v7037 = vunpack.c.l.b16 %v6997
  %v7038 = vunpack.c.h.b16 %v6997
  %v7039 = vunpack.c.l.b16 %v6998
  %v7040 = vunpack.c.h.b16 %v6998
  %v7041 = vunpack.c.l.b16 %v6999
  %v7042 = vunpack.c.h.b16 %v6999
  %v7043 = vunpack.c.l.b16 %v7000
  %v7044 = vunpack.c.h.b16 %v7000
  %v7045 = vpack.c.b16 %v7039, %v7037
  %v7046 = vpack.c.b16 %v7040, %v7038
  %v7047 = vpack.c.b16 %v7043, %v7041
  %v7048 = vpack.c.b16 %v7044, %v7042
  %v7085 = vunpack.c.l.b16 %v7001
  %v7086 = vunpack.c.h.b16 %v7001
  %v7087 = vunpack.c.l.b16 %v7002
  %v7088 = vunpack.c.h.b16 %v7002
  %v7089 = vunpack.c.l.b16 %v7003
  %v7090 = vunpack.c.h.b16 %v7003
  %v7091 = vunpack.c.l.b16 %v7004
  %v7092 = vunpack.c.h.b16 %v7004
  %v7093 = vunpack.c.l.b16 %v7005
  %v7094 = vunpack.c.h.b16 %v7005
  %v7095 = vunpack.c.l.b16 %v7006
  %v7096 = vunpack.c.h.b16 %v7006
  %v7097 = vunpack.c.l.b16 %v7007
  %v7098 = vunpack.c.h.b16 %v7007
  %v7099 = vunpack.c.l.b16 %v7008
  %v7100 = vunpack.c.h.b16 %v7008
  %v7101 = vunpack.c.l.b16 %v7009
  %v7102 = vunpack.c.h.b16 %v7009
  %v7103 = vunpack.c.l.b16 %v7010
  %v7104 = vunpack.c.h.b16 %v7010
  %v7105 = vunpack.c.l.b16 %v7011
  %v7106 = vunpack.c.h.b16 %v7011
  %v7107 = vunpack.c.l.b16 %v7012
  %v7108 = vunpack.c.h.b16 %v7012
  %v7109 = vunpack.c.l.b16 %v7013
  %v7110 = vunpack.c.h.b16 %v7013
  %v7111 = vunpack.c.l.b16 %v7014
  %v7112 = vunpack.c.h.b16 %v7014
  %v7113 = vunpack.c.l.b16 %v7015
  %v7114 = vunpack.c.h.b16 %v7015
  %v7115 = vunpack.c.l.b16 %v7016
  %v7116 = vunpack.c.h.b16 %v7016
  %v7117 = vunpack.c.l.b16 %v7017
  %v7118 = vunpack.c.h.b16 %v7017
  %v7119 = vunpack.c.l.b16 %v7018
  %v7120 = vunpack.c.h.b16 %v7018
  %v7121 = vunpack.c.l.b16 %v7019
  %v7122 = vunpack.c.h.b16 %v7019
  %v7123 = vunpack.c.l.b16 %v7020
  %v7124 = vunpack.c.h.b16 %v7020
  %v7125 = vunpack.c.l.b16 %v7021
  %v7126 = vunpack.c.h.b16 %v7021
  %v7127 = vunpack.c.l.b16 %v7022
  %v7128 = vunpack.c.h.b16 %v7022
  %v7129 = vunpack.c.l.b16 %v7023
  %v7130 = vunpack.c.h.b16 %v7023
  %v7131 = vunpack.c.l.b16 %v7024
  %v7132 = vunpack.c.h.b16 %v7024
  %v7133 = vunpack.c.l.b16 %v7025
  %v7134 = vunpack.c.h.b16 %v7025
  %v7135 = vunpack.c.l.b16 %v7026
  %v7136 = vunpack.c.h.b16 %v7026
  %v7137 = vunpack.c.l.b16 %v7027
  %v7138 = vunpack.c.h.b16 %v7027
  %v7139 = vunpack.c.l.b16 %v7028
  %v7140 = vunpack.c.h.b16 %v7028
  %v7141 = vunpack.c.l.b16 %v7029
  %v7142 = vunpack.c.h.b16 %v7029
  %v7143 = vunpack.c.l.b16 %v7030
  %v7144 = vunpack.c.h.b16 %v7030
  %v7145 = vunpack.c.l.b16 %v7031
  %v7146 = vunpack.c.h.b16 %v7031
  %v7147 = vunpack.c.l.b16 %v7032
  %v7148 = vunpack.c.h.b16 %v7032
  %v7149 = vpack.c.b16 %v7087, %v7085
  %v7150 = vpack.c.b16 %v7088, %v7086
  %v7151 = vpack.c.b16 %v7091, %v7089
  %v7152 = vpack.c.b16 %v7092, %v7090
  %v7153 = vpack.c.b16 %v7095, %v7093
  %v7154 = vpack.c.b16 %v7096, %v7094
  %v7155 = vpack.c.b16 %v7099, %v7097
  %v7156 = vpack.c.b16 %v7100, %v7098
  %v7157 = vpack.c.b16 %v7103, %v7101
  %v7158 = vpack.c.b16 %v7104, %v7102
  %v7159 = vpack.c.b16 %v7107, %v7105
  %v7160 = vpack.c.b16 %v7108, %v7106
  %v7161 = vpack.c.b16 %v7111, %v7109
  %v7162 = vpack.c.b16 %v7112, %v7110
  %v7163 = vpack.c.b16 %v7115, %v7113
  %v7164 = vpack.c.b16 %v7116, %v7114
  %v7165 = vpack.c.b16 %v7119, %v7117
  %v7166 = vpack.c.b16 %v7120, %v7118
  %v7167 = vpack.c.b16 %v7123, %v7121
  %v7168 = vpack.c.b16 %v7124, %v7122
  %v7169 = vpack.c.b16 %v7127, %v7125
  %v7170 = vpack.c.b16 %v7128, %v7126
  %v7171 = vpack.c.b16 %v7131, %v7129
  %v7172 = vpack.c.b16 %v7132, %v7130
  %v7173 = vpack.c.b16 %v7135, %v7133
  %v7174 = vpack.c.b16 %v7136, %v7134
  %v7175 = vpack.c.b16 %v7139, %v7137
  %v7176 = vpack.c.b16 %v7140, %v7138
  %v7177 = vpack.c.b16 %v7143, %v7141
  %v7178 = vpack.c.b16 %v7144, %v7142
  %v7179 = vpack.c.b16 %v7147, %v7145
  %v7180 = vpack.c.b16 %v7148, %v7146
  %7213 = vmatprep.subr.bf16.mxu0 %v7164
  %7214 = vmatpush1.bf16.msra.mxu0 %v7163
  %7215 = vmatprep.subr.bf16.mxu0 %v7162
  %7216 = vmatpush1.bf16.msra.mxu0 %v7161
  %7217 = vmatprep.subr.bf16.mxu0 %v7160
  %7218 = vmatpush1.bf16.msra.mxu0 %v7159
  %7219 = vmatprep.subr.bf16.mxu0 %v7158
  %7220 = vmatpush1.bf16.msra.mxu0 %v7157
  %7221 = vmatprep.subr.bf16.mxu0 %v7156
  %7222 = vmatpush1.bf16.msra.mxu0 %v7155
  %7223 = vmatprep.subr.bf16.mxu0 %v7154
  %7224 = vmatpush1.bf16.msra.mxu0 %v7153
  %7225 = vmatprep.subr.bf16.mxu0 %v7152
  %7226 = vmatpush1.bf16.msra.mxu0 %v7151
  %7227 = vmatprep.subr.bf16.mxu0 %v7150
  %7228 = vmatpush1.bf16.msra.mxu0 %v7149
  %7229 = vmatprep.subr.bf16.mxu0 %v7180
  %7230 = vmatpush2.bf16.msra.mxu0 %v7179
  %7231 = vmatprep.subr.bf16.mxu0 %v7178
  %7232 = vmatpush2.bf16.msra.mxu0 %v7177
  %7233 = vmatprep.subr.bf16.mxu0 %v7176
  %7234 = vmatpush2.bf16.msra.mxu0 %v7175
  %7235 = vmatprep.subr.bf16.mxu0 %v7174
  %7236 = vmatpush2.bf16.msra.mxu0 %v7173
  %7237 = vmatprep.subr.bf16.mxu0 %v7172
  %7238 = vmatpush2.bf16.msra.mxu0 %v7171
  %7239 = vmatprep.subr.bf16.mxu0 %v7170
  %7240 = vmatpush2.bf16.msra.mxu0 %v7169
  %7241 = vmatprep.subr.bf16.mxu0 %v7168
  %7242 = vmatpush2.bf16.msra.mxu0 %v7167
  %7243 = vmatprep.subr.bf16.mxu0 %v7166
  %7244 = vmatpush2.bf16.msra.mxu0 %v7165
  %7245 = vmatprep.mubr.bf16.mxu0 %v7046
  %7246 = vmatmul.mubr.bf16.gmra.mxu0 %v7045
  %v7247 = vpop.f32.mrf.mxu0
  %v7248 = vadd.f32 0.0, %v7247
  %v7249 = vpop.f32.mrf.mxu0
  %v7250 = vadd.f32 0.0, %v7249
  %v7251 = vpop.f32.mrf.mxu0
  %v7252 = vadd.f32 0.0, %v7251
  %v7253 = vpop.f32.mrf.mxu0
  %v7254 = vadd.f32 0.0, %v7253
  %7255 = vmatprep.mubr.bf16.mxu0 %v7048
  %7256 = vmatmul.mubr.bf16.gmra.mxu0 %v7047
  %v7257 = vpop.f32.mrf.mxu0
  %v7258 = vadd.f32 0.0, %v7257
  %v7259 = vpop.f32.mrf.mxu0
  %v7260 = vadd.f32 0.0, %v7259
  %v7261 = vpop.f32.mrf.mxu0
  %v7262 = vadd.f32 0.0, %v7261
  %v7263 = vpop.f32.mrf.mxu0
  %v7264 = vadd.f32 0.0, %v7263
  %7265 = vdwg.mxu0
  %v7266 = vadd.f32 %v6989, %v7248
  %v7267 = vadd.f32 %v6990, %v7250
  %v7268 = vadd.f32 %v6991, %v7252
  %v7269 = vadd.f32 %v6992, %v7254
  %v7270 = vadd.f32 %v6993, %v7258
  %v7271 = vadd.f32 %v6994, %v7260
  %v7272 = vadd.f32 %v6995, %v7262
  %v7273 = vadd.f32 %v6996, %v7264
  %v7274 = vld [vmem:[#allocation2 + $0x80] sm:$0xff]
  %v7275 = vld [vmem:[#allocation2 + $0x88] sm:$0xff]
  %v7276 = vld [vmem:[#allocation2 + $0x150] sm:$0xff]
  %v7277 = vld [vmem:[#allocation2 + $0x158] sm:$0xff]
  %v7278 = vld [vmem:[%s27 + $0x700] sm:$0xff]
  %v7279 = vld [vmem:[%s27 + $0x708] sm:$0xff]
  %v7280 = vld [vmem:[%s27 + $0x710] sm:$0xff]
  %v7281 = vld [vmem:[%s27 + $0x718] sm:$0xff]
  %v7282 = vld [vmem:[%s27 + $0x720] sm:$0xff]
  %v7283 = vld [vmem:[%s27 + $0x728] sm:$0xff]
  %v7284 = vld [vmem:[%s27 + $0x730] sm:$0xff]
  %v7285 = vld [vmem:[%s27 + $0x738] sm:$0xff]
  %v7286 = vld [vmem:[%s27 + $0x740] sm:$0xff]
  %v7287 = vld [vmem:[%s27 + $0x748] sm:$0xff]
  %v7288 = vld [vmem:[%s27 + $0x750] sm:$0xff]
  %v7289 = vld [vmem:[%s27 + $0x758] sm:$0xff]
  %v7290 = vld [vmem:[%s27 + $0x760] sm:$0xff]
  %v7291 = vld [vmem:[%s27 + $0x768] sm:$0xff]
  %v7292 = vld [vmem:[%s27 + $0x770] sm:$0xff]
  %v7293 = vld [vmem:[%s27 + $0x778] sm:$0xff]
  %v7294 = vld [vmem:[%s27 + $0x780] sm:$0xff]
  %v7295 = vld [vmem:[%s27 + $0x788] sm:$0xff]
  %v7296 = vld [vmem:[%s27 + $0x790] sm:$0xff]
  %v7297 = vld [vmem:[%s27 + $0x798] sm:$0xff]
  %v7298 = vld [vmem:[%s27 + $0x7a0] sm:$0xff]
  %v7299 = vld [vmem:[%s27 + $0x7a8] sm:$0xff]
  %v7300 = vld [vmem:[%s27 + $0x7b0] sm:$0xff]
  %v7301 = vld [vmem:[%s27 + $0x7b8] sm:$0xff]
  %v7302 = vld [vmem:[%s27 + $0x7c0] sm:$0xff]
  %v7303 = vld [vmem:[%s27 + $0x7c8] sm:$0xff]
  %v7304 = vld [vmem:[%s27 + $0x7d0] sm:$0xff]
  %v7305 = vld [vmem:[%s27 + $0x7d8] sm:$0xff]
  %v7306 = vld [vmem:[%s27 + $0x7e0] sm:$0xff]
  %v7307 = vld [vmem:[%s27 + $0x7e8] sm:$0xff]
  %v7308 = vld [vmem:[%s27 + $0x7f0] sm:$0xff]
  %v7309 = vld [vmem:[%s27 + $0x7f8] sm:$0xff]
  %v7314 = vunpack.c.l.b16 %v7274
  %v7315 = vunpack.c.h.b16 %v7274
  %v7316 = vunpack.c.l.b16 %v7275
  %v7317 = vunpack.c.h.b16 %v7275
  %v7318 = vunpack.c.l.b16 %v7276
  %v7319 = vunpack.c.h.b16 %v7276
  %v7320 = vunpack.c.l.b16 %v7277
  %v7321 = vunpack.c.h.b16 %v7277
  %v7322 = vpack.c.b16 %v7316, %v7314
  %v7323 = vpack.c.b16 %v7317, %v7315
  %v7324 = vpack.c.b16 %v7320, %v7318
  %v7325 = vpack.c.b16 %v7321, %v7319
  %v7362 = vunpack.c.l.b16 %v7278
  %v7363 = vunpack.c.h.b16 %v7278
  %v7364 = vunpack.c.l.b16 %v7279
  %v7365 = vunpack.c.h.b16 %v7279
  %v7366 = vunpack.c.l.b16 %v7280
  %v7367 = vunpack.c.h.b16 %v7280
  %v7368 = vunpack.c.l.b16 %v7281
  %v7369 = vunpack.c.h.b16 %v7281
  %v7370 = vunpack.c.l.b16 %v7282
  %v7371 = vunpack.c.h.b16 %v7282
  %v7372 = vunpack.c.l.b16 %v7283
  %v7373 = vunpack.c.h.b16 %v7283
  %v7374 = vunpack.c.l.b16 %v7284
  %v7375 = vunpack.c.h.b16 %v7284
  %v7376 = vunpack.c.l.b16 %v7285
  %v7377 = vunpack.c.h.b16 %v7285
  %v7378 = vunpack.c.l.b16 %v7286
  %v7379 = vunpack.c.h.b16 %v7286
  %v7380 = vunpack.c.l.b16 %v7287
  %v7381 = vunpack.c.h.b16 %v7287
  %v7382 = vunpack.c.l.b16 %v7288
  %v7383 = vunpack.c.h.b16 %v7288
  %v7384 = vunpack.c.l.b16 %v7289
  %v7385 = vunpack.c.h.b16 %v7289
  %v7386 = vunpack.c.l.b16 %v7290
  %v7387 = vunpack.c.h.b16 %v7290
  %v7388 = vunpack.c.l.b16 %v7291
  %v7389 = vunpack.c.h.b16 %v7291
  %v7390 = vunpack.c.l.b16 %v7292
  %v7391 = vunpack.c.h.b16 %v7292
  %v7392 = vunpack.c.l.b16 %v7293
  %v7393 = vunpack.c.h.b16 %v7293
  %v7394 = vunpack.c.l.b16 %v7294
  %v7395 = vunpack.c.h.b16 %v7294
  %v7396 = vunpack.c.l.b16 %v7295
  %v7397 = vunpack.c.h.b16 %v7295
  %v7398 = vunpack.c.l.b16 %v7296
  %v7399 = vunpack.c.h.b16 %v7296
  %v7400 = vunpack.c.l.b16 %v7297
  %v7401 = vunpack.c.h.b16 %v7297
  %v7402 = vunpack.c.l.b16 %v7298
  %v7403 = vunpack.c.h.b16 %v7298
  %v7404 = vunpack.c.l.b16 %v7299
  %v7405 = vunpack.c.h.b16 %v7299
  %v7406 = vunpack.c.l.b16 %v7300
  %v7407 = vunpack.c.h.b16 %v7300
  %v7408 = vunpack.c.l.b16 %v7301
  %v7409 = vunpack.c.h.b16 %v7301
  %v7410 = vunpack.c.l.b16 %v7302
  %v7411 = vunpack.c.h.b16 %v7302
  %v7412 = vunpack.c.l.b16 %v7303
  %v7413 = vunpack.c.h.b16 %v7303
  %v7414 = vunpack.c.l.b16 %v7304
  %v7415 = vunpack.c.h.b16 %v7304
  %v7416 = vunpack.c.l.b16 %v7305
  %v7417 = vunpack.c.h.b16 %v7305
  %v7418 = vunpack.c.l.b16 %v7306
  %v7419 = vunpack.c.h.b16 %v7306
  %v7420 = vunpack.c.l.b16 %v7307
  %v7421 = vunpack.c.h.b16 %v7307
  %v7422 = vunpack.c.l.b16 %v7308
  %v7423 = vunpack.c.h.b16 %v7308
  %v7424 = vunpack.c.l.b16 %v7309
  %v7425 = vunpack.c.h.b16 %v7309
  %v7426 = vpack.c.b16 %v7364, %v7362
  %v7427 = vpack.c.b16 %v7365, %v7363
  %v7428 = vpack.c.b16 %v7368, %v7366
  %v7429 = vpack.c.b16 %v7369, %v7367
  %v7430 = vpack.c.b16 %v7372, %v7370
  %v7431 = vpack.c.b16 %v7373, %v7371
  %v7432 = vpack.c.b16 %v7376, %v7374
  %v7433 = vpack.c.b16 %v7377, %v7375
  %v7434 = vpack.c.b16 %v7380, %v7378
  %v7435 = vpack.c.b16 %v7381, %v7379
  %v7436 = vpack.c.b16 %v7384, %v7382
  %v7437 = vpack.c.b16 %v7385, %v7383
  %v7438 = vpack.c.b16 %v7388, %v7386
  %v7439 = vpack.c.b16 %v7389, %v7387
  %v7440 = vpack.c.b16 %v7392, %v7390
  %v7441 = vpack.c.b16 %v7393, %v7391
  %v7442 = vpack.c.b16 %v7396, %v7394
  %v7443 = vpack.c.b16 %v7397, %v7395
  %v7444 = vpack.c.b16 %v7400, %v7398
  %v7445 = vpack.c.b16 %v7401, %v7399
  %v7446 = vpack.c.b16 %v7404, %v7402
  %v7447 = vpack.c.b16 %v7405, %v7403
  %v7448 = vpack.c.b16 %v7408, %v7406
  %v7449 = vpack.c.b16 %v7409, %v7407
  %v7450 = vpack.c.b16 %v7412, %v7410
  %v7451 = vpack.c.b16 %v7413, %v7411
  %v7452 = vpack.c.b16 %v7416, %v7414
  %v7453 = vpack.c.b16 %v7417, %v7415
  %v7454 = vpack.c.b16 %v7420, %v7418
  %v7455 = vpack.c.b16 %v7421, %v7419
  %v7456 = vpack.c.b16 %v7424, %v7422
  %v7457 = vpack.c.b16 %v7425, %v7423
  %7490 = vmatprep.subr.bf16.mxu0 %v7441
  %7491 = vmatpush1.bf16.msra.mxu0 %v7440
  %7492 = vmatprep.subr.bf16.mxu0 %v7439
  %7493 = vmatpush1.bf16.msra.mxu0 %v7438
  %7494 = vmatprep.subr.bf16.mxu0 %v7437
  %7495 = vmatpush1.bf16.msra.mxu0 %v7436
  %7496 = vmatprep.subr.bf16.mxu0 %v7435
  %7497 = vmatpush1.bf16.msra.mxu0 %v7434
  %7498 = vmatprep.subr.bf16.mxu0 %v7433
  %7499 = vmatpush1.bf16.msra.mxu0 %v7432
  %7500 = vmatprep.subr.bf16.mxu0 %v7431
  %7501 = vmatpush1.bf16.msra.mxu0 %v7430
  %7502 = vmatprep.subr.bf16.mxu0 %v7429
  %7503 = vmatpush1.bf16.msra.mxu0 %v7428
  %7504 = vmatprep.subr.bf16.mxu0 %v7427
  %7505 = vmatpush1.bf16.msra.mxu0 %v7426
  %7506 = vmatprep.subr.bf16.mxu0 %v7457
  %7507 = vmatpush2.bf16.msra.mxu0 %v7456
  %7508 = vmatprep.subr.bf16.mxu0 %v7455
  %7509 = vmatpush2.bf16.msra.mxu0 %v7454
  %7510 = vmatprep.subr.bf16.mxu0 %v7453
  %7511 = vmatpush2.bf16.msra.mxu0 %v7452
  %7512 = vmatprep.subr.bf16.mxu0 %v7451
  %7513 = vmatpush2.bf16.msra.mxu0 %v7450
  %7514 = vmatprep.subr.bf16.mxu0 %v7449
  %7515 = vmatpush2.bf16.msra.mxu0 %v7448
  %7516 = vmatprep.subr.bf16.mxu0 %v7447
  %7517 = vmatpush2.bf16.msra.mxu0 %v7446
  %7518 = vmatprep.subr.bf16.mxu0 %v7445
  %7519 = vmatpush2.bf16.msra.mxu0 %v7444
  %7520 = vmatprep.subr.bf16.mxu0 %v7443
  %7521 = vmatpush2.bf16.msra.mxu0 %v7442
  %7522 = vmatprep.mubr.bf16.mxu0 %v7323
  %7523 = vmatmul.mubr.bf16.gmra.mxu0 %v7322
  %v7524 = vpop.f32.mrf.mxu0
  %v7525 = vadd.f32 0.0, %v7524
  %v7526 = vpop.f32.mrf.mxu0
  %v7527 = vadd.f32 0.0, %v7526
  %v7528 = vpop.f32.mrf.mxu0
  %v7529 = vadd.f32 0.0, %v7528
  %v7530 = vpop.f32.mrf.mxu0
  %v7531 = vadd.f32 0.0, %v7530
  %7532 = vmatprep.mubr.bf16.mxu0 %v7325
  %7533 = vmatmul.mubr.bf16.gmra.mxu0 %v7324
  %v7534 = vpop.f32.mrf.mxu0
  %v7535 = vadd.f32 0.0, %v7534
  %v7536 = vpop.f32.mrf.mxu0
  %v7537 = vadd.f32 0.0, %v7536
  %v7538 = vpop.f32.mrf.mxu0
  %v7539 = vadd.f32 0.0, %v7538
  %v7540 = vpop.f32.mrf.mxu0
  %v7541 = vadd.f32 0.0, %v7540
  %7542 = vdwg.mxu0
  %v7543 = vadd.f32 %v7266, %v7525
  %v7544 = vadd.f32 %v7267, %v7527
  %v7545 = vadd.f32 %v7268, %v7529
  %v7546 = vadd.f32 %v7269, %v7531
  %v7547 = vadd.f32 %v7270, %v7535
  %v7548 = vadd.f32 %v7271, %v7537
  %v7549 = vadd.f32 %v7272, %v7539
  %v7550 = vadd.f32 %v7273, %v7541
  %v7551 = vld [vmem:[#allocation2 + $0x90] sm:$0xff]
  %v7552 = vld [vmem:[#allocation2 + $0x98] sm:$0xff]
  %v7553 = vld [vmem:[#allocation2 + $0x160] sm:$0xff]
  %v7554 = vld [vmem:[#allocation2 + $0x168] sm:$0xff]
  %v7555 = vld [vmem:[%s27 + $0x800] sm:$0xff]
  %v7556 = vld [vmem:[%s27 + $0x808] sm:$0xff]
  %v7557 = vld [vmem:[%s27 + $0x810] sm:$0xff]
  %v7558 = vld [vmem:[%s27 + $0x818] sm:$0xff]
  %v7559 = vld [vmem:[%s27 + $0x820] sm:$0xff]
  %v7560 = vld [vmem:[%s27 + $0x828] sm:$0xff]
  %v7561 = vld [vmem:[%s27 + $0x830] sm:$0xff]
  %v7562 = vld [vmem:[%s27 + $0x838] sm:$0xff]
  %v7563 = vld [vmem:[%s27 + $0x840] sm:$0xff]
  %v7564 = vld [vmem:[%s27 + $0x848] sm:$0xff]
  %v7565 = vld [vmem:[%s27 + $0x850] sm:$0xff]
  %v7566 = vld [vmem:[%s27 + $0x858] sm:$0xff]
  %v7567 = vld [vmem:[%s27 + $0x860] sm:$0xff]
  %v7568 = vld [vmem:[%s27 + $0x868] sm:$0xff]
  %v7569 = vld [vmem:[%s27 + $0x870] sm:$0xff]
  %v7570 = vld [vmem:[%s27 + $0x878] sm:$0xff]
  %v7571 = vld [vmem:[%s27 + $0x880] sm:$0xff]
  %v7572 = vld [vmem:[%s27 + $0x888] sm:$0xff]
  %v7573 = vld [vmem:[%s27 + $0x890] sm:$0xff]
  %v7574 = vld [vmem:[%s27 + $0x898] sm:$0xff]
  %v7575 = vld [vmem:[%s27 + $0x8a0] sm:$0xff]
  %v7576 = vld [vmem:[%s27 + $0x8a8] sm:$0xff]
  %v7577 = vld [vmem:[%s27 + $0x8b0] sm:$0xff]
  %v7578 = vld [vmem:[%s27 + $0x8b8] sm:$0xff]
  %v7579 = vld [vmem:[%s27 + $0x8c0] sm:$0xff]
  %v7580 = vld [vmem:[%s27 + $0x8c8] sm:$0xff]
  %v7581 = vld [vmem:[%s27 + $0x8d0] sm:$0xff]
  %v7582 = vld [vmem:[%s27 + $0x8d8] sm:$0xff]
  %v7583 = vld [vmem:[%s27 + $0x8e0] sm:$0xff]
  %v7584 = vld [vmem:[%s27 + $0x8e8] sm:$0xff]
  %v7585 = vld [vmem:[%s27 + $0x8f0] sm:$0xff]
  %v7586 = vld [vmem:[%s27 + $0x8f8] sm:$0xff]
  %v7591 = vunpack.c.l.b16 %v7551
  %v7592 = vunpack.c.h.b16 %v7551
  %v7593 = vunpack.c.l.b16 %v7552
  %v7594 = vunpack.c.h.b16 %v7552
  %v7595 = vunpack.c.l.b16 %v7553
  %v7596 = vunpack.c.h.b16 %v7553
  %v7597 = vunpack.c.l.b16 %v7554
  %v7598 = vunpack.c.h.b16 %v7554
  %v7599 = vpack.c.b16 %v7593, %v7591
  %v7600 = vpack.c.b16 %v7594, %v7592
  %v7601 = vpack.c.b16 %v7597, %v7595
  %v7602 = vpack.c.b16 %v7598, %v7596
  %v7639 = vunpack.c.l.b16 %v7555
  %v7640 = vunpack.c.h.b16 %v7555
  %v7641 = vunpack.c.l.b16 %v7556
  %v7642 = vunpack.c.h.b16 %v7556
  %v7643 = vunpack.c.l.b16 %v7557
  %v7644 = vunpack.c.h.b16 %v7557
  %v7645 = vunpack.c.l.b16 %v7558
  %v7646 = vunpack.c.h.b16 %v7558
  %v7647 = vunpack.c.l.b16 %v7559
  %v7648 = vunpack.c.h.b16 %v7559
  %v7649 = vunpack.c.l.b16 %v7560
  %v7650 = vunpack.c.h.b16 %v7560
  %v7651 = vunpack.c.l.b16 %v7561
  %v7652 = vunpack.c.h.b16 %v7561
  %v7653 = vunpack.c.l.b16 %v7562
  %v7654 = vunpack.c.h.b16 %v7562
  %v7655 = vunpack.c.l.b16 %v7563
  %v7656 = vunpack.c.h.b16 %v7563
  %v7657 = vunpack.c.l.b16 %v7564
  %v7658 = vunpack.c.h.b16 %v7564
  %v7659 = vunpack.c.l.b16 %v7565
  %v7660 = vunpack.c.h.b16 %v7565
  %v7661 = vunpack.c.l.b16 %v7566
  %v7662 = vunpack.c.h.b16 %v7566
  %v7663 = vunpack.c.l.b16 %v7567
  %v7664 = vunpack.c.h.b16 %v7567
  %v7665 = vunpack.c.l.b16 %v7568
  %v7666 = vunpack.c.h.b16 %v7568
  %v7667 = vunpack.c.l.b16 %v7569
  %v7668 = vunpack.c.h.b16 %v7569
  %v7669 = vunpack.c.l.b16 %v7570
  %v7670 = vunpack.c.h.b16 %v7570
  %v7671 = vunpack.c.l.b16 %v7571
  %v7672 = vunpack.c.h.b16 %v7571
  %v7673 = vunpack.c.l.b16 %v7572
  %v7674 = vunpack.c.h.b16 %v7572
  %v7675 = vunpack.c.l.b16 %v7573
  %v7676 = vunpack.c.h.b16 %v7573
  %v7677 = vunpack.c.l.b16 %v7574
  %v7678 = vunpack.c.h.b16 %v7574
  %v7679 = vunpack.c.l.b16 %v7575
  %v7680 = vunpack.c.h.b16 %v7575
  %v7681 = vunpack.c.l.b16 %v7576
  %v7682 = vunpack.c.h.b16 %v7576
  %v7683 = vunpack.c.l.b16 %v7577
  %v7684 = vunpack.c.h.b16 %v7577
  %v7685 = vunpack.c.l.b16 %v7578
  %v7686 = vunpack.c.h.b16 %v7578
  %v7687 = vunpack.c.l.b16 %v7579
  %v7688 = vunpack.c.h.b16 %v7579
  %v7689 = vunpack.c.l.b16 %v7580
  %v7690 = vunpack.c.h.b16 %v7580
  %v7691 = vunpack.c.l.b16 %v7581
  %v7692 = vunpack.c.h.b16 %v7581
  %v7693 = vunpack.c.l.b16 %v7582
  %v7694 = vunpack.c.h.b16 %v7582
  %v7695 = vunpack.c.l.b16 %v7583
  %v7696 = vunpack.c.h.b16 %v7583
  %v7697 = vunpack.c.l.b16 %v7584
  %v7698 = vunpack.c.h.b16 %v7584
  %v7699 = vunpack.c.l.b16 %v7585
  %v7700 = vunpack.c.h.b16 %v7585
  %v7701 = vunpack.c.l.b16 %v7586
  %v7702 = vunpack.c.h.b16 %v7586
  %v7703 = vpack.c.b16 %v7641, %v7639
  %v7704 = vpack.c.b16 %v7642, %v7640
  %v7705 = vpack.c.b16 %v7645, %v7643
  %v7706 = vpack.c.b16 %v7646, %v7644
  %v7707 = vpack.c.b16 %v7649, %v7647
  %v7708 = vpack.c.b16 %v7650, %v7648
  %v7709 = vpack.c.b16 %v7653, %v7651
  %v7710 = vpack.c.b16 %v7654, %v7652
  %v7711 = vpack.c.b16 %v7657, %v7655
  %v7712 = vpack.c.b16 %v7658, %v7656
  %v7713 = vpack.c.b16 %v7661, %v7659
  %v7714 = vpack.c.b16 %v7662, %v7660
  %v7715 = vpack.c.b16 %v7665, %v7663
  %v7716 = vpack.c.b16 %v7666, %v7664
  %v7717 = vpack.c.b16 %v7669, %v7667
  %v7718 = vpack.c.b16 %v7670, %v7668
  %v7719 = vpack.c.b16 %v7673, %v7671
  %v7720 = vpack.c.b16 %v7674, %v7672
  %v7721 = vpack.c.b16 %v7677, %v7675
  %v7722 = vpack.c.b16 %v7678, %v7676
  %v7723 = vpack.c.b16 %v7681, %v7679
  %v7724 = vpack.c.b16 %v7682, %v7680
  %v7725 = vpack.c.b16 %v7685, %v7683
  %v7726 = vpack.c.b16 %v7686, %v7684
  %v7727 = vpack.c.b16 %v7689, %v7687
  %v7728 = vpack.c.b16 %v7690, %v7688
  %v7729 = vpack.c.b16 %v7693, %v7691
  %v7730 = vpack.c.b16 %v7694, %v7692
  %v7731 = vpack.c.b16 %v7697, %v7695
  %v7732 = vpack.c.b16 %v7698, %v7696
  %v7733 = vpack.c.b16 %v7701, %v7699
  %v7734 = vpack.c.b16 %v7702, %v7700
  %7767 = vmatprep.subr.bf16.mxu0 %v7718
  %7768 = vmatpush1.bf16.msra.mxu0 %v7717
  %7769 = vmatprep.subr.bf16.mxu0 %v7716
  %7770 = vmatpush1.bf16.msra.mxu0 %v7715
  %7771 = vmatprep.subr.bf16.mxu0 %v7714
  %7772 = vmatpush1.bf16.msra.mxu0 %v7713
  %7773 = vmatprep.subr.bf16.mxu0 %v7712
  %7774 = vmatpush1.bf16.msra.mxu0 %v7711
  %7775 = vmatprep.subr.bf16.mxu0 %v7710
  %7776 = vmatpush1.bf16.msra.mxu0 %v7709
  %7777 = vmatprep.subr.bf16.mxu0 %v7708
  %7778 = vmatpush1.bf16.msra.mxu0 %v7707
  %7779 = vmatprep.subr.bf16.mxu0 %v7706
  %7780 = vmatpush1.bf16.msra.mxu0 %v7705
  %7781 = vmatprep.subr.bf16.mxu0 %v7704
  %7782 = vmatpush1.bf16.msra.mxu0 %v7703
  %7783 = vmatprep.subr.bf16.mxu0 %v7734
  %7784 = vmatpush2.bf16.msra.mxu0 %v7733
  %7785 = vmatprep.subr.bf16.mxu0 %v7732
  %7786 = vmatpush2.bf16.msra.mxu0 %v7731
  %7787 = vmatprep.subr.bf16.mxu0 %v7730
  %7788 = vmatpush2.bf16.msra.mxu0 %v7729
  %7789 = vmatprep.subr.bf16.mxu0 %v7728
  %7790 = vmatpush2.bf16.msra.mxu0 %v7727
  %7791 = vmatprep.subr.bf16.mxu0 %v7726
  %7792 = vmatpush2.bf16.msra.mxu0 %v7725
  %7793 = vmatprep.subr.bf16.mxu0 %v7724
  %7794 = vmatpush2.bf16.msra.mxu0 %v7723
  %7795 = vmatprep.subr.bf16.mxu0 %v7722
  %7796 = vmatpush2.bf16.msra.mxu0 %v7721
  %7797 = vmatprep.subr.bf16.mxu0 %v7720
  %7798 = vmatpush2.bf16.msra.mxu0 %v7719
  %7799 = vmatprep.mubr.bf16.mxu0 %v7600
  %7800 = vmatmul.mubr.bf16.gmra.mxu0 %v7599
  %v7801 = vpop.f32.mrf.mxu0
  %v7802 = vadd.f32 0.0, %v7801
  %v7803 = vpop.f32.mrf.mxu0
  %v7804 = vadd.f32 0.0, %v7803
  %v7805 = vpop.f32.mrf.mxu0
  %v7806 = vadd.f32 0.0, %v7805
  %v7807 = vpop.f32.mrf.mxu0
  %v7808 = vadd.f32 0.0, %v7807
  %7809 = vmatprep.mubr.bf16.mxu0 %v7602
  %7810 = vmatmul.mubr.bf16.gmra.mxu0 %v7601
  %v7811 = vpop.f32.mrf.mxu0
  %v7812 = vadd.f32 0.0, %v7811
  %v7813 = vpop.f32.mrf.mxu0
  %v7814 = vadd.f32 0.0, %v7813
  %v7815 = vpop.f32.mrf.mxu0
  %v7816 = vadd.f32 0.0, %v7815
  %v7817 = vpop.f32.mrf.mxu0
  %v7818 = vadd.f32 0.0, %v7817
  %7819 = vdwg.mxu0
  %v7820 = vadd.f32 %v7543, %v7802
  %v7821 = vadd.f32 %v7544, %v7804
  %v7822 = vadd.f32 %v7545, %v7806
  %v7823 = vadd.f32 %v7546, %v7808
  %v7824 = vadd.f32 %v7547, %v7812
  %v7825 = vadd.f32 %v7548, %v7814
  %v7826 = vadd.f32 %v7549, %v7816
  %v7827 = vadd.f32 %v7550, %v7818
  %v7828 = vld [vmem:[#allocation2 + $0xa0] sm:$0xff]
  %v7829 = vld [vmem:[#allocation2 + $0xa8] sm:$0xff]
  %v7830 = vld [vmem:[#allocation2 + $0x170] sm:$0xff]
  %v7831 = vld [vmem:[#allocation2 + $0x178] sm:$0xff]
  %v7832 = vld [vmem:[%s27 + $0x900] sm:$0xff]
  %v7833 = vld [vmem:[%s27 + $0x908] sm:$0xff]
  %v7834 = vld [vmem:[%s27 + $0x910] sm:$0xff]
  %v7835 = vld [vmem:[%s27 + $0x918] sm:$0xff]
  %v7836 = vld [vmem:[%s27 + $0x920] sm:$0xff]
  %v7837 = vld [vmem:[%s27 + $0x928] sm:$0xff]
  %v7838 = vld [vmem:[%s27 + $0x930] sm:$0xff]
  %v7839 = vld [vmem:[%s27 + $0x938] sm:$0xff]
  %v7840 = vld [vmem:[%s27 + $0x940] sm:$0xff]
  %v7841 = vld [vmem:[%s27 + $0x948] sm:$0xff]
  %v7842 = vld [vmem:[%s27 + $0x950] sm:$0xff]
  %v7843 = vld [vmem:[%s27 + $0x958] sm:$0xff]
  %v7844 = vld [vmem:[%s27 + $0x960] sm:$0xff]
  %v7845 = vld [vmem:[%s27 + $0x968] sm:$0xff]
  %v7846 = vld [vmem:[%s27 + $0x970] sm:$0xff]
  %v7847 = vld [vmem:[%s27 + $0x978] sm:$0xff]
  %v7848 = vld [vmem:[%s27 + $0x980] sm:$0xff]
  %v7849 = vld [vmem:[%s27 + $0x988] sm:$0xff]
  %v7850 = vld [vmem:[%s27 + $0x990] sm:$0xff]
  %v7851 = vld [vmem:[%s27 + $0x998] sm:$0xff]
  %v7852 = vld [vmem:[%s27 + $0x9a0] sm:$0xff]
  %v7853 = vld [vmem:[%s27 + $0x9a8] sm:$0xff]
  %v7854 = vld [vmem:[%s27 + $0x9b0] sm:$0xff]
  %v7855 = vld [vmem:[%s27 + $0x9b8] sm:$0xff]
  %v7856 = vld [vmem:[%s27 + $0x9c0] sm:$0xff]
  %v7857 = vld [vmem:[%s27 + $0x9c8] sm:$0xff]
  %v7858 = vld [vmem:[%s27 + $0x9d0] sm:$0xff]
  %v7859 = vld [vmem:[%s27 + $0x9d8] sm:$0xff]
  %v7860 = vld [vmem:[%s27 + $0x9e0] sm:$0xff]
  %v7861 = vld [vmem:[%s27 + $0x9e8] sm:$0xff]
  %v7862 = vld [vmem:[%s27 + $0x9f0] sm:$0xff]
  %v7863 = vld [vmem:[%s27 + $0x9f8] sm:$0xff]
  %v7868 = vunpack.c.l.b16 %v7828
  %v7869 = vunpack.c.h.b16 %v7828
  %v7870 = vunpack.c.l.b16 %v7829
  %v7871 = vunpack.c.h.b16 %v7829
  %v7872 = vunpack.c.l.b16 %v7830
  %v7873 = vunpack.c.h.b16 %v7830
  %v7874 = vunpack.c.l.b16 %v7831
  %v7875 = vunpack.c.h.b16 %v7831
  %v7876 = vpack.c.b16 %v7870, %v7868
  %v7877 = vpack.c.b16 %v7871, %v7869
  %v7878 = vpack.c.b16 %v7874, %v7872
  %v7879 = vpack.c.b16 %v7875, %v7873
  %v7916 = vunpack.c.l.b16 %v7832
  %v7917 = vunpack.c.h.b16 %v7832
  %v7918 = vunpack.c.l.b16 %v7833
  %v7919 = vunpack.c.h.b16 %v7833
  %v7920 = vunpack.c.l.b16 %v7834
  %v7921 = vunpack.c.h.b16 %v7834
  %v7922 = vunpack.c.l.b16 %v7835
  %v7923 = vunpack.c.h.b16 %v7835
  %v7924 = vunpack.c.l.b16 %v7836
  %v7925 = vunpack.c.h.b16 %v7836
  %v7926 = vunpack.c.l.b16 %v7837
  %v7927 = vunpack.c.h.b16 %v7837
  %v7928 = vunpack.c.l.b16 %v7838
  %v7929 = vunpack.c.h.b16 %v7838
  %v7930 = vunpack.c.l.b16 %v7839
  %v7931 = vunpack.c.h.b16 %v7839
  %v7932 = vunpack.c.l.b16 %v7840
  %v7933 = vunpack.c.h.b16 %v7840
  %v7934 = vunpack.c.l.b16 %v7841
  %v7935 = vunpack.c.h.b16 %v7841
  %v7936 = vunpack.c.l.b16 %v7842
  %v7937 = vunpack.c.h.b16 %v7842
  %v7938 = vunpack.c.l.b16 %v7843
  %v7939 = vunpack.c.h.b16 %v7843
  %v7940 = vunpack.c.l.b16 %v7844
  %v7941 = vunpack.c.h.b16 %v7844
  %v7942 = vunpack.c.l.b16 %v7845
  %v7943 = vunpack.c.h.b16 %v7845
  %v7944 = vunpack.c.l.b16 %v7846
  %v7945 = vunpack.c.h.b16 %v7846
  %v7946 = vunpack.c.l.b16 %v7847
  %v7947 = vunpack.c.h.b16 %v7847
  %v7948 = vunpack.c.l.b16 %v7848
  %v7949 = vunpack.c.h.b16 %v7848
  %v7950 = vunpack.c.l.b16 %v7849
  %v7951 = vunpack.c.h.b16 %v7849
  %v7952 = vunpack.c.l.b16 %v7850
  %v7953 = vunpack.c.h.b16 %v7850
  %v7954 = vunpack.c.l.b16 %v7851
  %v7955 = vunpack.c.h.b16 %v7851
  %v7956 = vunpack.c.l.b16 %v7852
  %v7957 = vunpack.c.h.b16 %v7852
  %v7958 = vunpack.c.l.b16 %v7853
  %v7959 = vunpack.c.h.b16 %v7853
  %v7960 = vunpack.c.l.b16 %v7854
  %v7961 = vunpack.c.h.b16 %v7854
  %v7962 = vunpack.c.l.b16 %v7855
  %v7963 = vunpack.c.h.b16 %v7855
  %v7964 = vunpack.c.l.b16 %v7856
  %v7965 = vunpack.c.h.b16 %v7856
  %v7966 = vunpack.c.l.b16 %v7857
  %v7967 = vunpack.c.h.b16 %v7857
  %v7968 = vunpack.c.l.b16 %v7858
  %v7969 = vunpack.c.h.b16 %v7858
  %v7970 = vunpack.c.l.b16 %v7859
  %v7971 = vunpack.c.h.b16 %v7859
  %v7972 = vunpack.c.l.b16 %v7860
  %v7973 = vunpack.c.h.b16 %v7860
  %v7974 = vunpack.c.l.b16 %v7861
  %v7975 = vunpack.c.h.b16 %v7861
  %v7976 = vunpack.c.l.b16 %v7862
  %v7977 = vunpack.c.h.b16 %v7862
  %v7978 = vunpack.c.l.b16 %v7863
  %v7979 = vunpack.c.h.b16 %v7863
  %v7980 = vpack.c.b16 %v7918, %v7916
  %v7981 = vpack.c.b16 %v7919, %v7917
  %v7982 = vpack.c.b16 %v7922, %v7920
  %v7983 = vpack.c.b16 %v7923, %v7921
  %v7984 = vpack.c.b16 %v7926, %v7924
  %v7985 = vpack.c.b16 %v7927, %v7925
  %v7986 = vpack.c.b16 %v7930, %v7928
  %v7987 = vpack.c.b16 %v7931, %v7929
  %v7988 = vpack.c.b16 %v7934, %v7932
  %v7989 = vpack.c.b16 %v7935, %v7933
  %v7990 = vpack.c.b16 %v7938, %v7936
  %v7991 = vpack.c.b16 %v7939, %v7937
  %v7992 = vpack.c.b16 %v7942, %v7940
  %v7993 = vpack.c.b16 %v7943, %v7941
  %v7994 = vpack.c.b16 %v7946, %v7944
  %v7995 = vpack.c.b16 %v7947, %v7945
  %v7996 = vpack.c.b16 %v7950, %v7948
  %v7997 = vpack.c.b16 %v7951, %v7949
  %v7998 = vpack.c.b16 %v7954, %v7952
  %v7999 = vpack.c.b16 %v7955, %v7953
  %v8000 = vpack.c.b16 %v7958, %v7956
  %v8001 = vpack.c.b16 %v7959, %v7957
  %v8002 = vpack.c.b16 %v7962, %v7960
  %v8003 = vpack.c.b16 %v7963, %v7961
  %v8004 = vpack.c.b16 %v7966, %v7964
  %v8005 = vpack.c.b16 %v7967, %v7965
  %v8006 = vpack.c.b16 %v7970, %v7968
  %v8007 = vpack.c.b16 %v7971, %v7969
  %v8008 = vpack.c.b16 %v7974, %v7972
  %v8009 = vpack.c.b16 %v7975, %v7973
  %v8010 = vpack.c.b16 %v7978, %v7976
  %v8011 = vpack.c.b16 %v7979, %v7977
  %8044 = vmatprep.subr.bf16.mxu0 %v7995
  %8045 = vmatpush1.bf16.msra.mxu0 %v7994
  %8046 = vmatprep.subr.bf16.mxu0 %v7993
  %8047 = vmatpush1.bf16.msra.mxu0 %v7992
  %8048 = vmatprep.subr.bf16.mxu0 %v7991
  %8049 = vmatpush1.bf16.msra.mxu0 %v7990
  %8050 = vmatprep.subr.bf16.mxu0 %v7989
  %8051 = vmatpush1.bf16.msra.mxu0 %v7988
  %8052 = vmatprep.subr.bf16.mxu0 %v7987
  %8053 = vmatpush1.bf16.msra.mxu0 %v7986
  %8054 = vmatprep.subr.bf16.mxu0 %v7985
  %8055 = vmatpush1.bf16.msra.mxu0 %v7984
  %8056 = vmatprep.subr.bf16.mxu0 %v7983
  %8057 = vmatpush1.bf16.msra.mxu0 %v7982
  %8058 = vmatprep.subr.bf16.mxu0 %v7981
  %8059 = vmatpush1.bf16.msra.mxu0 %v7980
  %8060 = vmatprep.subr.bf16.mxu0 %v8011
  %8061 = vmatpush2.bf16.msra.mxu0 %v8010
  %8062 = vmatprep.subr.bf16.mxu0 %v8009
  %8063 = vmatpush2.bf16.msra.mxu0 %v8008
  %8064 = vmatprep.subr.bf16.mxu0 %v8007
  %8065 = vmatpush2.bf16.msra.mxu0 %v8006
  %8066 = vmatprep.subr.bf16.mxu0 %v8005
  %8067 = vmatpush2.bf16.msra.mxu0 %v8004
  %8068 = vmatprep.subr.bf16.mxu0 %v8003
  %8069 = vmatpush2.bf16.msra.mxu0 %v8002
  %8070 = vmatprep.subr.bf16.mxu0 %v8001
  %8071 = vmatpush2.bf16.msra.mxu0 %v8000
  %8072 = vmatprep.subr.bf16.mxu0 %v7999
  %8073 = vmatpush2.bf16.msra.mxu0 %v7998
  %8074 = vmatprep.subr.bf16.mxu0 %v7997
  %8075 = vmatpush2.bf16.msra.mxu0 %v7996
  %8076 = vmatprep.mubr.bf16.mxu0 %v7877
  %8077 = vmatmul.mubr.bf16.gmra.mxu0 %v7876
  %v8078 = vpop.f32.mrf.mxu0
  %v8079 = vadd.f32 0.0, %v8078
  %v8080 = vpop.f32.mrf.mxu0
  %v8081 = vadd.f32 0.0, %v8080
  %v8082 = vpop.f32.mrf.mxu0
  %v8083 = vadd.f32 0.0, %v8082
  %v8084 = vpop.f32.mrf.mxu0
  %v8085 = vadd.f32 0.0, %v8084
  %8086 = vmatprep.mubr.bf16.mxu0 %v7879
  %8087 = vmatmul.mubr.bf16.gmra.mxu0 %v7878
  %v8088 = vpop.f32.mrf.mxu0
  %v8089 = vadd.f32 0.0, %v8088
  %v8090 = vpop.f32.mrf.mxu0
  %v8091 = vadd.f32 0.0, %v8090
  %v8092 = vpop.f32.mrf.mxu0
  %v8093 = vadd.f32 0.0, %v8092
  %v8094 = vpop.f32.mrf.mxu0
  %v8095 = vadd.f32 0.0, %v8094
  %8096 = vdwg.mxu0
  %v8097 = vadd.f32 %v7820, %v8079
  %v8098 = vadd.f32 %v7821, %v8081
  %v8099 = vadd.f32 %v7822, %v8083
  %v8100 = vadd.f32 %v7823, %v8085
  %v8101 = vadd.f32 %v7824, %v8089
  %v8102 = vadd.f32 %v7825, %v8091
  %v8103 = vadd.f32 %v7826, %v8093
  %v8104 = vadd.f32 %v7827, %v8095
  %v8105 = vld [vmem:[#allocation2 + $0xb0] sm:$0xff]
  %v8106 = vld [vmem:[#allocation2 + $0xb8] sm:$0xff]
  %v8107 = vld [vmem:[#allocation2 + $0x180] sm:$0xff]
  %v8108 = vld [vmem:[#allocation2 + $0x188] sm:$0xff]
  %v8109 = vld [vmem:[%s27 + $0xa00] sm:$0xff]
  %v8110 = vld [vmem:[%s27 + $0xa08] sm:$0xff]
  %v8111 = vld [vmem:[%s27 + $0xa10] sm:$0xff]
  %v8112 = vld [vmem:[%s27 + $0xa18] sm:$0xff]
  %v8113 = vld [vmem:[%s27 + $0xa20] sm:$0xff]
  %v8114 = vld [vmem:[%s27 + $0xa28] sm:$0xff]
  %v8115 = vld [vmem:[%s27 + $0xa30] sm:$0xff]
  %v8116 = vld [vmem:[%s27 + $0xa38] sm:$0xff]
  %v8117 = vld [vmem:[%s27 + $0xa40] sm:$0xff]
  %v8118 = vld [vmem:[%s27 + $0xa48] sm:$0xff]
  %v8119 = vld [vmem:[%s27 + $0xa50] sm:$0xff]
  %v8120 = vld [vmem:[%s27 + $0xa58] sm:$0xff]
  %v8121 = vld [vmem:[%s27 + $0xa60] sm:$0xff]
  %v8122 = vld [vmem:[%s27 + $0xa68] sm:$0xff]
  %v8123 = vld [vmem:[%s27 + $0xa70] sm:$0xff]
  %v8124 = vld [vmem:[%s27 + $0xa78] sm:$0xff]
  %v8125 = vld [vmem:[%s27 + $0xa80] sm:$0xff]
  %v8126 = vld [vmem:[%s27 + $0xa88] sm:$0xff]
  %v8127 = vld [vmem:[%s27 + $0xa90] sm:$0xff]
  %v8128 = vld [vmem:[%s27 + $0xa98] sm:$0xff]
  %v8129 = vld [vmem:[%s27 + $0xaa0] sm:$0xff]
  %v8130 = vld [vmem:[%s27 + $0xaa8] sm:$0xff]
  %v8131 = vld [vmem:[%s27 + $0xab0] sm:$0xff]
  %v8132 = vld [vmem:[%s27 + $0xab8] sm:$0xff]
  %v8133 = vld [vmem:[%s27 + $0xac0] sm:$0xff]
  %v8134 = vld [vmem:[%s27 + $0xac8] sm:$0xff]
  %v8135 = vld [vmem:[%s27 + $0xad0] sm:$0xff]
  %v8136 = vld [vmem:[%s27 + $0xad8] sm:$0xff]
  %v8137 = vld [vmem:[%s27 + $0xae0] sm:$0xff]
  %v8138 = vld [vmem:[%s27 + $0xae8] sm:$0xff]
  %v8139 = vld [vmem:[%s27 + $0xaf0] sm:$0xff]
  %v8140 = vld [vmem:[%s27 + $0xaf8] sm:$0xff]
  %v8145 = vunpack.c.l.b16 %v8105
  %v8146 = vunpack.c.h.b16 %v8105
  %v8147 = vunpack.c.l.b16 %v8106
  %v8148 = vunpack.c.h.b16 %v8106
  %v8149 = vunpack.c.l.b16 %v8107
  %v8150 = vunpack.c.h.b16 %v8107
  %v8151 = vunpack.c.l.b16 %v8108
  %v8152 = vunpack.c.h.b16 %v8108
  %v8153 = vpack.c.b16 %v8147, %v8145
  %v8154 = vpack.c.b16 %v8148, %v8146
  %v8155 = vpack.c.b16 %v8151, %v8149
  %v8156 = vpack.c.b16 %v8152, %v8150
  %v8193 = vunpack.c.l.b16 %v8109
  %v8194 = vunpack.c.h.b16 %v8109
  %v8195 = vunpack.c.l.b16 %v8110
  %v8196 = vunpack.c.h.b16 %v8110
  %v8197 = vunpack.c.l.b16 %v8111
  %v8198 = vunpack.c.h.b16 %v8111
  %v8199 = vunpack.c.l.b16 %v8112
  %v8200 = vunpack.c.h.b16 %v8112
  %v8201 = vunpack.c.l.b16 %v8113
  %v8202 = vunpack.c.h.b16 %v8113
  %v8203 = vunpack.c.l.b16 %v8114
  %v8204 = vunpack.c.h.b16 %v8114
  %v8205 = vunpack.c.l.b16 %v8115
  %v8206 = vunpack.c.h.b16 %v8115
  %v8207 = vunpack.c.l.b16 %v8116
  %v8208 = vunpack.c.h.b16 %v8116
  %v8209 = vunpack.c.l.b16 %v8117
  %v8210 = vunpack.c.h.b16 %v8117
  %v8211 = vunpack.c.l.b16 %v8118
  %v8212 = vunpack.c.h.b16 %v8118
  %v8213 = vunpack.c.l.b16 %v8119
  %v8214 = vunpack.c.h.b16 %v8119
  %v8215 = vunpack.c.l.b16 %v8120
  %v8216 = vunpack.c.h.b16 %v8120
  %v8217 = vunpack.c.l.b16 %v8121
  %v8218 = vunpack.c.h.b16 %v8121
  %v8219 = vunpack.c.l.b16 %v8122
  %v8220 = vunpack.c.h.b16 %v8122
  %v8221 = vunpack.c.l.b16 %v8123
  %v8222 = vunpack.c.h.b16 %v8123
  %v8223 = vunpack.c.l.b16 %v8124
  %v8224 = vunpack.c.h.b16 %v8124
  %v8225 = vunpack.c.l.b16 %v8125
  %v8226 = vunpack.c.h.b16 %v8125
  %v8227 = vunpack.c.l.b16 %v8126
  %v8228 = vunpack.c.h.b16 %v8126
  %v8229 = vunpack.c.l.b16 %v8127
  %v8230 = vunpack.c.h.b16 %v8127
  %v8231 = vunpack.c.l.b16 %v8128
  %v8232 = vunpack.c.h.b16 %v8128
  %v8233 = vunpack.c.l.b16 %v8129
  %v8234 = vunpack.c.h.b16 %v8129
  %v8235 = vunpack.c.l.b16 %v8130
  %v8236 = vunpack.c.h.b16 %v8130
  %v8237 = vunpack.c.l.b16 %v8131
  %v8238 = vunpack.c.h.b16 %v8131
  %v8239 = vunpack.c.l.b16 %v8132
  %v8240 = vunpack.c.h.b16 %v8132
  %v8241 = vunpack.c.l.b16 %v8133
  %v8242 = vunpack.c.h.b16 %v8133
  %v8243 = vunpack.c.l.b16 %v8134
  %v8244 = vunpack.c.h.b16 %v8134
  %v8245 = vunpack.c.l.b16 %v8135
  %v8246 = vunpack.c.h.b16 %v8135
  %v8247 = vunpack.c.l.b16 %v8136
  %v8248 = vunpack.c.h.b16 %v8136
  %v8249 = vunpack.c.l.b16 %v8137
  %v8250 = vunpack.c.h.b16 %v8137
  %v8251 = vunpack.c.l.b16 %v8138
  %v8252 = vunpack.c.h.b16 %v8138
  %v8253 = vunpack.c.l.b16 %v8139
  %v8254 = vunpack.c.h.b16 %v8139
  %v8255 = vunpack.c.l.b16 %v8140
  %v8256 = vunpack.c.h.b16 %v8140
  %v8257 = vpack.c.b16 %v8195, %v8193
  %v8258 = vpack.c.b16 %v8196, %v8194
  %v8259 = vpack.c.b16 %v8199, %v8197
  %v8260 = vpack.c.b16 %v8200, %v8198
  %v8261 = vpack.c.b16 %v8203, %v8201
  %v8262 = vpack.c.b16 %v8204, %v8202
  %v8263 = vpack.c.b16 %v8207, %v8205
  %v8264 = vpack.c.b16 %v8208, %v8206
  %v8265 = vpack.c.b16 %v8211, %v8209
  %v8266 = vpack.c.b16 %v8212, %v8210
  %v8267 = vpack.c.b16 %v8215, %v8213
  %v8268 = vpack.c.b16 %v8216, %v8214
  %v8269 = vpack.c.b16 %v8219, %v8217
  %v8270 = vpack.c.b16 %v8220, %v8218
  %v8271 = vpack.c.b16 %v8223, %v8221
  %v8272 = vpack.c.b16 %v8224, %v8222
  %v8273 = vpack.c.b16 %v8227, %v8225
  %v8274 = vpack.c.b16 %v8228, %v8226
  %v8275 = vpack.c.b16 %v8231, %v8229
  %v8276 = vpack.c.b16 %v8232, %v8230
  %v8277 = vpack.c.b16 %v8235, %v8233
  %v8278 = vpack.c.b16 %v8236, %v8234
  %v8279 = vpack.c.b16 %v8239, %v8237
  %v8280 = vpack.c.b16 %v8240, %v8238
  %v8281 = vpack.c.b16 %v8243, %v8241
  %v8282 = vpack.c.b16 %v8244, %v8242
  %v8283 = vpack.c.b16 %v8247, %v8245
  %v8284 = vpack.c.b16 %v8248, %v8246
  %v8285 = vpack.c.b16 %v8251, %v8249
  %v8286 = vpack.c.b16 %v8252, %v8250
  %v8287 = vpack.c.b16 %v8255, %v8253
  %v8288 = vpack.c.b16 %v8256, %v8254
  %8321 = vmatprep.subr.bf16.mxu0 %v8272
  %8322 = vmatpush1.bf16.msra.mxu0 %v8271
  %8323 = vmatprep.subr.bf16.mxu0 %v8270
  %8324 = vmatpush1.bf16.msra.mxu0 %v8269
  %8325 = vmatprep.subr.bf16.mxu0 %v8268
  %8326 = vmatpush1.bf16.msra.mxu0 %v8267
  %8327 = vmatprep.subr.bf16.mxu0 %v8266
  %8328 = vmatpush1.bf16.msra.mxu0 %v8265
  %8329 = vmatprep.subr.bf16.mxu0 %v8264
  %8330 = vmatpush1.bf16.msra.mxu0 %v8263
  %8331 = vmatprep.subr.bf16.mxu0 %v8262
  %8332 = vmatpush1.bf16.msra.mxu0 %v8261
  %8333 = vmatprep.subr.bf16.mxu0 %v8260
  %8334 = vmatpush1.bf16.msra.mxu0 %v8259
  %8335 = vmatprep.subr.bf16.mxu0 %v8258
  %8336 = vmatpush1.bf16.msra.mxu0 %v8257
  %8337 = vmatprep.subr.bf16.mxu0 %v8288
  %8338 = vmatpush2.bf16.msra.mxu0 %v8287
  %8339 = vmatprep.subr.bf16.mxu0 %v8286
  %8340 = vmatpush2.bf16.msra.mxu0 %v8285
  %8341 = vmatprep.subr.bf16.mxu0 %v8284
  %8342 = vmatpush2.bf16.msra.mxu0 %v8283
  %8343 = vmatprep.subr.bf16.mxu0 %v8282
  %8344 = vmatpush2.bf16.msra.mxu0 %v8281
  %8345 = vmatprep.subr.bf16.mxu0 %v8280
  %8346 = vmatpush2.bf16.msra.mxu0 %v8279
  %8347 = vmatprep.subr.bf16.mxu0 %v8278
  %8348 = vmatpush2.bf16.msra.mxu0 %v8277
  %8349 = vmatprep.subr.bf16.mxu0 %v8276
  %8350 = vmatpush2.bf16.msra.mxu0 %v8275
  %8351 = vmatprep.subr.bf16.mxu0 %v8274
  %8352 = vmatpush2.bf16.msra.mxu0 %v8273
  %8353 = vmatprep.mubr.bf16.mxu0 %v8154
  %8354 = vmatmul.mubr.bf16.gmra.mxu0 %v8153
  %v8355 = vpop.f32.mrf.mxu0
  %v8356 = vadd.f32 0.0, %v8355
  %v8357 = vpop.f32.mrf.mxu0
  %v8358 = vadd.f32 0.0, %v8357
  %v8359 = vpop.f32.mrf.mxu0
  %v8360 = vadd.f32 0.0, %v8359
  %v8361 = vpop.f32.mrf.mxu0
  %v8362 = vadd.f32 0.0, %v8361
  %8363 = vmatprep.mubr.bf16.mxu0 %v8156
  %8364 = vmatmul.mubr.bf16.gmra.mxu0 %v8155
  %v8365 = vpop.f32.mrf.mxu0
  %v8366 = vadd.f32 0.0, %v8365
  %v8367 = vpop.f32.mrf.mxu0
  %v8368 = vadd.f32 0.0, %v8367
  %v8369 = vpop.f32.mrf.mxu0
  %v8370 = vadd.f32 0.0, %v8369
  %v8371 = vpop.f32.mrf.mxu0
  %v8372 = vadd.f32 0.0, %v8371
  %8373 = vdwg.mxu0
  %v8374 = vadd.f32 %v8097, %v8356
  %v8375 = vadd.f32 %v8098, %v8358
  %v8376 = vadd.f32 %v8099, %v8360
  %v8377 = vadd.f32 %v8100, %v8362
  %v8378 = vadd.f32 %v8101, %v8366
  %v8379 = vadd.f32 %v8102, %v8368
  %v8380 = vadd.f32 %v8103, %v8370
  %v8381 = vadd.f32 %v8104, %v8372
  %v8382 = vpack.c.bf16 %v8376, %v8374
  %v8383 = vpack.c.bf16 %v8377, %v8375
  %v8384 = vpack.c.bf16 %v8380, %v8378
  %v8385 = vpack.c.bf16 %v8381, %v8379
  %v8386 = vld [vmem:[%s31] sm:$0xff]
  %v8387 = vld [vmem:[%s31 + $0x8] sm:$0xff]
  %v8388 = vld [vmem:[%s31 + $0x10] sm:$0xff]
  %v8389 = vld [vmem:[%s31 + $0x18] sm:$0xff]
  %v8390 = vld [vmem:[%s31 + $0x20] sm:$0xff]
  %v8391 = vld [vmem:[%s31 + $0x28] sm:$0xff]
  %v8392 = vld [vmem:[%s31 + $0x30] sm:$0xff]
  %v8393 = vld [vmem:[%s31 + $0x38] sm:$0xff]
  %v8394 = vld [vmem:[%s31 + $0x40] sm:$0xff]
  %v8395 = vld [vmem:[%s31 + $0x48] sm:$0xff]
  %v8396 = vld [vmem:[%s31 + $0x50] sm:$0xff]
  %v8397 = vld [vmem:[%s31 + $0x58] sm:$0xff]
  %v8398 = vld [vmem:[%s31 + $0x60] sm:$0xff]
  %v8399 = vld [vmem:[%s31 + $0x68] sm:$0xff]
  %v8400 = vld [vmem:[%s31 + $0x70] sm:$0xff]
  %v8401 = vld [vmem:[%s31 + $0x78] sm:$0xff]
  %v8402 = vld [vmem:[%s31 + $0x80] sm:$0xff]
  %v8403 = vld [vmem:[%s31 + $0x88] sm:$0xff]
  %v8404 = vld [vmem:[%s31 + $0x90] sm:$0xff]
  %v8405 = vld [vmem:[%s31 + $0x98] sm:$0xff]
  %v8406 = vld [vmem:[%s31 + $0xa0] sm:$0xff]
  %v8407 = vld [vmem:[%s31 + $0xa8] sm:$0xff]
  %v8408 = vld [vmem:[%s31 + $0xb0] sm:$0xff]
  %v8409 = vld [vmem:[%s31 + $0xb8] sm:$0xff]
  %v8410 = vld [vmem:[%s31 + $0xc0] sm:$0xff]
  %v8411 = vld [vmem:[%s31 + $0xc8] sm:$0xff]
  %v8412 = vld [vmem:[%s31 + $0xd0] sm:$0xff]
  %v8413 = vld [vmem:[%s31 + $0xd8] sm:$0xff]
  %v8414 = vld [vmem:[%s31 + $0xe0] sm:$0xff]
  %v8415 = vld [vmem:[%s31 + $0xe8] sm:$0xff]
  %v8416 = vld [vmem:[%s31 + $0xf0] sm:$0xff]
  %v8417 = vld [vmem:[%s31 + $0xf8] sm:$0xff]
  %v8418 = vld [vmem:[%s31 + $0x100] sm:$0xff]
  %v8419 = vld [vmem:[%s31 + $0x108] sm:$0xff]
  %v8420 = vld [vmem:[%s31 + $0x110] sm:$0xff]
  %v8421 = vld [vmem:[%s31 + $0x118] sm:$0xff]
  %v8422 = vld [vmem:[%s31 + $0x120] sm:$0xff]
  %v8423 = vld [vmem:[%s31 + $0x128] sm:$0xff]
  %v8424 = vld [vmem:[%s31 + $0x130] sm:$0xff]
  %v8425 = vld [vmem:[%s31 + $0x138] sm:$0xff]
  %v8426 = vld [vmem:[%s31 + $0x140] sm:$0xff]
  %v8427 = vld [vmem:[%s31 + $0x148] sm:$0xff]
  %v8428 = vld [vmem:[%s31 + $0x150] sm:$0xff]
  %v8429 = vld [vmem:[%s31 + $0x158] sm:$0xff]
  %v8430 = vld [vmem:[%s31 + $0x160] sm:$0xff]
  %v8431 = vld [vmem:[%s31 + $0x168] sm:$0xff]
  %v8432 = vld [vmem:[%s31 + $0x170] sm:$0xff]
  %v8433 = vld [vmem:[%s31 + $0x178] sm:$0xff]
  %v8434 = vld [vmem:[%s31 + $0x180] sm:$0xff]
  %v8435 = vld [vmem:[%s31 + $0x188] sm:$0xff]
  %v8436 = vld [vmem:[%s31 + $0x190] sm:$0xff]
  %v8437 = vld [vmem:[%s31 + $0x198] sm:$0xff]
  %v8438 = vld [vmem:[%s31 + $0x1a0] sm:$0xff]
  %v8439 = vld [vmem:[%s31 + $0x1a8] sm:$0xff]
  %v8440 = vld [vmem:[%s31 + $0x1b0] sm:$0xff]
  %v8441 = vld [vmem:[%s31 + $0x1b8] sm:$0xff]
  %v8442 = vld [vmem:[%s31 + $0x1c0] sm:$0xff]
  %v8443 = vld [vmem:[%s31 + $0x1c8] sm:$0xff]
  %v8444 = vld [vmem:[%s31 + $0x1d0] sm:$0xff]
  %v8445 = vld [vmem:[%s31 + $0x1d8] sm:$0xff]
  %v8446 = vld [vmem:[%s31 + $0x1e0] sm:$0xff]
  %v8447 = vld [vmem:[%s31 + $0x1e8] sm:$0xff]
  %v8448 = vld [vmem:[%s31 + $0x1f0] sm:$0xff]
  %v8449 = vld [vmem:[%s31 + $0x1f8] sm:$0xff]
  %v8450 = vld [vmem:[%s33] sm:$0xf]
  %v8452 = vlaneseq
  %v8453 = vshrl.u32 %v8452, 7
  %v8454 = vsub.s32 0, %v8453
  %v8455 = vrot.slane %v8450, %v8454
  %v8456 = vlaneseq
  %v8457 = vshrl.u32 %v8456, 7
  %v8458 = vsub.s32 1, %v8457
  %v8459 = vrot.slane %v8450, %v8458
  %v8460 = vlaneseq
  %v8461 = vshrl.u32 %v8460, 7
  %v8462 = vsub.s32 2, %v8461
  %v8463 = vrot.slane %v8450, %v8462
  %v8464 = vlaneseq
  %v8465 = vshrl.u32 %v8464, 7
  %v8466 = vsub.s32 3, %v8465
  %v8467 = vrot.slane %v8450, %v8466
  %v8536 = vunpack.c.l.b16 %v8386
  %v8537 = vunpack.c.h.b16 %v8386
  %v8538 = vunpack.c.l.b16 %v8387
  %v8539 = vunpack.c.h.b16 %v8387
  %v8540 = vunpack.c.l.b16 %v8388
  %v8541 = vunpack.c.h.b16 %v8388
  %v8542 = vunpack.c.l.b16 %v8389
  %v8543 = vunpack.c.h.b16 %v8389
  %v8544 = vunpack.c.l.b16 %v8390
  %v8545 = vunpack.c.h.b16 %v8390
  %v8546 = vunpack.c.l.b16 %v8391
  %v8547 = vunpack.c.h.b16 %v8391
  %v8548 = vunpack.c.l.b16 %v8392
  %v8549 = vunpack.c.h.b16 %v8392
  %v8550 = vunpack.c.l.b16 %v8393
  %v8551 = vunpack.c.h.b16 %v8393
  %v8552 = vunpack.c.l.b16 %v8394
  %v8553 = vunpack.c.h.b16 %v8394
  %v8554 = vunpack.c.l.b16 %v8395
  %v8555 = vunpack.c.h.b16 %v8395
  %v8556 = vunpack.c.l.b16 %v8396
  %v8557 = vunpack.c.h.b16 %v8396
  %v8558 = vunpack.c.l.b16 %v8397
  %v8559 = vunpack.c.h.b16 %v8397
  %v8560 = vunpack.c.l.b16 %v8398
  %v8561 = vunpack.c.h.b16 %v8398
  %v8562 = vunpack.c.l.b16 %v8399
  %v8563 = vunpack.c.h.b16 %v8399
  %v8564 = vunpack.c.l.b16 %v8400
  %v8565 = vunpack.c.h.b16 %v8400
  %v8566 = vunpack.c.l.b16 %v8401
  %v8567 = vunpack.c.h.b16 %v8401
  %v8568 = vunpack.c.l.b16 %v8402
  %v8569 = vunpack.c.h.b16 %v8402
  %v8570 = vunpack.c.l.b16 %v8403
  %v8571 = vunpack.c.h.b16 %v8403
  %v8572 = vunpack.c.l.b16 %v8404
  %v8573 = vunpack.c.h.b16 %v8404
  %v8574 = vunpack.c.l.b16 %v8405
  %v8575 = vunpack.c.h.b16 %v8405
  %v8576 = vunpack.c.l.b16 %v8406
  %v8577 = vunpack.c.h.b16 %v8406
  %v8578 = vunpack.c.l.b16 %v8407
  %v8579 = vunpack.c.h.b16 %v8407
  %v8580 = vunpack.c.l.b16 %v8408
  %v8581 = vunpack.c.h.b16 %v8408
  %v8582 = vunpack.c.l.b16 %v8409
  %v8583 = vunpack.c.h.b16 %v8409
  %v8584 = vunpack.c.l.b16 %v8410
  %v8585 = vunpack.c.h.b16 %v8410
  %v8586 = vunpack.c.l.b16 %v8411
  %v8587 = vunpack.c.h.b16 %v8411
  %v8588 = vunpack.c.l.b16 %v8412
  %v8589 = vunpack.c.h.b16 %v8412
  %v8590 = vunpack.c.l.b16 %v8413
  %v8591 = vunpack.c.h.b16 %v8413
  %v8592 = vunpack.c.l.b16 %v8414
  %v8593 = vunpack.c.h.b16 %v8414
  %v8594 = vunpack.c.l.b16 %v8415
  %v8595 = vunpack.c.h.b16 %v8415
  %v8596 = vunpack.c.l.b16 %v8416
  %v8597 = vunpack.c.h.b16 %v8416
  %v8598 = vunpack.c.l.b16 %v8417
  %v8599 = vunpack.c.h.b16 %v8417
  %v8600 = vunpack.c.l.b16 %v8418
  %v8601 = vunpack.c.h.b16 %v8418
  %v8602 = vunpack.c.l.b16 %v8419
  %v8603 = vunpack.c.h.b16 %v8419
  %v8604 = vunpack.c.l.b16 %v8420
  %v8605 = vunpack.c.h.b16 %v8420
  %v8606 = vunpack.c.l.b16 %v8421
  %v8607 = vunpack.c.h.b16 %v8421
  %v8608 = vunpack.c.l.b16 %v8422
  %v8609 = vunpack.c.h.b16 %v8422
  %v8610 = vunpack.c.l.b16 %v8423
  %v8611 = vunpack.c.h.b16 %v8423
  %v8612 = vunpack.c.l.b16 %v8424
  %v8613 = vunpack.c.h.b16 %v8424
  %v8614 = vunpack.c.l.b16 %v8425
  %v8615 = vunpack.c.h.b16 %v8425
  %v8616 = vunpack.c.l.b16 %v8426
  %v8617 = vunpack.c.h.b16 %v8426
  %v8618 = vunpack.c.l.b16 %v8427
  %v8619 = vunpack.c.h.b16 %v8427
  %v8620 = vunpack.c.l.b16 %v8428
  %v8621 = vunpack.c.h.b16 %v8428
  %v8622 = vunpack.c.l.b16 %v8429
  %v8623 = vunpack.c.h.b16 %v8429
  %v8624 = vunpack.c.l.b16 %v8430
  %v8625 = vunpack.c.h.b16 %v8430
  %v8626 = vunpack.c.l.b16 %v8431
  %v8627 = vunpack.c.h.b16 %v8431
  %v8628 = vunpack.c.l.b16 %v8432
  %v8629 = vunpack.c.h.b16 %v8432
  %v8630 = vunpack.c.l.b16 %v8433
  %v8631 = vunpack.c.h.b16 %v8433
  %v8632 = vunpack.c.l.b16 %v8434
  %v8633 = vunpack.c.h.b16 %v8434
  %v8634 = vunpack.c.l.b16 %v8435
  %v8635 = vunpack.c.h.b16 %v8435
  %v8636 = vunpack.c.l.b16 %v8436
  %v8637 = vunpack.c.h.b16 %v8436
  %v8638 = vunpack.c.l.b16 %v8437
  %v8639 = vunpack.c.h.b16 %v8437
  %v8640 = vunpack.c.l.b16 %v8438
  %v8641 = vunpack.c.h.b16 %v8438
  %v8642 = vunpack.c.l.b16 %v8439
  %v8643 = vunpack.c.h.b16 %v8439
  %v8644 = vunpack.c.l.b16 %v8440
  %v8645 = vunpack.c.h.b16 %v8440
  %v8646 = vunpack.c.l.b16 %v8441
  %v8647 = vunpack.c.h.b16 %v8441
  %v8648 = vunpack.c.l.b16 %v8442
  %v8649 = vunpack.c.h.b16 %v8442
  %v8650 = vunpack.c.l.b16 %v8443
  %v8651 = vunpack.c.h.b16 %v8443
  %v8652 = vunpack.c.l.b16 %v8444
  %v8653 = vunpack.c.h.b16 %v8444
  %v8654 = vunpack.c.l.b16 %v8445
  %v8655 = vunpack.c.h.b16 %v8445
  %v8656 = vunpack.c.l.b16 %v8446
  %v8657 = vunpack.c.h.b16 %v8446
  %v8658 = vunpack.c.l.b16 %v8447
  %v8659 = vunpack.c.h.b16 %v8447
  %v8660 = vunpack.c.l.b16 %v8448
  %v8661 = vunpack.c.h.b16 %v8448
  %v8662 = vunpack.c.l.b16 %v8449
  %v8663 = vunpack.c.h.b16 %v8449
  %v8664 = vpack.c.b16 %v8540, %v8536
  %v8665 = vpack.c.b16 %v8541, %v8537
  %v8666 = vpack.c.b16 %v8542, %v8538
  %v8667 = vpack.c.b16 %v8543, %v8539
  %v8668 = vpack.c.b16 %v8548, %v8544
  %v8669 = vpack.c.b16 %v8549, %v8545
  %v8670 = vpack.c.b16 %v8550, %v8546
  %v8671 = vpack.c.b16 %v8551, %v8547
  %v8672 = vpack.c.b16 %v8556, %v8552
  %v8673 = vpack.c.b16 %v8557, %v8553
  %v8674 = vpack.c.b16 %v8558, %v8554
  %v8675 = vpack.c.b16 %v8559, %v8555
  %v8676 = vpack.c.b16 %v8564, %v8560
  %v8677 = vpack.c.b16 %v8565, %v8561
  %v8678 = vpack.c.b16 %v8566, %v8562
  %v8679 = vpack.c.b16 %v8567, %v8563
  %v8680 = vpack.c.b16 %v8572, %v8568
  %v8681 = vpack.c.b16 %v8573, %v8569
  %v8682 = vpack.c.b16 %v8574, %v8570
  %v8683 = vpack.c.b16 %v8575, %v8571
  %v8684 = vpack.c.b16 %v8580, %v8576
  %v8685 = vpack.c.b16 %v8581, %v8577
  %v8686 = vpack.c.b16 %v8582, %v8578
  %v8687 = vpack.c.b16 %v8583, %v8579
  %v8688 = vpack.c.b16 %v8588, %v8584
  %v8689 = vpack.c.b16 %v8589, %v8585
  %v8690 = vpack.c.b16 %v8590, %v8586
  %v8691 = vpack.c.b16 %v8591, %v8587
  %v8692 = vpack.c.b16 %v8596, %v8592
  %v8693 = vpack.c.b16 %v8597, %v8593
  %v8694 = vpack.c.b16 %v8598, %v8594
  %v8695 = vpack.c.b16 %v8599, %v8595
  %v8696 = vpack.c.b16 %v8604, %v8600
  %v8697 = vpack.c.b16 %v8605, %v8601
  %v8698 = vpack.c.b16 %v8606, %v8602
  %v8699 = vpack.c.b16 %v8607, %v8603
  %v8700 = vpack.c.b16 %v8612, %v8608
  %v8701 = vpack.c.b16 %v8613, %v8609
  %v8702 = vpack.c.b16 %v8614, %v8610
  %v8703 = vpack.c.b16 %v8615, %v8611
  %v8704 = vpack.c.b16 %v8620, %v8616
  %v8705 = vpack.c.b16 %v8621, %v8617
  %v8706 = vpack.c.b16 %v8622, %v8618
  %v8707 = vpack.c.b16 %v8623, %v8619
  %v8708 = vpack.c.b16 %v8628, %v8624
  %v8709 = vpack.c.b16 %v8629, %v8625
  %v8710 = vpack.c.b16 %v8630, %v8626
  %v8711 = vpack.c.b16 %v8631, %v8627
  %v8712 = vpack.c.b16 %v8636, %v8632
  %v8713 = vpack.c.b16 %v8637, %v8633
  %v8714 = vpack.c.b16 %v8638, %v8634
  %v8715 = vpack.c.b16 %v8639, %v8635
  %v8716 = vpack.c.b16 %v8644, %v8640
  %v8717 = vpack.c.b16 %v8645, %v8641
  %v8718 = vpack.c.b16 %v8646, %v8642
  %v8719 = vpack.c.b16 %v8647, %v8643
  %v8720 = vpack.c.b16 %v8652, %v8648
  %v8721 = vpack.c.b16 %v8653, %v8649
  %v8722 = vpack.c.b16 %v8654, %v8650
  %v8723 = vpack.c.b16 %v8655, %v8651
  %v8724 = vpack.c.b16 %v8660, %v8656
  %v8725 = vpack.c.b16 %v8661, %v8657
  %v8726 = vpack.c.b16 %v8662, %v8658
  %v8727 = vpack.c.b16 %v8663, %v8659
  %8792 = vmatprep.subr.bf16.mxu0 %v8693
  %8793 = vmatpush1.bf16.msra.mxu0 %v8692
  %8794 = vmatprep.subr.bf16.mxu0 %v8689
  %8795 = vmatpush1.bf16.msra.mxu0 %v8688
  %8796 = vmatprep.subr.bf16.mxu0 %v8685
  %8797 = vmatpush1.bf16.msra.mxu0 %v8684
  %8798 = vmatprep.subr.bf16.mxu0 %v8681
  %8799 = vmatpush1.bf16.msra.mxu0 %v8680
  %8800 = vmatprep.subr.bf16.mxu0 %v8677
  %8801 = vmatpush1.bf16.msra.mxu0 %v8676
  %8802 = vmatprep.subr.bf16.mxu0 %v8673
  %8803 = vmatpush1.bf16.msra.mxu0 %v8672
  %8804 = vmatprep.subr.bf16.mxu0 %v8669
  %8805 = vmatpush1.bf16.msra.mxu0 %v8668
  %8806 = vmatprep.subr.bf16.mxu0 %v8665
  %8807 = vmatpush1.bf16.msra.mxu0 %v8664
  %8808 = vmatprep.subr.bf16.mxu0 %v8725
  %8809 = vmatpush2.bf16.msra.mxu0 %v8724
  %8810 = vmatprep.subr.bf16.mxu0 %v8721
  %8811 = vmatpush2.bf16.msra.mxu0 %v8720
  %8812 = vmatprep.subr.bf16.mxu0 %v8717
  %8813 = vmatpush2.bf16.msra.mxu0 %v8716
  %8814 = vmatprep.subr.bf16.mxu0 %v8713
  %8815 = vmatpush2.bf16.msra.mxu0 %v8712
  %8816 = vmatprep.subr.bf16.mxu0 %v8709
  %8817 = vmatpush2.bf16.msra.mxu0 %v8708
  %8818 = vmatprep.subr.bf16.mxu0 %v8705
  %8819 = vmatpush2.bf16.msra.mxu0 %v8704
  %8820 = vmatprep.subr.bf16.mxu0 %v8701
  %8821 = vmatpush2.bf16.msra.mxu0 %v8700
  %8822 = vmatprep.subr.bf16.mxu0 %v8697
  %8823 = vmatpush2.bf16.msra.mxu0 %v8696
  %8824 = vmatprep.mubr.bf16.mxu0 %v8383
  %8825 = vmatmul.mubr.bf16.gmra.mxu0 %v8382
  %v8826 = vpop.f32.mrf.mxu0
  %v8827 = vadd.f32 %v8455, %v8826
  %v8828 = vpop.f32.mrf.mxu0
  %v8829 = vadd.f32 %v8459, %v8828
  %v8830 = vpop.f32.mrf.mxu0
  %v8831 = vadd.f32 %v8455, %v8830
  %v8832 = vpop.f32.mrf.mxu0
  %v8833 = vadd.f32 %v8459, %v8832
  %8834 = vmatprep.mubr.bf16.mxu0 %v8385
  %8835 = vmatmul.mubr.bf16.gmra.mxu0 %v8384
  %v8836 = vpop.f32.mrf.mxu0
  %v8837 = vadd.f32 %v8455, %v8836
  %v8838 = vpop.f32.mrf.mxu0
  %v8839 = vadd.f32 %v8459, %v8838
  %v8840 = vpop.f32.mrf.mxu0
  %v8841 = vadd.f32 %v8455, %v8840
  %v8842 = vpop.f32.mrf.mxu0
  %v8843 = vadd.f32 %v8459, %v8842
  %8844 = vdwg.mxu0
  %8845 = vmatprep.subr.bf16.mxu0 %v8695
  %8846 = vmatpush1.bf16.msra.mxu0 %v8694
  %8847 = vmatprep.subr.bf16.mxu0 %v8691
  %8848 = vmatpush1.bf16.msra.mxu0 %v8690
  %8849 = vmatprep.subr.bf16.mxu0 %v8687
  %8850 = vmatpush1.bf16.msra.mxu0 %v8686
  %8851 = vmatprep.subr.bf16.mxu0 %v8683
  %8852 = vmatpush1.bf16.msra.mxu0 %v8682
  %8853 = vmatprep.subr.bf16.mxu0 %v8679
  %8854 = vmatpush1.bf16.msra.mxu0 %v8678
  %8855 = vmatprep.subr.bf16.mxu0 %v8675
  %8856 = vmatpush1.bf16.msra.mxu0 %v8674
  %8857 = vmatprep.subr.bf16.mxu0 %v8671
  %8858 = vmatpush1.bf16.msra.mxu0 %v8670
  %8859 = vmatprep.subr.bf16.mxu0 %v8667
  %8860 = vmatpush1.bf16.msra.mxu0 %v8666
  %8861 = vmatprep.subr.bf16.mxu0 %v8727
  %8862 = vmatpush2.bf16.msra.mxu0 %v8726
  %8863 = vmatprep.subr.bf16.mxu0 %v8723
  %8864 = vmatpush2.bf16.msra.mxu0 %v8722
  %8865 = vmatprep.subr.bf16.mxu0 %v8719
  %8866 = vmatpush2.bf16.msra.mxu0 %v8718
  %8867 = vmatprep.subr.bf16.mxu0 %v8715
  %8868 = vmatpush2.bf16.msra.mxu0 %v8714
  %8869 = vmatprep.subr.bf16.mxu0 %v8711
  %8870 = vmatpush2.bf16.msra.mxu0 %v8710
  %8871 = vmatprep.subr.bf16.mxu0 %v8707
  %8872 = vmatpush2.bf16.msra.mxu0 %v8706
  %8873 = vmatprep.subr.bf16.mxu0 %v8703
  %8874 = vmatpush2.bf16.msra.mxu0 %v8702
  %8875 = vmatprep.subr.bf16.mxu0 %v8699
  %8876 = vmatpush2.bf16.msra.mxu0 %v8698
  %8877 = vmatprep.mubr.bf16.mxu0 %v8383
  %8878 = vmatmul.mubr.bf16.gmra.mxu0 %v8382
  %v8879 = vpop.f32.mrf.mxu0
  %v8880 = vadd.f32 %v8463, %v8879
  %v8881 = vpop.f32.mrf.mxu0
  %v8882 = vadd.f32 %v8467, %v8881
  %v8883 = vpop.f32.mrf.mxu0
  %v8884 = vadd.f32 %v8463, %v8883
  %v8885 = vpop.f32.mrf.mxu0
  %v8886 = vadd.f32 %v8467, %v8885
  %8887 = vmatprep.mubr.bf16.mxu0 %v8385
  %8888 = vmatmul.mubr.bf16.gmra.mxu0 %v8384
  %v8889 = vpop.f32.mrf.mxu0
  %v8890 = vadd.f32 %v8463, %v8889
  %v8891 = vpop.f32.mrf.mxu0
  %v8892 = vadd.f32 %v8467, %v8891
  %v8893 = vpop.f32.mrf.mxu0
  %v8894 = vadd.f32 %v8463, %v8893
  %v8895 = vpop.f32.mrf.mxu0
  %v8896 = vadd.f32 %v8467, %v8895
  %8897 = vdwg.mxu0
  %v8898 = vadd.f32 %v8827, %v8829
  %v8899 = vadd.f32 %v8898, %v8880
  %v8900 = vadd.f32 %v8899, %v8882
  %8901 = vadd.xlane.f32.xlu0 %v8900
  %v8902 = vpop.xlane.xlu0 %8901
  %v8903 = vadd.f32 %v8831, %v8833
  %v8904 = vadd.f32 %v8903, %v8884
  %v8905 = vadd.f32 %v8904, %v8886
  %8906 = vadd.xlane.f32.xlu0 %v8905
  %v8907 = vpop.xlane.xlu0 %8906
  %v8908 = vadd.f32 %v8837, %v8839
  %v8909 = vadd.f32 %v8908, %v8890
  %v8910 = vadd.f32 %v8909, %v8892
  %8911 = vadd.xlane.f32.xlu0 %v8910
  %v8912 = vpop.xlane.xlu0 %8911
  %v8913 = vadd.f32 %v8841, %v8843
  %v8914 = vadd.f32 %v8913, %v8894
  %v8915 = vadd.f32 %v8914, %v8896
  %8916 = vadd.xlane.f32.xlu0 %v8915
  %v8917 = vpop.xlane.xlu0 %8916
  %v8918 = vrcp.pop 512.0
  %v8919 = vmul.f32 %v8902, %v8918
  %v8920 = vmul.f32 %v8907, %v8918
  %v8921 = vmul.f32 %v8912, %v8918
  %v8922 = vmul.f32 %v8917, %v8918
  %v8923 = vsub.f32 %v8827, %v8919
  %v8924 = vsub.f32 %v8829, %v8919
  %v8925 = vsub.f32 %v8880, %v8919
  %v8926 = vsub.f32 %v8882, %v8919
  %v8927 = vsub.f32 %v8831, %v8920
  %v8928 = vsub.f32 %v8833, %v8920
  %v8929 = vsub.f32 %v8884, %v8920
  %v8930 = vsub.f32 %v8886, %v8920
  %v8931 = vsub.f32 %v8837, %v8921
  %v8932 = vsub.f32 %v8839, %v8921
  %v8933 = vsub.f32 %v8890, %v8921
  %v8934 = vsub.f32 %v8892, %v8921
  %v8935 = vsub.f32 %v8841, %v8922
  %v8936 = vsub.f32 %v8843, %v8922
  %v8937 = vsub.f32 %v8894, %v8922
  %v8938 = vsub.f32 %v8896, %v8922
  %v8939 = vmul.f32 %v8923, %v8923
  %v8940 = vmul.f32 %v8924, %v8924
  %v8941 = vmul.f32 %v8925, %v8925
  %v8942 = vmul.f32 %v8926, %v8926
  %v8943 = vmul.f32 %v8927, %v8927
  %v8944 = vmul.f32 %v8928, %v8928
  %v8945 = vmul.f32 %v8929, %v8929
  %v8946 = vmul.f32 %v8930, %v8930
  %v8947 = vmul.f32 %v8931, %v8931
  %v8948 = vmul.f32 %v8932, %v8932
  %v8949 = vmul.f32 %v8933, %v8933
  %v8950 = vmul.f32 %v8934, %v8934
  %v8951 = vmul.f32 %v8935, %v8935
  %v8952 = vmul.f32 %v8936, %v8936
  %v8953 = vmul.f32 %v8937, %v8937
  %v8954 = vmul.f32 %v8938, %v8938
  %v8955 = vadd.f32 %v8939, %v8940
  %v8956 = vadd.f32 %v8955, %v8941
  %v8957 = vadd.f32 %v8956, %v8942
  %8958 = vadd.xlane.f32.xlu0 %v8957
  %v8959 = vpop.xlane.xlu0 %8958
  %v8960 = vadd.f32 %v8943, %v8944
  %v8961 = vadd.f32 %v8960, %v8945
  %v8962 = vadd.f32 %v8961, %v8946
  %8963 = vadd.xlane.f32.xlu0 %v8962
  %v8964 = vpop.xlane.xlu0 %8963
  %v8965 = vadd.f32 %v8947, %v8948
  %v8966 = vadd.f32 %v8965, %v8949
  %v8967 = vadd.f32 %v8966, %v8950
  %8968 = vadd.xlane.f32.xlu0 %v8967
  %v8969 = vpop.xlane.xlu0 %8968
  %v8970 = vadd.f32 %v8951, %v8952
  %v8971 = vadd.f32 %v8970, %v8953
  %v8972 = vadd.f32 %v8971, %v8954
  %8973 = vadd.xlane.f32.xlu0 %v8972
  %v8974 = vpop.xlane.xlu0 %8973
  %v8975 = vmul.f32 %v8959, %v8918
  %v8976 = vmul.f32 %v8964, %v8918
  %v8977 = vmul.f32 %v8969, %v8918
  %v8978 = vmul.f32 %v8974, %v8918
  %v8979 = vadd.f32 %v8975, 1e-05
  %v8980 = vadd.f32 %v8976, 1e-05
  %v8981 = vadd.f32 %v8977, 1e-05
  %v8982 = vadd.f32 %v8978, 1e-05
  %v8983 = vrsqrt.pop %v8979
  %v8984 = vrsqrt.pop %v8980
  %v8985 = vrsqrt.pop %v8981
  %v8986 = vrsqrt.pop %v8982
  %v8987 = vmul.f32 %v8923, %v8983
  %v8988 = vmul.f32 %v8924, %v8983
  %v8989 = vmul.f32 %v8925, %v8983
  %v8990 = vmul.f32 %v8926, %v8983
  %v8991 = vmul.f32 %v8927, %v8984
  %v8992 = vmul.f32 %v8928, %v8984
  %v8993 = vmul.f32 %v8929, %v8984
  %v8994 = vmul.f32 %v8930, %v8984
  %v8995 = vmul.f32 %v8931, %v8985
  %v8996 = vmul.f32 %v8932, %v8985
  %v8997 = vmul.f32 %v8933, %v8985
  %v8998 = vmul.f32 %v8934, %v8985
  %v8999 = vmul.f32 %v8935, %v8986
  %v9000 = vmul.f32 %v8936, %v8986
  %v9001 = vmul.f32 %v8937, %v8986
  %v9002 = vmul.f32 %v8938, %v8986
  %v9003 = vld [vmem:[%s35] sm:$0xf]
  %v9005 = vlaneseq
  %v9006 = vshrl.u32 %v9005, 7
  %v9007 = vsub.s32 0, %v9006
  %v9008 = vrot.slane %v9003, %v9007
  %v9009 = vlaneseq
  %v9010 = vshrl.u32 %v9009, 7
  %v9011 = vsub.s32 1, %v9010
  %v9012 = vrot.slane %v9003, %v9011
  %v9013 = vlaneseq
  %v9014 = vshrl.u32 %v9013, 7
  %v9015 = vsub.s32 2, %v9014
  %v9016 = vrot.slane %v9003, %v9015
  %v9017 = vlaneseq
  %v9018 = vshrl.u32 %v9017, 7
  %v9019 = vsub.s32 3, %v9018
  %v9020 = vrot.slane %v9003, %v9019
  %v9025 = vmul.f32 %v8987, %v9008
  %v9026 = vmul.f32 %v8988, %v9012
  %v9027 = vmul.f32 %v8989, %v9016
  %v9028 = vmul.f32 %v8990, %v9020
  %v9029 = vmul.f32 %v8991, %v9008
  %v9030 = vmul.f32 %v8992, %v9012
  %v9031 = vmul.f32 %v8993, %v9016
  %v9032 = vmul.f32 %v8994, %v9020
  %v9033 = vmul.f32 %v8995, %v9008
  %v9034 = vmul.f32 %v8996, %v9012
  %v9035 = vmul.f32 %v8997, %v9016
  %v9036 = vmul.f32 %v8998, %v9020
  %v9037 = vmul.f32 %v8999, %v9008
  %v9038 = vmul.f32 %v9000, %v9012
  %v9039 = vmul.f32 %v9001, %v9016
  %v9040 = vmul.f32 %v9002, %v9020
  %v9041 = vld [vmem:[%s37] sm:$0xf]
  %v9043 = vlaneseq
  %v9044 = vshrl.u32 %v9043, 7
  %v9045 = vsub.s32 0, %v9044
  %v9046 = vrot.slane %v9041, %v9045
  %v9047 = vlaneseq
  %v9048 = vshrl.u32 %v9047, 7
  %v9049 = vsub.s32 1, %v9048
  %v9050 = vrot.slane %v9041, %v9049
  %v9051 = vlaneseq
  %v9052 = vshrl.u32 %v9051, 7
  %v9053 = vsub.s32 2, %v9052
  %v9054 = vrot.slane %v9041, %v9053
  %v9055 = vlaneseq
  %v9056 = vshrl.u32 %v9055, 7
  %v9057 = vsub.s32 3, %v9056
  %v9058 = vrot.slane %v9041, %v9057
  %v9063 = vadd.f32 %v9025, %v9046
  %v9064 = vadd.f32 %v9026, %v9050
  %v9065 = vadd.f32 %v9027, %v9054
  %v9066 = vadd.f32 %v9028, %v9058
  %v9067 = vadd.f32 %v9029, %v9046
  %v9068 = vadd.f32 %v9030, %v9050
  %v9069 = vadd.f32 %v9031, %v9054
  %v9070 = vadd.f32 %v9032, %v9058
  %v9071 = vadd.f32 %v9033, %v9046
  %v9072 = vadd.f32 %v9034, %v9050
  %v9073 = vadd.f32 %v9035, %v9054
  %v9074 = vadd.f32 %v9036, %v9058
  %v9075 = vadd.f32 %v9037, %v9046
  %v9076 = vadd.f32 %v9038, %v9050
  %v9077 = vadd.f32 %v9039, %v9054
  %v9078 = vadd.f32 %v9040, %v9058
  %v9079 = vmax.f32 %v9063, 0.0
  %v9080 = vmax.f32 %v9064, 0.0
  %v9081 = vmax.f32 %v9065, 0.0
  %v9082 = vmax.f32 %v9066, 0.0
  %v9083 = vmax.f32 %v9067, 0.0
  %v9084 = vmax.f32 %v9068, 0.0
  %v9085 = vmax.f32 %v9069, 0.0
  %v9086 = vmax.f32 %v9070, 0.0
  %v9087 = vmax.f32 %v9071, 0.0
  %v9088 = vmax.f32 %v9072, 0.0
  %v9089 = vmax.f32 %v9073, 0.0
  %v9090 = vmax.f32 %v9074, 0.0
  %v9091 = vmax.f32 %v9075, 0.0
  %v9092 = vmax.f32 %v9076, 0.0
  %v9093 = vmax.f32 %v9077, 0.0
  %v9094 = vmax.f32 %v9078, 0.0
  %v9095 = vpack.c.bf16 %v9083, %v9079
  %v9096 = vpack.c.bf16 %v9084, %v9080
  %v9097 = vpack.c.bf16 %v9085, %v9081
  %v9098 = vpack.c.bf16 %v9086, %v9082
  %v9099 = vpack.c.bf16 %v9091, %v9087
  %v9100 = vpack.c.bf16 %v9092, %v9088
  %v9101 = vpack.c.bf16 %v9093, %v9089
  %v9102 = vpack.c.bf16 %v9094, %v9090
  %v9103 = vld [vmem:[%s39] sm:$0xff]
  %v9104 = vld [vmem:[%s39 + $0x8] sm:$0xff]
  %v9105 = vld [vmem:[%s39 + $0x10] sm:$0xff]
  %v9106 = vld [vmem:[%s39 + $0x18] sm:$0xff]
  %v9107 = vld [vmem:[%s39 + $0x20] sm:$0xff]
  %v9108 = vld [vmem:[%s39 + $0x28] sm:$0xff]
  %v9109 = vld [vmem:[%s39 + $0x30] sm:$0xff]
  %v9110 = vld [vmem:[%s39 + $0x38] sm:$0xff]
  %v9111 = vld [vmem:[%s39 + $0x40] sm:$0xff]
  %v9112 = vld [vmem:[%s39 + $0x48] sm:$0xff]
  %v9113 = vld [vmem:[%s39 + $0x50] sm:$0xff]
  %v9114 = vld [vmem:[%s39 + $0x58] sm:$0xff]
  %v9115 = vld [vmem:[%s39 + $0x60] sm:$0xff]
  %v9116 = vld [vmem:[%s39 + $0x68] sm:$0xff]
  %v9117 = vld [vmem:[%s39 + $0x70] sm:$0xff]
  %v9118 = vld [vmem:[%s39 + $0x78] sm:$0xff]
  %v9119 = vld [vmem:[%s39 + $0x80] sm:$0xff]
  %v9120 = vld [vmem:[%s39 + $0x88] sm:$0xff]
  %v9121 = vld [vmem:[%s39 + $0x90] sm:$0xff]
  %v9122 = vld [vmem:[%s39 + $0x98] sm:$0xff]
  %v9123 = vld [vmem:[%s39 + $0xa0] sm:$0xff]
  %v9124 = vld [vmem:[%s39 + $0xa8] sm:$0xff]
  %v9125 = vld [vmem:[%s39 + $0xb0] sm:$0xff]
  %v9126 = vld [vmem:[%s39 + $0xb8] sm:$0xff]
  %v9127 = vld [vmem:[%s39 + $0xc0] sm:$0xff]
  %v9128 = vld [vmem:[%s39 + $0xc8] sm:$0xff]
  %v9129 = vld [vmem:[%s39 + $0xd0] sm:$0xff]
  %v9130 = vld [vmem:[%s39 + $0xd8] sm:$0xff]
  %v9131 = vld [vmem:[%s39 + $0xe0] sm:$0xff]
  %v9132 = vld [vmem:[%s39 + $0xe8] sm:$0xff]
  %v9133 = vld [vmem:[%s39 + $0xf0] sm:$0xff]
  %v9134 = vld [vmem:[%s39 + $0xf8] sm:$0xff]
  %v9135 = vld [vmem:[%s39 + $0x100] sm:$0xff]
  %v9136 = vld [vmem:[%s39 + $0x108] sm:$0xff]
  %v9137 = vld [vmem:[%s39 + $0x110] sm:$0xff]
  %v9138 = vld [vmem:[%s39 + $0x118] sm:$0xff]
  %v9139 = vld [vmem:[%s39 + $0x120] sm:$0xff]
  %v9140 = vld [vmem:[%s39 + $0x128] sm:$0xff]
  %v9141 = vld [vmem:[%s39 + $0x130] sm:$0xff]
  %v9142 = vld [vmem:[%s39 + $0x138] sm:$0xff]
  %v9143 = vld [vmem:[%s39 + $0x140] sm:$0xff]
  %v9144 = vld [vmem:[%s39 + $0x148] sm:$0xff]
  %v9145 = vld [vmem:[%s39 + $0x150] sm:$0xff]
  %v9146 = vld [vmem:[%s39 + $0x158] sm:$0xff]
  %v9147 = vld [vmem:[%s39 + $0x160] sm:$0xff]
  %v9148 = vld [vmem:[%s39 + $0x168] sm:$0xff]
  %v9149 = vld [vmem:[%s39 + $0x170] sm:$0xff]
  %v9150 = vld [vmem:[%s39 + $0x178] sm:$0xff]
  %v9151 = vld [vmem:[%s39 + $0x180] sm:$0xff]
  %v9152 = vld [vmem:[%s39 + $0x188] sm:$0xff]
  %v9153 = vld [vmem:[%s39 + $0x190] sm:$0xff]
  %v9154 = vld [vmem:[%s39 + $0x198] sm:$0xff]
  %v9155 = vld [vmem:[%s39 + $0x1a0] sm:$0xff]
  %v9156 = vld [vmem:[%s39 + $0x1a8] sm:$0xff]
  %v9157 = vld [vmem:[%s39 + $0x1b0] sm:$0xff]
  %v9158 = vld [vmem:[%s39 + $0x1b8] sm:$0xff]
  %v9159 = vld [vmem:[%s39 + $0x1c0] sm:$0xff]
  %v9160 = vld [vmem:[%s39 + $0x1c8] sm:$0xff]
  %v9161 = vld [vmem:[%s39 + $0x1d0] sm:$0xff]
  %v9162 = vld [vmem:[%s39 + $0x1d8] sm:$0xff]
  %v9163 = vld [vmem:[%s39 + $0x1e0] sm:$0xff]
  %v9164 = vld [vmem:[%s39 + $0x1e8] sm:$0xff]
  %v9165 = vld [vmem:[%s39 + $0x1f0] sm:$0xff]
  %v9166 = vld [vmem:[%s39 + $0x1f8] sm:$0xff]
  %v9167 = vld [vmem:[%s39 + $0x200] sm:$0xff]
  %v9168 = vld [vmem:[%s39 + $0x208] sm:$0xff]
  %v9169 = vld [vmem:[%s39 + $0x210] sm:$0xff]
  %v9170 = vld [vmem:[%s39 + $0x218] sm:$0xff]
  %v9171 = vld [vmem:[%s39 + $0x220] sm:$0xff]
  %v9172 = vld [vmem:[%s39 + $0x228] sm:$0xff]
  %v9173 = vld [vmem:[%s39 + $0x230] sm:$0xff]
  %v9174 = vld [vmem:[%s39 + $0x238] sm:$0xff]
  %v9175 = vld [vmem:[%s39 + $0x240] sm:$0xff]
  %v9176 = vld [vmem:[%s39 + $0x248] sm:$0xff]
  %v9177 = vld [vmem:[%s39 + $0x250] sm:$0xff]
  %v9178 = vld [vmem:[%s39 + $0x258] sm:$0xff]
  %v9179 = vld [vmem:[%s39 + $0x260] sm:$0xff]
  %v9180 = vld [vmem:[%s39 + $0x268] sm:$0xff]
  %v9181 = vld [vmem:[%s39 + $0x270] sm:$0xff]
  %v9182 = vld [vmem:[%s39 + $0x278] sm:$0xff]
  %v9183 = vld [vmem:[%s39 + $0x280] sm:$0xff]
  %v9184 = vld [vmem:[%s39 + $0x288] sm:$0xff]
  %v9185 = vld [vmem:[%s39 + $0x290] sm:$0xff]
  %v9186 = vld [vmem:[%s39 + $0x298] sm:$0xff]
  %v9187 = vld [vmem:[%s39 + $0x2a0] sm:$0xff]
  %v9188 = vld [vmem:[%s39 + $0x2a8] sm:$0xff]
  %v9189 = vld [vmem:[%s39 + $0x2b0] sm:$0xff]
  %v9190 = vld [vmem:[%s39 + $0x2b8] sm:$0xff]
  %v9191 = vld [vmem:[%s39 + $0x2c0] sm:$0xff]
  %v9192 = vld [vmem:[%s39 + $0x2c8] sm:$0xff]
  %v9193 = vld [vmem:[%s39 + $0x2d0] sm:$0xff]
  %v9194 = vld [vmem:[%s39 + $0x2d8] sm:$0xff]
  %v9195 = vld [vmem:[%s39 + $0x2e0] sm:$0xff]
  %v9196 = vld [vmem:[%s39 + $0x2e8] sm:$0xff]
  %v9197 = vld [vmem:[%s39 + $0x2f0] sm:$0xff]
  %v9198 = vld [vmem:[%s39 + $0x2f8] sm:$0xff]
  %v9199 = vld [vmem:[%s39 + $0x300] sm:$0xff]
  %v9200 = vld [vmem:[%s39 + $0x308] sm:$0xff]
  %v9201 = vld [vmem:[%s39 + $0x310] sm:$0xff]
  %v9202 = vld [vmem:[%s39 + $0x318] sm:$0xff]
  %v9203 = vld [vmem:[%s39 + $0x320] sm:$0xff]
  %v9204 = vld [vmem:[%s39 + $0x328] sm:$0xff]
  %v9205 = vld [vmem:[%s39 + $0x330] sm:$0xff]
  %v9206 = vld [vmem:[%s39 + $0x338] sm:$0xff]
  %v9207 = vld [vmem:[%s39 + $0x340] sm:$0xff]
  %v9208 = vld [vmem:[%s39 + $0x348] sm:$0xff]
  %v9209 = vld [vmem:[%s39 + $0x350] sm:$0xff]
  %v9210 = vld [vmem:[%s39 + $0x358] sm:$0xff]
  %v9211 = vld [vmem:[%s39 + $0x360] sm:$0xff]
  %v9212 = vld [vmem:[%s39 + $0x368] sm:$0xff]
  %v9213 = vld [vmem:[%s39 + $0x370] sm:$0xff]
  %v9214 = vld [vmem:[%s39 + $0x378] sm:$0xff]
  %v9215 = vld [vmem:[%s39 + $0x380] sm:$0xff]
  %v9216 = vld [vmem:[%s39 + $0x388] sm:$0xff]
  %v9217 = vld [vmem:[%s39 + $0x390] sm:$0xff]
  %v9218 = vld [vmem:[%s39 + $0x398] sm:$0xff]
  %v9219 = vld [vmem:[%s39 + $0x3a0] sm:$0xff]
  %v9220 = vld [vmem:[%s39 + $0x3a8] sm:$0xff]
  %v9221 = vld [vmem:[%s39 + $0x3b0] sm:$0xff]
  %v9222 = vld [vmem:[%s39 + $0x3b8] sm:$0xff]
  %v9223 = vld [vmem:[%s39 + $0x3c0] sm:$0xff]
  %v9224 = vld [vmem:[%s39 + $0x3c8] sm:$0xff]
  %v9225 = vld [vmem:[%s39 + $0x3d0] sm:$0xff]
  %v9226 = vld [vmem:[%s39 + $0x3d8] sm:$0xff]
  %v9227 = vld [vmem:[%s39 + $0x3e0] sm:$0xff]
  %v9228 = vld [vmem:[%s39 + $0x3e8] sm:$0xff]
  %v9229 = vld [vmem:[%s39 + $0x3f0] sm:$0xff]
  %v9230 = vld [vmem:[%s39 + $0x3f8] sm:$0xff]
  %v9231 = vld [vmem:[%s41] sm:$0xf]
  %v9233 = vlaneseq
  %v9234 = vshrl.u32 %v9233, 7
  %v9235 = vsub.s32 0, %v9234
  %v9236 = vrot.slane %v9231, %v9235
  %v9237 = vlaneseq
  %v9238 = vshrl.u32 %v9237, 7
  %v9239 = vsub.s32 1, %v9238
  %v9240 = vrot.slane %v9231, %v9239
  %v9241 = vlaneseq
  %v9242 = vshrl.u32 %v9241, 7
  %v9243 = vsub.s32 2, %v9242
  %v9244 = vrot.slane %v9231, %v9243
  %v9245 = vlaneseq
  %v9246 = vshrl.u32 %v9245, 7
  %v9247 = vsub.s32 3, %v9246
  %v9248 = vrot.slane %v9231, %v9247
  %v9381 = vunpack.c.l.b16 %v9103
  %v9382 = vunpack.c.h.b16 %v9103
  %v9383 = vunpack.c.l.b16 %v9104
  %v9384 = vunpack.c.h.b16 %v9104
  %v9385 = vunpack.c.l.b16 %v9105
  %v9386 = vunpack.c.h.b16 %v9105
  %v9387 = vunpack.c.l.b16 %v9106
  %v9388 = vunpack.c.h.b16 %v9106
  %v9389 = vunpack.c.l.b16 %v9107
  %v9390 = vunpack.c.h.b16 %v9107
  %v9391 = vunpack.c.l.b16 %v9108
  %v9392 = vunpack.c.h.b16 %v9108
  %v9393 = vunpack.c.l.b16 %v9109
  %v9394 = vunpack.c.h.b16 %v9109
  %v9395 = vunpack.c.l.b16 %v9110
  %v9396 = vunpack.c.h.b16 %v9110
  %v9397 = vunpack.c.l.b16 %v9111
  %v9398 = vunpack.c.h.b16 %v9111
  %v9399 = vunpack.c.l.b16 %v9112
  %v9400 = vunpack.c.h.b16 %v9112
  %v9401 = vunpack.c.l.b16 %v9113
  %v9402 = vunpack.c.h.b16 %v9113
  %v9403 = vunpack.c.l.b16 %v9114
  %v9404 = vunpack.c.h.b16 %v9114
  %v9405 = vunpack.c.l.b16 %v9115
  %v9406 = vunpack.c.h.b16 %v9115
  %v9407 = vunpack.c.l.b16 %v9116
  %v9408 = vunpack.c.h.b16 %v9116
  %v9409 = vunpack.c.l.b16 %v9117
  %v9410 = vunpack.c.h.b16 %v9117
  %v9411 = vunpack.c.l.b16 %v9118
  %v9412 = vunpack.c.h.b16 %v9118
  %v9413 = vunpack.c.l.b16 %v9119
  %v9414 = vunpack.c.h.b16 %v9119
  %v9415 = vunpack.c.l.b16 %v9120
  %v9416 = vunpack.c.h.b16 %v9120
  %v9417 = vunpack.c.l.b16 %v9121
  %v9418 = vunpack.c.h.b16 %v9121
  %v9419 = vunpack.c.l.b16 %v9122
  %v9420 = vunpack.c.h.b16 %v9122
  %v9421 = vunpack.c.l.b16 %v9123
  %v9422 = vunpack.c.h.b16 %v9123
  %v9423 = vunpack.c.l.b16 %v9124
  %v9424 = vunpack.c.h.b16 %v9124
  %v9425 = vunpack.c.l.b16 %v9125
  %v9426 = vunpack.c.h.b16 %v9125
  %v9427 = vunpack.c.l.b16 %v9126
  %v9428 = vunpack.c.h.b16 %v9126
  %v9429 = vunpack.c.l.b16 %v9127
  %v9430 = vunpack.c.h.b16 %v9127
  %v9431 = vunpack.c.l.b16 %v9128
  %v9432 = vunpack.c.h.b16 %v9128
  %v9433 = vunpack.c.l.b16 %v9129
  %v9434 = vunpack.c.h.b16 %v9129
  %v9435 = vunpack.c.l.b16 %v9130
  %v9436 = vunpack.c.h.b16 %v9130
  %v9437 = vunpack.c.l.b16 %v9131
  %v9438 = vunpack.c.h.b16 %v9131
  %v9439 = vunpack.c.l.b16 %v9132
  %v9440 = vunpack.c.h.b16 %v9132
  %v9441 = vunpack.c.l.b16 %v9133
  %v9442 = vunpack.c.h.b16 %v9133
  %v9443 = vunpack.c.l.b16 %v9134
  %v9444 = vunpack.c.h.b16 %v9134
  %v9445 = vunpack.c.l.b16 %v9135
  %v9446 = vunpack.c.h.b16 %v9135
  %v9447 = vunpack.c.l.b16 %v9136
  %v9448 = vunpack.c.h.b16 %v9136
  %v9449 = vunpack.c.l.b16 %v9137
  %v9450 = vunpack.c.h.b16 %v9137
  %v9451 = vunpack.c.l.b16 %v9138
  %v9452 = vunpack.c.h.b16 %v9138
  %v9453 = vunpack.c.l.b16 %v9139
  %v9454 = vunpack.c.h.b16 %v9139
  %v9455 = vunpack.c.l.b16 %v9140
  %v9456 = vunpack.c.h.b16 %v9140
  %v9457 = vunpack.c.l.b16 %v9141
  %v9458 = vunpack.c.h.b16 %v9141
  %v9459 = vunpack.c.l.b16 %v9142
  %v9460 = vunpack.c.h.b16 %v9142
  %v9461 = vunpack.c.l.b16 %v9143
  %v9462 = vunpack.c.h.b16 %v9143
  %v9463 = vunpack.c.l.b16 %v9144
  %v9464 = vunpack.c.h.b16 %v9144
  %v9465 = vunpack.c.l.b16 %v9145
  %v9466 = vunpack.c.h.b16 %v9145
  %v9467 = vunpack.c.l.b16 %v9146
  %v9468 = vunpack.c.h.b16 %v9146
  %v9469 = vunpack.c.l.b16 %v9147
  %v9470 = vunpack.c.h.b16 %v9147
  %v9471 = vunpack.c.l.b16 %v9148
  %v9472 = vunpack.c.h.b16 %v9148
  %v9473 = vunpack.c.l.b16 %v9149
  %v9474 = vunpack.c.h.b16 %v9149
  %v9475 = vunpack.c.l.b16 %v9150
  %v9476 = vunpack.c.h.b16 %v9150
  %v9477 = vunpack.c.l.b16 %v9151
  %v9478 = vunpack.c.h.b16 %v9151
  %v9479 = vunpack.c.l.b16 %v9152
  %v9480 = vunpack.c.h.b16 %v9152
  %v9481 = vunpack.c.l.b16 %v9153
  %v9482 = vunpack.c.h.b16 %v9153
  %v9483 = vunpack.c.l.b16 %v9154
  %v9484 = vunpack.c.h.b16 %v9154
  %v9485 = vunpack.c.l.b16 %v9155
  %v9486 = vunpack.c.h.b16 %v9155
  %v9487 = vunpack.c.l.b16 %v9156
  %v9488 = vunpack.c.h.b16 %v9156
  %v9489 = vunpack.c.l.b16 %v9157
  %v9490 = vunpack.c.h.b16 %v9157
  %v9491 = vunpack.c.l.b16 %v9158
  %v9492 = vunpack.c.h.b16 %v9158
  %v9493 = vunpack.c.l.b16 %v9159
  %v9494 = vunpack.c.h.b16 %v9159
  %v9495 = vunpack.c.l.b16 %v9160
  %v9496 = vunpack.c.h.b16 %v9160
  %v9497 = vunpack.c.l.b16 %v9161
  %v9498 = vunpack.c.h.b16 %v9161
  %v9499 = vunpack.c.l.b16 %v9162
  %v9500 = vunpack.c.h.b16 %v9162
  %v9501 = vunpack.c.l.b16 %v9163
  %v9502 = vunpack.c.h.b16 %v9163
  %v9503 = vunpack.c.l.b16 %v9164
  %v9504 = vunpack.c.h.b16 %v9164
  %v9505 = vunpack.c.l.b16 %v9165
  %v9506 = vunpack.c.h.b16 %v9165
  %v9507 = vunpack.c.l.b16 %v9166
  %v9508 = vunpack.c.h.b16 %v9166
  %v9509 = vunpack.c.l.b16 %v9167
  %v9510 = vunpack.c.h.b16 %v9167
  %v9511 = vunpack.c.l.b16 %v9168
  %v9512 = vunpack.c.h.b16 %v9168
  %v9513 = vunpack.c.l.b16 %v9169
  %v9514 = vunpack.c.h.b16 %v9169
  %v9515 = vunpack.c.l.b16 %v9170
  %v9516 = vunpack.c.h.b16 %v9170
  %v9517 = vunpack.c.l.b16 %v9171
  %v9518 = vunpack.c.h.b16 %v9171
  %v9519 = vunpack.c.l.b16 %v9172
  %v9520 = vunpack.c.h.b16 %v9172
  %v9521 = vunpack.c.l.b16 %v9173
  %v9522 = vunpack.c.h.b16 %v9173
  %v9523 = vunpack.c.l.b16 %v9174
  %v9524 = vunpack.c.h.b16 %v9174
  %v9525 = vunpack.c.l.b16 %v9175
  %v9526 = vunpack.c.h.b16 %v9175
  %v9527 = vunpack.c.l.b16 %v9176
  %v9528 = vunpack.c.h.b16 %v9176
  %v9529 = vunpack.c.l.b16 %v9177
  %v9530 = vunpack.c.h.b16 %v9177
  %v9531 = vunpack.c.l.b16 %v9178
  %v9532 = vunpack.c.h.b16 %v9178
  %v9533 = vunpack.c.l.b16 %v9179
  %v9534 = vunpack.c.h.b16 %v9179
  %v9535 = vunpack.c.l.b16 %v9180
  %v9536 = vunpack.c.h.b16 %v9180
  %v9537 = vunpack.c.l.b16 %v9181
  %v9538 = vunpack.c.h.b16 %v9181
  %v9539 = vunpack.c.l.b16 %v9182
  %v9540 = vunpack.c.h.b16 %v9182
  %v9541 = vunpack.c.l.b16 %v9183
  %v9542 = vunpack.c.h.b16 %v9183
  %v9543 = vunpack.c.l.b16 %v9184
  %v9544 = vunpack.c.h.b16 %v9184
  %v9545 = vunpack.c.l.b16 %v9185
  %v9546 = vunpack.c.h.b16 %v9185
  %v9547 = vunpack.c.l.b16 %v9186
  %v9548 = vunpack.c.h.b16 %v9186
  %v9549 = vunpack.c.l.b16 %v9187
  %v9550 = vunpack.c.h.b16 %v9187
  %v9551 = vunpack.c.l.b16 %v9188
  %v9552 = vunpack.c.h.b16 %v9188
  %v9553 = vunpack.c.l.b16 %v9189
  %v9554 = vunpack.c.h.b16 %v9189
  %v9555 = vunpack.c.l.b16 %v9190
  %v9556 = vunpack.c.h.b16 %v9190
  %v9557 = vunpack.c.l.b16 %v9191
  %v9558 = vunpack.c.h.b16 %v9191
  %v9559 = vunpack.c.l.b16 %v9192
  %v9560 = vunpack.c.h.b16 %v9192
  %v9561 = vunpack.c.l.b16 %v9193
  %v9562 = vunpack.c.h.b16 %v9193
  %v9563 = vunpack.c.l.b16 %v9194
  %v9564 = vunpack.c.h.b16 %v9194
  %v9565 = vunpack.c.l.b16 %v9195
  %v9566 = vunpack.c.h.b16 %v9195
  %v9567 = vunpack.c.l.b16 %v9196
  %v9568 = vunpack.c.h.b16 %v9196
  %v9569 = vunpack.c.l.b16 %v9197
  %v9570 = vunpack.c.h.b16 %v9197
  %v9571 = vunpack.c.l.b16 %v9198
  %v9572 = vunpack.c.h.b16 %v9198
  %v9573 = vunpack.c.l.b16 %v9199
  %v9574 = vunpack.c.h.b16 %v9199
  %v9575 = vunpack.c.l.b16 %v9200
  %v9576 = vunpack.c.h.b16 %v9200
  %v9577 = vunpack.c.l.b16 %v9201
  %v9578 = vunpack.c.h.b16 %v9201
  %v9579 = vunpack.c.l.b16 %v9202
  %v9580 = vunpack.c.h.b16 %v9202
  %v9581 = vunpack.c.l.b16 %v9203
  %v9582 = vunpack.c.h.b16 %v9203
  %v9583 = vunpack.c.l.b16 %v9204
  %v9584 = vunpack.c.h.b16 %v9204
  %v9585 = vunpack.c.l.b16 %v9205
  %v9586 = vunpack.c.h.b16 %v9205
  %v9587 = vunpack.c.l.b16 %v9206
  %v9588 = vunpack.c.h.b16 %v9206
  %v9589 = vunpack.c.l.b16 %v9207
  %v9590 = vunpack.c.h.b16 %v9207
  %v9591 = vunpack.c.l.b16 %v9208
  %v9592 = vunpack.c.h.b16 %v9208
  %v9593 = vunpack.c.l.b16 %v9209
  %v9594 = vunpack.c.h.b16 %v9209
  %v9595 = vunpack.c.l.b16 %v9210
  %v9596 = vunpack.c.h.b16 %v9210
  %v9597 = vunpack.c.l.b16 %v9211
  %v9598 = vunpack.c.h.b16 %v9211
  %v9599 = vunpack.c.l.b16 %v9212
  %v9600 = vunpack.c.h.b16 %v9212
  %v9601 = vunpack.c.l.b16 %v9213
  %v9602 = vunpack.c.h.b16 %v9213
  %v9603 = vunpack.c.l.b16 %v9214
  %v9604 = vunpack.c.h.b16 %v9214
  %v9605 = vunpack.c.l.b16 %v9215
  %v9606 = vunpack.c.h.b16 %v9215
  %v9607 = vunpack.c.l.b16 %v9216
  %v9608 = vunpack.c.h.b16 %v9216
  %v9609 = vunpack.c.l.b16 %v9217
  %v9610 = vunpack.c.h.b16 %v9217
  %v9611 = vunpack.c.l.b16 %v9218
  %v9612 = vunpack.c.h.b16 %v9218
  %v9613 = vunpack.c.l.b16 %v9219
  %v9614 = vunpack.c.h.b16 %v9219
  %v9615 = vunpack.c.l.b16 %v9220
  %v9616 = vunpack.c.h.b16 %v9220
  %v9617 = vunpack.c.l.b16 %v9221
  %v9618 = vunpack.c.h.b16 %v9221
  %v9619 = vunpack.c.l.b16 %v9222
  %v9620 = vunpack.c.h.b16 %v9222
  %v9621 = vunpack.c.l.b16 %v9223
  %v9622 = vunpack.c.h.b16 %v9223
  %v9623 = vunpack.c.l.b16 %v9224
  %v9624 = vunpack.c.h.b16 %v9224
  %v9625 = vunpack.c.l.b16 %v9225
  %v9626 = vunpack.c.h.b16 %v9225
  %v9627 = vunpack.c.l.b16 %v9226
  %v9628 = vunpack.c.h.b16 %v9226
  %v9629 = vunpack.c.l.b16 %v9227
  %v9630 = vunpack.c.h.b16 %v9227
  %v9631 = vunpack.c.l.b16 %v9228
  %v9632 = vunpack.c.h.b16 %v9228
  %v9633 = vunpack.c.l.b16 %v9229
  %v9634 = vunpack.c.h.b16 %v9229
  %v9635 = vunpack.c.l.b16 %v9230
  %v9636 = vunpack.c.h.b16 %v9230
  %v9637 = vpack.c.b16 %v9385, %v9381
  %v9638 = vpack.c.b16 %v9386, %v9382
  %v9639 = vpack.c.b16 %v9387, %v9383
  %v9640 = vpack.c.b16 %v9388, %v9384
  %v9641 = vpack.c.b16 %v9393, %v9389
  %v9642 = vpack.c.b16 %v9394, %v9390
  %v9643 = vpack.c.b16 %v9395, %v9391
  %v9644 = vpack.c.b16 %v9396, %v9392
  %v9645 = vpack.c.b16 %v9401, %v9397
  %v9646 = vpack.c.b16 %v9402, %v9398
  %v9647 = vpack.c.b16 %v9403, %v9399
  %v9648 = vpack.c.b16 %v9404, %v9400
  %v9649 = vpack.c.b16 %v9409, %v9405
  %v9650 = vpack.c.b16 %v9410, %v9406
  %v9651 = vpack.c.b16 %v9411, %v9407
  %v9652 = vpack.c.b16 %v9412, %v9408
  %v9653 = vpack.c.b16 %v9417, %v9413
  %v9654 = vpack.c.b16 %v9418, %v9414
  %v9655 = vpack.c.b16 %v9419, %v9415
  %v9656 = vpack.c.b16 %v9420, %v9416
  %v9657 = vpack.c.b16 %v9425, %v9421
  %v9658 = vpack.c.b16 %v9426, %v9422
  %v9659 = vpack.c.b16 %v9427, %v9423
  %v9660 = vpack.c.b16 %v9428, %v9424
  %v9661 = vpack.c.b16 %v9433, %v9429
  %v9662 = vpack.c.b16 %v9434, %v9430
  %v9663 = vpack.c.b16 %v9435, %v9431
  %v9664 = vpack.c.b16 %v9436, %v9432
  %v9665 = vpack.c.b16 %v9441, %v9437
  %v9666 = vpack.c.b16 %v9442, %v9438
  %v9667 = vpack.c.b16 %v9443, %v9439
  %v9668 = vpack.c.b16 %v9444, %v9440
  %v9669 = vpack.c.b16 %v9449, %v9445
  %v9670 = vpack.c.b16 %v9450, %v9446
  %v9671 = vpack.c.b16 %v9451, %v9447
  %v9672 = vpack.c.b16 %v9452, %v9448
  %v9673 = vpack.c.b16 %v9457, %v9453
  %v9674 = vpack.c.b16 %v9458, %v9454
  %v9675 = vpack.c.b16 %v9459, %v9455
  %v9676 = vpack.c.b16 %v9460, %v9456
  %v9677 = vpack.c.b16 %v9465, %v9461
  %v9678 = vpack.c.b16 %v9466, %v9462
  %v9679 = vpack.c.b16 %v9467, %v9463
  %v9680 = vpack.c.b16 %v9468, %v9464
  %v9681 = vpack.c.b16 %v9473, %v9469
  %v9682 = vpack.c.b16 %v9474, %v9470
  %v9683 = vpack.c.b16 %v9475, %v9471
  %v9684 = vpack.c.b16 %v9476, %v9472
  %v9685 = vpack.c.b16 %v9481, %v9477
  %v9686 = vpack.c.b16 %v9482, %v9478
  %v9687 = vpack.c.b16 %v9483, %v9479
  %v9688 = vpack.c.b16 %v9484, %v9480
  %v9689 = vpack.c.b16 %v9489, %v9485
  %v9690 = vpack.c.b16 %v9490, %v9486
  %v9691 = vpack.c.b16 %v9491, %v9487
  %v9692 = vpack.c.b16 %v9492, %v9488
  %v9693 = vpack.c.b16 %v9497, %v9493
  %v9694 = vpack.c.b16 %v9498, %v9494
  %v9695 = vpack.c.b16 %v9499, %v9495
  %v9696 = vpack.c.b16 %v9500, %v9496
  %v9697 = vpack.c.b16 %v9505, %v9501
  %v9698 = vpack.c.b16 %v9506, %v9502
  %v9699 = vpack.c.b16 %v9507, %v9503
  %v9700 = vpack.c.b16 %v9508, %v9504
  %v9701 = vpack.c.b16 %v9513, %v9509
  %v9702 = vpack.c.b16 %v9514, %v9510
  %v9703 = vpack.c.b16 %v9515, %v9511
  %v9704 = vpack.c.b16 %v9516, %v9512
  %v9705 = vpack.c.b16 %v9521, %v9517
  %v9706 = vpack.c.b16 %v9522, %v9518
  %v9707 = vpack.c.b16 %v9523, %v9519
  %v9708 = vpack.c.b16 %v9524, %v9520
  %v9709 = vpack.c.b16 %v9529, %v9525
  %v9710 = vpack.c.b16 %v9530, %v9526
  %v9711 = vpack.c.b16 %v9531, %v9527
  %v9712 = vpack.c.b16 %v9532, %v9528
  %v9713 = vpack.c.b16 %v9537, %v9533
  %v9714 = vpack.c.b16 %v9538, %v9534
  %v9715 = vpack.c.b16 %v9539, %v9535
  %v9716 = vpack.c.b16 %v9540, %v9536
  %v9717 = vpack.c.b16 %v9545, %v9541
  %v9718 = vpack.c.b16 %v9546, %v9542
  %v9719 = vpack.c.b16 %v9547, %v9543
  %v9720 = vpack.c.b16 %v9548, %v9544
  %v9721 = vpack.c.b16 %v9553, %v9549
  %v9722 = vpack.c.b16 %v9554, %v9550
  %v9723 = vpack.c.b16 %v9555, %v9551
  %v9724 = vpack.c.b16 %v9556, %v9552
  %v9725 = vpack.c.b16 %v9561, %v9557
  %v9726 = vpack.c.b16 %v9562, %v9558
  %v9727 = vpack.c.b16 %v9563, %v9559
  %v9728 = vpack.c.b16 %v9564, %v9560
  %v9729 = vpack.c.b16 %v9569, %v9565
  %v9730 = vpack.c.b16 %v9570, %v9566
  %v9731 = vpack.c.b16 %v9571, %v9567
  %v9732 = vpack.c.b16 %v9572, %v9568
  %v9733 = vpack.c.b16 %v9577, %v9573
  %v9734 = vpack.c.b16 %v9578, %v9574
  %v9735 = vpack.c.b16 %v9579, %v9575
  %v9736 = vpack.c.b16 %v9580, %v9576
  %v9737 = vpack.c.b16 %v9585, %v9581
  %v9738 = vpack.c.b16 %v9586, %v9582
  %v9739 = vpack.c.b16 %v9587, %v9583
  %v9740 = vpack.c.b16 %v9588, %v9584
  %v9741 = vpack.c.b16 %v9593, %v9589
  %v9742 = vpack.c.b16 %v9594, %v9590
  %v9743 = vpack.c.b16 %v9595, %v9591
  %v9744 = vpack.c.b16 %v9596, %v9592
  %v9745 = vpack.c.b16 %v9601, %v9597
  %v9746 = vpack.c.b16 %v9602, %v9598
  %v9747 = vpack.c.b16 %v9603, %v9599
  %v9748 = vpack.c.b16 %v9604, %v9600
  %v9749 = vpack.c.b16 %v9609, %v9605
  %v9750 = vpack.c.b16 %v9610, %v9606
  %v9751 = vpack.c.b16 %v9611, %v9607
  %v9752 = vpack.c.b16 %v9612, %v9608
  %v9753 = vpack.c.b16 %v9617, %v9613
  %v9754 = vpack.c.b16 %v9618, %v9614
  %v9755 = vpack.c.b16 %v9619, %v9615
  %v9756 = vpack.c.b16 %v9620, %v9616
  %v9757 = vpack.c.b16 %v9625, %v9621
  %v9758 = vpack.c.b16 %v9626, %v9622
  %v9759 = vpack.c.b16 %v9627, %v9623
  %v9760 = vpack.c.b16 %v9628, %v9624
  %v9761 = vpack.c.b16 %v9633, %v9629
  %v9762 = vpack.c.b16 %v9634, %v9630
  %v9763 = vpack.c.b16 %v9635, %v9631
  %v9764 = vpack.c.b16 %v9636, %v9632
  %9893 = vmatprep.subr.bf16.mxu0 %v9666
  %9894 = vmatpush1.bf16.msra.mxu0 %v9665
  %9895 = vmatprep.subr.bf16.mxu0 %v9662
  %9896 = vmatpush1.bf16.msra.mxu0 %v9661
  %9897 = vmatprep.subr.bf16.mxu0 %v9658
  %9898 = vmatpush1.bf16.msra.mxu0 %v9657
  %9899 = vmatprep.subr.bf16.mxu0 %v9654
  %9900 = vmatpush1.bf16.msra.mxu0 %v9653
  %9901 = vmatprep.subr.bf16.mxu0 %v9650
  %9902 = vmatpush1.bf16.msra.mxu0 %v9649
  %9903 = vmatprep.subr.bf16.mxu0 %v9646
  %9904 = vmatpush1.bf16.msra.mxu0 %v9645
  %9905 = vmatprep.subr.bf16.mxu0 %v9642
  %9906 = vmatpush1.bf16.msra.mxu0 %v9641
  %9907 = vmatprep.subr.bf16.mxu0 %v9638
  %9908 = vmatpush1.bf16.msra.mxu0 %v9637
  %9909 = vmatprep.subr.bf16.mxu0 %v9698
  %9910 = vmatpush2.bf16.msra.mxu0 %v9697
  %9911 = vmatprep.subr.bf16.mxu0 %v9694
  %9912 = vmatpush2.bf16.msra.mxu0 %v9693
  %9913 = vmatprep.subr.bf16.mxu0 %v9690
  %9914 = vmatpush2.bf16.msra.mxu0 %v9689
  %9915 = vmatprep.subr.bf16.mxu0 %v9686
  %9916 = vmatpush2.bf16.msra.mxu0 %v9685
  %9917 = vmatprep.subr.bf16.mxu0 %v9682
  %9918 = vmatpush2.bf16.msra.mxu0 %v9681
  %9919 = vmatprep.subr.bf16.mxu0 %v9678
  %9920 = vmatpush2.bf16.msra.mxu0 %v9677
  %9921 = vmatprep.subr.bf16.mxu0 %v9674
  %9922 = vmatpush2.bf16.msra.mxu0 %v9673
  %9923 = vmatprep.subr.bf16.mxu0 %v9670
  %9924 = vmatpush2.bf16.msra.mxu0 %v9669
  %9925 = vmatprep.mubr.bf16.mxu0 %v9096
  %9926 = vmatmul.mubr.bf16.gmra.mxu0 %v9095
  %v9927 = vpop.f32.mrf.mxu0
  %v9928 = vadd.f32 %v9236, %v9927
  %v9929 = vpop.f32.mrf.mxu0
  %v9930 = vadd.f32 %v9240, %v9929
  %v9931 = vpop.f32.mrf.mxu0
  %v9932 = vadd.f32 %v9236, %v9931
  %v9933 = vpop.f32.mrf.mxu0
  %v9934 = vadd.f32 %v9240, %v9933
  %9935 = vmatprep.mubr.bf16.mxu0 %v9100
  %9936 = vmatmul.mubr.bf16.gmra.mxu0 %v9099
  %v9937 = vpop.f32.mrf.mxu0
  %v9938 = vadd.f32 %v9236, %v9937
  %v9939 = vpop.f32.mrf.mxu0
  %v9940 = vadd.f32 %v9240, %v9939
  %v9941 = vpop.f32.mrf.mxu0
  %v9942 = vadd.f32 %v9236, %v9941
  %v9943 = vpop.f32.mrf.mxu0
  %v9944 = vadd.f32 %v9240, %v9943
  %9945 = vdwg.mxu0
  %9946 = vmatprep.subr.bf16.mxu0 %v9730
  %9947 = vmatpush1.bf16.msra.mxu0 %v9729
  %9948 = vmatprep.subr.bf16.mxu0 %v9726
  %9949 = vmatpush1.bf16.msra.mxu0 %v9725
  %9950 = vmatprep.subr.bf16.mxu0 %v9722
  %9951 = vmatpush1.bf16.msra.mxu0 %v9721
  %9952 = vmatprep.subr.bf16.mxu0 %v9718
  %9953 = vmatpush1.bf16.msra.mxu0 %v9717
  %9954 = vmatprep.subr.bf16.mxu0 %v9714
  %9955 = vmatpush1.bf16.msra.mxu0 %v9713
  %9956 = vmatprep.subr.bf16.mxu0 %v9710
  %9957 = vmatpush1.bf16.msra.mxu0 %v9709
  %9958 = vmatprep.subr.bf16.mxu0 %v9706
  %9959 = vmatpush1.bf16.msra.mxu0 %v9705
  %9960 = vmatprep.subr.bf16.mxu0 %v9702
  %9961 = vmatpush1.bf16.msra.mxu0 %v9701
  %9962 = vmatprep.subr.bf16.mxu0 %v9762
  %9963 = vmatpush2.bf16.msra.mxu0 %v9761
  %9964 = vmatprep.subr.bf16.mxu0 %v9758
  %9965 = vmatpush2.bf16.msra.mxu0 %v9757
  %9966 = vmatprep.subr.bf16.mxu0 %v9754
  %9967 = vmatpush2.bf16.msra.mxu0 %v9753
  %9968 = vmatprep.subr.bf16.mxu0 %v9750
  %9969 = vmatpush2.bf16.msra.mxu0 %v9749
  %9970 = vmatprep.subr.bf16.mxu0 %v9746
  %9971 = vmatpush2.bf16.msra.mxu0 %v9745
  %9972 = vmatprep.subr.bf16.mxu0 %v9742
  %9973 = vmatpush2.bf16.msra.mxu0 %v9741
  %9974 = vmatprep.subr.bf16.mxu0 %v9738
  %9975 = vmatpush2.bf16.msra.mxu0 %v9737
  %9976 = vmatprep.subr.bf16.mxu0 %v9734
  %9977 = vmatpush2.bf16.msra.mxu0 %v9733
  %9978 = vmatprep.mubr.bf16.mxu0 %v9098
  %9979 = vmatmul.mubr.bf16.gmra.mxu0 %v9097
  %v9980 = vpop.f32.mrf.mxu0
  %v9981 = vadd.f32 %v9928, %v9980
  %v9982 = vpop.f32.mrf.mxu0
  %v9983 = vadd.f32 %v9930, %v9982
  %v9984 = vpop.f32.mrf.mxu0
  %v9985 = vadd.f32 %v9932, %v9984
  %v9986 = vpop.f32.mrf.mxu0
  %v9987 = vadd.f32 %v9934, %v9986
  %9988 = vmatprep.mubr.bf16.mxu0 %v9102
  %9989 = vmatmul.mubr.bf16.gmra.mxu0 %v9101
  %v9990 = vpop.f32.mrf.mxu0
  %v9991 = vadd.f32 %v9938, %v9990
  %v9992 = vpop.f32.mrf.mxu0
  %v9993 = vadd.f32 %v9940, %v9992
  %v9994 = vpop.f32.mrf.mxu0
  %v9995 = vadd.f32 %v9942, %v9994
  %v9996 = vpop.f32.mrf.mxu0
  %v9997 = vadd.f32 %v9944, %v9996
  %9998 = vdwg.mxu0
  %9999 = vmatprep.subr.bf16.mxu0 %v9668
  %10000 = vmatpush1.bf16.msra.mxu0 %v9667
  %10001 = vmatprep.subr.bf16.mxu0 %v9664
  %10002 = vmatpush1.bf16.msra.mxu0 %v9663
  %10003 = vmatprep.subr.bf16.mxu0 %v9660
  %10004 = vmatpush1.bf16.msra.mxu0 %v9659
  %10005 = vmatprep.subr.bf16.mxu0 %v9656
  %10006 = vmatpush1.bf16.msra.mxu0 %v9655
  %10007 = vmatprep.subr.bf16.mxu0 %v9652
  %10008 = vmatpush1.bf16.msra.mxu0 %v9651
  %10009 = vmatprep.subr.bf16.mxu0 %v9648
  %10010 = vmatpush1.bf16.msra.mxu0 %v9647
  %10011 = vmatprep.subr.bf16.mxu0 %v9644
  %10012 = vmatpush1.bf16.msra.mxu0 %v9643
  %10013 = vmatprep.subr.bf16.mxu0 %v9640
  %10014 = vmatpush1.bf16.msra.mxu0 %v9639
  %10015 = vmatprep.subr.bf16.mxu0 %v9700
  %10016 = vmatpush2.bf16.msra.mxu0 %v9699
  %10017 = vmatprep.subr.bf16.mxu0 %v9696
  %10018 = vmatpush2.bf16.msra.mxu0 %v9695
  %10019 = vmatprep.subr.bf16.mxu0 %v9692
  %10020 = vmatpush2.bf16.msra.mxu0 %v9691
  %10021 = vmatprep.subr.bf16.mxu0 %v9688
  %10022 = vmatpush2.bf16.msra.mxu0 %v9687
  %10023 = vmatprep.subr.bf16.mxu0 %v9684
  %10024 = vmatpush2.bf16.msra.mxu0 %v9683
  %10025 = vmatprep.subr.bf16.mxu0 %v9680
  %10026 = vmatpush2.bf16.msra.mxu0 %v9679
  %10027 = vmatprep.subr.bf16.mxu0 %v9676
  %10028 = vmatpush2.bf16.msra.mxu0 %v9675
  %10029 = vmatprep.subr.bf16.mxu0 %v9672
  %10030 = vmatpush2.bf16.msra.mxu0 %v9671
  %10031 = vmatprep.mubr.bf16.mxu0 %v9096
  %10032 = vmatmul.mubr.bf16.gmra.mxu0 %v9095
  %v10033 = vpop.f32.mrf.mxu0
  %v10034 = vadd.f32 %v9244, %v10033
  %v10035 = vpop.f32.mrf.mxu0
  %v10036 = vadd.f32 %v9248, %v10035
  %v10037 = vpop.f32.mrf.mxu0
  %v10038 = vadd.f32 %v9244, %v10037
  %v10039 = vpop.f32.mrf.mxu0
  %v10040 = vadd.f32 %v9248, %v10039
  %10041 = vmatprep.mubr.bf16.mxu0 %v9100
  %10042 = vmatmul.mubr.bf16.gmra.mxu0 %v9099
  %v10043 = vpop.f32.mrf.mxu0
  %v10044 = vadd.f32 %v9244, %v10043
  %v10045 = vpop.f32.mrf.mxu0
  %v10046 = vadd.f32 %v9248, %v10045
  %v10047 = vpop.f32.mrf.mxu0
  %v10048 = vadd.f32 %v9244, %v10047
  %v10049 = vpop.f32.mrf.mxu0
  %v10050 = vadd.f32 %v9248, %v10049
  %10051 = vdwg.mxu0
  %10052 = vmatprep.subr.bf16.mxu0 %v9732
  %10053 = vmatpush1.bf16.msra.mxu0 %v9731
  %10054 = vmatprep.subr.bf16.mxu0 %v9728
  %10055 = vmatpush1.bf16.msra.mxu0 %v9727
  %10056 = vmatprep.subr.bf16.mxu0 %v9724
  %10057 = vmatpush1.bf16.msra.mxu0 %v9723
  %10058 = vmatprep.subr.bf16.mxu0 %v9720
  %10059 = vmatpush1.bf16.msra.mxu0 %v9719
  %10060 = vmatprep.subr.bf16.mxu0 %v9716
  %10061 = vmatpush1.bf16.msra.mxu0 %v9715
  %10062 = vmatprep.subr.bf16.mxu0 %v9712
  %10063 = vmatpush1.bf16.msra.mxu0 %v9711
  %10064 = vmatprep.subr.bf16.mxu0 %v9708
  %10065 = vmatpush1.bf16.msra.mxu0 %v9707
  %10066 = vmatprep.subr.bf16.mxu0 %v9704
  %10067 = vmatpush1.bf16.msra.mxu0 %v9703
  %10068 = vmatprep.subr.bf16.mxu0 %v9764
  %10069 = vmatpush2.bf16.msra.mxu0 %v9763
  %10070 = vmatprep.subr.bf16.mxu0 %v9760
  %10071 = vmatpush2.bf16.msra.mxu0 %v9759
  %10072 = vmatprep.subr.bf16.mxu0 %v9756
  %10073 = vmatpush2.bf16.msra.mxu0 %v9755
  %10074 = vmatprep.subr.bf16.mxu0 %v9752
  %10075 = vmatpush2.bf16.msra.mxu0 %v9751
  %10076 = vmatprep.subr.bf16.mxu0 %v9748
  %10077 = vmatpush2.bf16.msra.mxu0 %v9747
  %10078 = vmatprep.subr.bf16.mxu0 %v9744
  %10079 = vmatpush2.bf16.msra.mxu0 %v9743
  %10080 = vmatprep.subr.bf16.mxu0 %v9740
  %10081 = vmatpush2.bf16.msra.mxu0 %v9739
  %10082 = vmatprep.subr.bf16.mxu0 %v9736
  %10083 = vmatpush2.bf16.msra.mxu0 %v9735
  %10084 = vmatprep.mubr.bf16.mxu0 %v9098
  %10085 = vmatmul.mubr.bf16.gmra.mxu0 %v9097
  %v10086 = vpop.f32.mrf.mxu0
  %v10087 = vadd.f32 %v10034, %v10086
  %v10088 = vpop.f32.mrf.mxu0
  %v10089 = vadd.f32 %v10036, %v10088
  %v10090 = vpop.f32.mrf.mxu0
  %v10091 = vadd.f32 %v10038, %v10090
  %v10092 = vpop.f32.mrf.mxu0
  %v10093 = vadd.f32 %v10040, %v10092
  %10094 = vmatprep.mubr.bf16.mxu0 %v9102
  %10095 = vmatmul.mubr.bf16.gmra.mxu0 %v9101
  %v10096 = vpop.f32.mrf.mxu0
  %v10097 = vadd.f32 %v10044, %v10096
  %v10098 = vpop.f32.mrf.mxu0
  %v10099 = vadd.f32 %v10046, %v10098
  %v10100 = vpop.f32.mrf.mxu0
  %v10101 = vadd.f32 %v10048, %v10100
  %v10102 = vpop.f32.mrf.mxu0
  %v10103 = vadd.f32 %v10050, %v10102
  %10104 = vdwg.mxu0
  %v10105 = vadd.f32 %v9981, %v9983
  %v10106 = vadd.f32 %v10105, %v10087
  %v10107 = vadd.f32 %v10106, %v10089
  %10108 = vadd.xlane.f32.xlu0 %v10107
  %v10109 = vpop.xlane.xlu0 %10108
  %v10110 = vadd.f32 %v9985, %v9987
  %v10111 = vadd.f32 %v10110, %v10091
  %v10112 = vadd.f32 %v10111, %v10093
  %10113 = vadd.xlane.f32.xlu0 %v10112
  %v10114 = vpop.xlane.xlu0 %10113
  %v10115 = vadd.f32 %v9991, %v9993
  %v10116 = vadd.f32 %v10115, %v10097
  %v10117 = vadd.f32 %v10116, %v10099
  %10118 = vadd.xlane.f32.xlu0 %v10117
  %v10119 = vpop.xlane.xlu0 %10118
  %v10120 = vadd.f32 %v9995, %v9997
  %v10121 = vadd.f32 %v10120, %v10101
  %v10122 = vadd.f32 %v10121, %v10103
  %10123 = vadd.xlane.f32.xlu0 %v10122
  %v10124 = vpop.xlane.xlu0 %10123
  %v10125 = vmul.f32 %v10109, %v8918
  %v10126 = vmul.f32 %v10114, %v8918
  %v10127 = vmul.f32 %v10119, %v8918
  %v10128 = vmul.f32 %v10124, %v8918
  %v10129 = vsub.f32 %v9981, %v10125
  %v10130 = vsub.f32 %v9983, %v10125
  %v10131 = vsub.f32 %v10087, %v10125
  %v10132 = vsub.f32 %v10089, %v10125
  %v10133 = vsub.f32 %v9985, %v10126
  %v10134 = vsub.f32 %v9987, %v10126
  %v10135 = vsub.f32 %v10091, %v10126
  %v10136 = vsub.f32 %v10093, %v10126
  %v10137 = vsub.f32 %v9991, %v10127
  %v10138 = vsub.f32 %v9993, %v10127
  %v10139 = vsub.f32 %v10097, %v10127
  %v10140 = vsub.f32 %v10099, %v10127
  %v10141 = vsub.f32 %v9995, %v10128
  %v10142 = vsub.f32 %v9997, %v10128
  %v10143 = vsub.f32 %v10101, %v10128
  %v10144 = vsub.f32 %v10103, %v10128
  %v10145 = vmul.f32 %v10129, %v10129
  %v10146 = vmul.f32 %v10130, %v10130
  %v10147 = vmul.f32 %v10131, %v10131
  %v10148 = vmul.f32 %v10132, %v10132
  %v10149 = vmul.f32 %v10133, %v10133
  %v10150 = vmul.f32 %v10134, %v10134
  %v10151 = vmul.f32 %v10135, %v10135
  %v10152 = vmul.f32 %v10136, %v10136
  %v10153 = vmul.f32 %v10137, %v10137
  %v10154 = vmul.f32 %v10138, %v10138
  %v10155 = vmul.f32 %v10139, %v10139
  %v10156 = vmul.f32 %v10140, %v10140
  %v10157 = vmul.f32 %v10141, %v10141
  %v10158 = vmul.f32 %v10142, %v10142
  %v10159 = vmul.f32 %v10143, %v10143
  %v10160 = vmul.f32 %v10144, %v10144
  %v10161 = vadd.f32 %v10145, %v10146
  %v10162 = vadd.f32 %v10161, %v10147
  %v10163 = vadd.f32 %v10162, %v10148
  %10164 = vadd.xlane.f32.xlu0 %v10163
  %v10165 = vpop.xlane.xlu0 %10164
  %v10166 = vadd.f32 %v10149, %v10150
  %v10167 = vadd.f32 %v10166, %v10151
  %v10168 = vadd.f32 %v10167, %v10152
  %10169 = vadd.xlane.f32.xlu0 %v10168
  %v10170 = vpop.xlane.xlu0 %10169
  %v10171 = vadd.f32 %v10153, %v10154
  %v10172 = vadd.f32 %v10171, %v10155
  %v10173 = vadd.f32 %v10172, %v10156
  %10174 = vadd.xlane.f32.xlu0 %v10173
  %v10175 = vpop.xlane.xlu0 %10174
  %v10176 = vadd.f32 %v10157, %v10158
  %v10177 = vadd.f32 %v10176, %v10159
  %v10178 = vadd.f32 %v10177, %v10160
  %10179 = vadd.xlane.f32.xlu0 %v10178
  %v10180 = vpop.xlane.xlu0 %10179
  %v10181 = vmul.f32 %v10165, %v8918
  %v10182 = vmul.f32 %v10170, %v8918
  %v10183 = vmul.f32 %v10175, %v8918
  %v10184 = vmul.f32 %v10180, %v8918
  %v10185 = vadd.f32 %v10181, 1e-05
  %v10186 = vadd.f32 %v10182, 1e-05
  %v10187 = vadd.f32 %v10183, 1e-05
  %v10188 = vadd.f32 %v10184, 1e-05
  %v10189 = vrsqrt.pop %v10185
  %v10190 = vrsqrt.pop %v10186
  %v10191 = vrsqrt.pop %v10187
  %v10192 = vrsqrt.pop %v10188
  %v10193 = vmul.f32 %v10129, %v10189
  %v10194 = vmul.f32 %v10130, %v10189
  %v10195 = vmul.f32 %v10131, %v10189
  %v10196 = vmul.f32 %v10132, %v10189
  %v10197 = vmul.f32 %v10133, %v10190
  %v10198 = vmul.f32 %v10134, %v10190
  %v10199 = vmul.f32 %v10135, %v10190
  %v10200 = vmul.f32 %v10136, %v10190
  %v10201 = vmul.f32 %v10137, %v10191
  %v10202 = vmul.f32 %v10138, %v10191
  %v10203 = vmul.f32 %v10139, %v10191
  %v10204 = vmul.f32 %v10140, %v10191
  %v10205 = vmul.f32 %v10141, %v10192
  %v10206 = vmul.f32 %v10142, %v10192
  %v10207 = vmul.f32 %v10143, %v10192
  %v10208 = vmul.f32 %v10144, %v10192
  %v10209 = vld [vmem:[%s43] sm:$0xf]
  %v10211 = vlaneseq
  %v10212 = vshrl.u32 %v10211, 7
  %v10213 = vsub.s32 0, %v10212
  %v10214 = vrot.slane %v10209, %v10213
  %v10215 = vlaneseq
  %v10216 = vshrl.u32 %v10215, 7
  %v10217 = vsub.s32 1, %v10216
  %v10218 = vrot.slane %v10209, %v10217
  %v10219 = vlaneseq
  %v10220 = vshrl.u32 %v10219, 7
  %v10221 = vsub.s32 2, %v10220
  %v10222 = vrot.slane %v10209, %v10221
  %v10223 = vlaneseq
  %v10224 = vshrl.u32 %v10223, 7
  %v10225 = vsub.s32 3, %v10224
  %v10226 = vrot.slane %v10209, %v10225
  %v10231 = vmul.f32 %v10193, %v10214
  %v10232 = vmul.f32 %v10194, %v10218
  %v10233 = vmul.f32 %v10195, %v10222
  %v10234 = vmul.f32 %v10196, %v10226
  %v10235 = vmul.f32 %v10197, %v10214
  %v10236 = vmul.f32 %v10198, %v10218
  %v10237 = vmul.f32 %v10199, %v10222
  %v10238 = vmul.f32 %v10200, %v10226
  %v10239 = vmul.f32 %v10201, %v10214
  %v10240 = vmul.f32 %v10202, %v10218
  %v10241 = vmul.f32 %v10203, %v10222
  %v10242 = vmul.f32 %v10204, %v10226
  %v10243 = vmul.f32 %v10205, %v10214
  %v10244 = vmul.f32 %v10206, %v10218
  %v10245 = vmul.f32 %v10207, %v10222
  %v10246 = vmul.f32 %v10208, %v10226
  %v10247 = vld [vmem:[%s45] sm:$0xf]
  %v10249 = vlaneseq
  %v10250 = vshrl.u32 %v10249, 7
  %v10251 = vsub.s32 0, %v10250
  %v10252 = vrot.slane %v10247, %v10251
  %v10253 = vlaneseq
  %v10254 = vshrl.u32 %v10253, 7
  %v10255 = vsub.s32 1, %v10254
  %v10256 = vrot.slane %v10247, %v10255
  %v10257 = vlaneseq
  %v10258 = vshrl.u32 %v10257, 7
  %v10259 = vsub.s32 2, %v10258
  %v10260 = vrot.slane %v10247, %v10259
  %v10261 = vlaneseq
  %v10262 = vshrl.u32 %v10261, 7
  %v10263 = vsub.s32 3, %v10262
  %v10264 = vrot.slane %v10247, %v10263
  %v10269 = vadd.f32 %v10231, %v10252
  %v10270 = vadd.f32 %v10232, %v10256
  %v10271 = vadd.f32 %v10233, %v10260
  %v10272 = vadd.f32 %v10234, %v10264
  %v10273 = vadd.f32 %v10235, %v10252
  %v10274 = vadd.f32 %v10236, %v10256
  %v10275 = vadd.f32 %v10237, %v10260
  %v10276 = vadd.f32 %v10238, %v10264
  %v10277 = vadd.f32 %v10239, %v10252
  %v10278 = vadd.f32 %v10240, %v10256
  %v10279 = vadd.f32 %v10241, %v10260
  %v10280 = vadd.f32 %v10242, %v10264
  %v10281 = vadd.f32 %v10243, %v10252
  %v10282 = vadd.f32 %v10244, %v10256
  %v10283 = vadd.f32 %v10245, %v10260
  %v10284 = vadd.f32 %v10246, %v10264
  %v10285 = vmax.f32 %v10269, 0.0
  %v10286 = vmax.f32 %v10270, 0.0
  %v10287 = vmax.f32 %v10271, 0.0
  %v10288 = vmax.f32 %v10272, 0.0
  %v10289 = vmax.f32 %v10273, 0.0
  %v10290 = vmax.f32 %v10274, 0.0
  %v10291 = vmax.f32 %v10275, 0.0
  %v10292 = vmax.f32 %v10276, 0.0
  %v10293 = vmax.f32 %v10277, 0.0
  %v10294 = vmax.f32 %v10278, 0.0
  %v10295 = vmax.f32 %v10279, 0.0
  %v10296 = vmax.f32 %v10280, 0.0
  %v10297 = vmax.f32 %v10281, 0.0
  %v10298 = vmax.f32 %v10282, 0.0
  %v10299 = vmax.f32 %v10283, 0.0
  %v10300 = vmax.f32 %v10284, 0.0
  %v10301 = vpack.c.bf16 %v10289, %v10285
  %v10302 = vpack.c.bf16 %v10290, %v10286
  %v10303 = vpack.c.bf16 %v10291, %v10287
  %v10304 = vpack.c.bf16 %v10292, %v10288
  %v10305 = vpack.c.bf16 %v10297, %v10293
  %v10306 = vpack.c.bf16 %v10298, %v10294
  %v10307 = vpack.c.bf16 %v10299, %v10295
  %v10308 = vpack.c.bf16 %v10300, %v10296
  %v10309 = vld [vmem:[%s47] sm:$0xff]
  %v10310 = vld [vmem:[%s47 + $0x8] sm:$0xff]
  %v10311 = vld [vmem:[%s47 + $0x10] sm:$0xff]
  %v10312 = vld [vmem:[%s47 + $0x18] sm:$0xff]
  %v10313 = vld [vmem:[%s47 + $0x20] sm:$0xff]
  %v10314 = vld [vmem:[%s47 + $0x28] sm:$0xff]
  %v10315 = vld [vmem:[%s47 + $0x30] sm:$0xff]
  %v10316 = vld [vmem:[%s47 + $0x38] sm:$0xff]
  %v10317 = vld [vmem:[%s47 + $0x40] sm:$0xff]
  %v10318 = vld [vmem:[%s47 + $0x48] sm:$0xff]
  %v10319 = vld [vmem:[%s47 + $0x50] sm:$0xff]
  %v10320 = vld [vmem:[%s47 + $0x58] sm:$0xff]
  %v10321 = vld [vmem:[%s47 + $0x60] sm:$0xff]
  %v10322 = vld [vmem:[%s47 + $0x68] sm:$0xff]
  %v10323 = vld [vmem:[%s47 + $0x70] sm:$0xff]
  %v10324 = vld [vmem:[%s47 + $0x78] sm:$0xff]
  %v10325 = vld [vmem:[%s47 + $0x80] sm:$0xff]
  %v10326 = vld [vmem:[%s47 + $0x88] sm:$0xff]
  %v10327 = vld [vmem:[%s47 + $0x90] sm:$0xff]
  %v10328 = vld [vmem:[%s47 + $0x98] sm:$0xff]
  %v10329 = vld [vmem:[%s47 + $0xa0] sm:$0xff]
  %v10330 = vld [vmem:[%s47 + $0xa8] sm:$0xff]
  %v10331 = vld [vmem:[%s47 + $0xb0] sm:$0xff]
  %v10332 = vld [vmem:[%s47 + $0xb8] sm:$0xff]
  %v10333 = vld [vmem:[%s47 + $0xc0] sm:$0xff]
  %v10334 = vld [vmem:[%s47 + $0xc8] sm:$0xff]
  %v10335 = vld [vmem:[%s47 + $0xd0] sm:$0xff]
  %v10336 = vld [vmem:[%s47 + $0xd8] sm:$0xff]
  %v10337 = vld [vmem:[%s47 + $0xe0] sm:$0xff]
  %v10338 = vld [vmem:[%s47 + $0xe8] sm:$0xff]
  %v10339 = vld [vmem:[%s47 + $0xf0] sm:$0xff]
  %v10340 = vld [vmem:[%s47 + $0xf8] sm:$0xff]
  %v10341 = vld [vmem:[%s47 + $0x100] sm:$0xff]
  %v10342 = vld [vmem:[%s47 + $0x108] sm:$0xff]
  %v10343 = vld [vmem:[%s47 + $0x110] sm:$0xff]
  %v10344 = vld [vmem:[%s47 + $0x118] sm:$0xff]
  %v10345 = vld [vmem:[%s47 + $0x120] sm:$0xff]
  %v10346 = vld [vmem:[%s47 + $0x128] sm:$0xff]
  %v10347 = vld [vmem:[%s47 + $0x130] sm:$0xff]
  %v10348 = vld [vmem:[%s47 + $0x138] sm:$0xff]
  %v10349 = vld [vmem:[%s47 + $0x140] sm:$0xff]
  %v10350 = vld [vmem:[%s47 + $0x148] sm:$0xff]
  %v10351 = vld [vmem:[%s47 + $0x150] sm:$0xff]
  %v10352 = vld [vmem:[%s47 + $0x158] sm:$0xff]
  %v10353 = vld [vmem:[%s47 + $0x160] sm:$0xff]
  %v10354 = vld [vmem:[%s47 + $0x168] sm:$0xff]
  %v10355 = vld [vmem:[%s47 + $0x170] sm:$0xff]
  %v10356 = vld [vmem:[%s47 + $0x178] sm:$0xff]
  %v10357 = vld [vmem:[%s47 + $0x180] sm:$0xff]
  %v10358 = vld [vmem:[%s47 + $0x188] sm:$0xff]
  %v10359 = vld [vmem:[%s47 + $0x190] sm:$0xff]
  %v10360 = vld [vmem:[%s47 + $0x198] sm:$0xff]
  %v10361 = vld [vmem:[%s47 + $0x1a0] sm:$0xff]
  %v10362 = vld [vmem:[%s47 + $0x1a8] sm:$0xff]
  %v10363 = vld [vmem:[%s47 + $0x1b0] sm:$0xff]
  %v10364 = vld [vmem:[%s47 + $0x1b8] sm:$0xff]
  %v10365 = vld [vmem:[%s47 + $0x1c0] sm:$0xff]
  %v10366 = vld [vmem:[%s47 + $0x1c8] sm:$0xff]
  %v10367 = vld [vmem:[%s47 + $0x1d0] sm:$0xff]
  %v10368 = vld [vmem:[%s47 + $0x1d8] sm:$0xff]
  %v10369 = vld [vmem:[%s47 + $0x1e0] sm:$0xff]
  %v10370 = vld [vmem:[%s47 + $0x1e8] sm:$0xff]
  %v10371 = vld [vmem:[%s47 + $0x1f0] sm:$0xff]
  %v10372 = vld [vmem:[%s47 + $0x1f8] sm:$0xff]
  %v10373 = vld [vmem:[%s47 + $0x200] sm:$0xff]
  %v10374 = vld [vmem:[%s47 + $0x208] sm:$0xff]
  %v10375 = vld [vmem:[%s47 + $0x210] sm:$0xff]
  %v10376 = vld [vmem:[%s47 + $0x218] sm:$0xff]
  %v10377 = vld [vmem:[%s47 + $0x220] sm:$0xff]
  %v10378 = vld [vmem:[%s47 + $0x228] sm:$0xff]
  %v10379 = vld [vmem:[%s47 + $0x230] sm:$0xff]
  %v10380 = vld [vmem:[%s47 + $0x238] sm:$0xff]
  %v10381 = vld [vmem:[%s47 + $0x240] sm:$0xff]
  %v10382 = vld [vmem:[%s47 + $0x248] sm:$0xff]
  %v10383 = vld [vmem:[%s47 + $0x250] sm:$0xff]
  %v10384 = vld [vmem:[%s47 + $0x258] sm:$0xff]
  %v10385 = vld [vmem:[%s47 + $0x260] sm:$0xff]
  %v10386 = vld [vmem:[%s47 + $0x268] sm:$0xff]
  %v10387 = vld [vmem:[%s47 + $0x270] sm:$0xff]
  %v10388 = vld [vmem:[%s47 + $0x278] sm:$0xff]
  %v10389 = vld [vmem:[%s47 + $0x280] sm:$0xff]
  %v10390 = vld [vmem:[%s47 + $0x288] sm:$0xff]
  %v10391 = vld [vmem:[%s47 + $0x290] sm:$0xff]
  %v10392 = vld [vmem:[%s47 + $0x298] sm:$0xff]
  %v10393 = vld [vmem:[%s47 + $0x2a0] sm:$0xff]
  %v10394 = vld [vmem:[%s47 + $0x2a8] sm:$0xff]
  %v10395 = vld [vmem:[%s47 + $0x2b0] sm:$0xff]
  %v10396 = vld [vmem:[%s47 + $0x2b8] sm:$0xff]
  %v10397 = vld [vmem:[%s47 + $0x2c0] sm:$0xff]
  %v10398 = vld [vmem:[%s47 + $0x2c8] sm:$0xff]
  %v10399 = vld [vmem:[%s47 + $0x2d0] sm:$0xff]
  %v10400 = vld [vmem:[%s47 + $0x2d8] sm:$0xff]
  %v10401 = vld [vmem:[%s47 + $0x2e0] sm:$0xff]
  %v10402 = vld [vmem:[%s47 + $0x2e8] sm:$0xff]
  %v10403 = vld [vmem:[%s47 + $0x2f0] sm:$0xff]
  %v10404 = vld [vmem:[%s47 + $0x2f8] sm:$0xff]
  %v10405 = vld [vmem:[%s47 + $0x300] sm:$0xff]
  %v10406 = vld [vmem:[%s47 + $0x308] sm:$0xff]
  %v10407 = vld [vmem:[%s47 + $0x310] sm:$0xff]
  %v10408 = vld [vmem:[%s47 + $0x318] sm:$0xff]
  %v10409 = vld [vmem:[%s47 + $0x320] sm:$0xff]
  %v10410 = vld [vmem:[%s47 + $0x328] sm:$0xff]
  %v10411 = vld [vmem:[%s47 + $0x330] sm:$0xff]
  %v10412 = vld [vmem:[%s47 + $0x338] sm:$0xff]
  %v10413 = vld [vmem:[%s47 + $0x340] sm:$0xff]
  %v10414 = vld [vmem:[%s47 + $0x348] sm:$0xff]
  %v10415 = vld [vmem:[%s47 + $0x350] sm:$0xff]
  %v10416 = vld [vmem:[%s47 + $0x358] sm:$0xff]
  %v10417 = vld [vmem:[%s47 + $0x360] sm:$0xff]
  %v10418 = vld [vmem:[%s47 + $0x368] sm:$0xff]
  %v10419 = vld [vmem:[%s47 + $0x370] sm:$0xff]
  %v10420 = vld [vmem:[%s47 + $0x378] sm:$0xff]
  %v10421 = vld [vmem:[%s47 + $0x380] sm:$0xff]
  %v10422 = vld [vmem:[%s47 + $0x388] sm:$0xff]
  %v10423 = vld [vmem:[%s47 + $0x390] sm:$0xff]
  %v10424 = vld [vmem:[%s47 + $0x398] sm:$0xff]
  %v10425 = vld [vmem:[%s47 + $0x3a0] sm:$0xff]
  %v10426 = vld [vmem:[%s47 + $0x3a8] sm:$0xff]
  %v10427 = vld [vmem:[%s47 + $0x3b0] sm:$0xff]
  %v10428 = vld [vmem:[%s47 + $0x3b8] sm:$0xff]
  %v10429 = vld [vmem:[%s47 + $0x3c0] sm:$0xff]
  %v10430 = vld [vmem:[%s47 + $0x3c8] sm:$0xff]
  %v10431 = vld [vmem:[%s47 + $0x3d0] sm:$0xff]
  %v10432 = vld [vmem:[%s47 + $0x3d8] sm:$0xff]
  %v10433 = vld [vmem:[%s47 + $0x3e0] sm:$0xff]
  %v10434 = vld [vmem:[%s47 + $0x3e8] sm:$0xff]
  %v10435 = vld [vmem:[%s47 + $0x3f0] sm:$0xff]
  %v10436 = vld [vmem:[%s47 + $0x3f8] sm:$0xff]
  %v10437 = vld [vmem:[%s49] sm:$0xf]
  %v10439 = vlaneseq
  %v10440 = vshrl.u32 %v10439, 7
  %v10441 = vsub.s32 0, %v10440
  %v10442 = vrot.slane %v10437, %v10441
  %v10443 = vlaneseq
  %v10444 = vshrl.u32 %v10443, 7
  %v10445 = vsub.s32 1, %v10444
  %v10446 = vrot.slane %v10437, %v10445
  %v10447 = vlaneseq
  %v10448 = vshrl.u32 %v10447, 7
  %v10449 = vsub.s32 2, %v10448
  %v10450 = vrot.slane %v10437, %v10449
  %v10451 = vlaneseq
  %v10452 = vshrl.u32 %v10451, 7
  %v10453 = vsub.s32 3, %v10452
  %v10454 = vrot.slane %v10437, %v10453
  %v10587 = vunpack.c.l.b16 %v10309
  %v10588 = vunpack.c.h.b16 %v10309
  %v10589 = vunpack.c.l.b16 %v10310
  %v10590 = vunpack.c.h.b16 %v10310
  %v10591 = vunpack.c.l.b16 %v10311
  %v10592 = vunpack.c.h.b16 %v10311
  %v10593 = vunpack.c.l.b16 %v10312
  %v10594 = vunpack.c.h.b16 %v10312
  %v10595 = vunpack.c.l.b16 %v10313
  %v10596 = vunpack.c.h.b16 %v10313
  %v10597 = vunpack.c.l.b16 %v10314
  %v10598 = vunpack.c.h.b16 %v10314
  %v10599 = vunpack.c.l.b16 %v10315
  %v10600 = vunpack.c.h.b16 %v10315
  %v10601 = vunpack.c.l.b16 %v10316
  %v10602 = vunpack.c.h.b16 %v10316
  %v10603 = vunpack.c.l.b16 %v10317
  %v10604 = vunpack.c.h.b16 %v10317
  %v10605 = vunpack.c.l.b16 %v10318
  %v10606 = vunpack.c.h.b16 %v10318
  %v10607 = vunpack.c.l.b16 %v10319
  %v10608 = vunpack.c.h.b16 %v10319
  %v10609 = vunpack.c.l.b16 %v10320
  %v10610 = vunpack.c.h.b16 %v10320
  %v10611 = vunpack.c.l.b16 %v10321
  %v10612 = vunpack.c.h.b16 %v10321
  %v10613 = vunpack.c.l.b16 %v10322
  %v10614 = vunpack.c.h.b16 %v10322
  %v10615 = vunpack.c.l.b16 %v10323
  %v10616 = vunpack.c.h.b16 %v10323
  %v10617 = vunpack.c.l.b16 %v10324
  %v10618 = vunpack.c.h.b16 %v10324
  %v10619 = vunpack.c.l.b16 %v10325
  %v10620 = vunpack.c.h.b16 %v10325
  %v10621 = vunpack.c.l.b16 %v10326
  %v10622 = vunpack.c.h.b16 %v10326
  %v10623 = vunpack.c.l.b16 %v10327
  %v10624 = vunpack.c.h.b16 %v10327
  %v10625 = vunpack.c.l.b16 %v10328
  %v10626 = vunpack.c.h.b16 %v10328
  %v10627 = vunpack.c.l.b16 %v10329
  %v10628 = vunpack.c.h.b16 %v10329
  %v10629 = vunpack.c.l.b16 %v10330
  %v10630 = vunpack.c.h.b16 %v10330
  %v10631 = vunpack.c.l.b16 %v10331
  %v10632 = vunpack.c.h.b16 %v10331
  %v10633 = vunpack.c.l.b16 %v10332
  %v10634 = vunpack.c.h.b16 %v10332
  %v10635 = vunpack.c.l.b16 %v10333
  %v10636 = vunpack.c.h.b16 %v10333
  %v10637 = vunpack.c.l.b16 %v10334
  %v10638 = vunpack.c.h.b16 %v10334
  %v10639 = vunpack.c.l.b16 %v10335
  %v10640 = vunpack.c.h.b16 %v10335
  %v10641 = vunpack.c.l.b16 %v10336
  %v10642 = vunpack.c.h.b16 %v10336
  %v10643 = vunpack.c.l.b16 %v10337
  %v10644 = vunpack.c.h.b16 %v10337
  %v10645 = vunpack.c.l.b16 %v10338
  %v10646 = vunpack.c.h.b16 %v10338
  %v10647 = vunpack.c.l.b16 %v10339
  %v10648 = vunpack.c.h.b16 %v10339
  %v10649 = vunpack.c.l.b16 %v10340
  %v10650 = vunpack.c.h.b16 %v10340
  %v10651 = vunpack.c.l.b16 %v10341
  %v10652 = vunpack.c.h.b16 %v10341
  %v10653 = vunpack.c.l.b16 %v10342
  %v10654 = vunpack.c.h.b16 %v10342
  %v10655 = vunpack.c.l.b16 %v10343
  %v10656 = vunpack.c.h.b16 %v10343
  %v10657 = vunpack.c.l.b16 %v10344
  %v10658 = vunpack.c.h.b16 %v10344
  %v10659 = vunpack.c.l.b16 %v10345
  %v10660 = vunpack.c.h.b16 %v10345
  %v10661 = vunpack.c.l.b16 %v10346
  %v10662 = vunpack.c.h.b16 %v10346
  %v10663 = vunpack.c.l.b16 %v10347
  %v10664 = vunpack.c.h.b16 %v10347
  %v10665 = vunpack.c.l.b16 %v10348
  %v10666 = vunpack.c.h.b16 %v10348
  %v10667 = vunpack.c.l.b16 %v10349
  %v10668 = vunpack.c.h.b16 %v10349
  %v10669 = vunpack.c.l.b16 %v10350
  %v10670 = vunpack.c.h.b16 %v10350
  %v10671 = vunpack.c.l.b16 %v10351
  %v10672 = vunpack.c.h.b16 %v10351
  %v10673 = vunpack.c.l.b16 %v10352
  %v10674 = vunpack.c.h.b16 %v10352
  %v10675 = vunpack.c.l.b16 %v10353
  %v10676 = vunpack.c.h.b16 %v10353
  %v10677 = vunpack.c.l.b16 %v10354
  %v10678 = vunpack.c.h.b16 %v10354
  %v10679 = vunpack.c.l.b16 %v10355
  %v10680 = vunpack.c.h.b16 %v10355
  %v10681 = vunpack.c.l.b16 %v10356
  %v10682 = vunpack.c.h.b16 %v10356
  %v10683 = vunpack.c.l.b16 %v10357
  %v10684 = vunpack.c.h.b16 %v10357
  %v10685 = vunpack.c.l.b16 %v10358
  %v10686 = vunpack.c.h.b16 %v10358
  %v10687 = vunpack.c.l.b16 %v10359
  %v10688 = vunpack.c.h.b16 %v10359
  %v10689 = vunpack.c.l.b16 %v10360
  %v10690 = vunpack.c.h.b16 %v10360
  %v10691 = vunpack.c.l.b16 %v10361
  %v10692 = vunpack.c.h.b16 %v10361
  %v10693 = vunpack.c.l.b16 %v10362
  %v10694 = vunpack.c.h.b16 %v10362
  %v10695 = vunpack.c.l.b16 %v10363
  %v10696 = vunpack.c.h.b16 %v10363
  %v10697 = vunpack.c.l.b16 %v10364
  %v10698 = vunpack.c.h.b16 %v10364
  %v10699 = vunpack.c.l.b16 %v10365
  %v10700 = vunpack.c.h.b16 %v10365
  %v10701 = vunpack.c.l.b16 %v10366
  %v10702 = vunpack.c.h.b16 %v10366
  %v10703 = vunpack.c.l.b16 %v10367
  %v10704 = vunpack.c.h.b16 %v10367
  %v10705 = vunpack.c.l.b16 %v10368
  %v10706 = vunpack.c.h.b16 %v10368
  %v10707 = vunpack.c.l.b16 %v10369
  %v10708 = vunpack.c.h.b16 %v10369
  %v10709 = vunpack.c.l.b16 %v10370
  %v10710 = vunpack.c.h.b16 %v10370
  %v10711 = vunpack.c.l.b16 %v10371
  %v10712 = vunpack.c.h.b16 %v10371
  %v10713 = vunpack.c.l.b16 %v10372
  %v10714 = vunpack.c.h.b16 %v10372
  %v10715 = vunpack.c.l.b16 %v10373
  %v10716 = vunpack.c.h.b16 %v10373
  %v10717 = vunpack.c.l.b16 %v10374
  %v10718 = vunpack.c.h.b16 %v10374
  %v10719 = vunpack.c.l.b16 %v10375
  %v10720 = vunpack.c.h.b16 %v10375
  %v10721 = vunpack.c.l.b16 %v10376
  %v10722 = vunpack.c.h.b16 %v10376
  %v10723 = vunpack.c.l.b16 %v10377
  %v10724 = vunpack.c.h.b16 %v10377
  %v10725 = vunpack.c.l.b16 %v10378
  %v10726 = vunpack.c.h.b16 %v10378
  %v10727 = vunpack.c.l.b16 %v10379
  %v10728 = vunpack.c.h.b16 %v10379
  %v10729 = vunpack.c.l.b16 %v10380
  %v10730 = vunpack.c.h.b16 %v10380
  %v10731 = vunpack.c.l.b16 %v10381
  %v10732 = vunpack.c.h.b16 %v10381
  %v10733 = vunpack.c.l.b16 %v10382
  %v10734 = vunpack.c.h.b16 %v10382
  %v10735 = vunpack.c.l.b16 %v10383
  %v10736 = vunpack.c.h.b16 %v10383
  %v10737 = vunpack.c.l.b16 %v10384
  %v10738 = vunpack.c.h.b16 %v10384
  %v10739 = vunpack.c.l.b16 %v10385
  %v10740 = vunpack.c.h.b16 %v10385
  %v10741 = vunpack.c.l.b16 %v10386
  %v10742 = vunpack.c.h.b16 %v10386
  %v10743 = vunpack.c.l.b16 %v10387
  %v10744 = vunpack.c.h.b16 %v10387
  %v10745 = vunpack.c.l.b16 %v10388
  %v10746 = vunpack.c.h.b16 %v10388
  %v10747 = vunpack.c.l.b16 %v10389
  %v10748 = vunpack.c.h.b16 %v10389
  %v10749 = vunpack.c.l.b16 %v10390
  %v10750 = vunpack.c.h.b16 %v10390
  %v10751 = vunpack.c.l.b16 %v10391
  %v10752 = vunpack.c.h.b16 %v10391
  %v10753 = vunpack.c.l.b16 %v10392
  %v10754 = vunpack.c.h.b16 %v10392
  %v10755 = vunpack.c.l.b16 %v10393
  %v10756 = vunpack.c.h.b16 %v10393
  %v10757 = vunpack.c.l.b16 %v10394
  %v10758 = vunpack.c.h.b16 %v10394
  %v10759 = vunpack.c.l.b16 %v10395
  %v10760 = vunpack.c.h.b16 %v10395
  %v10761 = vunpack.c.l.b16 %v10396
  %v10762 = vunpack.c.h.b16 %v10396
  %v10763 = vunpack.c.l.b16 %v10397
  %v10764 = vunpack.c.h.b16 %v10397
  %v10765 = vunpack.c.l.b16 %v10398
  %v10766 = vunpack.c.h.b16 %v10398
  %v10767 = vunpack.c.l.b16 %v10399
  %v10768 = vunpack.c.h.b16 %v10399
  %v10769 = vunpack.c.l.b16 %v10400
  %v10770 = vunpack.c.h.b16 %v10400
  %v10771 = vunpack.c.l.b16 %v10401
  %v10772 = vunpack.c.h.b16 %v10401
  %v10773 = vunpack.c.l.b16 %v10402
  %v10774 = vunpack.c.h.b16 %v10402
  %v10775 = vunpack.c.l.b16 %v10403
  %v10776 = vunpack.c.h.b16 %v10403
  %v10777 = vunpack.c.l.b16 %v10404
  %v10778 = vunpack.c.h.b16 %v10404
  %v10779 = vunpack.c.l.b16 %v10405
  %v10780 = vunpack.c.h.b16 %v10405
  %v10781 = vunpack.c.l.b16 %v10406
  %v10782 = vunpack.c.h.b16 %v10406
  %v10783 = vunpack.c.l.b16 %v10407
  %v10784 = vunpack.c.h.b16 %v10407
  %v10785 = vunpack.c.l.b16 %v10408
  %v10786 = vunpack.c.h.b16 %v10408
  %v10787 = vunpack.c.l.b16 %v10409
  %v10788 = vunpack.c.h.b16 %v10409
  %v10789 = vunpack.c.l.b16 %v10410
  %v10790 = vunpack.c.h.b16 %v10410
  %v10791 = vunpack.c.l.b16 %v10411
  %v10792 = vunpack.c.h.b16 %v10411
  %v10793 = vunpack.c.l.b16 %v10412
  %v10794 = vunpack.c.h.b16 %v10412
  %v10795 = vunpack.c.l.b16 %v10413
  %v10796 = vunpack.c.h.b16 %v10413
  %v10797 = vunpack.c.l.b16 %v10414
  %v10798 = vunpack.c.h.b16 %v10414
  %v10799 = vunpack.c.l.b16 %v10415
  %v10800 = vunpack.c.h.b16 %v10415
  %v10801 = vunpack.c.l.b16 %v10416
  %v10802 = vunpack.c.h.b16 %v10416
  %v10803 = vunpack.c.l.b16 %v10417
  %v10804 = vunpack.c.h.b16 %v10417
  %v10805 = vunpack.c.l.b16 %v10418
  %v10806 = vunpack.c.h.b16 %v10418
  %v10807 = vunpack.c.l.b16 %v10419
  %v10808 = vunpack.c.h.b16 %v10419
  %v10809 = vunpack.c.l.b16 %v10420
  %v10810 = vunpack.c.h.b16 %v10420
  %v10811 = vunpack.c.l.b16 %v10421
  %v10812 = vunpack.c.h.b16 %v10421
  %v10813 = vunpack.c.l.b16 %v10422
  %v10814 = vunpack.c.h.b16 %v10422
  %v10815 = vunpack.c.l.b16 %v10423
  %v10816 = vunpack.c.h.b16 %v10423
  %v10817 = vunpack.c.l.b16 %v10424
  %v10818 = vunpack.c.h.b16 %v10424
  %v10819 = vunpack.c.l.b16 %v10425
  %v10820 = vunpack.c.h.b16 %v10425
  %v10821 = vunpack.c.l.b16 %v10426
  %v10822 = vunpack.c.h.b16 %v10426
  %v10823 = vunpack.c.l.b16 %v10427
  %v10824 = vunpack.c.h.b16 %v10427
  %v10825 = vunpack.c.l.b16 %v10428
  %v10826 = vunpack.c.h.b16 %v10428
  %v10827 = vunpack.c.l.b16 %v10429
  %v10828 = vunpack.c.h.b16 %v10429
  %v10829 = vunpack.c.l.b16 %v10430
  %v10830 = vunpack.c.h.b16 %v10430
  %v10831 = vunpack.c.l.b16 %v10431
  %v10832 = vunpack.c.h.b16 %v10431
  %v10833 = vunpack.c.l.b16 %v10432
  %v10834 = vunpack.c.h.b16 %v10432
  %v10835 = vunpack.c.l.b16 %v10433
  %v10836 = vunpack.c.h.b16 %v10433
  %v10837 = vunpack.c.l.b16 %v10434
  %v10838 = vunpack.c.h.b16 %v10434
  %v10839 = vunpack.c.l.b16 %v10435
  %v10840 = vunpack.c.h.b16 %v10435
  %v10841 = vunpack.c.l.b16 %v10436
  %v10842 = vunpack.c.h.b16 %v10436
  %v10843 = vpack.c.b16 %v10591, %v10587
  %v10844 = vpack.c.b16 %v10592, %v10588
  %v10845 = vpack.c.b16 %v10593, %v10589
  %v10846 = vpack.c.b16 %v10594, %v10590
  %v10847 = vpack.c.b16 %v10599, %v10595
  %v10848 = vpack.c.b16 %v10600, %v10596
  %v10849 = vpack.c.b16 %v10601, %v10597
  %v10850 = vpack.c.b16 %v10602, %v10598
  %v10851 = vpack.c.b16 %v10607, %v10603
  %v10852 = vpack.c.b16 %v10608, %v10604
  %v10853 = vpack.c.b16 %v10609, %v10605
  %v10854 = vpack.c.b16 %v10610, %v10606
  %v10855 = vpack.c.b16 %v10615, %v10611
  %v10856 = vpack.c.b16 %v10616, %v10612
  %v10857 = vpack.c.b16 %v10617, %v10613
  %v10858 = vpack.c.b16 %v10618, %v10614
  %v10859 = vpack.c.b16 %v10623, %v10619
  %v10860 = vpack.c.b16 %v10624, %v10620
  %v10861 = vpack.c.b16 %v10625, %v10621
  %v10862 = vpack.c.b16 %v10626, %v10622
  %v10863 = vpack.c.b16 %v10631, %v10627
  %v10864 = vpack.c.b16 %v10632, %v10628
  %v10865 = vpack.c.b16 %v10633, %v10629
  %v10866 = vpack.c.b16 %v10634, %v10630
  %v10867 = vpack.c.b16 %v10639, %v10635
  %v10868 = vpack.c.b16 %v10640, %v10636
  %v10869 = vpack.c.b16 %v10641, %v10637
  %v10870 = vpack.c.b16 %v10642, %v10638
  %v10871 = vpack.c.b16 %v10647, %v10643
  %v10872 = vpack.c.b16 %v10648, %v10644
  %v10873 = vpack.c.b16 %v10649, %v10645
  %v10874 = vpack.c.b16 %v10650, %v10646
  %v10875 = vpack.c.b16 %v10655, %v10651
  %v10876 = vpack.c.b16 %v10656, %v10652
  %v10877 = vpack.c.b16 %v10657, %v10653
  %v10878 = vpack.c.b16 %v10658, %v10654
  %v10879 = vpack.c.b16 %v10663, %v10659
  %v10880 = vpack.c.b16 %v10664, %v10660
  %v10881 = vpack.c.b16 %v10665, %v10661
  %v10882 = vpack.c.b16 %v10666, %v10662
  %v10883 = vpack.c.b16 %v10671, %v10667
  %v10884 = vpack.c.b16 %v10672, %v10668
  %v10885 = vpack.c.b16 %v10673, %v10669
  %v10886 = vpack.c.b16 %v10674, %v10670
  %v10887 = vpack.c.b16 %v10679, %v10675
  %v10888 = vpack.c.b16 %v10680, %v10676
  %v10889 = vpack.c.b16 %v10681, %v10677
  %v10890 = vpack.c.b16 %v10682, %v10678
  %v10891 = vpack.c.b16 %v10687, %v10683
  %v10892 = vpack.c.b16 %v10688, %v10684
  %v10893 = vpack.c.b16 %v10689, %v10685
  %v10894 = vpack.c.b16 %v10690, %v10686
  %v10895 = vpack.c.b16 %v10695, %v10691
  %v10896 = vpack.c.b16 %v10696, %v10692
  %v10897 = vpack.c.b16 %v10697, %v10693
  %v10898 = vpack.c.b16 %v10698, %v10694
  %v10899 = vpack.c.b16 %v10703, %v10699
  %v10900 = vpack.c.b16 %v10704, %v10700
  %v10901 = vpack.c.b16 %v10705, %v10701
  %v10902 = vpack.c.b16 %v10706, %v10702
  %v10903 = vpack.c.b16 %v10711, %v10707
  %v10904 = vpack.c.b16 %v10712, %v10708
  %v10905 = vpack.c.b16 %v10713, %v10709
  %v10906 = vpack.c.b16 %v10714, %v10710
  %v10907 = vpack.c.b16 %v10719, %v10715
  %v10908 = vpack.c.b16 %v10720, %v10716
  %v10909 = vpack.c.b16 %v10721, %v10717
  %v10910 = vpack.c.b16 %v10722, %v10718
  %v10911 = vpack.c.b16 %v10727, %v10723
  %v10912 = vpack.c.b16 %v10728, %v10724
  %v10913 = vpack.c.b16 %v10729, %v10725
  %v10914 = vpack.c.b16 %v10730, %v10726
  %v10915 = vpack.c.b16 %v10735, %v10731
  %v10916 = vpack.c.b16 %v10736, %v10732
  %v10917 = vpack.c.b16 %v10737, %v10733
  %v10918 = vpack.c.b16 %v10738, %v10734
  %v10919 = vpack.c.b16 %v10743, %v10739
  %v10920 = vpack.c.b16 %v10744, %v10740
  %v10921 = vpack.c.b16 %v10745, %v10741
  %v10922 = vpack.c.b16 %v10746, %v10742
  %v10923 = vpack.c.b16 %v10751, %v10747
  %v10924 = vpack.c.b16 %v10752, %v10748
  %v10925 = vpack.c.b16 %v10753, %v10749
  %v10926 = vpack.c.b16 %v10754, %v10750
  %v10927 = vpack.c.b16 %v10759, %v10755
  %v10928 = vpack.c.b16 %v10760, %v10756
  %v10929 = vpack.c.b16 %v10761, %v10757
  %v10930 = vpack.c.b16 %v10762, %v10758
  %v10931 = vpack.c.b16 %v10767, %v10763
  %v10932 = vpack.c.b16 %v10768, %v10764
  %v10933 = vpack.c.b16 %v10769, %v10765
  %v10934 = vpack.c.b16 %v10770, %v10766
  %v10935 = vpack.c.b16 %v10775, %v10771
  %v10936 = vpack.c.b16 %v10776, %v10772
  %v10937 = vpack.c.b16 %v10777, %v10773
  %v10938 = vpack.c.b16 %v10778, %v10774
  %v10939 = vpack.c.b16 %v10783, %v10779
  %v10940 = vpack.c.b16 %v10784, %v10780
  %v10941 = vpack.c.b16 %v10785, %v10781
  %v10942 = vpack.c.b16 %v10786, %v10782
  %v10943 = vpack.c.b16 %v10791, %v10787
  %v10944 = vpack.c.b16 %v10792, %v10788
  %v10945 = vpack.c.b16 %v10793, %v10789
  %v10946 = vpack.c.b16 %v10794, %v10790
  %v10947 = vpack.c.b16 %v10799, %v10795
  %v10948 = vpack.c.b16 %v10800, %v10796
  %v10949 = vpack.c.b16 %v10801, %v10797
  %v10950 = vpack.c.b16 %v10802, %v10798
  %v10951 = vpack.c.b16 %v10807, %v10803
  %v10952 = vpack.c.b16 %v10808, %v10804
  %v10953 = vpack.c.b16 %v10809, %v10805
  %v10954 = vpack.c.b16 %v10810, %v10806
  %v10955 = vpack.c.b16 %v10815, %v10811
  %v10956 = vpack.c.b16 %v10816, %v10812
  %v10957 = vpack.c.b16 %v10817, %v10813
  %v10958 = vpack.c.b16 %v10818, %v10814
  %v10959 = vpack.c.b16 %v10823, %v10819
  %v10960 = vpack.c.b16 %v10824, %v10820
  %v10961 = vpack.c.b16 %v10825, %v10821
  %v10962 = vpack.c.b16 %v10826, %v10822
  %v10963 = vpack.c.b16 %v10831, %v10827
  %v10964 = vpack.c.b16 %v10832, %v10828
  %v10965 = vpack.c.b16 %v10833, %v10829
  %v10966 = vpack.c.b16 %v10834, %v10830
  %v10967 = vpack.c.b16 %v10839, %v10835
  %v10968 = vpack.c.b16 %v10840, %v10836
  %v10969 = vpack.c.b16 %v10841, %v10837
  %v10970 = vpack.c.b16 %v10842, %v10838
  %11099 = vmatprep.subr.bf16.mxu0 %v10872
  %11100 = vmatpush1.bf16.msra.mxu0 %v10871
  %11101 = vmatprep.subr.bf16.mxu0 %v10868
  %11102 = vmatpush1.bf16.msra.mxu0 %v10867
  %11103 = vmatprep.subr.bf16.mxu0 %v10864
  %11104 = vmatpush1.bf16.msra.mxu0 %v10863
  %11105 = vmatprep.subr.bf16.mxu0 %v10860
  %11106 = vmatpush1.bf16.msra.mxu0 %v10859
  %11107 = vmatprep.subr.bf16.mxu0 %v10856
  %11108 = vmatpush1.bf16.msra.mxu0 %v10855
  %11109 = vmatprep.subr.bf16.mxu0 %v10852
  %11110 = vmatpush1.bf16.msra.mxu0 %v10851
  %11111 = vmatprep.subr.bf16.mxu0 %v10848
  %11112 = vmatpush1.bf16.msra.mxu0 %v10847
  %11113 = vmatprep.subr.bf16.mxu0 %v10844
  %11114 = vmatpush1.bf16.msra.mxu0 %v10843
  %11115 = vmatprep.subr.bf16.mxu0 %v10904
  %11116 = vmatpush2.bf16.msra.mxu0 %v10903
  %11117 = vmatprep.subr.bf16.mxu0 %v10900
  %11118 = vmatpush2.bf16.msra.mxu0 %v10899
  %11119 = vmatprep.subr.bf16.mxu0 %v10896
  %11120 = vmatpush2.bf16.msra.mxu0 %v10895
  %11121 = vmatprep.subr.bf16.mxu0 %v10892
  %11122 = vmatpush2.bf16.msra.mxu0 %v10891
  %11123 = vmatprep.subr.bf16.mxu0 %v10888
  %11124 = vmatpush2.bf16.msra.mxu0 %v10887
  %11125 = vmatprep.subr.bf16.mxu0 %v10884
  %11126 = vmatpush2.bf16.msra.mxu0 %v10883
  %11127 = vmatprep.subr.bf16.mxu0 %v10880
  %11128 = vmatpush2.bf16.msra.mxu0 %v10879
  %11129 = vmatprep.subr.bf16.mxu0 %v10876
  %11130 = vmatpush2.bf16.msra.mxu0 %v10875
  %11131 = vmatprep.mubr.bf16.mxu0 %v10302
  %11132 = vmatmul.mubr.bf16.gmra.mxu0 %v10301
  %v11133 = vpop.f32.mrf.mxu0
  %v11134 = vadd.f32 %v10442, %v11133
  %v11135 = vpop.f32.mrf.mxu0
  %v11136 = vadd.f32 %v10446, %v11135
  %v11137 = vpop.f32.mrf.mxu0
  %v11138 = vadd.f32 %v10442, %v11137
  %v11139 = vpop.f32.mrf.mxu0
  %v11140 = vadd.f32 %v10446, %v11139
  %11141 = vmatprep.mubr.bf16.mxu0 %v10306
  %11142 = vmatmul.mubr.bf16.gmra.mxu0 %v10305
  %v11143 = vpop.f32.mrf.mxu0
  %v11144 = vadd.f32 %v10442, %v11143
  %v11145 = vpop.f32.mrf.mxu0
  %v11146 = vadd.f32 %v10446, %v11145
  %v11147 = vpop.f32.mrf.mxu0
  %v11148 = vadd.f32 %v10442, %v11147
  %v11149 = vpop.f32.mrf.mxu0
  %v11150 = vadd.f32 %v10446, %v11149
  %11151 = vdwg.mxu0
  %11152 = vmatprep.subr.bf16.mxu0 %v10936
  %11153 = vmatpush1.bf16.msra.mxu0 %v10935
  %11154 = vmatprep.subr.bf16.mxu0 %v10932
  %11155 = vmatpush1.bf16.msra.mxu0 %v10931
  %11156 = vmatprep.subr.bf16.mxu0 %v10928
  %11157 = vmatpush1.bf16.msra.mxu0 %v10927
  %11158 = vmatprep.subr.bf16.mxu0 %v10924
  %11159 = vmatpush1.bf16.msra.mxu0 %v10923
  %11160 = vmatprep.subr.bf16.mxu0 %v10920
  %11161 = vmatpush1.bf16.msra.mxu0 %v10919
  %11162 = vmatprep.subr.bf16.mxu0 %v10916
  %11163 = vmatpush1.bf16.msra.mxu0 %v10915
  %11164 = vmatprep.subr.bf16.mxu0 %v10912
  %11165 = vmatpush1.bf16.msra.mxu0 %v10911
  %11166 = vmatprep.subr.bf16.mxu0 %v10908
  %11167 = vmatpush1.bf16.msra.mxu0 %v10907
  %11168 = vmatprep.subr.bf16.mxu0 %v10968
  %11169 = vmatpush2.bf16.msra.mxu0 %v10967
  %11170 = vmatprep.subr.bf16.mxu0 %v10964
  %11171 = vmatpush2.bf16.msra.mxu0 %v10963
  %11172 = vmatprep.subr.bf16.mxu0 %v10960
  %11173 = vmatpush2.bf16.msra.mxu0 %v10959
  %11174 = vmatprep.subr.bf16.mxu0 %v10956
  %11175 = vmatpush2.bf16.msra.mxu0 %v10955
  %11176 = vmatprep.subr.bf16.mxu0 %v10952
  %11177 = vmatpush2.bf16.msra.mxu0 %v10951
  %11178 = vmatprep.subr.bf16.mxu0 %v10948
  %11179 = vmatpush2.bf16.msra.mxu0 %v10947
  %11180 = vmatprep.subr.bf16.mxu0 %v10944
  %11181 = vmatpush2.bf16.msra.mxu0 %v10943
  %11182 = vmatprep.subr.bf16.mxu0 %v10940
  %11183 = vmatpush2.bf16.msra.mxu0 %v10939
  %11184 = vmatprep.mubr.bf16.mxu0 %v10304
  %11185 = vmatmul.mubr.bf16.gmra.mxu0 %v10303
  %v11186 = vpop.f32.mrf.mxu0
  %v11187 = vadd.f32 %v11134, %v11186
  %v11188 = vpop.f32.mrf.mxu0
  %v11189 = vadd.f32 %v11136, %v11188
  %v11190 = vpop.f32.mrf.mxu0
  %v11191 = vadd.f32 %v11138, %v11190
  %v11192 = vpop.f32.mrf.mxu0
  %v11193 = vadd.f32 %v11140, %v11192
  %11194 = vmatprep.mubr.bf16.mxu0 %v10308
  %11195 = vmatmul.mubr.bf16.gmra.mxu0 %v10307
  %v11196 = vpop.f32.mrf.mxu0
  %v11197 = vadd.f32 %v11144, %v11196
  %v11198 = vpop.f32.mrf.mxu0
  %v11199 = vadd.f32 %v11146, %v11198
  %v11200 = vpop.f32.mrf.mxu0
  %v11201 = vadd.f32 %v11148, %v11200
  %v11202 = vpop.f32.mrf.mxu0
  %v11203 = vadd.f32 %v11150, %v11202
  %11204 = vdwg.mxu0
  %11205 = vmatprep.subr.bf16.mxu0 %v10874
  %11206 = vmatpush1.bf16.msra.mxu0 %v10873
  %11207 = vmatprep.subr.bf16.mxu0 %v10870
  %11208 = vmatpush1.bf16.msra.mxu0 %v10869
  %11209 = vmatprep.subr.bf16.mxu0 %v10866
  %11210 = vmatpush1.bf16.msra.mxu0 %v10865
  %11211 = vmatprep.subr.bf16.mxu0 %v10862
  %11212 = vmatpush1.bf16.msra.mxu0 %v10861
  %11213 = vmatprep.subr.bf16.mxu0 %v10858
  %11214 = vmatpush1.bf16.msra.mxu0 %v10857
  %11215 = vmatprep.subr.bf16.mxu0 %v10854
  %11216 = vmatpush1.bf16.msra.mxu0 %v10853
  %11217 = vmatprep.subr.bf16.mxu0 %v10850
  %11218 = vmatpush1.bf16.msra.mxu0 %v10849
  %11219 = vmatprep.subr.bf16.mxu0 %v10846
  %11220 = vmatpush1.bf16.msra.mxu0 %v10845
  %11221 = vmatprep.subr.bf16.mxu0 %v10906
  %11222 = vmatpush2.bf16.msra.mxu0 %v10905
  %11223 = vmatprep.subr.bf16.mxu0 %v10902
  %11224 = vmatpush2.bf16.msra.mxu0 %v10901
  %11225 = vmatprep.subr.bf16.mxu0 %v10898
  %11226 = vmatpush2.bf16.msra.mxu0 %v10897
  %11227 = vmatprep.subr.bf16.mxu0 %v10894
  %11228 = vmatpush2.bf16.msra.mxu0 %v10893
  %11229 = vmatprep.subr.bf16.mxu0 %v10890
  %11230 = vmatpush2.bf16.msra.mxu0 %v10889
  %11231 = vmatprep.subr.bf16.mxu0 %v10886
  %11232 = vmatpush2.bf16.msra.mxu0 %v10885
  %11233 = vmatprep.subr.bf16.mxu0 %v10882
  %11234 = vmatpush2.bf16.msra.mxu0 %v10881
  %11235 = vmatprep.subr.bf16.mxu0 %v10878
  %11236 = vmatpush2.bf16.msra.mxu0 %v10877
  %11237 = vmatprep.mubr.bf16.mxu0 %v10302
  %11238 = vmatmul.mubr.bf16.gmra.mxu0 %v10301
  %v11239 = vpop.f32.mrf.mxu0
  %v11240 = vadd.f32 %v10450, %v11239
  %v11241 = vpop.f32.mrf.mxu0
  %v11242 = vadd.f32 %v10454, %v11241
  %v11243 = vpop.f32.mrf.mxu0
  %v11244 = vadd.f32 %v10450, %v11243
  %v11245 = vpop.f32.mrf.mxu0
  %v11246 = vadd.f32 %v10454, %v11245
  %11247 = vmatprep.mubr.bf16.mxu0 %v10306
  %11248 = vmatmul.mubr.bf16.gmra.mxu0 %v10305
  %v11249 = vpop.f32.mrf.mxu0
  %v11250 = vadd.f32 %v10450, %v11249
  %v11251 = vpop.f32.mrf.mxu0
  %v11252 = vadd.f32 %v10454, %v11251
  %v11253 = vpop.f32.mrf.mxu0
  %v11254 = vadd.f32 %v10450, %v11253
  %v11255 = vpop.f32.mrf.mxu0
  %v11256 = vadd.f32 %v10454, %v11255
  %11257 = vdwg.mxu0
  %11258 = vmatprep.subr.bf16.mxu0 %v10938
  %11259 = vmatpush1.bf16.msra.mxu0 %v10937
  %11260 = vmatprep.subr.bf16.mxu0 %v10934
  %11261 = vmatpush1.bf16.msra.mxu0 %v10933
  %11262 = vmatprep.subr.bf16.mxu0 %v10930
  %11263 = vmatpush1.bf16.msra.mxu0 %v10929
  %11264 = vmatprep.subr.bf16.mxu0 %v10926
  %11265 = vmatpush1.bf16.msra.mxu0 %v10925
  %11266 = vmatprep.subr.bf16.mxu0 %v10922
  %11267 = vmatpush1.bf16.msra.mxu0 %v10921
  %11268 = vmatprep.subr.bf16.mxu0 %v10918
  %11269 = vmatpush1.bf16.msra.mxu0 %v10917
  %11270 = vmatprep.subr.bf16.mxu0 %v10914
  %11271 = vmatpush1.bf16.msra.mxu0 %v10913
  %11272 = vmatprep.subr.bf16.mxu0 %v10910
  %11273 = vmatpush1.bf16.msra.mxu0 %v10909
  %11274 = vmatprep.subr.bf16.mxu0 %v10970
  %11275 = vmatpush2.bf16.msra.mxu0 %v10969
  %11276 = vmatprep.subr.bf16.mxu0 %v10966
  %11277 = vmatpush2.bf16.msra.mxu0 %v10965
  %11278 = vmatprep.subr.bf16.mxu0 %v10962
  %11279 = vmatpush2.bf16.msra.mxu0 %v10961
  %11280 = vmatprep.subr.bf16.mxu0 %v10958
  %11281 = vmatpush2.bf16.msra.mxu0 %v10957
  %11282 = vmatprep.subr.bf16.mxu0 %v10954
  %11283 = vmatpush2.bf16.msra.mxu0 %v10953
  %11284 = vmatprep.subr.bf16.mxu0 %v10950
  %11285 = vmatpush2.bf16.msra.mxu0 %v10949
  %11286 = vmatprep.subr.bf16.mxu0 %v10946
  %11287 = vmatpush2.bf16.msra.mxu0 %v10945
  %11288 = vmatprep.subr.bf16.mxu0 %v10942
  %11289 = vmatpush2.bf16.msra.mxu0 %v10941
  %11290 = vmatprep.mubr.bf16.mxu0 %v10304
  %11291 = vmatmul.mubr.bf16.gmra.mxu0 %v10303
  %v11292 = vpop.f32.mrf.mxu0
  %v11293 = vadd.f32 %v11240, %v11292
  %v11294 = vpop.f32.mrf.mxu0
  %v11295 = vadd.f32 %v11242, %v11294
  %v11296 = vpop.f32.mrf.mxu0
  %v11297 = vadd.f32 %v11244, %v11296
  %v11298 = vpop.f32.mrf.mxu0
  %v11299 = vadd.f32 %v11246, %v11298
  %11300 = vmatprep.mubr.bf16.mxu0 %v10308
  %11301 = vmatmul.mubr.bf16.gmra.mxu0 %v10307
  %v11302 = vpop.f32.mrf.mxu0
  %v11303 = vadd.f32 %v11250, %v11302
  %v11304 = vpop.f32.mrf.mxu0
  %v11305 = vadd.f32 %v11252, %v11304
  %v11306 = vpop.f32.mrf.mxu0
  %v11307 = vadd.f32 %v11254, %v11306
  %v11308 = vpop.f32.mrf.mxu0
  %v11309 = vadd.f32 %v11256, %v11308
  %11310 = vdwg.mxu0
  %v11311 = vadd.f32 %v11187, %v11189
  %v11312 = vadd.f32 %v11311, %v11293
  %v11313 = vadd.f32 %v11312, %v11295
  %11314 = vadd.xlane.f32.xlu0 %v11313
  %v11315 = vpop.xlane.xlu0 %11314
  %v11316 = vadd.f32 %v11191, %v11193
  %v11317 = vadd.f32 %v11316, %v11297
  %v11318 = vadd.f32 %v11317, %v11299
  %11319 = vadd.xlane.f32.xlu0 %v11318
  %v11320 = vpop.xlane.xlu0 %11319
  %v11321 = vadd.f32 %v11197, %v11199
  %v11322 = vadd.f32 %v11321, %v11303
  %v11323 = vadd.f32 %v11322, %v11305
  %11324 = vadd.xlane.f32.xlu0 %v11323
  %v11325 = vpop.xlane.xlu0 %11324
  %v11326 = vadd.f32 %v11201, %v11203
  %v11327 = vadd.f32 %v11326, %v11307
  %v11328 = vadd.f32 %v11327, %v11309
  %11329 = vadd.xlane.f32.xlu0 %v11328
  %v11330 = vpop.xlane.xlu0 %11329
  %v11331 = vmul.f32 %v11315, %v8918
  %v11332 = vmul.f32 %v11320, %v8918
  %v11333 = vmul.f32 %v11325, %v8918
  %v11334 = vmul.f32 %v11330, %v8918
  %v11335 = vsub.f32 %v11187, %v11331
  %v11336 = vsub.f32 %v11189, %v11331
  %v11337 = vsub.f32 %v11293, %v11331
  %v11338 = vsub.f32 %v11295, %v11331
  %v11339 = vsub.f32 %v11191, %v11332
  %v11340 = vsub.f32 %v11193, %v11332
  %v11341 = vsub.f32 %v11297, %v11332
  %v11342 = vsub.f32 %v11299, %v11332
  %v11343 = vsub.f32 %v11197, %v11333
  %v11344 = vsub.f32 %v11199, %v11333
  %v11345 = vsub.f32 %v11303, %v11333
  %v11346 = vsub.f32 %v11305, %v11333
  %v11347 = vsub.f32 %v11201, %v11334
  %v11348 = vsub.f32 %v11203, %v11334
  %v11349 = vsub.f32 %v11307, %v11334
  %v11350 = vsub.f32 %v11309, %v11334
  %v11351 = vmul.f32 %v11335, %v11335
  %v11352 = vmul.f32 %v11336, %v11336
  %v11353 = vmul.f32 %v11337, %v11337
  %v11354 = vmul.f32 %v11338, %v11338
  %v11355 = vmul.f32 %v11339, %v11339
  %v11356 = vmul.f32 %v11340, %v11340
  %v11357 = vmul.f32 %v11341, %v11341
  %v11358 = vmul.f32 %v11342, %v11342
  %v11359 = vmul.f32 %v11343, %v11343
  %v11360 = vmul.f32 %v11344, %v11344
  %v11361 = vmul.f32 %v11345, %v11345
  %v11362 = vmul.f32 %v11346, %v11346
  %v11363 = vmul.f32 %v11347, %v11347
  %v11364 = vmul.f32 %v11348, %v11348
  %v11365 = vmul.f32 %v11349, %v11349
  %v11366 = vmul.f32 %v11350, %v11350
  %v11367 = vadd.f32 %v11351, %v11352
  %v11368 = vadd.f32 %v11367, %v11353
  %v11369 = vadd.f32 %v11368, %v11354
  %11370 = vadd.xlane.f32.xlu0 %v11369
  %v11371 = vpop.xlane.xlu0 %11370
  %v11372 = vadd.f32 %v11355, %v11356
  %v11373 = vadd.f32 %v11372, %v11357
  %v11374 = vadd.f32 %v11373, %v11358
  %11375 = vadd.xlane.f32.xlu0 %v11374
  %v11376 = vpop.xlane.xlu0 %11375
  %v11377 = vadd.f32 %v11359, %v11360
  %v11378 = vadd.f32 %v11377, %v11361
  %v11379 = vadd.f32 %v11378, %v11362
  %11380 = vadd.xlane.f32.xlu0 %v11379
  %v11381 = vpop.xlane.xlu0 %11380
  %v11382 = vadd.f32 %v11363, %v11364
  %v11383 = vadd.f32 %v11382, %v11365
  %v11384 = vadd.f32 %v11383, %v11366
  %11385 = vadd.xlane.f32.xlu0 %v11384
  %v11386 = vpop.xlane.xlu0 %11385
  %v11387 = vmul.f32 %v11371, %v8918
  %v11388 = vmul.f32 %v11376, %v8918
  %v11389 = vmul.f32 %v11381, %v8918
  %v11390 = vmul.f32 %v11386, %v8918
  %v11391 = vadd.f32 %v11387, 1e-05
  %v11392 = vadd.f32 %v11388, 1e-05
  %v11393 = vadd.f32 %v11389, 1e-05
  %v11394 = vadd.f32 %v11390, 1e-05
  %v11395 = vrsqrt.pop %v11391
  %v11396 = vrsqrt.pop %v11392
  %v11397 = vrsqrt.pop %v11393
  %v11398 = vrsqrt.pop %v11394
  %v11399 = vmul.f32 %v11335, %v11395
  %v11400 = vmul.f32 %v11336, %v11395
  %v11401 = vmul.f32 %v11337, %v11395
  %v11402 = vmul.f32 %v11338, %v11395
  %v11403 = vmul.f32 %v11339, %v11396
  %v11404 = vmul.f32 %v11340, %v11396
  %v11405 = vmul.f32 %v11341, %v11396
  %v11406 = vmul.f32 %v11342, %v11396
  %v11407 = vmul.f32 %v11343, %v11397
  %v11408 = vmul.f32 %v11344, %v11397
  %v11409 = vmul.f32 %v11345, %v11397
  %v11410 = vmul.f32 %v11346, %v11397
  %v11411 = vmul.f32 %v11347, %v11398
  %v11412 = vmul.f32 %v11348, %v11398
  %v11413 = vmul.f32 %v11349, %v11398
  %v11414 = vmul.f32 %v11350, %v11398
  %v11415 = vld [vmem:[%s51] sm:$0xf]
  %v11417 = vlaneseq
  %v11418 = vshrl.u32 %v11417, 7
  %v11419 = vsub.s32 0, %v11418
  %v11420 = vrot.slane %v11415, %v11419
  %v11421 = vlaneseq
  %v11422 = vshrl.u32 %v11421, 7
  %v11423 = vsub.s32 1, %v11422
  %v11424 = vrot.slane %v11415, %v11423
  %v11425 = vlaneseq
  %v11426 = vshrl.u32 %v11425, 7
  %v11427 = vsub.s32 2, %v11426
  %v11428 = vrot.slane %v11415, %v11427
  %v11429 = vlaneseq
  %v11430 = vshrl.u32 %v11429, 7
  %v11431 = vsub.s32 3, %v11430
  %v11432 = vrot.slane %v11415, %v11431
  %v11437 = vmul.f32 %v11399, %v11420
  %v11438 = vmul.f32 %v11400, %v11424
  %v11439 = vmul.f32 %v11401, %v11428
  %v11440 = vmul.f32 %v11402, %v11432
  %v11441 = vmul.f32 %v11403, %v11420
  %v11442 = vmul.f32 %v11404, %v11424
  %v11443 = vmul.f32 %v11405, %v11428
  %v11444 = vmul.f32 %v11406, %v11432
  %v11445 = vmul.f32 %v11407, %v11420
  %v11446 = vmul.f32 %v11408, %v11424
  %v11447 = vmul.f32 %v11409, %v11428
  %v11448 = vmul.f32 %v11410, %v11432
  %v11449 = vmul.f32 %v11411, %v11420
  %v11450 = vmul.f32 %v11412, %v11424
  %v11451 = vmul.f32 %v11413, %v11428
  %v11452 = vmul.f32 %v11414, %v11432
  %v11453 = vld [vmem:[%s53] sm:$0xf]
  %v11455 = vlaneseq
  %v11456 = vshrl.u32 %v11455, 7
  %v11457 = vsub.s32 0, %v11456
  %v11458 = vrot.slane %v11453, %v11457
  %v11459 = vlaneseq
  %v11460 = vshrl.u32 %v11459, 7
  %v11461 = vsub.s32 1, %v11460
  %v11462 = vrot.slane %v11453, %v11461
  %v11463 = vlaneseq
  %v11464 = vshrl.u32 %v11463, 7
  %v11465 = vsub.s32 2, %v11464
  %v11466 = vrot.slane %v11453, %v11465
  %v11467 = vlaneseq
  %v11468 = vshrl.u32 %v11467, 7
  %v11469 = vsub.s32 3, %v11468
  %v11470 = vrot.slane %v11453, %v11469
  %v11475 = vadd.f32 %v11437, %v11458
  %v11476 = vadd.f32 %v11438, %v11462
  %v11477 = vadd.f32 %v11439, %v11466
  %v11478 = vadd.f32 %v11440, %v11470
  %v11479 = vadd.f32 %v11441, %v11458
  %v11480 = vadd.f32 %v11442, %v11462
  %v11481 = vadd.f32 %v11443, %v11466
  %v11482 = vadd.f32 %v11444, %v11470
  %v11483 = vadd.f32 %v11445, %v11458
  %v11484 = vadd.f32 %v11446, %v11462
  %v11485 = vadd.f32 %v11447, %v11466
  %v11486 = vadd.f32 %v11448, %v11470
  %v11487 = vadd.f32 %v11449, %v11458
  %v11488 = vadd.f32 %v11450, %v11462
  %v11489 = vadd.f32 %v11451, %v11466
  %v11490 = vadd.f32 %v11452, %v11470
  %v11491 = vmax.f32 %v11475, 0.0
  %v11492 = vmax.f32 %v11476, 0.0
  %v11493 = vmax.f32 %v11477, 0.0
  %v11494 = vmax.f32 %v11478, 0.0
  %v11495 = vmax.f32 %v11479, 0.0
  %v11496 = vmax.f32 %v11480, 0.0
  %v11497 = vmax.f32 %v11481, 0.0
  %v11498 = vmax.f32 %v11482, 0.0
  %v11499 = vmax.f32 %v11483, 0.0
  %v11500 = vmax.f32 %v11484, 0.0
  %v11501 = vmax.f32 %v11485, 0.0
  %v11502 = vmax.f32 %v11486, 0.0
  %v11503 = vmax.f32 %v11487, 0.0
  %v11504 = vmax.f32 %v11488, 0.0
  %v11505 = vmax.f32 %v11489, 0.0
  %v11506 = vmax.f32 %v11490, 0.0
  %v11507 = vpack.c.bf16 %v11495, %v11491
  %v11508 = vpack.c.bf16 %v11496, %v11492
  %v11509 = vpack.c.bf16 %v11497, %v11493
  %v11510 = vpack.c.bf16 %v11498, %v11494
  %v11511 = vpack.c.bf16 %v11503, %v11499
  %v11512 = vpack.c.bf16 %v11504, %v11500
  %v11513 = vpack.c.bf16 %v11505, %v11501
  %v11514 = vpack.c.bf16 %v11506, %v11502
  %v11515 = vld [vmem:[%s55] sm:$0xff]
  %v11516 = vld [vmem:[%s55 + $0x8] sm:$0xff]
  %v11517 = vld [vmem:[%s55 + $0x10] sm:$0xff]
  %v11518 = vld [vmem:[%s55 + $0x18] sm:$0xff]
  %v11519 = vld [vmem:[%s55 + $0x20] sm:$0xff]
  %v11520 = vld [vmem:[%s55 + $0x28] sm:$0xff]
  %v11521 = vld [vmem:[%s55 + $0x30] sm:$0xff]
  %v11522 = vld [vmem:[%s55 + $0x38] sm:$0xff]
  %v11523 = vld [vmem:[%s55 + $0x40] sm:$0xff]
  %v11524 = vld [vmem:[%s55 + $0x48] sm:$0xff]
  %v11525 = vld [vmem:[%s55 + $0x50] sm:$0xff]
  %v11526 = vld [vmem:[%s55 + $0x58] sm:$0xff]
  %v11527 = vld [vmem:[%s55 + $0x60] sm:$0xff]
  %v11528 = vld [vmem:[%s55 + $0x68] sm:$0xff]
  %v11529 = vld [vmem:[%s55 + $0x70] sm:$0xff]
  %v11530 = vld [vmem:[%s55 + $0x78] sm:$0xff]
  %v11531 = vld [vmem:[%s55 + $0x80] sm:$0xff]
  %v11532 = vld [vmem:[%s55 + $0x88] sm:$0xff]
  %v11533 = vld [vmem:[%s55 + $0x90] sm:$0xff]
  %v11534 = vld [vmem:[%s55 + $0x98] sm:$0xff]
  %v11535 = vld [vmem:[%s55 + $0xa0] sm:$0xff]
  %v11536 = vld [vmem:[%s55 + $0xa8] sm:$0xff]
  %v11537 = vld [vmem:[%s55 + $0xb0] sm:$0xff]
  %v11538 = vld [vmem:[%s55 + $0xb8] sm:$0xff]
  %v11539 = vld [vmem:[%s55 + $0xc0] sm:$0xff]
  %v11540 = vld [vmem:[%s55 + $0xc8] sm:$0xff]
  %v11541 = vld [vmem:[%s55 + $0xd0] sm:$0xff]
  %v11542 = vld [vmem:[%s55 + $0xd8] sm:$0xff]
  %v11543 = vld [vmem:[%s55 + $0xe0] sm:$0xff]
  %v11544 = vld [vmem:[%s55 + $0xe8] sm:$0xff]
  %v11545 = vld [vmem:[%s55 + $0xf0] sm:$0xff]
  %v11546 = vld [vmem:[%s55 + $0xf8] sm:$0xff]
  %v11547 = vld [vmem:[%s55 + $0x100] sm:$0xff]
  %v11548 = vld [vmem:[%s55 + $0x108] sm:$0xff]
  %v11549 = vld [vmem:[%s55 + $0x110] sm:$0xff]
  %v11550 = vld [vmem:[%s55 + $0x118] sm:$0xff]
  %v11551 = vld [vmem:[%s55 + $0x120] sm:$0xff]
  %v11552 = vld [vmem:[%s55 + $0x128] sm:$0xff]
  %v11553 = vld [vmem:[%s55 + $0x130] sm:$0xff]
  %v11554 = vld [vmem:[%s55 + $0x138] sm:$0xff]
  %v11555 = vld [vmem:[%s55 + $0x140] sm:$0xff]
  %v11556 = vld [vmem:[%s55 + $0x148] sm:$0xff]
  %v11557 = vld [vmem:[%s55 + $0x150] sm:$0xff]
  %v11558 = vld [vmem:[%s55 + $0x158] sm:$0xff]
  %v11559 = vld [vmem:[%s55 + $0x160] sm:$0xff]
  %v11560 = vld [vmem:[%s55 + $0x168] sm:$0xff]
  %v11561 = vld [vmem:[%s55 + $0x170] sm:$0xff]
  %v11562 = vld [vmem:[%s55 + $0x178] sm:$0xff]
  %v11563 = vld [vmem:[%s55 + $0x180] sm:$0xff]
  %v11564 = vld [vmem:[%s55 + $0x188] sm:$0xff]
  %v11565 = vld [vmem:[%s55 + $0x190] sm:$0xff]
  %v11566 = vld [vmem:[%s55 + $0x198] sm:$0xff]
  %v11567 = vld [vmem:[%s55 + $0x1a0] sm:$0xff]
  %v11568 = vld [vmem:[%s55 + $0x1a8] sm:$0xff]
  %v11569 = vld [vmem:[%s55 + $0x1b0] sm:$0xff]
  %v11570 = vld [vmem:[%s55 + $0x1b8] sm:$0xff]
  %v11571 = vld [vmem:[%s55 + $0x1c0] sm:$0xff]
  %v11572 = vld [vmem:[%s55 + $0x1c8] sm:$0xff]
  %v11573 = vld [vmem:[%s55 + $0x1d0] sm:$0xff]
  %v11574 = vld [vmem:[%s55 + $0x1d8] sm:$0xff]
  %v11575 = vld [vmem:[%s55 + $0x1e0] sm:$0xff]
  %v11576 = vld [vmem:[%s55 + $0x1e8] sm:$0xff]
  %v11577 = vld [vmem:[%s55 + $0x1f0] sm:$0xff]
  %v11578 = vld [vmem:[%s55 + $0x1f8] sm:$0xff]
  %v11579 = vld [vmem:[%s57] sm:$0x3]
  %v11581 = vlaneseq
  %v11582 = vshrl.u32 %v11581, 7
  %v11583 = vsub.s32 0, %v11582
  %v11584 = vrot.slane %v11579, %v11583
  %v11585 = vlaneseq
  %v11586 = vshrl.u32 %v11585, 7
  %v11587 = vsub.s32 1, %v11586
  %v11588 = vrot.slane %v11579, %v11587
  %v11655 = vunpack.c.l.b16 %v11515
  %v11656 = vunpack.c.h.b16 %v11515
  %v11657 = vunpack.c.l.b16 %v11516
  %v11658 = vunpack.c.h.b16 %v11516
  %v11659 = vunpack.c.l.b16 %v11517
  %v11660 = vunpack.c.h.b16 %v11517
  %v11661 = vunpack.c.l.b16 %v11518
  %v11662 = vunpack.c.h.b16 %v11518
  %v11663 = vunpack.c.l.b16 %v11519
  %v11664 = vunpack.c.h.b16 %v11519
  %v11665 = vunpack.c.l.b16 %v11520
  %v11666 = vunpack.c.h.b16 %v11520
  %v11667 = vunpack.c.l.b16 %v11521
  %v11668 = vunpack.c.h.b16 %v11521
  %v11669 = vunpack.c.l.b16 %v11522
  %v11670 = vunpack.c.h.b16 %v11522
  %v11671 = vunpack.c.l.b16 %v11523
  %v11672 = vunpack.c.h.b16 %v11523
  %v11673 = vunpack.c.l.b16 %v11524
  %v11674 = vunpack.c.h.b16 %v11524
  %v11675 = vunpack.c.l.b16 %v11525
  %v11676 = vunpack.c.h.b16 %v11525
  %v11677 = vunpack.c.l.b16 %v11526
  %v11678 = vunpack.c.h.b16 %v11526
  %v11679 = vunpack.c.l.b16 %v11527
  %v11680 = vunpack.c.h.b16 %v11527
  %v11681 = vunpack.c.l.b16 %v11528
  %v11682 = vunpack.c.h.b16 %v11528
  %v11683 = vunpack.c.l.b16 %v11529
  %v11684 = vunpack.c.h.b16 %v11529
  %v11685 = vunpack.c.l.b16 %v11530
  %v11686 = vunpack.c.h.b16 %v11530
  %v11687 = vunpack.c.l.b16 %v11531
  %v11688 = vunpack.c.h.b16 %v11531
  %v11689 = vunpack.c.l.b16 %v11532
  %v11690 = vunpack.c.h.b16 %v11532
  %v11691 = vunpack.c.l.b16 %v11533
  %v11692 = vunpack.c.h.b16 %v11533
  %v11693 = vunpack.c.l.b16 %v11534
  %v11694 = vunpack.c.h.b16 %v11534
  %v11695 = vunpack.c.l.b16 %v11535
  %v11696 = vunpack.c.h.b16 %v11535
  %v11697 = vunpack.c.l.b16 %v11536
  %v11698 = vunpack.c.h.b16 %v11536
  %v11699 = vunpack.c.l.b16 %v11537
  %v11700 = vunpack.c.h.b16 %v11537
  %v11701 = vunpack.c.l.b16 %v11538
  %v11702 = vunpack.c.h.b16 %v11538
  %v11703 = vunpack.c.l.b16 %v11539
  %v11704 = vunpack.c.h.b16 %v11539
  %v11705 = vunpack.c.l.b16 %v11540
  %v11706 = vunpack.c.h.b16 %v11540
  %v11707 = vunpack.c.l.b16 %v11541
  %v11708 = vunpack.c.h.b16 %v11541
  %v11709 = vunpack.c.l.b16 %v11542
  %v11710 = vunpack.c.h.b16 %v11542
  %v11711 = vunpack.c.l.b16 %v11543
  %v11712 = vunpack.c.h.b16 %v11543
  %v11713 = vunpack.c.l.b16 %v11544
  %v11714 = vunpack.c.h.b16 %v11544
  %v11715 = vunpack.c.l.b16 %v11545
  %v11716 = vunpack.c.h.b16 %v11545
  %v11717 = vunpack.c.l.b16 %v11546
  %v11718 = vunpack.c.h.b16 %v11546
  %v11719 = vunpack.c.l.b16 %v11547
  %v11720 = vunpack.c.h.b16 %v11547
  %v11721 = vunpack.c.l.b16 %v11548
  %v11722 = vunpack.c.h.b16 %v11548
  %v11723 = vunpack.c.l.b16 %v11549
  %v11724 = vunpack.c.h.b16 %v11549
  %v11725 = vunpack.c.l.b16 %v11550
  %v11726 = vunpack.c.h.b16 %v11550
  %v11727 = vunpack.c.l.b16 %v11551
  %v11728 = vunpack.c.h.b16 %v11551
  %v11729 = vunpack.c.l.b16 %v11552
  %v11730 = vunpack.c.h.b16 %v11552
  %v11731 = vunpack.c.l.b16 %v11553
  %v11732 = vunpack.c.h.b16 %v11553
  %v11733 = vunpack.c.l.b16 %v11554
  %v11734 = vunpack.c.h.b16 %v11554
  %v11735 = vunpack.c.l.b16 %v11555
  %v11736 = vunpack.c.h.b16 %v11555
  %v11737 = vunpack.c.l.b16 %v11556
  %v11738 = vunpack.c.h.b16 %v11556
  %v11739 = vunpack.c.l.b16 %v11557
  %v11740 = vunpack.c.h.b16 %v11557
  %v11741 = vunpack.c.l.b16 %v11558
  %v11742 = vunpack.c.h.b16 %v11558
  %v11743 = vunpack.c.l.b16 %v11559
  %v11744 = vunpack.c.h.b16 %v11559
  %v11745 = vunpack.c.l.b16 %v11560
  %v11746 = vunpack.c.h.b16 %v11560
  %v11747 = vunpack.c.l.b16 %v11561
  %v11748 = vunpack.c.h.b16 %v11561
  %v11749 = vunpack.c.l.b16 %v11562
  %v11750 = vunpack.c.h.b16 %v11562
  %v11751 = vunpack.c.l.b16 %v11563
  %v11752 = vunpack.c.h.b16 %v11563
  %v11753 = vunpack.c.l.b16 %v11564
  %v11754 = vunpack.c.h.b16 %v11564
  %v11755 = vunpack.c.l.b16 %v11565
  %v11756 = vunpack.c.h.b16 %v11565
  %v11757 = vunpack.c.l.b16 %v11566
  %v11758 = vunpack.c.h.b16 %v11566
  %v11759 = vunpack.c.l.b16 %v11567
  %v11760 = vunpack.c.h.b16 %v11567
  %v11761 = vunpack.c.l.b16 %v11568
  %v11762 = vunpack.c.h.b16 %v11568
  %v11763 = vunpack.c.l.b16 %v11569
  %v11764 = vunpack.c.h.b16 %v11569
  %v11765 = vunpack.c.l.b16 %v11570
  %v11766 = vunpack.c.h.b16 %v11570
  %v11767 = vunpack.c.l.b16 %v11571
  %v11768 = vunpack.c.h.b16 %v11571
  %v11769 = vunpack.c.l.b16 %v11572
  %v11770 = vunpack.c.h.b16 %v11572
  %v11771 = vunpack.c.l.b16 %v11573
  %v11772 = vunpack.c.h.b16 %v11573
  %v11773 = vunpack.c.l.b16 %v11574
  %v11774 = vunpack.c.h.b16 %v11574
  %v11775 = vunpack.c.l.b16 %v11575
  %v11776 = vunpack.c.h.b16 %v11575
  %v11777 = vunpack.c.l.b16 %v11576
  %v11778 = vunpack.c.h.b16 %v11576
  %v11779 = vunpack.c.l.b16 %v11577
  %v11780 = vunpack.c.h.b16 %v11577
  %v11781 = vunpack.c.l.b16 %v11578
  %v11782 = vunpack.c.h.b16 %v11578
  %v11783 = vpack.c.b16 %v11657, %v11655
  %v11784 = vpack.c.b16 %v11658, %v11656
  %v11785 = vpack.c.b16 %v11661, %v11659
  %v11786 = vpack.c.b16 %v11662, %v11660
  %v11787 = vpack.c.b16 %v11665, %v11663
  %v11788 = vpack.c.b16 %v11666, %v11664
  %v11789 = vpack.c.b16 %v11669, %v11667
  %v11790 = vpack.c.b16 %v11670, %v11668
  %v11791 = vpack.c.b16 %v11673, %v11671
  %v11792 = vpack.c.b16 %v11674, %v11672
  %v11793 = vpack.c.b16 %v11677, %v11675
  %v11794 = vpack.c.b16 %v11678, %v11676
  %v11795 = vpack.c.b16 %v11681, %v11679
  %v11796 = vpack.c.b16 %v11682, %v11680
  %v11797 = vpack.c.b16 %v11685, %v11683
  %v11798 = vpack.c.b16 %v11686, %v11684
  %v11799 = vpack.c.b16 %v11689, %v11687
  %v11800 = vpack.c.b16 %v11690, %v11688
  %v11801 = vpack.c.b16 %v11693, %v11691
  %v11802 = vpack.c.b16 %v11694, %v11692
  %v11803 = vpack.c.b16 %v11697, %v11695
  %v11804 = vpack.c.b16 %v11698, %v11696
  %v11805 = vpack.c.b16 %v11701, %v11699
  %v11806 = vpack.c.b16 %v11702, %v11700
  %v11807 = vpack.c.b16 %v11705, %v11703
  %v11808 = vpack.c.b16 %v11706, %v11704
  %v11809 = vpack.c.b16 %v11709, %v11707
  %v11810 = vpack.c.b16 %v11710, %v11708
  %v11811 = vpack.c.b16 %v11713, %v11711
  %v11812 = vpack.c.b16 %v11714, %v11712
  %v11813 = vpack.c.b16 %v11717, %v11715
  %v11814 = vpack.c.b16 %v11718, %v11716
  %v11815 = vpack.c.b16 %v11721, %v11719
  %v11816 = vpack.c.b16 %v11722, %v11720
  %v11817 = vpack.c.b16 %v11725, %v11723
  %v11818 = vpack.c.b16 %v11726, %v11724
  %v11819 = vpack.c.b16 %v11729, %v11727
  %v11820 = vpack.c.b16 %v11730, %v11728
  %v11821 = vpack.c.b16 %v11733, %v11731
  %v11822 = vpack.c.b16 %v11734, %v11732
  %v11823 = vpack.c.b16 %v11737, %v11735
  %v11824 = vpack.c.b16 %v11738, %v11736
  %v11825 = vpack.c.b16 %v11741, %v11739
  %v11826 = vpack.c.b16 %v11742, %v11740
  %v11827 = vpack.c.b16 %v11745, %v11743
  %v11828 = vpack.c.b16 %v11746, %v11744
  %v11829 = vpack.c.b16 %v11749, %v11747
  %v11830 = vpack.c.b16 %v11750, %v11748
  %v11831 = vpack.c.b16 %v11753, %v11751
  %v11832 = vpack.c.b16 %v11754, %v11752
  %v11833 = vpack.c.b16 %v11757, %v11755
  %v11834 = vpack.c.b16 %v11758, %v11756
  %v11835 = vpack.c.b16 %v11761, %v11759
  %v11836 = vpack.c.b16 %v11762, %v11760
  %v11837 = vpack.c.b16 %v11765, %v11763
  %v11838 = vpack.c.b16 %v11766, %v11764
  %v11839 = vpack.c.b16 %v11769, %v11767
  %v11840 = vpack.c.b16 %v11770, %v11768
  %v11841 = vpack.c.b16 %v11773, %v11771
  %v11842 = vpack.c.b16 %v11774, %v11772
  %v11843 = vpack.c.b16 %v11777, %v11775
  %v11844 = vpack.c.b16 %v11778, %v11776
  %v11845 = vpack.c.b16 %v11781, %v11779
  %v11846 = vpack.c.b16 %v11782, %v11780
  %11911 = vmatprep.subr.bf16.mxu0 %v11798
  %11912 = vmatpush1.bf16.msra.mxu0 %v11797
  %11913 = vmatprep.subr.bf16.mxu0 %v11796
  %11914 = vmatpush1.bf16.msra.mxu0 %v11795
  %11915 = vmatprep.subr.bf16.mxu0 %v11794
  %11916 = vmatpush1.bf16.msra.mxu0 %v11793
  %11917 = vmatprep.subr.bf16.mxu0 %v11792
  %11918 = vmatpush1.bf16.msra.mxu0 %v11791
  %11919 = vmatprep.subr.bf16.mxu0 %v11790
  %11920 = vmatpush1.bf16.msra.mxu0 %v11789
  %11921 = vmatprep.subr.bf16.mxu0 %v11788
  %11922 = vmatpush1.bf16.msra.mxu0 %v11787
  %11923 = vmatprep.subr.bf16.mxu0 %v11786
  %11924 = vmatpush1.bf16.msra.mxu0 %v11785
  %11925 = vmatprep.subr.bf16.mxu0 %v11784
  %11926 = vmatpush1.bf16.msra.mxu0 %v11783
  %11927 = vmatprep.subr.bf16.mxu0 %v11814
  %11928 = vmatpush2.bf16.msra.mxu0 %v11813
  %11929 = vmatprep.subr.bf16.mxu0 %v11812
  %11930 = vmatpush2.bf16.msra.mxu0 %v11811
  %11931 = vmatprep.subr.bf16.mxu0 %v11810
  %11932 = vmatpush2.bf16.msra.mxu0 %v11809
  %11933 = vmatprep.subr.bf16.mxu0 %v11808
  %11934 = vmatpush2.bf16.msra.mxu0 %v11807
  %11935 = vmatprep.subr.bf16.mxu0 %v11806
  %11936 = vmatpush2.bf16.msra.mxu0 %v11805
  %11937 = vmatprep.subr.bf16.mxu0 %v11804
  %11938 = vmatpush2.bf16.msra.mxu0 %v11803
  %11939 = vmatprep.subr.bf16.mxu0 %v11802
  %11940 = vmatpush2.bf16.msra.mxu0 %v11801
  %11941 = vmatprep.subr.bf16.mxu0 %v11800
  %11942 = vmatpush2.bf16.msra.mxu0 %v11799
  %11943 = vmatprep.mubr.bf16.mxu0 %v11508
  %11944 = vmatmul.mubr.bf16.gmra.mxu0 %v11507
  %v11945 = vpop.f32.mrf.mxu0
  %v11946 = vadd.f32 %v11584, %v11945
  %v11947 = vpop.f32.mrf.mxu0
  %v11948 = vadd.f32 %v11588, %v11947
  %v11949 = vpop.f32.mrf.mxu0
  %v11950 = vadd.f32 %v11584, %v11949
  %v11951 = vpop.f32.mrf.mxu0
  %v11952 = vadd.f32 %v11588, %v11951
  %11953 = vmatprep.mubr.bf16.mxu0 %v11512
  %11954 = vmatmul.mubr.bf16.gmra.mxu0 %v11511
  %v11955 = vpop.f32.mrf.mxu0
  %v11956 = vadd.f32 %v11584, %v11955
  %v11957 = vpop.f32.mrf.mxu0
  %v11958 = vadd.f32 %v11588, %v11957
  %v11959 = vpop.f32.mrf.mxu0
  %v11960 = vadd.f32 %v11584, %v11959
  %v11961 = vpop.f32.mrf.mxu0
  %v11962 = vadd.f32 %v11588, %v11961
  %11963 = vdwg.mxu0
  %11964 = vmatprep.subr.bf16.mxu0 %v11830
  %11965 = vmatpush1.bf16.msra.mxu0 %v11829
  %11966 = vmatprep.subr.bf16.mxu0 %v11828
  %11967 = vmatpush1.bf16.msra.mxu0 %v11827
  %11968 = vmatprep.subr.bf16.mxu0 %v11826
  %11969 = vmatpush1.bf16.msra.mxu0 %v11825
  %11970 = vmatprep.subr.bf16.mxu0 %v11824
  %11971 = vmatpush1.bf16.msra.mxu0 %v11823
  %11972 = vmatprep.subr.bf16.mxu0 %v11822
  %11973 = vmatpush1.bf16.msra.mxu0 %v11821
  %11974 = vmatprep.subr.bf16.mxu0 %v11820
  %11975 = vmatpush1.bf16.msra.mxu0 %v11819
  %11976 = vmatprep.subr.bf16.mxu0 %v11818
  %11977 = vmatpush1.bf16.msra.mxu0 %v11817
  %11978 = vmatprep.subr.bf16.mxu0 %v11816
  %11979 = vmatpush1.bf16.msra.mxu0 %v11815
  %11980 = vmatprep.subr.bf16.mxu0 %v11846
  %11981 = vmatpush2.bf16.msra.mxu0 %v11845
  %11982 = vmatprep.subr.bf16.mxu0 %v11844
  %11983 = vmatpush2.bf16.msra.mxu0 %v11843
  %11984 = vmatprep.subr.bf16.mxu0 %v11842
  %11985 = vmatpush2.bf16.msra.mxu0 %v11841
  %11986 = vmatprep.subr.bf16.mxu0 %v11840
  %11987 = vmatpush2.bf16.msra.mxu0 %v11839
  %11988 = vmatprep.subr.bf16.mxu0 %v11838
  %11989 = vmatpush2.bf16.msra.mxu0 %v11837
  %11990 = vmatprep.subr.bf16.mxu0 %v11836
  %11991 = vmatpush2.bf16.msra.mxu0 %v11835
  %11992 = vmatprep.subr.bf16.mxu0 %v11834
  %11993 = vmatpush2.bf16.msra.mxu0 %v11833
  %11994 = vmatprep.subr.bf16.mxu0 %v11832
  %11995 = vmatpush2.bf16.msra.mxu0 %v11831
  %11996 = vmatprep.mubr.bf16.mxu0 %v11510
  %11997 = vmatmul.mubr.bf16.gmra.mxu0 %v11509
  %v11998 = vpop.f32.mrf.mxu0
  %v11999 = vadd.f32 %v11946, %v11998
  %v12000 = vpop.f32.mrf.mxu0
  %v12001 = vadd.f32 %v11948, %v12000
  %v12002 = vpop.f32.mrf.mxu0
  %v12003 = vadd.f32 %v11950, %v12002
  %v12004 = vpop.f32.mrf.mxu0
  %v12005 = vadd.f32 %v11952, %v12004
  %12006 = vmatprep.mubr.bf16.mxu0 %v11514
  %12007 = vmatmul.mubr.bf16.gmra.mxu0 %v11513
  %v12008 = vpop.f32.mrf.mxu0
  %v12009 = vadd.f32 %v11956, %v12008
  %v12010 = vpop.f32.mrf.mxu0
  %v12011 = vadd.f32 %v11958, %v12010
  %v12012 = vpop.f32.mrf.mxu0
  %v12013 = vadd.f32 %v11960, %v12012
  %v12014 = vpop.f32.mrf.mxu0
  %v12015 = vadd.f32 %v11962, %v12014
  %12016 = vdwg.mxu0
  %v12017 = vmax.f32 %v11999, 0.0
  %v12018 = vmax.f32 %v12001, 0.0
  %v12019 = vmax.f32 %v12003, 0.0
  %v12020 = vmax.f32 %v12005, 0.0
  %v12021 = vmax.f32 %v12009, 0.0
  %v12022 = vmax.f32 %v12011, 0.0
  %v12023 = vmax.f32 %v12013, 0.0
  %v12024 = vmax.f32 %v12015, 0.0
  %v12025 = vpack.c.bf16 %v12019, %v12017
  %v12026 = vpack.c.bf16 %v12020, %v12018
  %v12027 = vpack.c.bf16 %v12023, %v12021
  %v12028 = vpack.c.bf16 %v12024, %v12022
  %v12029 = vld [vmem:[%s59] sm:$0xf]
  %v12030 = vld [vmem:[%s59 + $0x4] sm:$0xf]
  %v12031 = vld [vmem:[%s59 + $0x8] sm:$0xf]
  %v12032 = vld [vmem:[%s59 + $0xc] sm:$0xf]
  %v12033 = vld [vmem:[%s59 + $0x10] sm:$0xf]
  %v12034 = vld [vmem:[%s59 + $0x14] sm:$0xf]
  %v12035 = vld [vmem:[%s59 + $0x18] sm:$0xf]
  %v12036 = vld [vmem:[%s59 + $0x1c] sm:$0xf]
  %v12037 = vld [vmem:[%s59 + $0x20] sm:$0xf]
  %v12038 = vld [vmem:[%s59 + $0x24] sm:$0xf]
  %v12039 = vld [vmem:[%s59 + $0x28] sm:$0xf]
  %v12040 = vld [vmem:[%s59 + $0x2c] sm:$0xf]
  %v12041 = vld [vmem:[%s59 + $0x30] sm:$0xf]
  %v12042 = vld [vmem:[%s59 + $0x34] sm:$0xf]
  %v12043 = vld [vmem:[%s59 + $0x38] sm:$0xf]
  %v12044 = vld [vmem:[%s59 + $0x3c] sm:$0xf]
  %v12045 = vld [vmem:[%s59 + $0x40] sm:$0xf]
  %v12046 = vld [vmem:[%s59 + $0x44] sm:$0xf]
  %v12047 = vld [vmem:[%s59 + $0x48] sm:$0xf]
  %v12048 = vld [vmem:[%s59 + $0x4c] sm:$0xf]
  %v12049 = vld [vmem:[%s59 + $0x50] sm:$0xf]
  %v12050 = vld [vmem:[%s59 + $0x54] sm:$0xf]
  %v12051 = vld [vmem:[%s59 + $0x58] sm:$0xf]
  %v12052 = vld [vmem:[%s59 + $0x5c] sm:$0xf]
  %v12053 = vld [vmem:[%s59 + $0x60] sm:$0xf]
  %v12054 = vld [vmem:[%s59 + $0x64] sm:$0xf]
  %v12055 = vld [vmem:[%s59 + $0x68] sm:$0xf]
  %v12056 = vld [vmem:[%s59 + $0x6c] sm:$0xf]
  %v12057 = vld [vmem:[%s59 + $0x70] sm:$0xf]
  %v12058 = vld [vmem:[%s59 + $0x74] sm:$0xf]
  %v12059 = vld [vmem:[%s59 + $0x78] sm:$0xf]
  %v12060 = vld [vmem:[%s59 + $0x7c] sm:$0xf]
  %v12061 = vld [vmem:[%s61] sm:$0x1]
  %v12063 = vlaneseq
  %v12064 = vshrl.u32 %v12063, 7
  %v12065 = vsub.s32 0, %v12064
  %v12066 = vrot.slane %v12061, %v12065
  %v12100 = vunpack.c.l.b16 %v12029
  %v12101 = vunpack.c.l.b16 %v12030
  %v12102 = vunpack.c.l.b16 %v12031
  %v12103 = vunpack.c.l.b16 %v12032
  %v12104 = vunpack.c.l.b16 %v12033
  %v12105 = vunpack.c.l.b16 %v12034
  %v12106 = vunpack.c.l.b16 %v12035
  %v12107 = vunpack.c.l.b16 %v12036
  %v12108 = vunpack.c.l.b16 %v12037
  %v12109 = vunpack.c.l.b16 %v12038
  %v12110 = vunpack.c.l.b16 %v12039
  %v12111 = vunpack.c.l.b16 %v12040
  %v12112 = vunpack.c.l.b16 %v12041
  %v12113 = vunpack.c.l.b16 %v12042
  %v12114 = vunpack.c.l.b16 %v12043
  %v12115 = vunpack.c.l.b16 %v12044
  %v12116 = vunpack.c.l.b16 %v12045
  %v12117 = vunpack.c.l.b16 %v12046
  %v12118 = vunpack.c.l.b16 %v12047
  %v12119 = vunpack.c.l.b16 %v12048
  %v12120 = vunpack.c.l.b16 %v12049
  %v12121 = vunpack.c.l.b16 %v12050
  %v12122 = vunpack.c.l.b16 %v12051
  %v12123 = vunpack.c.l.b16 %v12052
  %v12124 = vunpack.c.l.b16 %v12053
  %v12125 = vunpack.c.l.b16 %v12054
  %v12126 = vunpack.c.l.b16 %v12055
  %v12127 = vunpack.c.l.b16 %v12056
  %v12128 = vunpack.c.l.b16 %v12057
  %v12129 = vunpack.c.l.b16 %v12058
  %v12130 = vunpack.c.l.b16 %v12059
  %v12131 = vunpack.c.l.b16 %v12060
  %v12132 = vpack.c.b16 %v12101, %v12100
  %v12133 = vpack.c.b16 %v12103, %v12102
  %v12134 = vpack.c.b16 %v12105, %v12104
  %v12135 = vpack.c.b16 %v12107, %v12106
  %v12136 = vpack.c.b16 %v12109, %v12108
  %v12137 = vpack.c.b16 %v12111, %v12110
  %v12138 = vpack.c.b16 %v12113, %v12112
  %v12139 = vpack.c.b16 %v12115, %v12114
  %v12140 = vpack.c.b16 %v12117, %v12116
  %v12141 = vpack.c.b16 %v12119, %v12118
  %v12142 = vpack.c.b16 %v12121, %v12120
  %v12143 = vpack.c.b16 %v12123, %v12122
  %v12144 = vpack.c.b16 %v12125, %v12124
  %v12145 = vpack.c.b16 %v12127, %v12126
  %v12146 = vpack.c.b16 %v12129, %v12128
  %v12147 = vpack.c.b16 %v12131, %v12130
  %12164 = vmatprep.subr.bf16.mxu0 0
  %12165 = vmatpush1.bf16.msra.mxu0 %v12139
  %12166 = vmatprep.subr.bf16.mxu0 0
  %12167 = vmatpush1.bf16.msra.mxu0 %v12138
  %12168 = vmatprep.subr.bf16.mxu0 0
  %12169 = vmatpush1.bf16.msra.mxu0 %v12137
  %12170 = vmatprep.subr.bf16.mxu0 0
  %12171 = vmatpush1.bf16.msra.mxu0 %v12136
  %12172 = vmatprep.subr.bf16.mxu0 0
  %12173 = vmatpush1.bf16.msra.mxu0 %v12135
  %12174 = vmatprep.subr.bf16.mxu0 0
  %12175 = vmatpush1.bf16.msra.mxu0 %v12134
  %12176 = vmatprep.subr.bf16.mxu0 0
  %12177 = vmatpush1.bf16.msra.mxu0 %v12133
  %12178 = vmatprep.subr.bf16.mxu0 0
  %12179 = vmatpush1.bf16.msra.mxu0 %v12132
  %12180 = vmatprep.subr.bf16.mxu0 0
  %12181 = vmatpush2.bf16.msra.mxu0 %v12147
  %12182 = vmatprep.subr.bf16.mxu0 0
  %12183 = vmatpush2.bf16.msra.mxu0 %v12146
  %12184 = vmatprep.subr.bf16.mxu0 0
  %12185 = vmatpush2.bf16.msra.mxu0 %v12145
  %12186 = vmatprep.subr.bf16.mxu0 0
  %12187 = vmatpush2.bf16.msra.mxu0 %v12144
  %12188 = vmatprep.subr.bf16.mxu0 0
  %12189 = vmatpush2.bf16.msra.mxu0 %v12143
  %12190 = vmatprep.subr.bf16.mxu0 0
  %12191 = vmatpush2.bf16.msra.mxu0 %v12142
  %12192 = vmatprep.subr.bf16.mxu0 0
  %12193 = vmatpush2.bf16.msra.mxu0 %v12141
  %12194 = vmatprep.subr.bf16.mxu0 0
  %12195 = vmatpush2.bf16.msra.mxu0 %v12140
  %12196 = vmatprep.mubr.bf16.mxu0 %v12026
  %12197 = vmatmul.mubr.bf16.gmra.mxu0 %v12025
  %v12198 = vpop.f32.mrf.mxu0
  %v12199 = vadd.f32 %v12066, %v12198
  %v12200 = vpop.f32.mrf.mxu0
  %v12201 = vpop.f32.mrf.mxu0
  %v12202 = vadd.f32 %v12066, %v12201
  %v12203 = vpop.f32.mrf.mxu0
  %12204 = vmatprep.mubr.bf16.mxu0 %v12028
  %12205 = vmatmul.mubr.bf16.gmra.mxu0 %v12027
  %v12206 = vpop.f32.mrf.mxu0
  %v12207 = vadd.f32 %v12066, %v12206
  %v12208 = vpop.f32.mrf.mxu0
  %v12209 = vpop.f32.mrf.mxu0
  %v12210 = vadd.f32 %v12066, %v12209
  %v12211 = vpop.f32.mrf.mxu0
  %12212 = vdwg.mxu0
  %v12213 = vlaneseq
  %v12214 = vand.u32 %v12213, 127
  %vm12215 = vcmp.ge.s32.totalorder %v12214, 3
  %v12216 = vmul.f32 %v12199, %v12199
  %v12217 = vmul.f32 %v12202, %v12202
  %v12218 = vmul.f32 %v12207, %v12207
  %v12219 = vmul.f32 %v12210, %v12210
  %v12220 = vsel %vm12215, %v12216, 0.0
  %v12221 = vsel %vm12215, %v12217, 0.0
  %v12222 = vsel %vm12215, %v12218, 0.0
  %v12223 = vsel %vm12215, %v12219, 0.0
  %vm12224 = vcmask 56320
  %v12225 = vsel %vm12224, %v12220, 0.0
  %12226 = vadd.xlane.f32.xlu0 %v12225
  %v12227 = vpop.xlane.xlu0 %12226
  %v12228 = vsel %vm12224, %v12221, 0.0
  %12229 = vadd.xlane.f32.xlu0 %v12228
  %v12230 = vpop.xlane.xlu0 %12229
  %v12231 = vsel %vm12224, %v12222, 0.0
  %12232 = vadd.xlane.f32.xlu0 %v12231
  %v12233 = vpop.xlane.xlu0 %12232
  %v12234 = vsel %vm12224, %v12223, 0.0
  %12235 = vadd.xlane.f32.xlu0 %v12234
  %v12236 = vpop.xlane.xlu0 %12235
  %v12237 = vrsqrt.pop %v12227
  %v12238 = vmul.f32 %v12227, %v12237
  %vm12239 = vcmp.eq.f32.partialorder %v12227, inf
  %v12240 = vsel %vm12239, %v12227, %v12238
  %vm12241 = vcmp.eq.f32.partialorder %v12227, 0.0
  %v12242 = vand.u32 %v12227, 2147483648
  %v12243 = vsel %vm12241, %v12242, %v12240
  %v12244 = vrsqrt.pop %v12230
  %v12245 = vmul.f32 %v12230, %v12244
  %vm12246 = vcmp.eq.f32.partialorder %v12230, inf
  %v12247 = vsel %vm12246, %v12230, %v12245
  %vm12248 = vcmp.eq.f32.partialorder %v12230, 0.0
  %v12249 = vand.u32 %v12230, 2147483648
  %v12250 = vsel %vm12248, %v12249, %v12247
  %v12251 = vrsqrt.pop %v12233
  %v12252 = vmul.f32 %v12233, %v12251
  %vm12253 = vcmp.eq.f32.partialorder %v12233, inf
  %v12254 = vsel %vm12253, %v12233, %v12252
  %vm12255 = vcmp.eq.f32.partialorder %v12233, 0.0
  %v12256 = vand.u32 %v12233, 2147483648
  %v12257 = vsel %vm12255, %v12256, %v12254
  %v12258 = vrsqrt.pop %v12236
  %v12259 = vmul.f32 %v12236, %v12258
  %vm12260 = vcmp.eq.f32.partialorder %v12236, inf
  %v12261 = vsel %vm12260, %v12236, %v12259
  %vm12262 = vcmp.eq.f32.partialorder %v12236, 0.0
  %v12263 = vand.u32 %v12236, 2147483648
  %v12264 = vsel %vm12262, %v12263, %v12261
  %v12265 = vmax.f32 %v12243, 1e-12
  %v12266 = vmax.f32 %v12250, 1e-12
  %v12267 = vmax.f32 %v12257, 1e-12
  %v12268 = vmax.f32 %v12264, 1e-12
  %v12269 = vrcp.pop %v12265
  %v12270 = vmul.f32 1.0, %v12269
  %v12271 = vrcp.pop %v12266
  %v12272 = vmul.f32 1.0, %v12271
  %v12273 = vrcp.pop %v12267
  %v12274 = vmul.f32 1.0, %v12273
  %v12275 = vrcp.pop %v12268
  %v12276 = vmul.f32 1.0, %v12275
  %v12277 = vmul.f32 %v12199, %v12270
  %v12278 = vmul.f32 %v12202, %v12272
  %v12279 = vmul.f32 %v12207, %v12274
  %v12280 = vmul.f32 %v12210, %v12276
  %v12281 = vsel %vm12215, %v12277, %v12199
  %v12282 = vsel %vm12215, %v12278, %v12202
  %v12283 = vsel %vm12215, %v12279, %v12207
  %v12284 = vsel %vm12215, %v12280, %v12210
  %12285 = vst.msk [vmem:[%s63] sm:$0xff] %vm12224, %v12281
  %vm12286 = vcmask 50176
  %12287 = vst.msk [vmem:[%s63 + $0x8] sm:$0x3] %vm12286, %v12282
  %12288 = vst.msk [vmem:[%s63 + $0x10] sm:$0xff] %vm12224, %v12283
  %12289 = vst.msk [vmem:[%s63 + $0x18] sm:$0x3] %vm12286, %v12284
  // Predicated region
  $region126: #{imu_only_forward.1} parent=0 // pred_check
    _
  $region127: #{imu_only_forward.1} parent=0 // pred_check_branch
    %12291 = sbr.rel (0) target = $region129
  $region128: #{imu_only_forward.1} parent=0 // pred_region
    _
  $region129: #{imu_only_forward.1} parent=0 // pred_fallthru
    _
  // Predicated region
  $region130: #{imu_only_forward.1} parent=0 // pred_check
    _
  $region131: #{imu_only_forward.1} parent=0 // pred_check_branch
    %12293 = sbr.rel (0) target = $region133
  $region132: #{imu_only_forward.1} parent=0 // pred_region
    _
  $region133: #{imu_only_forward.1} parent=0 // pred_fallthru
    _

</llo_original>
